<compile_context>
chip_gen: v7x
topology: tpu7x:2x2x1
jax: 0.10.0
libtpu: 0.0.40
codegen_flags: <defaults>
</compile_context>

<pallas_src>
import functools

import jax
import jax.numpy as jnp
from jax.experimental import pallas as pl
from jax.experimental.pallas import tpu as pltpu


_HEADROOM = 6 * 1024 * 1024  # compiler scratch / misc temps


# ----------------------------------------------------------------------------
# generation-aware VMEM budget & tiling helpers
# ----------------------------------------------------------------------------

@functools.lru_cache(maxsize=None)
def _vmem_cap():
    """Usable per-core VMEM budget: ~3/4 of physical capacity.
    128 MiB parts (v5e/v6e) -> 96 MiB; 64 MiB parts (v7x) -> 48 MiB."""
    phys = 64 * 1024 * 1024  # conservative default (v7x)
    try:
        phys = int(pltpu.get_tpu_info().vmem_capacity_bytes)
    except Exception:
        pass
    return max(24 * 1024 * 1024, min(phys * 3 // 4, 100 * 1024 * 1024))


def _choose_row_tile(rows, var_bytes_per_row, fixed_bytes, cap):
    """Largest row tile (multiple of 8, <=512) whose double-buffered I/O plus
    resident weights plus f32 temps fit the VMEM budget.  Used with a
    pl.cdiv grid, so `rows` need not be divisible by the tile."""
    cands = [512, 384, 256, 192, 128, 64, 32, 16, 8]
    if rows <= cands[0]:
        cands = [rows] + [c for c in cands if c < rows]
    for tr in cands:
        if fixed_bytes + tr * var_bytes_per_row + _HEADROOM <= cap:
            return tr
    return 8


def _pick_nb(N, per_slice_bytes, extra_bytes, cap):
    """Largest nb <= 8 dividing N that fits VMEM double-buffered and leaves
    >= 2 grid steps (so both v7x TensorCores get work)."""
    for c in range(min(8, N), 0, -1):
        if N % c:
            continue
        if 2 * c * per_slice_bytes + extra_bytes + _HEADROOM > cap:
            continue
        if N // c >= 2 or N == 1:
            return c
    return 1


def _resident_spec(a):
    """Weights/biases: constant index map (stay VMEM-resident) and
    single-buffered — their block never changes, double-buffering is waste."""
    nd = a.ndim
    return pl.BlockSpec(a.shape, lambda i: (0,) * nd,
                        pipeline_mode=pl.Buffered(1))


def _rowwise_call(kernel, tiled, resident, out_cols, out_dtype, *,
                  f32_cols, flops=0, transcendentals=0):
    """Row-tiled pallas_call: `tiled` inputs are (rows, cols_i) activations,
    `resident` inputs are weights/biases loaded once."""
    rows = tiled[0].shape[0]
    out_isz = jnp.dtype(out_dtype).itemsize
    cap = _vmem_cap()

    fixed = sum(int(a.size) * a.dtype.itemsize for a in resident)
    var = (2 * sum(a.shape[1] * a.dtype.itemsize for a in tiled)
           + 2 * out_cols * out_isz
           + 4 * f32_cols)                      # f32 intermediates
    tr = _choose_row_tile(rows, var, fixed, cap)
    grid = (pl.cdiv(rows, tr),)

    in_specs = [pl.BlockSpec((tr, a.shape[1]), lambda i: (i, 0)) for a in tiled]
    in_specs += [_resident_spec(a) for a in resident]
    out_spec = pl.BlockSpec((tr, out_cols), lambda i: (i, 0))

    bytes_accessed = (sum(int(a.size) * a.dtype.itemsize
                          for a in list(tiled) + list(resident))
                      + rows * out_cols * out_isz)

    return pl.pallas_call(
        kernel,
        out_shape=jax.ShapeDtypeStruct((rows, out_cols), out_dtype),
        grid=grid,
        in_specs=in_specs,
        out_specs=out_spec,
        compiler_params=pltpu.CompilerParams(
            dimension_semantics=("parallel",),
            vmem_limit_bytes=cap),
        cost_estimate=pl.CostEstimate(flops=int(flops),
                                      transcendentals=int(transcendentals),
                                      bytes_accessed=int(bytes_accessed)),
    )(*tiled, *resident)


def _layernorm_f32(x, g, b):
    mu = jnp.mean(x, axis=-1, keepdims=True)
    var = jnp.mean(jnp.square(x - mu), axis=-1, keepdims=True)
    return (x - mu) * jax.lax.rsqrt(var + 1e-5) * g + b


# ----------------------------------------------------------------------------
# fused kernels
# ----------------------------------------------------------------------------

def _attn_pre_kernel(x_ref, g_ref, b_ref, aw1, ab1, aw2, ab2, wqkv, bqkv,
                     o_ref, *, scale):
    # ln_1 -> T_Adapter_in (no nonlinearity, skip-connect) -> in_proj (qkv)
    x = x_ref[...].astype(jnp.float32)
    y = _layernorm_f32(x, g_ref[...], b_ref[...])
    h = jnp.dot(y.astype(jnp.bfloat16), aw1[...],
                preferred_element_type=jnp.float32) + ab1[...]
    h = jnp.dot(h.astype(jnp.bfloat16), aw2[...],
                preferred_element_type=jnp.float32) + ab2[...]
    z = y + scale * h
    qkv = jnp.dot(z.astype(jnp.bfloat16), wqkv[...],
                  preferred_element_type=jnp.float32) + bqkv[...]
    o_ref[...] = qkv.astype(o_ref.dtype)          # bf16 out


def _attn_post_kernel(o_in_ref, xres_ref, wo, bo, sw1, sb1, sw2, sb2,
                      out_ref, *, scale):
    # out_proj -> S_Adapter -> residual add
    o = o_in_ref[...].astype(jnp.bfloat16)
    z = jnp.dot(o, wo[...], preferred_element_type=jnp.float32) + bo[...]
    h = jnp.dot(z.astype(jnp.bfloat16), sw1[...],
                preferred_element_type=jnp.float32) + sb1[...]
    h = jnp.dot(h.astype(jnp.bfloat16), sw2[...],
                preferred_element_type=jnp.float32) + sb2[...]
    a = z + scale * h
    out_ref[...] = (xres_ref[...].astype(jnp.float32) + a).astype(out_ref.dtype)


def _mlp_branch_kernel(x_ref, g_ref, b_ref, aw1, ab1, aw2, ab2,
                       w1, b1, w2, b2, out_ref, *, scale):
    # ln_2 -> MLP_Adapter -> c_fc -> QuickGELU -> c_proj -> residual add
    x = x_ref[...].astype(jnp.float32)
    y = _layernorm_f32(x, g_ref[...], b_ref[...])
    h = jnp.dot(y.astype(jnp.bfloat16), aw1[...],
                preferred_element_type=jnp.float32) + ab1[...]
    h = jnp.dot(h.astype(jnp.bfloat16), aw2[...],
                preferred_element_type=jnp.float32) + ab2[...]
    z = y + scale * h
    f = jnp.dot(z.astype(jnp.bfloat16), w1[...],
                preferred_element_type=jnp.float32) + b1[...]
    f = f * jax.nn.sigmoid(1.702 * f)             # QuickGELU (f32)
    m = jnp.dot(f.astype(jnp.bfloat16), w2[...],
                preferred_element_type=jnp.float32) + b2[...]
    out_ref[...] = (x + m).astype(out_ref.dtype)


def _stdha_attn_kernel(*refs, D, H, dh, nshift, scale, nb):
    # nb (batch*frame) slices per grid step; all heads per slice.
    if nshift > 0:
        cur_ref, prev_ref, o_ref = refs
    else:
        cur_ref, o_ref = refs
        prev_ref = None
    hg = 2 if H % 2 == 0 else 1                   # store head pairs (2*dh lanes)

    for j in range(nb):                           # static unroll over slices
        cur = cur_ref[:, j, 0, :]                 # (L, 3D) bf16
        q2d = cur[:, :D]
        k2d = cur[:, D:2 * D]
        v2d = cur[:, 2 * D:3 * D]
        if nshift > 0:
            # First `nshift` K/V channels come from the previous frame
            # (pre-sliced in the wrapper; frame 0 keeps its own channels).
            prev = prev_ref[:, j, 0, :]           # (L, 2*nshift)
            k2d = jnp.concatenate([prev[:, :nshift], k2d[:, nshift:]], axis=-1)
            v2d = jnp.concatenate([prev[:, nshift:], v2d[:, nshift:]], axis=-1)

        qb = q2d.astype(jnp.bfloat16)
        kb = k2d.astype(jnp.bfloat16)
        vb = v2d.astype(jnp.bfloat16)

        for h0 in range(0, H, hg):                # static unroll over head pairs
            outs = []
            for h in range(h0, h0 + hg):
                sl = slice(h * dh, (h + 1) * dh)
                s = jax.lax.dot_general(qb[:, sl], kb[:, sl],
                                        (((1,), (1,)), ((), ())),
                                        preferred_element_type=jnp.float32)
                s = s * scale
                s = s - jnp.max(s, axis=-1, keepdims=True)
                p = jnp.exp(s)
                p = p * pl.reciprocal(jnp.sum(p, axis=-1, keepdims=True),
                                      approx=True)
                outs.append(jax.lax.dot_general(
                    p.astype(jnp.bfloat16), vb[:, sl],
                    (((1,), (0,)), ((), ())),
                    preferred_element_type=jnp.float32))
            blk = outs[0] if hg == 1 else jnp.concatenate(outs, axis=-1)
            o_ref[:, j, 0, h0 * dh:(h0 + hg) * dh] = blk.astype(o_ref.dtype)


# ----------------------------------------------------------------------------
# wrappers
# ----------------------------------------------------------------------------

def attn_pre(x2d, p, scale):
    rows, D = x2d.shape
    a = p["t_adapter"]
    Dh = a["w1"].shape[1]
    flops = 2 * rows * (2 * D * Dh + 3 * D * D)
    return _rowwise_call(
        functools.partial(_attn_pre_kernel, scale=scale),
        [x2d],
        [p["ln1_g"], p["ln1_b"], a["w1"], a["b1"], a["w2"], a["b2"],
         p["attn"]["in_proj_w"], p["attn"]["in_proj_b"]],
        3 * D, jnp.bfloat16,                      # qkv emitted in bf16
        f32_cols=5 * D + Dh, flops=flops, transcendentals=rows)


def attn_post(o2d, x2d, p, scale):
    rows, D = x2d.shape
    a = p["s_adapter"]
    Dh = a["w1"].shape[1]
    flops = 2 * rows * (D * D + 2 * D * Dh)
    return _rowwise_call(
        functools.partial(_attn_post_kernel, scale=scale),
        [o2d, x2d],
        [p["attn"]["out_proj_w"], p["attn"]["out_proj_b"],
         a["w1"], a["b1"], a["w2"], a["b2"]],
        D, x2d.dtype, f32_cols=4 * D + Dh, flops=flops)


def mlp_branch(x2d, p, scale):
    rows, D = x2d.shape
    a = p["mlp_adapter"]
    Dh = a["w1"].shape[1]
    Dm = p["mlp_w1"].shape[1]
    flops = 2 * rows * (2 * D * Dh + 2 * D * Dm)
    return _rowwise_call(
        functools.partial(_mlp_branch_kernel, scale=scale),
        [x2d],
        [p["ln2_g"], p["ln2_b"], a["w1"], a["b1"], a["w2"], a["b2"],
         p["mlp_w1"], p["mlp_b1"], p["mlp_w2"], p["mlp_b2"]],
        D, x2d.dtype, f32_cols=8 * D + Dh,
        flops=flops, transcendentals=rows * (Dm + 1))


def stdha_attention(qkv2d, L, N, D, num_heads, T, nshift):
    """STDHA multi-head self-attention over each (batch*frame) slice."""
    dh = D // num_heads
    scale = dh ** -0.5
    isz = jnp.dtype(qkv2d.dtype).itemsize
    qkv4 = qkv2d.reshape(L, N, 1, 3 * D)

    operands = [qkv4]
    if nshift > 0:
        # Wrapper-side pre-slice of the shifted K/V channels of the previous
        # frame: only 2*nshift columns instead of a full (L, 3D) prev slab.
        # Ordering n = b*T + t (frames contiguous per clip).
        B = N // T
        kvs = jnp.concatenate([qkv2d[:, D:D + nshift],
                               qkv2d[:, 2 * D:2 * D + nshift]], axis=-1)
        kvs = kvs.reshape(L, B, T, 2 * nshift)
        prev = jnp.concatenate([kvs[:, :, :1, :], kvs[:, :, :-1, :]], axis=2)
        operands.append(prev.reshape(L, N, 1, 2 * nshift))

    cap = _vmem_cap()
    per_slice = L * (4 * D + 2 * nshift) * isz       # cur + prev + out per slice
    f32_tmp = 3 * L * L * 4 + 3 * L * D * 4 + (1 << 20)
    nb = _pick_nb(N, per_slice, f32_tmp, cap)
    grid = (N // nb,)

    in_specs = [pl.BlockSpec((L, nb, 1, 3 * D), lambda n: (0, n, 0, 0))]
    if nshift > 0:
        in_specs.append(pl.BlockSpec((L, nb, 1, 2 * nshift),
                                     lambda n: (0, n, 0, 0)))
    out_spec = pl.BlockSpec((L, nb, 1, D), lambda n: (0, n, 0, 0))

    flops = 4 * N * L * L * D
    bytes_accessed = (int(qkv4.size) * isz
                      + (L * N * 2 * nshift * isz if nshift > 0 else 0)
                      + L * N * D * 2)

    out = pl.pallas_call(
        functools.partial(_stdha_attn_kernel, D=D, H=num_heads, dh=dh,
                          nshift=nshift, scale=scale, nb=nb),
        out_shape=jax.ShapeDtypeStruct((L, N, 1, D), jnp.bfloat16),
        grid=grid,
        in_specs=in_specs,
        out_specs=out_spec,
        compiler_params=pltpu.CompilerParams(
            dimension_semantics=("parallel",),
            vmem_limit_bytes=cap),
        cost_estimate=pl.CostEstimate(
            flops=int(flops),
            transcendentals=int(N * num_heads * L * L),
            bytes_accessed=int(bytes_accessed)),
    )(*operands)
    return out.reshape(L * N, D)


# ----------------------------------------------------------------------------
# ResidualAttentionBlock_stdha / Transformer forward
# ----------------------------------------------------------------------------

def block_forward(x, p, num_heads, num_frames, scale=1.0, shift1_div=12):
    L, N, D = x.shape
    x2d = x.reshape(L * N, D)
    # attention branch: x + S_Adapter(out_proj(attn(T_Adapter_in(ln_1(x)))))
    qkv = attn_pre(x2d, p, scale)                              # bf16 (L*N, 3D)
    o = stdha_attention(qkv, L, N, D, num_heads, num_frames,
                        D // shift1_div)                       # bf16 (L*N, D)
    x2d = attn_post(o, x2d, p, scale)
    # MLP branch: x + mlp(MLP_Adapter(ln_2(x)))
    x2d = mlp_branch(x2d, p, scale)
    return x2d.reshape(L, N, D)


def transformer_forward(x, params, num_heads, num_frames, scale=1.0):
    for p in params:
        x = block_forward(x, p, num_heads, num_frames, scale)
    return x


# ----------------------------------------------------------------------------
# deterministic synthetic parameters (match module shapes)
# ----------------------------------------------------------------------------

def _adapter_params(key, d, mlp_ratio=0.25, std=0.02):
    dh = int(d * mlp_ratio)
    k1, k2 = jax.random.split(key)
    return {
        "w1": std * jax.random.normal(k1, (d, dh), jnp.float32),
        "b1": jnp.zeros((1, dh), jnp.float32),
        "w2": std * jax.random.normal(k2, (dh, d), jnp.float32),
        "b2": jnp.zeros((1, d), jnp.float32),
    }


def init_params(key, layers, width, std=0.02):
    params = []
    for _ in range(layers):
        key, *ks = jax.random.split(key, 8)
        params.append({
            "ln1_g": jnp.ones((1, width), jnp.float32),
            "ln1_b": jnp.zeros((1, width), jnp.float32),
            "ln2_g": jnp.ones((1, width), jnp.float32),
            "ln2_b": jnp.zeros((1, width), jnp.float32),
            "t_adapter": _adapter_params(ks[0], width),
            "s_adapter": _adapter_params(ks[1], width),
            "mlp_adapter": _adapter_params(ks[2], width),
            "attn": {
                "in_proj_w": std * jax.random.normal(ks[3], (width, 3 * width), jnp.float32),
                "in_proj_b": jnp.zeros((1, 3 * width), jnp.float32),
                "out_proj_w": std * jax.random.normal(ks[4], (width, width), jnp.float32),
                "out_proj_b": jnp.zeros((1, width), jnp.float32),
            },
            "mlp_w1": std * jax.random.normal(ks[5], (width, 4 * width), jnp.float32),
            "mlp_b1": jnp.zeros((1, 4 * width), jnp.float32),
            "mlp_w2": std * jax.random.normal(ks[6], (4 * width, width), jnp.float32),
            "mlp_b2": jnp.zeros((1, width), jnp.float32),
        })
    return params


def cast_params_for_tpu(params):
    """Matmul weights -> bf16 (MXU-native); biases and LN params stay f32."""
    def cast_block(p):
        q = dict(p)
        for ad in ("t_adapter", "s_adapter", "mlp_adapter"):
            q[ad] = dict(p[ad])
            q[ad]["w1"] = p[ad]["w1"].astype(jnp.bfloat16)
            q[ad]["w2"] = p[ad]["w2"].astype(jnp.bfloat16)
        q["attn"] = dict(p["attn"])
        q["attn"]["in_proj_w"] = p["attn"]["in_proj_w"].astype(jnp.bfloat16)
        q["attn"]["out_proj_w"] = p["attn"]["out_proj_w"].astype(jnp.bfloat16)
        q["mlp_w1"] = p["mlp_w1"].astype(jnp.bfloat16)
        q["mlp_w2"] = p["mlp_w2"].astype(jnp.bfloat16)
        return q
    return [cast_block(p) for p in params]


# ----------------------------------------------------------------------------
# main
# ----------------------------------------------------------------------------

if __name__ == "__main__":
    # small shapes: width=32, heads=4, layers=2, num_frames=4, batch=2, L=8
    num_frames = 4
    width = 32
    layers = 2
    heads = 4
    batch = 2
    L = 8

    key = jax.random.PRNGKey(0)
    kx, kp = jax.random.split(key)
    # layout: (L, batch*num_frames, width)
    x = jax.random.normal(kx, (L, batch * num_frames, width), jnp.float32)
    params = cast_params_for_tpu(init_params(kp, layers, width))

    fwd = jax.jit(functools.partial(transformer_forward, num_heads=heads,
                                    num_frames=num_frames, scale=1.0))
    out = jax.block_until_ready(fwd(x, params))

    assert out.shape == x.shape and out.dtype == x.dtype
    assert bool(jnp.all(jnp.isfinite(out)))
    print("KERNEL_OK")
</pallas_src>

<mosaic_0001>
module attributes {stable_mosaic.version = 11 : i64} {
  func.func @_attn_pre_kernel(%arg0: i32, %arg1: memref<64x32xf32, #tpu.memory_space<vmem>>, %arg2: memref<1x32xf32, #tpu.memory_space<vmem>>, %arg3: memref<1x32xf32, #tpu.memory_space<vmem>>, %arg4: memref<32x8xbf16, #tpu.memory_space<vmem>>, %arg5: memref<1x8xf32, #tpu.memory_space<vmem>>, %arg6: memref<8x32xbf16, #tpu.memory_space<vmem>>, %arg7: memref<1x32xf32, #tpu.memory_space<vmem>>, %arg8: memref<32x96xbf16, #tpu.memory_space<vmem>>, %arg9: memref<1x96xf32, #tpu.memory_space<vmem>>, %arg10: memref<64x96xbf16, #tpu.memory_space<vmem>>) attributes {dimension_semantics = [#tpu.dimension_semantics<parallel>], iteration_bounds = array<i64: 1>, scalar_prefetch = 0 : i64, scratch_operands = 0 : i64, tpu.core_type = #tpu.core_type<tc>, window_params = [{transform_indices = @transform_0, window_bounds = array<i64: 64, 32>}, {pipeline_mode = #tpu.pipeline_mode<synchronous>, transform_indices = @transform_1, window_bounds = array<i64: 1, 32>}, {pipeline_mode = #tpu.pipeline_mode<synchronous>, transform_indices = @transform_2, window_bounds = array<i64: 1, 32>}, {pipeline_mode = #tpu.pipeline_mode<synchronous>, transform_indices = @transform_3, window_bounds = array<i64: 32, 8>}, {pipeline_mode = #tpu.pipeline_mode<synchronous>, transform_indices = @transform_4, window_bounds = array<i64: 1, 8>}, {pipeline_mode = #tpu.pipeline_mode<synchronous>, transform_indices = @transform_5, window_bounds = array<i64: 8, 32>}, {pipeline_mode = #tpu.pipeline_mode<synchronous>, transform_indices = @transform_6, window_bounds = array<i64: 1, 32>}, {pipeline_mode = #tpu.pipeline_mode<synchronous>, transform_indices = @transform_7, window_bounds = array<i64: 32, 96>}, {pipeline_mode = #tpu.pipeline_mode<synchronous>, transform_indices = @transform_8, window_bounds = array<i64: 1, 96>}, {transform_indices = @transform_9, window_bounds = array<i64: 64, 96>}]} {
    %c0 = arith.constant 0 : index
    %c0_0 = arith.constant 0 : index
    %0 = vector.load %arg1[%c0, %c0_0] : memref<64x32xf32, #tpu.memory_space<vmem>>, vector<64x32xf32>
    %c0_1 = arith.constant 0 : index
    %c0_2 = arith.constant 0 : index
    %1 = vector.load %arg2[%c0_1, %c0_2] : memref<1x32xf32, #tpu.memory_space<vmem>>, vector<1x32xf32>
    %c0_3 = arith.constant 0 : index
    %c0_4 = arith.constant 0 : index
    %2 = vector.load %arg3[%c0_3, %c0_4] : memref<1x32xf32, #tpu.memory_space<vmem>>, vector<1x32xf32>
    %cst = arith.constant dense<0.000000e+00> : vector<64xf32>
    %3 = vector.multi_reduction <add>, %0, %cst [1] : vector<64x32xf32> to vector<64xf32>
    %4 = vector.shape_cast %3 : vector<64xf32> to vector<64x1xf32>
    %cst_5 = arith.constant 3.200000e+01 : f32
    %5 = vector.broadcast %cst_5 : f32 to vector<64x1xf32>
    %6 = arith.divf %4, %5 : vector<64x1xf32>
    %7 = vector.broadcast %6 : vector<64x1xf32> to vector<64x32xf32>
    %8 = arith.subf %0, %7 : vector<64x32xf32>
    %9 = arith.mulf %8, %8 : vector<64x32xf32>
    %cst_6 = arith.constant dense<0.000000e+00> : vector<64xf32>
    %10 = vector.multi_reduction <add>, %9, %cst_6 [1] : vector<64x32xf32> to vector<64xf32>
    %11 = vector.shape_cast %10 : vector<64xf32> to vector<64x1xf32>
    %cst_7 = arith.constant 3.200000e+01 : f32
    %12 = vector.broadcast %cst_7 : f32 to vector<64x1xf32>
    %13 = arith.divf %11, %12 : vector<64x1xf32>
    %14 = vector.broadcast %6 : vector<64x1xf32> to vector<64x32xf32>
    %15 = arith.subf %0, %14 : vector<64x32xf32>
    %cst_8 = arith.constant 9.99999974E-6 : f32
    %16 = vector.broadcast %cst_8 : f32 to vector<64x1xf32>
    %17 = arith.addf %13, %16 : vector<64x1xf32>
    %18 = math.rsqrt %17 : vector<64x1xf32>
    %19 = vector.broadcast %18 : vector<64x1xf32> to vector<64x32xf32>
    %20 = arith.mulf %15, %19 : vector<64x32xf32>
    %21 = vector.broadcast %1 : vector<1x32xf32> to vector<64x32xf32>
    %22 = arith.mulf %20, %21 : vector<64x32xf32>
    %23 = vector.broadcast %2 : vector<1x32xf32> to vector<64x32xf32>
    %24 = arith.addf %22, %23 : vector<64x32xf32>
    %25 = arith.truncf %24 : vector<64x32xf32> to vector<64x32xbf16>
    %c0_9 = arith.constant 0 : index
    %c0_10 = arith.constant 0 : index
    %26 = vector.load %arg4[%c0_9, %c0_10] : memref<32x8xbf16, #tpu.memory_space<vmem>>, vector<32x8xbf16>
    %cst_11 = arith.constant dense<0.000000e+00> : vector<64x8xf32>
    %27 = tpu.matmul %25, %26, %cst_11 {dimension_numbers = #tpu.dot_dimension_numbers<[1], [0], [0], [1], [0, 0, 1, 1], [], []>} : vector<64x32xbf16>, vector<32x8xbf16>, vector<64x8xf32> -> vector<64x8xf32>
    %c0_12 = arith.constant 0 : index
    %c0_13 = arith.constant 0 : index
    %28 = vector.load %arg5[%c0_12, %c0_13] : memref<1x8xf32, #tpu.memory_space<vmem>>, vector<1x8xf32>
    %29 = vector.broadcast %28 : vector<1x8xf32> to vector<64x8xf32>
    %30 = arith.addf %27, %29 : vector<64x8xf32>
    %31 = arith.truncf %30 : vector<64x8xf32> to vector<64x8xbf16>
    %c0_14 = arith.constant 0 : index
    %c0_15 = arith.constant 0 : index
    %32 = vector.load %arg6[%c0_14, %c0_15] : memref<8x32xbf16, #tpu.memory_space<vmem>>, vector<8x32xbf16>
    %cst_16 = arith.constant dense<0.000000e+00> : vector<64x32xf32>
    %33 = tpu.matmul %31, %32, %cst_16 {dimension_numbers = #tpu.dot_dimension_numbers<[1], [0], [0], [1], [0, 0, 1, 1], [], []>} : vector<64x8xbf16>, vector<8x32xbf16>, vector<64x32xf32> -> vector<64x32xf32>
    %c0_17 = arith.constant 0 : index
    %c0_18 = arith.constant 0 : index
    %34 = vector.load %arg7[%c0_17, %c0_18] : memref<1x32xf32, #tpu.memory_space<vmem>>, vector<1x32xf32>
    %35 = vector.broadcast %34 : vector<1x32xf32> to vector<64x32xf32>
    %36 = arith.addf %33, %35 : vector<64x32xf32>
    %cst_19 = arith.constant 1.000000e+00 : f32
    %37 = vector.broadcast %cst_19 : f32 to vector<64x32xf32>
    %38 = arith.mulf %37, %36 : vector<64x32xf32>
    %39 = arith.addf %24, %38 : vector<64x32xf32>
    %40 = arith.truncf %39 : vector<64x32xf32> to vector<64x32xbf16>
    %c0_20 = arith.constant 0 : index
    %c0_21 = arith.constant 0 : index
    %41 = vector.load %arg8[%c0_20, %c0_21] : memref<32x96xbf16, #tpu.memory_space<vmem>>, vector<32x96xbf16>
    %cst_22 = arith.constant dense<0.000000e+00> : vector<64x96xf32>
    %42 = tpu.matmul %40, %41, %cst_22 {dimension_numbers = #tpu.dot_dimension_numbers<[1], [0], [0], [1], [0, 0, 1, 1], [], []>} : vector<64x32xbf16>, vector<32x96xbf16>, vector<64x96xf32> -> vector<64x96xf32>
    %c0_23 = arith.constant 0 : index
    %c0_24 = arith.constant 0 : index
    %43 = vector.load %arg9[%c0_23, %c0_24] : memref<1x96xf32, #tpu.memory_space<vmem>>, vector<1x96xf32>
    %44 = vector.broadcast %43 : vector<1x96xf32> to vector<64x96xf32>
    %45 = arith.addf %42, %44 : vector<64x96xf32>
    %46 = arith.truncf %45 : vector<64x96xf32> to vector<64x96xbf16>
    %c0_25 = arith.constant 0 : index
    %c0_26 = arith.constant 0 : index
    %47 = vector.load %arg10[%c0_25, %c0_26] : memref<64x96xbf16, #tpu.memory_space<vmem>>, vector<64x96xbf16>
    tpu.vector_store %arg10[%c0_25, %c0_26], %46 {strides = array<i32>} : memref<64x96xbf16, #tpu.memory_space<vmem>>, vector<64x96xbf16>,
    return
  }
  func.func @transform_0(%arg0: i32) -> (i32, i32) {
    %c0_i32 = arith.constant 0 : i32
    %c0_i32_0 = arith.constant 0 : i32
    return %arg0, %c0_i32 : i32, i32
  }
  func.func @transform_1(%arg0: i32) -> (i32, i32) {
    %c0_i32 = arith.constant 0 : i32
    %c0_i32_0 = arith.constant 0 : i32
    %c0_i32_1 = arith.constant 0 : i32
    return %c0_i32, %c0_i32_0 : i32, i32
  }
  func.func @transform_2(%arg0: i32) -> (i32, i32) {
    %c0_i32 = arith.constant 0 : i32
    %c0_i32_0 = arith.constant 0 : i32
    %c0_i32_1 = arith.constant 0 : i32
    return %c0_i32, %c0_i32_0 : i32, i32
  }
  func.func @transform_3(%arg0: i32) -> (i32, i32) {
    %c0_i32 = arith.constant 0 : i32
    %c0_i32_0 = arith.constant 0 : i32
    %c0_i32_1 = arith.constant 0 : i32
    return %c0_i32, %c0_i32_0 : i32, i32
  }
  func.func @transform_4(%arg0: i32) -> (i32, i32) {
    %c0_i32 = arith.constant 0 : i32
    %c0_i32_0 = arith.constant 0 : i32
    %c0_i32_1 = arith.constant 0 : i32
    return %c0_i32, %c0_i32_0 : i32, i32
  }
  func.func @transform_5(%arg0: i32) -> (i32, i32) {
    %c0_i32 = arith.constant 0 : i32
    %c0_i32_0 = arith.constant 0 : i32
    %c0_i32_1 = arith.constant 0 : i32
    return %c0_i32, %c0_i32_0 : i32, i32
  }
  func.func @transform_6(%arg0: i32) -> (i32, i32) {
    %c0_i32 = arith.constant 0 : i32
    %c0_i32_0 = arith.constant 0 : i32
    %c0_i32_1 = arith.constant 0 : i32
    return %c0_i32, %c0_i32_0 : i32, i32
  }
  func.func @transform_7(%arg0: i32) -> (i32, i32) {
    %c0_i32 = arith.constant 0 : i32
    %c0_i32_0 = arith.constant 0 : i32
    %c0_i32_1 = arith.constant 0 : i32
    return %c0_i32, %c0_i32_0 : i32, i32
  }
  func.func @transform_8(%arg0: i32) -> (i32, i32) {
    %c0_i32 = arith.constant 0 : i32
    %c0_i32_0 = arith.constant 0 : i32
    %c0_i32_1 = arith.constant 0 : i32
    return %c0_i32, %c0_i32_0 : i32, i32
  }
  func.func @transform_9(%arg0: i32) -> (i32, i32) {
    %c0_i32 = arith.constant 0 : i32
    %c0_i32_0 = arith.constant 0 : i32
    return %arg0, %c0_i32 : i32, i32
  }
}

module attributes {stable_mosaic.version = 11 : i64} {
  func.func @_attn_post_kernel(%arg0: i32, %arg1: memref<64x32xbf16, #tpu.memory_space<vmem>>, %arg2: memref<64x32xf32, #tpu.memory_space<vmem>>, %arg3: memref<32x32xbf16, #tpu.memory_space<vmem>>, %arg4: memref<1x32xf32, #tpu.memory_space<vmem>>, %arg5: memref<32x8xbf16, #tpu.memory_space<vmem>>, %arg6: memref<1x8xf32, #tpu.memory_space<vmem>>, %arg7: memref<8x32xbf16, #tpu.memory_space<vmem>>, %arg8: memref<1x32xf32, #tpu.memory_space<vmem>>, %arg9: memref<64x32xf32, #tpu.memory_space<vmem>>) attributes {dimension_semantics = [#tpu.dimension_semantics<parallel>], iteration_bounds = array<i64: 1>, scalar_prefetch = 0 : i64, scratch_operands = 0 : i64, tpu.core_type = #tpu.core_type<tc>, window_params = [{transform_indices = @transform_0, window_bounds = array<i64: 64, 32>}, {transform_indices = @transform_1, window_bounds = array<i64: 64, 32>}, {pipeline_mode = #tpu.pipeline_mode<synchronous>, transform_indices = @transform_2, window_bounds = array<i64: 32, 32>}, {pipeline_mode = #tpu.pipeline_mode<synchronous>, transform_indices = @transform_3, window_bounds = array<i64: 1, 32>}, {pipeline_mode = #tpu.pipeline_mode<synchronous>, transform_indices = @transform_4, window_bounds = array<i64: 32, 8>}, {pipeline_mode = #tpu.pipeline_mode<synchronous>, transform_indices = @transform_5, window_bounds = array<i64: 1, 8>}, {pipeline_mode = #tpu.pipeline_mode<synchronous>, transform_indices = @transform_6, window_bounds = array<i64: 8, 32>}, {pipeline_mode = #tpu.pipeline_mode<synchronous>, transform_indices = @transform_7, window_bounds = array<i64: 1, 32>}, {transform_indices = @transform_8, window_bounds = array<i64: 64, 32>}]} {
    %c0 = arith.constant 0 : index
    %c0_0 = arith.constant 0 : index
    %0 = vector.load %arg1[%c0, %c0_0] : memref<64x32xbf16, #tpu.memory_space<vmem>>, vector<64x32xbf16>
    %c0_1 = arith.constant 0 : index
    %c0_2 = arith.constant 0 : index
    %1 = vector.load %arg3[%c0_1, %c0_2] : memref<32x32xbf16, #tpu.memory_space<vmem>>, vector<32x32xbf16>
    %cst = arith.constant dense<0.000000e+00> : vector<64x32xf32>
    %2 = tpu.matmul %0, %1, %cst {dimension_numbers = #tpu.dot_dimension_numbers<[1], [0], [0], [1], [0, 0, 1, 1], [], []>} : vector<64x32xbf16>, vector<32x32xbf16>, vector<64x32xf32> -> vector<64x32xf32>
    %c0_3 = arith.constant 0 : index
    %c0_4 = arith.constant 0 : index
    %3 = vector.load %arg4[%c0_3, %c0_4] : memref<1x32xf32, #tpu.memory_space<vmem>>, vector<1x32xf32>
    %4 = vector.broadcast %3 : vector<1x32xf32> to vector<64x32xf32>
    %5 = arith.addf %2, %4 : vector<64x32xf32>
    %6 = arith.truncf %5 : vector<64x32xf32> to vector<64x32xbf16>
    %c0_5 = arith.constant 0 : index
    %c0_6 = arith.constant 0 : index
    %7 = vector.load %arg5[%c0_5, %c0_6] : memref<32x8xbf16, #tpu.memory_space<vmem>>, vector<32x8xbf16>
    %cst_7 = arith.constant dense<0.000000e+00> : vector<64x8xf32>
    %8 = tpu.matmul %6, %7, %cst_7 {dimension_numbers = #tpu.dot_dimension_numbers<[1], [0], [0], [1], [0, 0, 1, 1], [], []>} : vector<64x32xbf16>, vector<32x8xbf16>, vector<64x8xf32> -> vector<64x8xf32>
    %c0_8 = arith.constant 0 : index
    %c0_9 = arith.constant 0 : index
    %9 = vector.load %arg6[%c0_8, %c0_9] : memref<1x8xf32, #tpu.memory_space<vmem>>, vector<1x8xf32>
    %10 = vector.broadcast %9 : vector<1x8xf32> to vector<64x8xf32>
    %11 = arith.addf %8, %10 : vector<64x8xf32>
    %12 = arith.truncf %11 : vector<64x8xf32> to vector<64x8xbf16>
    %c0_10 = arith.constant 0 : index
    %c0_11 = arith.constant 0 : index
    %13 = vector.load %arg7[%c0_10, %c0_11] : memref<8x32xbf16, #tpu.memory_space<vmem>>, vector<8x32xbf16>
    %cst_12 = arith.constant dense<0.000000e+00> : vector<64x32xf32>
    %14 = tpu.matmul %12, %13, %cst_12 {dimension_numbers = #tpu.dot_dimension_numbers<[1], [0], [0], [1], [0, 0, 1, 1], [], []>} : vector<64x8xbf16>, vector<8x32xbf16>, vector<64x32xf32> -> vector<64x32xf32>
    %c0_13 = arith.constant 0 : index
    %c0_14 = arith.constant 0 : index
    %15 = vector.load %arg8[%c0_13, %c0_14] : memref<1x32xf32, #tpu.memory_space<vmem>>, vector<1x32xf32>
    %16 = vector.broadcast %15 : vector<1x32xf32> to vector<64x32xf32>
    %17 = arith.addf %14, %16 : vector<64x32xf32>
    %cst_15 = arith.constant 1.000000e+00 : f32
    %18 = vector.broadcast %cst_15 : f32 to vector<64x32xf32>
    %19 = arith.mulf %18, %17 : vector<64x32xf32>
    %20 = arith.addf %5, %19 : vector<64x32xf32>
    %c0_16 = arith.constant 0 : index
    %c0_17 = arith.constant 0 : index
    %21 = vector.load %arg2[%c0_16, %c0_17] : memref<64x32xf32, #tpu.memory_space<vmem>>, vector<64x32xf32>
    %22 = arith.addf %21, %20 : vector<64x32xf32>
    %c0_18 = arith.constant 0 : index
    %c0_19 = arith.constant 0 : index
    %23 = vector.load %arg9[%c0_18, %c0_19] : memref<64x32xf32, #tpu.memory_space<vmem>>, vector<64x32xf32>
    tpu.vector_store %arg9[%c0_18, %c0_19], %22 {strides = array<i32>} : memref<64x32xf32, #tpu.memory_space<vmem>>, vector<64x32xf32>,
    return
  }
  func.func @transform_0(%arg0: i32) -> (i32, i32) {
    %c0_i32 = arith.constant 0 : i32
    %c0_i32_0 = arith.constant 0 : i32
    return %arg0, %c0_i32 : i32, i32
  }
  func.func @transform_1(%arg0: i32) -> (i32, i32) {
    %c0_i32 = arith.constant 0 : i32
    %c0_i32_0 = arith.constant 0 : i32
    return %arg0, %c0_i32 : i32, i32
  }
  func.func @transform_2(%arg0: i32) -> (i32, i32) {
    %c0_i32 = arith.constant 0 : i32
    %c0_i32_0 = arith.constant 0 : i32
    %c0_i32_1 = arith.constant 0 : i32
    return %c0_i32, %c0_i32_0 : i32, i32
  }
  func.func @transform_3(%arg0: i32) -> (i32, i32) {
    %c0_i32 = arith.constant 0 : i32
    %c0_i32_0 = arith.constant 0 : i32
    %c0_i32_1 = arith.constant 0 : i32
    return %c0_i32, %c0_i32_0 : i32, i32
  }
  func.func @transform_4(%arg0: i32) -> (i32, i32) {
    %c0_i32 = arith.constant 0 : i32
    %c0_i32_0 = arith.constant 0 : i32
    %c0_i32_1 = arith.constant 0 : i32
    return %c0_i32, %c0_i32_0 : i32, i32
  }
  func.func @transform_5(%arg0: i32) -> (i32, i32) {
    %c0_i32 = arith.constant 0 : i32
    %c0_i32_0 = arith.constant 0 : i32
    %c0_i32_1 = arith.constant 0 : i32
    return %c0_i32, %c0_i32_0 : i32, i32
  }
  func.func @transform_6(%arg0: i32) -> (i32, i32) {
    %c0_i32 = arith.constant 0 : i32
    %c0_i32_0 = arith.constant 0 : i32
    %c0_i32_1 = arith.constant 0 : i32
    return %c0_i32, %c0_i32_0 : i32, i32
  }
  func.func @transform_7(%arg0: i32) -> (i32, i32) {
    %c0_i32 = arith.constant 0 : i32
    %c0_i32_0 = arith.constant 0 : i32
    %c0_i32_1 = arith.constant 0 : i32
    return %c0_i32, %c0_i32_0 : i32, i32
  }
  func.func @transform_8(%arg0: i32) -> (i32, i32) {
    %c0_i32 = arith.constant 0 : i32
    %c0_i32_0 = arith.constant 0 : i32
    return %arg0, %c0_i32 : i32, i32
  }
}

module attributes {stable_mosaic.version = 11 : i64} {
  func.func @_stdha_attn_kernel(%arg0: i32, %arg1: memref<8x4x1x96xbf16, #tpu.memory_space<vmem>>, %arg2: memref<8x4x1x4xbf16, #tpu.memory_space<vmem>>, %arg3: memref<8x4x1x32xbf16, #tpu.memory_space<vmem>>) attributes {dimension_semantics = [#tpu.dimension_semantics<parallel>], iteration_bounds = array<i64: 2>, scalar_prefetch = 0 : i64, scratch_operands = 0 : i64, tpu.core_type = #tpu.core_type<tc>, window_params = [{transform_indices = @transform_0, window_bounds = array<i64: 8, 4, 1, 96>}, {transform_indices = @transform_1, window_bounds = array<i64: 8, 4, 1, 4>}, {transform_indices = @transform_2, window_bounds = array<i64: 8, 4, 1, 32>}]} {
    %c0 = arith.constant 0 : index
    %c0_0 = arith.constant 0 : index
    %c0_1 = arith.constant 0 : index
    %c0_2 = arith.constant 0 : index
    %0 = vector.load %arg1[%c0, %c0_0, %c0_1, %c0_2] : memref<8x4x1x96xbf16, #tpu.memory_space<vmem>>, vector<8x1x1x96xbf16>
    %1 = vector.shape_cast %0 : vector<8x1x1x96xbf16> to vector<8x96xbf16>
    %2 = vector.extract_strided_slice %1 {offsets = [0, 0], sizes = [8, 32], strides = [1, 1]} : vector<8x96xbf16> to vector<8x32xbf16>
    %3 = vector.extract_strided_slice %1 {offsets = [0, 32], sizes = [8, 32], strides = [1, 1]} : vector<8x96xbf16> to vector<8x32xbf16>
    %4 = vector.extract_strided_slice %1 {offsets = [0, 64], sizes = [8, 32], strides = [1, 1]} : vector<8x96xbf16> to vector<8x32xbf16>
    %c0_3 = arith.constant 0 : index
    %c0_4 = arith.constant 0 : index
    %c0_5 = arith.constant 0 : index
    %c0_6 = arith.constant 0 : index
    %5 = vector.load %arg2[%c0_3, %c0_4, %c0_5, %c0_6] : memref<8x4x1x4xbf16, #tpu.memory_space<vmem>>, vector<8x1x1x4xbf16>
    %6 = vector.shape_cast %5 : vector<8x1x1x4xbf16> to vector<8x4xbf16>
    %7 = vector.extract_strided_slice %6 {offsets = [0, 0], sizes = [8, 2], strides = [1, 1]} : vector<8x4xbf16> to vector<8x2xbf16>
    %8 = vector.extract_strided_slice %3 {offsets = [0, 2], sizes = [8, 30], strides = [1, 1]} : vector<8x32xbf16> to vector<8x30xbf16>
    %9 = tpu.concatenate %7, %8 in 1 : vector<8x2xbf16>, vector<8x30xbf16> -> vector<8x32xbf16>
    %10 = vector.extract_strided_slice %6 {offsets = [0, 2], sizes = [8, 2], strides = [1, 1]} : vector<8x4xbf16> to vector<8x2xbf16>
    %11 = vector.extract_strided_slice %4 {offsets = [0, 2], sizes = [8, 30], strides = [1, 1]} : vector<8x32xbf16> to vector<8x30xbf16>
    %12 = tpu.concatenate %10, %11 in 1 : vector<8x2xbf16>, vector<8x30xbf16> -> vector<8x32xbf16>
    %13 = vector.extract_strided_slice %2 {offsets = [0, 0], sizes = [8, 8], strides = [1, 1]} : vector<8x32xbf16> to vector<8x8xbf16>
    %14 = vector.extract_strided_slice %9 {offsets = [0, 0], sizes = [8, 8], strides = [1, 1]} : vector<8x32xbf16> to vector<8x8xbf16>
    %cst = arith.constant dense<0.000000e+00> : vector<8x8xf32>
    %15 = tpu.matmul %13, %14, %cst {dimension_numbers = #tpu.dot_dimension_numbers<[1], [1], [0], [0], [0, 0, 1, 0], [], []>} : vector<8x8xbf16>, vector<8x8xbf16>, vector<8x8xf32> -> vector<8x8xf32>
    %cst_7 = arith.constant 0.353553385 : f32
    %16 = vector.broadcast %cst_7 : f32 to vector<8x8xf32>
    %17 = arith.mulf %15, %16 : vector<8x8xf32>
    %cst_8 = arith.constant dense<0xFF800000> : vector<8xf32>
    %18 = vector.multi_reduction <maximumf>, %17, %cst_8 [1] : vector<8x8xf32> to vector<8xf32>
    %19 = vector.shape_cast %18 : vector<8xf32> to vector<8x1xf32>
    %20 = vector.broadcast %19 : vector<8x1xf32> to vector<8x8xf32>
    %21 = arith.subf %17, %20 : vector<8x8xf32>
    %22 = math.exp %21 : vector<8x8xf32>
    %cst_9 = arith.constant dense<0.000000e+00> : vector<8xf32>
    %23 = vector.multi_reduction <add>, %22, %cst_9 [1] : vector<8x8xf32> to vector<8xf32>
    %24 = vector.shape_cast %23 : vector<8xf32> to vector<8x1xf32>
    %25 = tpu.reciprocal %24 {approx = true} : vector<8x1xf32> -> vector<8x1xf32>
    %26 = vector.broadcast %25 : vector<8x1xf32> to vector<8x8xf32>
    %27 = arith.mulf %22, %26 : vector<8x8xf32>
    %28 = arith.truncf %27 : vector<8x8xf32> to vector<8x8xbf16>
    %29 = vector.extract_strided_slice %12 {offsets = [0, 0], sizes = [8, 8], strides = [1, 1]} : vector<8x32xbf16> to vector<8x8xbf16>
    %cst_10 = arith.constant dense<0.000000e+00> : vector<8x8xf32>
    %30 = tpu.matmul %28, %29, %cst_10 {dimension_numbers = #tpu.dot_dimension_numbers<[1], [0], [0], [1], [0, 0, 1, 1], [], []>} : vector<8x8xbf16>, vector<8x8xbf16>, vector<8x8xf32> -> vector<8x8xf32>
    %31 = vector.extract_strided_slice %2 {offsets = [0, 8], sizes = [8, 8], strides = [1, 1]} : vector<8x32xbf16> to vector<8x8xbf16>
    %32 = vector.extract_strided_slice %9 {offsets = [0, 8], sizes = [8, 8], strides = [1, 1]} : vector<8x32xbf16> to vector<8x8xbf16>
    %cst_11 = arith.constant dense<0.000000e+00> : vector<8x8xf32>
    %33 = tpu.matmul %31, %32, %cst_11 {dimension_numbers = #tpu.dot_dimension_numbers<[1], [1], [0], [0], [0, 0, 1, 0], [], []>} : vector<8x8xbf16>, vector<8x8xbf16>, vector<8x8xf32> -> vector<8x8xf32>
    %cst_12 = arith.constant 0.353553385 : f32
    %34 = vector.broadcast %cst_12 : f32 to vector<8x8xf32>
    %35 = arith.mulf %33, %34 : vector<8x8xf32>
    %cst_13 = arith.constant dense<0xFF800000> : vector<8xf32>
    %36 = vector.multi_reduction <maximumf>, %35, %cst_13 [1] : vector<8x8xf32> to vector<8xf32>
    %37 = vector.shape_cast %36 : vector<8xf32> to vector<8x1xf32>
    %38 = vector.broadcast %37 : vector<8x1xf32> to vector<8x8xf32>
    %39 = arith.subf %35, %38 : vector<8x8xf32>
    %40 = math.exp %39 : vector<8x8xf32>
    %cst_14 = arith.constant dense<0.000000e+00> : vector<8xf32>
    %41 = vector.multi_reduction <add>, %40, %cst_14 [1] : vector<8x8xf32> to vector<8xf32>
    %42 = vector.shape_cast %41 : vector<8xf32> to vector<8x1xf32>
    %43 = tpu.reciprocal %42 {approx = true} : vector<8x1xf32> -> vector<8x1xf32>
    %44 = vector.broadcast %43 : vector<8x1xf32> to vector<8x8xf32>
    %45 = arith.mulf %40, %44 : vector<8x8xf32>
    %46 = arith.truncf %45 : vector<8x8xf32> to vector<8x8xbf16>
    %47 = vector.extract_strided_slice %12 {offsets = [0, 8], sizes = [8, 8], strides = [1, 1]} : vector<8x32xbf16> to vector<8x8xbf16>
    %cst_15 = arith.constant dense<0.000000e+00> : vector<8x8xf32>
    %48 = tpu.matmul %46, %47, %cst_15 {dimension_numbers = #tpu.dot_dimension_numbers<[1], [0], [0], [1], [0, 0, 1, 1], [], []>} : vector<8x8xbf16>, vector<8x8xbf16>, vector<8x8xf32> -> vector<8x8xf32>
    %49 = tpu.concatenate %30, %48 in 1 : vector<8x8xf32>, vector<8x8xf32> -> vector<8x16xf32>
    %50 = arith.truncf %49 : vector<8x16xf32> to vector<8x16xbf16>
    %c0_16 = arith.constant 0 : index
    %c0_17 = arith.constant 0 : index
    %c0_18 = arith.constant 0 : index
    %c0_19 = arith.constant 0 : index
    %51 = vector.load %arg3[%c0_16, %c0_17, %c0_18, %c0_19] : memref<8x4x1x32xbf16, #tpu.memory_space<vmem>>, vector<8x1x1x16xbf16>
    %52 = vector.shape_cast %51 : vector<8x1x1x16xbf16> to vector<8x16xbf16>
    %53 = vector.shape_cast %50 : vector<8x16xbf16> to vector<8x1x1x16xbf16>
    tpu.vector_store %arg3[%c0_16, %c0_17, %c0_18, %c0_19], %53 {strides = array<i32>} : memref<8x4x1x32xbf16, #tpu.memory_space<vmem>>, vector<8x1x1x16xbf16>,
    %54 = vector.extract_strided_slice %2 {offsets = [0, 16], sizes = [8, 8], strides = [1, 1]} : vector<8x32xbf16> to vector<8x8xbf16>
    %55 = vector.extract_strided_slice %9 {offsets = [0, 16], sizes = [8, 8], strides = [1, 1]} : vector<8x32xbf16> to vector<8x8xbf16>
    %cst_20 = arith.constant dense<0.000000e+00> : vector<8x8xf32>
    %56 = tpu.matmul %54, %55, %cst_20 {dimension_numbers = #tpu.dot_dimension_numbers<[1], [1], [0], [0], [0, 0, 1, 0], [], []>} : vector<8x8xbf16>, vector<8x8xbf16>, vector<8x8xf32> -> vector<8x8xf32>
    %cst_21 = arith.constant 0.353553385 : f32
    %57 = vector.broadcast %cst_21 : f32 to vector<8x8xf32>
    %58 = arith.mulf %56, %57 : vector<8x8xf32>
    %cst_22 = arith.constant dense<0xFF800000> : vector<8xf32>
    %59 = vector.multi_reduction <maximumf>, %58, %cst_22 [1] : vector<8x8xf32> to vector<8xf32>
    %60 = vector.shape_cast %59 : vector<8xf32> to vector<8x1xf32>
    %61 = vector.broadcast %60 : vector<8x1xf32> to vector<8x8xf32>
    %62 = arith.subf %58, %61 : vector<8x8xf32>
    %63 = math.exp %62 : vector<8x8xf32>
    %cst_23 = arith.constant dense<0.000000e+00> : vector<8xf32>
    %64 = vector.multi_reduction <add>, %63, %cst_23 [1] : vector<8x8xf32> to vector<8xf32>
    %65 = vector.shape_cast %64 : vector<8xf32> to vector<8x1xf32>
    %66 = tpu.reciprocal %65 {approx = true} : vector<8x1xf32> -> vector<8x1xf32>
    %67 = vector.broadcast %66 : vector<8x1xf32> to vector<8x8xf32>
    %68 = arith.mulf %63, %67 : vector<8x8xf32>
    %69 = arith.truncf %68 : vector<8x8xf32> to vector<8x8xbf16>
    %70 = vector.extract_strided_slice %12 {offsets = [0, 16], sizes = [8, 8], strides = [1, 1]} : vector<8x32xbf16> to vector<8x8xbf16>
    %cst_24 = arith.constant dense<0.000000e+00> : vector<8x8xf32>
    %71 = tpu.matmul %69, %70, %cst_24 {dimension_numbers = #tpu.dot_dimension_numbers<[1], [0], [0], [1], [0, 0, 1, 1], [], []>} : vector<8x8xbf16>, vector<8x8xbf16>, vector<8x8xf32> -> vector<8x8xf32>
    %72 = vector.extract_strided_slice %2 {offsets = [0, 24], sizes = [8, 8], strides = [1, 1]} : vector<8x32xbf16> to vector<8x8xbf16>
    %73 = vector.extract_strided_slice %9 {offsets = [0, 24], sizes = [8, 8], strides = [1, 1]} : vector<8x32xbf16> to vector<8x8xbf16>
    %cst_25 = arith.constant dense<0.000000e+00> : vector<8x8xf32>
    %74 = tpu.matmul %72, %73, %cst_25 {dimension_numbers = #tpu.dot_dimension_numbers<[1], [1], [0], [0], [0, 0, 1, 0], [], []>} : vector<8x8xbf16>, vector<8x8xbf16>, vector<8x8xf32> -> vector<8x8xf32>
    %cst_26 = arith.constant 0.353553385 : f32
    %75 = vector.broadcast %cst_26 : f32 to vector<8x8xf32>
    %76 = arith.mulf %74, %75 : vector<8x8xf32>
    %cst_27 = arith.constant dense<0xFF800000> : vector<8xf32>
    %77 = vector.multi_reduction <maximumf>, %76, %cst_27 [1] : vector<8x8xf32> to vector<8xf32>
    %78 = vector.shape_cast %77 : vector<8xf32> to vector<8x1xf32>
    %79 = vector.broadcast %78 : vector<8x1xf32> to vector<8x8xf32>
    %80 = arith.subf %76, %79 : vector<8x8xf32>
    %81 = math.exp %80 : vector<8x8xf32>
    %cst_28 = arith.constant dense<0.000000e+00> : vector<8xf32>
    %82 = vector.multi_reduction <add>, %81, %cst_28 [1] : vector<8x8xf32> to vector<8xf32>
    %83 = vector.shape_cast %82 : vector<8xf32> to vector<8x1xf32>
    %84 = tpu.reciprocal %83 {approx = true} : vector<8x1xf32> -> vector<8x1xf32>
    %85 = vector.broadcast %84 : vector<8x1xf32> to vector<8x8xf32>
    %86 = arith.mulf %81, %85 : vector<8x8xf32>
    %87 = arith.truncf %86 : vector<8x8xf32> to vector<8x8xbf16>
    %88 = vector.extract_strided_slice %12 {offsets = [0, 24], sizes = [8, 8], strides = [1, 1]} : vector<8x32xbf16> to vector<8x8xbf16>
    %cst_29 = arith.constant dense<0.000000e+00> : vector<8x8xf32>
    %89 = tpu.matmul %87, %88, %cst_29 {dimension_numbers = #tpu.dot_dimension_numbers<[1], [0], [0], [1], [0, 0, 1, 1], [], []>} : vector<8x8xbf16>, vector<8x8xbf16>, vector<8x8xf32> -> vector<8x8xf32>
    %90 = tpu.concatenate %71, %89 in 1 : vector<8x8xf32>, vector<8x8xf32> -> vector<8x16xf32>
    %91 = arith.truncf %90 : vector<8x16xf32> to vector<8x16xbf16>
    %c0_30 = arith.constant 0 : index
    %c0_31 = arith.constant 0 : index
    %c0_32 = arith.constant 0 : index
    %c16 = arith.constant 16 : index
    %92 = vector.load %arg3[%c0_30, %c0_31, %c0_32, %c16] : memref<8x4x1x32xbf16, #tpu.memory_space<vmem>>, vector<8x1x1x16xbf16>
    %93 = vector.shape_cast %92 : vector<8x1x1x16xbf16> to vector<8x16xbf16>
    %94 = vector.shape_cast %91 : vector<8x16xbf16> to vector<8x1x1x16xbf16>
    tpu.vector_store %arg3[%c0_30, %c0_31, %c0_32, %c16], %94 {strides = array<i32>} : memref<8x4x1x32xbf16, #tpu.memory_space<vmem>>, vector<8x1x1x16xbf16>,
    %c0_33 = arith.constant 0 : index
    %c1 = arith.constant 1 : index
    %c0_34 = arith.constant 0 : index
    %c0_35 = arith.constant 0 : index
    %95 = vector.load %arg1[%c0_33, %c1, %c0_34, %c0_35] : memref<8x4x1x96xbf16, #tpu.memory_space<vmem>>, vector<8x1x1x96xbf16>
    %96 = vector.shape_cast %95 : vector<8x1x1x96xbf16> to vector<8x96xbf16>
    %97 = vector.extract_strided_slice %96 {offsets = [0, 0], sizes = [8, 32], strides = [1, 1]} : vector<8x96xbf16> to vector<8x32xbf16>
    %98 = vector.extract_strided_slice %96 {offsets = [0, 32], sizes = [8, 32], strides = [1, 1]} : vector<8x96xbf16> to vector<8x32xbf16>
    %99 = vector.extract_strided_slice %96 {offsets = [0, 64], sizes = [8, 32], strides = [1, 1]} : vector<8x96xbf16> to vector<8x32xbf16>
    %c0_36 = arith.constant 0 : index
    %c1_37 = arith.constant 1 : index
    %c0_38 = arith.constant 0 : index
    %c0_39 = arith.constant 0 : index
    %100 = vector.load %arg2[%c0_36, %c1_37, %c0_38, %c0_39] : memref<8x4x1x4xbf16, #tpu.memory_space<vmem>>, vector<8x1x1x4xbf16>
    %101 = vector.shape_cast %100 : vector<8x1x1x4xbf16> to vector<8x4xbf16>
    %102 = vector.extract_strided_slice %101 {offsets = [0, 0], sizes = [8, 2], strides = [1, 1]} : vector<8x4xbf16> to vector<8x2xbf16>
    %103 = vector.extract_strided_slice %98 {offsets = [0, 2], sizes = [8, 30], strides = [1, 1]} : vector<8x32xbf16> to vector<8x30xbf16>
    %104 = tpu.concatenate %102, %103 in 1 : vector<8x2xbf16>, vector<8x30xbf16> -> vector<8x32xbf16>
    %105 = vector.extract_strided_slice %101 {offsets = [0, 2], sizes = [8, 2], strides = [1, 1]} : vector<8x4xbf16> to vector<8x2xbf16>
    %106 = vector.extract_strided_slice %99 {offsets = [0, 2], sizes = [8, 30], strides = [1, 1]} : vector<8x32xbf16> to vector<8x30xbf16>
    %107 = tpu.concatenate %105, %106 in 1 : vector<8x2xbf16>, vector<8x30xbf16> -> vector<8x32xbf16>
    %108 = vector.extract_strided_slice %97 {offsets = [0, 0], sizes = [8, 8], strides = [1, 1]} : vector<8x32xbf16> to vector<8x8xbf16>
    %109 = vector.extract_strided_slice %104 {offsets = [0, 0], sizes = [8, 8], strides = [1, 1]} : vector<8x32xbf16> to vector<8x8xbf16>
    %cst_40 = arith.constant dense<0.000000e+00> : vector<8x8xf32>
    %110 = tpu.matmul %108, %109, %cst_40 {dimension_numbers = #tpu.dot_dimension_numbers<[1], [1], [0], [0], [0, 0, 1, 0], [], []>} : vector<8x8xbf16>, vector<8x8xbf16>, vector<8x8xf32> -> vector<8x8xf32>
    %cst_41 = arith.constant 0.353553385 : f32
    %111 = vector.broadcast %cst_41 : f32 to vector<8x8xf32>
    %112 = arith.mulf %110, %111 : vector<8x8xf32>
    %cst_42 = arith.constant dense<0xFF800000> : vector<8xf32>
    %113 = vector.multi_reduction <maximumf>, %112, %cst_42 [1] : vector<8x8xf32> to vector<8xf32>
    %114 = vector.shape_cast %113 : vector<8xf32> to vector<8x1xf32>
    %115 = vector.broadcast %114 : vector<8x1xf32> to vector<8x8xf32>
    %116 = arith.subf %112, %115 : vector<8x8xf32>
    %117 = math.exp %116 : vector<8x8xf32>
    %cst_43 = arith.constant dense<0.000000e+00> : vector<8xf32>
    %118 = vector.multi_reduction <add>, %117, %cst_43 [1] : vector<8x8xf32> to vector<8xf32>
    %119 = vector.shape_cast %118 : vector<8xf32> to vector<8x1xf32>
    %120 = tpu.reciprocal %119 {approx = true} : vector<8x1xf32> -> vector<8x1xf32>
    %121 = vector.broadcast %120 : vector<8x1xf32> to vector<8x8xf32>
    %122 = arith.mulf %117, %121 : vector<8x8xf32>
    %123 = arith.truncf %122 : vector<8x8xf32> to vector<8x8xbf16>
    %124 = vector.extract_strided_slice %107 {offsets = [0, 0], sizes = [8, 8], strides = [1, 1]} : vector<8x32xbf16> to vector<8x8xbf16>
    %cst_44 = arith.constant dense<0.000000e+00> : vector<8x8xf32>
    %125 = tpu.matmul %123, %124, %cst_44 {dimension_numbers = #tpu.dot_dimension_numbers<[1], [0], [0], [1], [0, 0, 1, 1], [], []>} : vector<8x8xbf16>, vector<8x8xbf16>, vector<8x8xf32> -> vector<8x8xf32>
    %126 = vector.extract_strided_slice %97 {offsets = [0, 8], sizes = [8, 8], strides = [1, 1]} : vector<8x32xbf16> to vector<8x8xbf16>
    %127 = vector.extract_strided_slice %104 {offsets = [0, 8], sizes = [8, 8], strides = [1, 1]} : vector<8x32xbf16> to vector<8x8xbf16>
    %cst_45 = arith.constant dense<0.000000e+00> : vector<8x8xf32>
    %128 = tpu.matmul %126, %127, %cst_45 {dimension_numbers = #tpu.dot_dimension_numbers<[1], [1], [0], [0], [0, 0, 1, 0], [], []>} : vector<8x8xbf16>, vector<8x8xbf16>, vector<8x8xf32> -> vector<8x8xf32>
    %cst_46 = arith.constant 0.353553385 : f32
    %129 = vector.broadcast %cst_46 : f32 to vector<8x8xf32>
    %130 = arith.mulf %128, %129 : vector<8x8xf32>
    %cst_47 = arith.constant dense<0xFF800000> : vector<8xf32>
    %131 = vector.multi_reduction <maximumf>, %130, %cst_47 [1] : vector<8x8xf32> to vector<8xf32>
    %132 = vector.shape_cast %131 : vector<8xf32> to vector<8x1xf32>
    %133 = vector.broadcast %132 : vector<8x1xf32> to vector<8x8xf32>
    %134 = arith.subf %130, %133 : vector<8x8xf32>
    %135 = math.exp %134 : vector<8x8xf32>
    %cst_48 = arith.constant dense<0.000000e+00> : vector<8xf32>
    %136 = vector.multi_reduction <add>, %135, %cst_48 [1] : vector<8x8xf32> to vector<8xf32>
    %137 = vector.shape_cast %136 : vector<8xf32> to vector<8x1xf32>
    %138 = tpu.reciprocal %137 {approx = true} : vector<8x1xf32> -> vector<8x1xf32>
    %139 = vector.broadcast %138 : vector<8x1xf32> to vector<8x8xf32>
    %140 = arith.mulf %135, %139 : vector<8x8xf32>
    %141 = arith.truncf %140 : vector<8x8xf32> to vector<8x8xbf16>
    %142 = vector.extract_strided_slice %107 {offsets = [0, 8], sizes = [8, 8], strides = [1, 1]} : vector<8x32xbf16> to vector<8x8xbf16>
    %cst_49 = arith.constant dense<0.000000e+00> : vector<8x8xf32>
    %143 = tpu.matmul %141, %142, %cst_49 {dimension_numbers = #tpu.dot_dimension_numbers<[1], [0], [0], [1], [0, 0, 1, 1], [], []>} : vector<8x8xbf16>, vector<8x8xbf16>, vector<8x8xf32> -> vector<8x8xf32>
    %144 = tpu.concatenate %125, %143 in 1 : vector<8x8xf32>, vector<8x8xf32> -> vector<8x16xf32>
    %145 = arith.truncf %144 : vector<8x16xf32> to vector<8x16xbf16>
    %c0_50 = arith.constant 0 : index
    %c1_51 = arith.constant 1 : index
    %c0_52 = arith.constant 0 : index
    %c0_53 = arith.constant 0 : index
    %146 = vector.load %arg3[%c0_50, %c1_51, %c0_52, %c0_53] : memref<8x4x1x32xbf16, #tpu.memory_space<vmem>>, vector<8x1x1x16xbf16>
    %147 = vector.shape_cast %146 : vector<8x1x1x16xbf16> to vector<8x16xbf16>
    %148 = vector.shape_cast %145 : vector<8x16xbf16> to vector<8x1x1x16xbf16>
    tpu.vector_store %arg3[%c0_50, %c1_51, %c0_52, %c0_53], %148 {strides = array<i32>} : memref<8x4x1x32xbf16, #tpu.memory_space<vmem>>, vector<8x1x1x16xbf16>,
    %149 = vector.extract_strided_slice %97 {offsets = [0, 16], sizes = [8, 8], strides = [1, 1]} : vector<8x32xbf16> to vector<8x8xbf16>
    %150 = vector.extract_strided_slice %104 {offsets = [0, 16], sizes = [8, 8], strides = [1, 1]} : vector<8x32xbf16> to vector<8x8xbf16>
    %cst_54 = arith.constant dense<0.000000e+00> : vector<8x8xf32>
    %151 = tpu.matmul %149, %150, %cst_54 {dimension_numbers = #tpu.dot_dimension_numbers<[1], [1], [0], [0], [0, 0, 1, 0], [], []>} : vector<8x8xbf16>, vector<8x8xbf16>, vector<8x8xf32> -> vector<8x8xf32>
    %cst_55 = arith.constant 0.353553385 : f32
    %152 = vector.broadcast %cst_55 : f32 to vector<8x8xf32>
    %153 = arith.mulf %151, %152 : vector<8x8xf32>
    %cst_56 = arith.constant dense<0xFF800000> : vector<8xf32>
    %154 = vector.multi_reduction <maximumf>, %153, %cst_56 [1] : vector<8x8xf32> to vector<8xf32>
    %155 = vector.shape_cast %154 : vector<8xf32> to vector<8x1xf32>
    %156 = vector.broadcast %155 : vector<8x1xf32> to vector<8x8xf32>
    %157 = arith.subf %153, %156 : vector<8x8xf32>
    %158 = math.exp %157 : vector<8x8xf32>
    %cst_57 = arith.constant dense<0.000000e+00> : vector<8xf32>
    %159 = vector.multi_reduction <add>, %158, %cst_57 [1] : vector<8x8xf32> to vector<8xf32>
    %160 = vector.shape_cast %159 : vector<8xf32> to vector<8x1xf32>
    %161 = tpu.reciprocal %160 {approx = true} : vector<8x1xf32> -> vector<8x1xf32>
    %162 = vector.broadcast %161 : vector<8x1xf32> to vector<8x8xf32>
    %163 = arith.mulf %158, %162 : vector<8x8xf32>
    %164 = arith.truncf %163 : vector<8x8xf32> to vector<8x8xbf16>
    %165 = vector.extract_strided_slice %107 {offsets = [0, 16], sizes = [8, 8], strides = [1, 1]} : vector<8x32xbf16> to vector<8x8xbf16>
    %cst_58 = arith.constant dense<0.000000e+00> : vector<8x8xf32>
    %166 = tpu.matmul %164, %165, %cst_58 {dimension_numbers = #tpu.dot_dimension_numbers<[1], [0], [0], [1], [0, 0, 1, 1], [], []>} : vector<8x8xbf16>, vector<8x8xbf16>, vector<8x8xf32> -> vector<8x8xf32>
    %167 = vector.extract_strided_slice %97 {offsets = [0, 24], sizes = [8, 8], strides = [1, 1]} : vector<8x32xbf16> to vector<8x8xbf16>
    %168 = vector.extract_strided_slice %104 {offsets = [0, 24], sizes = [8, 8], strides = [1, 1]} : vector<8x32xbf16> to vector<8x8xbf16>
    %cst_59 = arith.constant dense<0.000000e+00> : vector<8x8xf32>
    %169 = tpu.matmul %167, %168, %cst_59 {dimension_numbers = #tpu.dot_dimension_numbers<[1], [1], [0], [0], [0, 0, 1, 0], [], []>} : vector<8x8xbf16>, vector<8x8xbf16>, vector<8x8xf32> -> vector<8x8xf32>
    %cst_60 = arith.constant 0.353553385 : f32
    %170 = vector.broadcast %cst_60 : f32 to vector<8x8xf32>
    %171 = arith.mulf %169, %170 : vector<8x8xf32>
    %cst_61 = arith.constant dense<0xFF800000> : vector<8xf32>
    %172 = vector.multi_reduction <maximumf>, %171, %cst_61 [1] : vector<8x8xf32> to vector<8xf32>
    %173 = vector.shape_cast %172 : vector<8xf32> to vector<8x1xf32>
    %174 = vector.broadcast %173 : vector<8x1xf32> to vector<8x8xf32>
    %175 = arith.subf %171, %174 : vector<8x8xf32>
    %176 = math.exp %175 : vector<8x8xf32>
    %cst_62 = arith.constant dense<0.000000e+00> : vector<8xf32>
    %177 = vector.multi_reduction <add>, %176, %cst_62 [1] : vector<8x8xf32> to vector<8xf32>
    %178 = vector.shape_cast %177 : vector<8xf32> to vector<8x1xf32>
    %179 = tpu.reciprocal %178 {approx = true} : vector<8x1xf32> -> vector<8x1xf32>
    %180 = vector.broadcast %179 : vector<8x1xf32> to vector<8x8xf32>
    %181 = arith.mulf %176, %180 : vector<8x8xf32>
    %182 = arith.truncf %181 : vector<8x8xf32> to vector<8x8xbf16>
    %183 = vector.extract_strided_slice %107 {offsets = [0, 24], sizes = [8, 8], strides = [1, 1]} : vector<8x32xbf16> to vector<8x8xbf16>
    %cst_63 = arith.constant dense<0.000000e+00> : vector<8x8xf32>
    %184 = tpu.matmul %182, %183, %cst_63 {dimension_numbers = #tpu.dot_dimension_numbers<[1], [0], [0], [1], [0, 0, 1, 1], [], []>} : vector<8x8xbf16>, vector<8x8xbf16>, vector<8x8xf32> -> vector<8x8xf32>
    %185 = tpu.concatenate %166, %184 in 1 : vector<8x8xf32>, vector<8x8xf32> -> vector<8x16xf32>
    %186 = arith.truncf %185 : vector<8x16xf32> to vector<8x16xbf16>
    %c0_64 = arith.constant 0 : index
    %c1_65 = arith.constant 1 : index
    %c0_66 = arith.constant 0 : index
    %c16_67 = arith.constant 16 : index
    %187 = vector.load %arg3[%c0_64, %c1_65, %c0_66, %c16_67] : memref<8x4x1x32xbf16, #tpu.memory_space<vmem>>, vector<8x1x1x16xbf16>
    %188 = vector.shape_cast %187 : vector<8x1x1x16xbf16> to vector<8x16xbf16>
    %189 = vector.shape_cast %186 : vector<8x16xbf16> to vector<8x1x1x16xbf16>
    tpu.vector_store %arg3[%c0_64, %c1_65, %c0_66, %c16_67], %189 {strides = array<i32>} : memref<8x4x1x32xbf16, #tpu.memory_space<vmem>>, vector<8x1x1x16xbf16>,
    %c0_68 = arith.constant 0 : index
    %c2 = arith.constant 2 : index
    %c0_69 = arith.constant 0 : index
    %c0_70 = arith.constant 0 : index
    %190 = vector.load %arg1[%c0_68, %c2, %c0_69, %c0_70] : memref<8x4x1x96xbf16, #tpu.memory_space<vmem>>, vector<8x1x1x96xbf16>
    %191 = vector.shape_cast %190 : vector<8x1x1x96xbf16> to vector<8x96xbf16>
    %192 = vector.extract_strided_slice %191 {offsets = [0, 0], sizes = [8, 32], strides = [1, 1]} : vector<8x96xbf16> to vector<8x32xbf16>
    %193 = vector.extract_strided_slice %191 {offsets = [0, 32], sizes = [8, 32], strides = [1, 1]} : vector<8x96xbf16> to vector<8x32xbf16>
    %194 = vector.extract_strided_slice %191 {offsets = [0, 64], sizes = [8, 32], strides = [1, 1]} : vector<8x96xbf16> to vector<8x32xbf16>
    %c0_71 = arith.constant 0 : index
    %c2_72 = arith.constant 2 : index
    %c0_73 = arith.constant 0 : index
    %c0_74 = arith.constant 0 : index
    %195 = vector.load %arg2[%c0_71, %c2_72, %c0_73, %c0_74] : memref<8x4x1x4xbf16, #tpu.memory_space<vmem>>, vector<8x1x1x4xbf16>
    %196 = vector.shape_cast %195 : vector<8x1x1x4xbf16> to vector<8x4xbf16>
    %197 = vector.extract_strided_slice %196 {offsets = [0, 0], sizes = [8, 2], strides = [1, 1]} : vector<8x4xbf16> to vector<8x2xbf16>
    %198 = vector.extract_strided_slice %193 {offsets = [0, 2], sizes = [8, 30], strides = [1, 1]} : vector<8x32xbf16> to vector<8x30xbf16>
    %199 = tpu.concatenate %197, %198 in 1 : vector<8x2xbf16>, vector<8x30xbf16> -> vector<8x32xbf16>
    %200 = vector.extract_strided_slice %196 {offsets = [0, 2], sizes = [8, 2], strides = [1, 1]} : vector<8x4xbf16> to vector<8x2xbf16>
    %201 = vector.extract_strided_slice %194 {offsets = [0, 2], sizes = [8, 30], strides = [1, 1]} : vector<8x32xbf16> to vector<8x30xbf16>
    %202 = tpu.concatenate %200, %201 in 1 : vector<8x2xbf16>, vector<8x30xbf16> -> vector<8x32xbf16>
    %203 = vector.extract_strided_slice %192 {offsets = [0, 0], sizes = [8, 8], strides = [1, 1]} : vector<8x32xbf16> to vector<8x8xbf16>
    %204 = vector.extract_strided_slice %199 {offsets = [0, 0], sizes = [8, 8], strides = [1, 1]} : vector<8x32xbf16> to vector<8x8xbf16>
    %cst_75 = arith.constant dense<0.000000e+00> : vector<8x8xf32>
    %205 = tpu.matmul %203, %204, %cst_75 {dimension_numbers = #tpu.dot_dimension_numbers<[1], [1], [0], [0], [0, 0, 1, 0], [], []>} : vector<8x8xbf16>, vector<8x8xbf16>, vector<8x8xf32> -> vector<8x8xf32>
    %cst_76 = arith.constant 0.353553385 : f32
    %206 = vector.broadcast %cst_76 : f32 to vector<8x8xf32>
    %207 = arith.mulf %205, %206 : vector<8x8xf32>
    %cst_77 = arith.constant dense<0xFF800000> : vector<8xf32>
    %208 = vector.multi_reduction <maximumf>, %207, %cst_77 [1] : vector<8x8xf32> to vector<8xf32>
    %209 = vector.shape_cast %208 : vector<8xf32> to vector<8x1xf32>
    %210 = vector.broadcast %209 : vector<8x1xf32> to vector<8x8xf32>
    %211 = arith.subf %207, %210 : vector<8x8xf32>
    %212 = math.exp %211 : vector<8x8xf32>
    %cst_78 = arith.constant dense<0.000000e+00> : vector<8xf32>
    %213 = vector.multi_reduction <add>, %212, %cst_78 [1] : vector<8x8xf32> to vector<8xf32>
    %214 = vector.shape_cast %213 : vector<8xf32> to vector<8x1xf32>
    %215 = tpu.reciprocal %214 {approx = true} : vector<8x1xf32> -> vector<8x1xf32>
    %216 = vector.broadcast %215 : vector<8x1xf32> to vector<8x8xf32>
    %217 = arith.mulf %212, %216 : vector<8x8xf32>
    %218 = arith.truncf %217 : vector<8x8xf32> to vector<8x8xbf16>
    %219 = vector.extract_strided_slice %202 {offsets = [0, 0], sizes = [8, 8], strides = [1, 1]} : vector<8x32xbf16> to vector<8x8xbf16>
    %cst_79 = arith.constant dense<0.000000e+00> : vector<8x8xf32>
    %220 = tpu.matmul %218, %219, %cst_79 {dimension_numbers = #tpu.dot_dimension_numbers<[1], [0], [0], [1], [0, 0, 1, 1], [], []>} : vector<8x8xbf16>, vector<8x8xbf16>, vector<8x8xf32> -> vector<8x8xf32>
    %221 = vector.extract_strided_slice %192 {offsets = [0, 8], sizes = [8, 8], strides = [1, 1]} : vector<8x32xbf16> to vector<8x8xbf16>
    %222 = vector.extract_strided_slice %199 {offsets = [0, 8], sizes = [8, 8], strides = [1, 1]} : vector<8x32xbf16> to vector<8x8xbf16>
    %cst_80 = arith.constant dense<0.000000e+00> : vector<8x8xf32>
    %223 = tpu.matmul %221, %222, %cst_80 {dimension_numbers = #tpu.dot_dimension_numbers<[1], [1], [0], [0], [0, 0, 1, 0], [], []>} : vector<8x8xbf16>, vector<8x8xbf16>, vector<8x8xf32> -> vector<8x8xf32>
    %cst_81 = arith.constant 0.353553385 : f32
    %224 = vector.broadcast %cst_81 : f32 to vector<8x8xf32>
    %225 = arith.mulf %223, %224 : vector<8x8xf32>
    %cst_82 = arith.constant dense<0xFF800000> : vector<8xf32>
    %226 = vector.multi_reduction <maximumf>, %225, %cst_82 [1] : vector<8x8xf32> to vector<8xf32>
    %227 = vector.shape_cast %226 : vector<8xf32> to vector<8x1xf32>
    %228 = vector.broadcast %227 : vector<8x1xf32> to vector<8x8xf32>
    %229 = arith.subf %225, %228 : vector<8x8xf32>
    %230 = math.exp %229 : vector<8x8xf32>
    %cst_83 = arith.constant dense<0.000000e+00> : vector<8xf32>
    %231 = vector.multi_reduction <add>, %230, %cst_83 [1] : vector<8x8xf32> to vector<8xf32>
    %232 = vector.shape_cast %231 : vector<8xf32> to vector<8x1xf32>
    %233 = tpu.reciprocal %232 {approx = true} : vector<8x1xf32> -> vector<8x1xf32>
    %234 = vector.broadcast %233 : vector<8x1xf32> to vector<8x8xf32>
    %235 = arith.mulf %230, %234 : vector<8x8xf32>
    %236 = arith.truncf %235 : vector<8x8xf32> to vector<8x8xbf16>
    %237 = vector.extract_strided_slice %202 {offsets = [0, 8], sizes = [8, 8], strides = [1, 1]} : vector<8x32xbf16> to vector<8x8xbf16>
    %cst_84 = arith.constant dense<0.000000e+00> : vector<8x8xf32>
    %238 = tpu.matmul %236, %237, %cst_84 {dimension_numbers = #tpu.dot_dimension_numbers<[1], [0], [0], [1], [0, 0, 1, 1], [], []>} : vector<8x8xbf16>, vector<8x8xbf16>, vector<8x8xf32> -> vector<8x8xf32>
    %239 = tpu.concatenate %220, %238 in 1 : vector<8x8xf32>, vector<8x8xf32> -> vector<8x16xf32>
    %240 = arith.truncf %239 : vector<8x16xf32> to vector<8x16xbf16>
    %c0_85 = arith.constant 0 : index
    %c2_86 = arith.constant 2 : index
    %c0_87 = arith.constant 0 : index
    %c0_88 = arith.constant 0 : index
    %241 = vector.load %arg3[%c0_85, %c2_86, %c0_87, %c0_88] : memref<8x4x1x32xbf16, #tpu.memory_space<vmem>>, vector<8x1x1x16xbf16>
    %242 = vector.shape_cast %241 : vector<8x1x1x16xbf16> to vector<8x16xbf16>
    %243 = vector.shape_cast %240 : vector<8x16xbf16> to vector<8x1x1x16xbf16>
    tpu.vector_store %arg3[%c0_85, %c2_86, %c0_87, %c0_88], %243 {strides = array<i32>} : memref<8x4x1x32xbf16, #tpu.memory_space<vmem>>, vector<8x1x1x16xbf16>,
    %244 = vector.extract_strided_slice %192 {offsets = [0, 16], sizes = [8, 8], strides = [1, 1]} : vector<8x32xbf16> to vector<8x8xbf16>
    %245 = vector.extract_strided_slice %199 {offsets = [0, 16], sizes = [8, 8], strides = [1, 1]} : vector<8x32xbf16> to vector<8x8xbf16>
    %cst_89 = arith.constant dense<0.000000e+00> : vector<8x8xf32>
    %246 = tpu.matmul %244, %245, %cst_89 {dimension_numbers = #tpu.dot_dimension_numbers<[1], [1], [0], [0], [0, 0, 1, 0], [], []>} : vector<8x8xbf16>, vector<8x8xbf16>, vector<8x8xf32> -> vector<8x8xf32>
    %cst_90 = arith.constant 0.353553385 : f32
    %247 = vector.broadcast %cst_90 : f32 to vector<8x8xf32>
    %248 = arith.mulf %246, %247 : vector<8x8xf32>
    %cst_91 = arith.constant dense<0xFF800000> : vector<8xf32>
    %249 = vector.multi_reduction <maximumf>, %248, %cst_91 [1] : vector<8x8xf32> to vector<8xf32>
    %250 = vector.shape_cast %249 : vector<8xf32> to vector<8x1xf32>
    %251 = vector.broadcast %250 : vector<8x1xf32> to vector<8x8xf32>
    %252 = arith.subf %248, %251 : vector<8x8xf32>
    %253 = math.exp %252 : vector<8x8xf32>
    %cst_92 = arith.constant dense<0.000000e+00> : vector<8xf32>
    %254 = vector.multi_reduction <add>, %253, %cst_92 [1] : vector<8x8xf32> to vector<8xf32>
    %255 = vector.shape_cast %254 : vector<8xf32> to vector<8x1xf32>
    %256 = tpu.reciprocal %255 {approx = true} : vector<8x1xf32> -> vector<8x1xf32>
    %257 = vector.broadcast %256 : vector<8x1xf32> to vector<8x8xf32>
    %258 = arith.mulf %253, %257 : vector<8x8xf32>
    %259 = arith.truncf %258 : vector<8x8xf32> to vector<8x8xbf16>
    %260 = vector.extract_strided_slice %202 {offsets = [0, 16], sizes = [8, 8], strides = [1, 1]} : vector<8x32xbf16> to vector<8x8xbf16>
    %cst_93 = arith.constant dense<0.000000e+00> : vector<8x8xf32>
    %261 = tpu.matmul %259, %260, %cst_93 {dimension_numbers = #tpu.dot_dimension_numbers<[1], [0], [0], [1], [0, 0, 1, 1], [], []>} : vector<8x8xbf16>, vector<8x8xbf16>, vector<8x8xf32> -> vector<8x8xf32>
    %262 = vector.extract_strided_slice %192 {offsets = [0, 24], sizes = [8, 8], strides = [1, 1]} : vector<8x32xbf16> to vector<8x8xbf16>
    %263 = vector.extract_strided_slice %199 {offsets = [0, 24], sizes = [8, 8], strides = [1, 1]} : vector<8x32xbf16> to vector<8x8xbf16>
    %cst_94 = arith.constant dense<0.000000e+00> : vector<8x8xf32>
    %264 = tpu.matmul %262, %263, %cst_94 {dimension_numbers = #tpu.dot_dimension_numbers<[1], [1], [0], [0], [0, 0, 1, 0], [], []>} : vector<8x8xbf16>, vector<8x8xbf16>, vector<8x8xf32> -> vector<8x8xf32>
    %cst_95 = arith.constant 0.353553385 : f32
    %265 = vector.broadcast %cst_95 : f32 to vector<8x8xf32>
    %266 = arith.mulf %264, %265 : vector<8x8xf32>
    %cst_96 = arith.constant dense<0xFF800000> : vector<8xf32>
    %267 = vector.multi_reduction <maximumf>, %266, %cst_96 [1] : vector<8x8xf32> to vector<8xf32>
    %268 = vector.shape_cast %267 : vector<8xf32> to vector<8x1xf32>
    %269 = vector.broadcast %268 : vector<8x1xf32> to vector<8x8xf32>
    %270 = arith.subf %266, %269 : vector<8x8xf32>
    %271 = math.exp %270 : vector<8x8xf32>
    %cst_97 = arith.constant dense<0.000000e+00> : vector<8xf32>
    %272 = vector.multi_reduction <add>, %271, %cst_97 [1] : vector<8x8xf32> to vector<8xf32>
    %273 = vector.shape_cast %272 : vector<8xf32> to vector<8x1xf32>
    %274 = tpu.reciprocal %273 {approx = true} : vector<8x1xf32> -> vector<8x1xf32>
    %275 = vector.broadcast %274 : vector<8x1xf32> to vector<8x8xf32>
    %276 = arith.mulf %271, %275 : vector<8x8xf32>
    %277 = arith.truncf %276 : vector<8x8xf32> to vector<8x8xbf16>
    %278 = vector.extract_strided_slice %202 {offsets = [0, 24], sizes = [8, 8], strides = [1, 1]} : vector<8x32xbf16> to vector<8x8xbf16>
    %cst_98 = arith.constant dense<0.000000e+00> : vector<8x8xf32>
    %279 = tpu.matmul %277, %278, %cst_98 {dimension_numbers = #tpu.dot_dimension_numbers<[1], [0], [0], [1], [0, 0, 1, 1], [], []>} : vector<8x8xbf16>, vector<8x8xbf16>, vector<8x8xf32> -> vector<8x8xf32>
    %280 = tpu.concatenate %261, %279 in 1 : vector<8x8xf32>, vector<8x8xf32> -> vector<8x16xf32>
    %281 = arith.truncf %280 : vector<8x16xf32> to vector<8x16xbf16>
    %c0_99 = arith.constant 0 : index
    %c2_100 = arith.constant 2 : index
    %c0_101 = arith.constant 0 : index
    %c16_102 = arith.constant 16 : index
    %282 = vector.load %arg3[%c0_99, %c2_100, %c0_101, %c16_102] : memref<8x4x1x32xbf16, #tpu.memory_space<vmem>>, vector<8x1x1x16xbf16>
    %283 = vector.shape_cast %282 : vector<8x1x1x16xbf16> to vector<8x16xbf16>
    %284 = vector.shape_cast %281 : vector<8x16xbf16> to vector<8x1x1x16xbf16>
    tpu.vector_store %arg3[%c0_99, %c2_100, %c0_101, %c16_102], %284 {strides = array<i32>} : memref<8x4x1x32xbf16, #tpu.memory_space<vmem>>, vector<8x1x1x16xbf16>,
    %c0_103 = arith.constant 0 : index
    %c3 = arith.constant 3 : index
    %c0_104 = arith.constant 0 : index
    %c0_105 = arith.constant 0 : index
    %285 = vector.load %arg1[%c0_103, %c3, %c0_104, %c0_105] : memref<8x4x1x96xbf16, #tpu.memory_space<vmem>>, vector<8x1x1x96xbf16>
    %286 = vector.shape_cast %285 : vector<8x1x1x96xbf16> to vector<8x96xbf16>
    %287 = vector.extract_strided_slice %286 {offsets = [0, 0], sizes = [8, 32], strides = [1, 1]} : vector<8x96xbf16> to vector<8x32xbf16>
    %288 = vector.extract_strided_slice %286 {offsets = [0, 32], sizes = [8, 32], strides = [1, 1]} : vector<8x96xbf16> to vector<8x32xbf16>
    %289 = vector.extract_strided_slice %286 {offsets = [0, 64], sizes = [8, 32], strides = [1, 1]} : vector<8x96xbf16> to vector<8x32xbf16>
    %c0_106 = arith.constant 0 : index
    %c3_107 = arith.constant 3 : index
    %c0_108 = arith.constant 0 : index
    %c0_109 = arith.constant 0 : index
    %290 = vector.load %arg2[%c0_106, %c3_107, %c0_108, %c0_109] : memref<8x4x1x4xbf16, #tpu.memory_space<vmem>>, vector<8x1x1x4xbf16>
    %291 = vector.shape_cast %290 : vector<8x1x1x4xbf16> to vector<8x4xbf16>
    %292 = vector.extract_strided_slice %291 {offsets = [0, 0], sizes = [8, 2], strides = [1, 1]} : vector<8x4xbf16> to vector<8x2xbf16>
    %293 = vector.extract_strided_slice %288 {offsets = [0, 2], sizes = [8, 30], strides = [1, 1]} : vector<8x32xbf16> to vector<8x30xbf16>
    %294 = tpu.concatenate %292, %293 in 1 : vector<8x2xbf16>, vector<8x30xbf16> -> vector<8x32xbf16>
    %295 = vector.extract_strided_slice %291 {offsets = [0, 2], sizes = [8, 2], strides = [1, 1]} : vector<8x4xbf16> to vector<8x2xbf16>
    %296 = vector.extract_strided_slice %289 {offsets = [0, 2], sizes = [8, 30], strides = [1, 1]} : vector<8x32xbf16> to vector<8x30xbf16>
    %297 = tpu.concatenate %295, %296 in 1 : vector<8x2xbf16>, vector<8x30xbf16> -> vector<8x32xbf16>
    %298 = vector.extract_strided_slice %287 {offsets = [0, 0], sizes = [8, 8], strides = [1, 1]} : vector<8x32xbf16> to vector<8x8xbf16>
    %299 = vector.extract_strided_slice %294 {offsets = [0, 0], sizes = [8, 8], strides = [1, 1]} : vector<8x32xbf16> to vector<8x8xbf16>
    %cst_110 = arith.constant dense<0.000000e+00> : vector<8x8xf32>
    %300 = tpu.matmul %298, %299, %cst_110 {dimension_numbers = #tpu.dot_dimension_numbers<[1], [1], [0], [0], [0, 0, 1, 0], [], []>} : vector<8x8xbf16>, vector<8x8xbf16>, vector<8x8xf32> -> vector<8x8xf32>
    %cst_111 = arith.constant 0.353553385 : f32
    %301 = vector.broadcast %cst_111 : f32 to vector<8x8xf32>
    %302 = arith.mulf %300, %301 : vector<8x8xf32>
    %cst_112 = arith.constant dense<0xFF800000> : vector<8xf32>
    %303 = vector.multi_reduction <maximumf>, %302, %cst_112 [1] : vector<8x8xf32> to vector<8xf32>
    %304 = vector.shape_cast %303 : vector<8xf32> to vector<8x1xf32>
    %305 = vector.broadcast %304 : vector<8x1xf32> to vector<8x8xf32>
    %306 = arith.subf %302, %305 : vector<8x8xf32>
    %307 = math.exp %306 : vector<8x8xf32>
    %cst_113 = arith.constant dense<0.000000e+00> : vector<8xf32>
    %308 = vector.multi_reduction <add>, %307, %cst_113 [1] : vector<8x8xf32> to vector<8xf32>
    %309 = vector.shape_cast %308 : vector<8xf32> to vector<8x1xf32>
    %310 = tpu.reciprocal %309 {approx = true} : vector<8x1xf32> -> vector<8x1xf32>
    %311 = vector.broadcast %310 : vector<8x1xf32> to vector<8x8xf32>
    %312 = arith.mulf %307, %311 : vector<8x8xf32>
    %313 = arith.truncf %312 : vector<8x8xf32> to vector<8x8xbf16>
    %314 = vector.extract_strided_slice %297 {offsets = [0, 0], sizes = [8, 8], strides = [1, 1]} : vector<8x32xbf16> to vector<8x8xbf16>
    %cst_114 = arith.constant dense<0.000000e+00> : vector<8x8xf32>
    %315 = tpu.matmul %313, %314, %cst_114 {dimension_numbers = #tpu.dot_dimension_numbers<[1], [0], [0], [1], [0, 0, 1, 1], [], []>} : vector<8x8xbf16>, vector<8x8xbf16>, vector<8x8xf32> -> vector<8x8xf32>
    %316 = vector.extract_strided_slice %287 {offsets = [0, 8], sizes = [8, 8], strides = [1, 1]} : vector<8x32xbf16> to vector<8x8xbf16>
    %317 = vector.extract_strided_slice %294 {offsets = [0, 8], sizes = [8, 8], strides = [1, 1]} : vector<8x32xbf16> to vector<8x8xbf16>
    %cst_115 = arith.constant dense<0.000000e+00> : vector<8x8xf32>
    %318 = tpu.matmul %316, %317, %cst_115 {dimension_numbers = #tpu.dot_dimension_numbers<[1], [1], [0], [0], [0, 0, 1, 0], [], []>} : vector<8x8xbf16>, vector<8x8xbf16>, vector<8x8xf32> -> vector<8x8xf32>
    %cst_116 = arith.constant 0.353553385 : f32
    %319 = vector.broadcast %cst_116 : f32 to vector<8x8xf32>
    %320 = arith.mulf %318, %319 : vector<8x8xf32>
    %cst_117 = arith.constant dense<0xFF800000> : vector<8xf32>
    %321 = vector.multi_reduction <maximumf>, %320, %cst_117 [1] : vector<8x8xf32> to vector<8xf32>
    %322 = vector.shape_cast %321 : vector<8xf32> to vector<8x1xf32>
    %323 = vector.broadcast %322 : vector<8x1xf32> to vector<8x8xf32>
    %324 = arith.subf %320, %323 : vector<8x8xf32>
    %325 = math.exp %324 : vector<8x8xf32>
    %cst_118 = arith.constant dense<0.000000e+00> : vector<8xf32>
    %326 = vector.multi_reduction <add>, %325, %cst_118 [1] : vector<8x8xf32> to vector<8xf32>
    %327 = vector.shape_cast %326 : vector<8xf32> to vector<8x1xf32>
    %328 = tpu.reciprocal %327 {approx = true} : vector<8x1xf32> -> vector<8x1xf32>
    %329 = vector.broadcast %328 : vector<8x1xf32> to vector<8x8xf32>
    %330 = arith.mulf %325, %329 : vector<8x8xf32>
    %331 = arith.truncf %330 : vector<8x8xf32> to vector<8x8xbf16>
    %332 = vector.extract_strided_slice %297 {offsets = [0, 8], sizes = [8, 8], strides = [1, 1]} : vector<8x32xbf16> to vector<8x8xbf16>
    %cst_119 = arith.constant dense<0.000000e+00> : vector<8x8xf32>
    %333 = tpu.matmul %331, %332, %cst_119 {dimension_numbers = #tpu.dot_dimension_numbers<[1], [0], [0], [1], [0, 0, 1, 1], [], []>} : vector<8x8xbf16>, vector<8x8xbf16>, vector<8x8xf32> -> vector<8x8xf32>
    %334 = tpu.concatenate %315, %333 in 1 : vector<8x8xf32>, vector<8x8xf32> -> vector<8x16xf32>
    %335 = arith.truncf %334 : vector<8x16xf32> to vector<8x16xbf16>
    %c0_120 = arith.constant 0 : index
    %c3_121 = arith.constant 3 : index
    %c0_122 = arith.constant 0 : index
    %c0_123 = arith.constant 0 : index
    %336 = vector.load %arg3[%c0_120, %c3_121, %c0_122, %c0_123] : memref<8x4x1x32xbf16, #tpu.memory_space<vmem>>, vector<8x1x1x16xbf16>
    %337 = vector.shape_cast %336 : vector<8x1x1x16xbf16> to vector<8x16xbf16>
    %338 = vector.shape_cast %335 : vector<8x16xbf16> to vector<8x1x1x16xbf16>
    tpu.vector_store %arg3[%c0_120, %c3_121, %c0_122, %c0_123], %338 {strides = array<i32>} : memref<8x4x1x32xbf16, #tpu.memory_space<vmem>>, vector<8x1x1x16xbf16>,
    %339 = vector.extract_strided_slice %287 {offsets = [0, 16], sizes = [8, 8], strides = [1, 1]} : vector<8x32xbf16> to vector<8x8xbf16>
    %340 = vector.extract_strided_slice %294 {offsets = [0, 16], sizes = [8, 8], strides = [1, 1]} : vector<8x32xbf16> to vector<8x8xbf16>
    %cst_124 = arith.constant dense<0.000000e+00> : vector<8x8xf32>
    %341 = tpu.matmul %339, %340, %cst_124 {dimension_numbers = #tpu.dot_dimension_numbers<[1], [1], [0], [0], [0, 0, 1, 0], [], []>} : vector<8x8xbf16>, vector<8x8xbf16>, vector<8x8xf32> -> vector<8x8xf32>
    %cst_125 = arith.constant 0.353553385 : f32
    %342 = vector.broadcast %cst_125 : f32 to vector<8x8xf32>
    %343 = arith.mulf %341, %342 : vector<8x8xf32>
    %cst_126 = arith.constant dense<0xFF800000> : vector<8xf32>
    %344 = vector.multi_reduction <maximumf>, %343, %cst_126 [1] : vector<8x8xf32> to vector<8xf32>
    %345 = vector.shape_cast %344 : vector<8xf32> to vector<8x1xf32>
    %346 = vector.broadcast %345 : vector<8x1xf32> to vector<8x8xf32>
    %347 = arith.subf %343, %346 : vector<8x8xf32>
    %348 = math.exp %347 : vector<8x8xf32>
    %cst_127 = arith.constant dense<0.000000e+00> : vector<8xf32>
    %349 = vector.multi_reduction <add>, %348, %cst_127 [1] : vector<8x8xf32> to vector<8xf32>
    %350 = vector.shape_cast %349 : vector<8xf32> to vector<8x1xf32>
    %351 = tpu.reciprocal %350 {approx = true} : vector<8x1xf32> -> vector<8x1xf32>
    %352 = vector.broadcast %351 : vector<8x1xf32> to vector<8x8xf32>
    %353 = arith.mulf %348, %352 : vector<8x8xf32>
    %354 = arith.truncf %353 : vector<8x8xf32> to vector<8x8xbf16>
    %355 = vector.extract_strided_slice %297 {offsets = [0, 16], sizes = [8, 8], strides = [1, 1]} : vector<8x32xbf16> to vector<8x8xbf16>
    %cst_128 = arith.constant dense<0.000000e+00> : vector<8x8xf32>
    %356 = tpu.matmul %354, %355, %cst_128 {dimension_numbers = #tpu.dot_dimension_numbers<[1], [0], [0], [1], [0, 0, 1, 1], [], []>} : vector<8x8xbf16>, vector<8x8xbf16>, vector<8x8xf32> -> vector<8x8xf32>
    %357 = vector.extract_strided_slice %287 {offsets = [0, 24], sizes = [8, 8], strides = [1, 1]} : vector<8x32xbf16> to vector<8x8xbf16>
    %358 = vector.extract_strided_slice %294 {offsets = [0, 24], sizes = [8, 8], strides = [1, 1]} : vector<8x32xbf16> to vector<8x8xbf16>
    %cst_129 = arith.constant dense<0.000000e+00> : vector<8x8xf32>
    %359 = tpu.matmul %357, %358, %cst_129 {dimension_numbers = #tpu.dot_dimension_numbers<[1], [1], [0], [0], [0, 0, 1, 0], [], []>} : vector<8x8xbf16>, vector<8x8xbf16>, vector<8x8xf32> -> vector<8x8xf32>
    %cst_130 = arith.constant 0.353553385 : f32
    %360 = vector.broadcast %cst_130 : f32 to vector<8x8xf32>
    %361 = arith.mulf %359, %360 : vector<8x8xf32>
    %cst_131 = arith.constant dense<0xFF800000> : vector<8xf32>
    %362 = vector.multi_reduction <maximumf>, %361, %cst_131 [1] : vector<8x8xf32> to vector<8xf32>
    %363 = vector.shape_cast %362 : vector<8xf32> to vector<8x1xf32>
    %364 = vector.broadcast %363 : vector<8x1xf32> to vector<8x8xf32>
    %365 = arith.subf %361, %364 : vector<8x8xf32>
    %366 = math.exp %365 : vector<8x8xf32>
    %cst_132 = arith.constant dense<0.000000e+00> : vector<8xf32>
    %367 = vector.multi_reduction <add>, %366, %cst_132 [1] : vector<8x8xf32> to vector<8xf32>
    %368 = vector.shape_cast %367 : vector<8xf32> to vector<8x1xf32>
    %369 = tpu.reciprocal %368 {approx = true} : vector<8x1xf32> -> vector<8x1xf32>
    %370 = vector.broadcast %369 : vector<8x1xf32> to vector<8x8xf32>
    %371 = arith.mulf %366, %370 : vector<8x8xf32>
    %372 = arith.truncf %371 : vector<8x8xf32> to vector<8x8xbf16>
    %373 = vector.extract_strided_slice %297 {offsets = [0, 24], sizes = [8, 8], strides = [1, 1]} : vector<8x32xbf16> to vector<8x8xbf16>
    %cst_133 = arith.constant dense<0.000000e+00> : vector<8x8xf32>
    %374 = tpu.matmul %372, %373, %cst_133 {dimension_numbers = #tpu.dot_dimension_numbers<[1], [0], [0], [1], [0, 0, 1, 1], [], []>} : vector<8x8xbf16>, vector<8x8xbf16>, vector<8x8xf32> -> vector<8x8xf32>
    %375 = tpu.concatenate %356, %374 in 1 : vector<8x8xf32>, vector<8x8xf32> -> vector<8x16xf32>
    %376 = arith.truncf %375 : vector<8x16xf32> to vector<8x16xbf16>
    %c0_134 = arith.constant 0 : index
    %c3_135 = arith.constant 3 : index
    %c0_136 = arith.constant 0 : index
    %c16_137 = arith.constant 16 : index
    %377 = vector.load %arg3[%c0_134, %c3_135, %c0_136, %c16_137] : memref<8x4x1x32xbf16, #tpu.memory_space<vmem>>, vector<8x1x1x16xbf16>
    %378 = vector.shape_cast %377 : vector<8x1x1x16xbf16> to vector<8x16xbf16>
    %379 = vector.shape_cast %376 : vector<8x16xbf16> to vector<8x1x1x16xbf16>
    tpu.vector_store %arg3[%c0_134, %c3_135, %c0_136, %c16_137], %379 {strides = array<i32>} : memref<8x4x1x32xbf16, #tpu.memory_space<vmem>>, vector<8x1x1x16xbf16>,
    return
  }
  func.func @transform_0(%arg0: i32) -> (i32, i32, i32, i32) {
    %c0_i32 = arith.constant 0 : i32
    %c0_i32_0 = arith.constant 0 : i32
    %c0_i32_1 = arith.constant 0 : i32
    %c0_i32_2 = arith.constant 0 : i32
    return %c0_i32, %arg0, %c0_i32_0, %c0_i32_1 : i32, i32, i32, i32
  }
  func.func @transform_1(%arg0: i32) -> (i32, i32, i32, i32) {
    %c0_i32 = arith.constant 0 : i32
    %c0_i32_0 = arith.constant 0 : i32
    %c0_i32_1 = arith.constant 0 : i32
    %c0_i32_2 = arith.constant 0 : i32
    return %c0_i32, %arg0, %c0_i32_0, %c0_i32_1 : i32, i32, i32, i32
  }
  func.func @transform_2(%arg0: i32) -> (i32, i32, i32, i32) {
    %c0_i32 = arith.constant 0 : i32
    %c0_i32_0 = arith.constant 0 : i32
    %c0_i32_1 = arith.constant 0 : i32
    %c0_i32_2 = arith.constant 0 : i32
    return %c0_i32, %arg0, %c0_i32_0, %c0_i32_1 : i32, i32, i32, i32
  }
}

module attributes {stable_mosaic.version = 11 : i64} {
  func.func @_mlp_branch_kernel(%arg0: i32, %arg1: memref<64x32xf32, #tpu.memory_space<vmem>>, %arg2: memref<1x32xf32, #tpu.memory_space<vmem>>, %arg3: memref<1x32xf32, #tpu.memory_space<vmem>>, %arg4: memref<32x8xbf16, #tpu.memory_space<vmem>>, %arg5: memref<1x8xf32, #tpu.memory_space<vmem>>, %arg6: memref<8x32xbf16, #tpu.memory_space<vmem>>, %arg7: memref<1x32xf32, #tpu.memory_space<vmem>>, %arg8: memref<32x128xbf16, #tpu.memory_space<vmem>>, %arg9: memref<1x128xf32, #tpu.memory_space<vmem>>, %arg10: memref<128x32xbf16, #tpu.memory_space<vmem>>, %arg11: memref<1x32xf32, #tpu.memory_space<vmem>>, %arg12: memref<64x32xf32, #tpu.memory_space<vmem>>) attributes {dimension_semantics = [#tpu.dimension_semantics<parallel>], iteration_bounds = array<i64: 1>, scalar_prefetch = 0 : i64, scratch_operands = 0 : i64, tpu.core_type = #tpu.core_type<tc>, window_params = [{transform_indices = @transform_0, window_bounds = array<i64: 64, 32>}, {pipeline_mode = #tpu.pipeline_mode<synchronous>, transform_indices = @transform_1, window_bounds = array<i64: 1, 32>}, {pipeline_mode = #tpu.pipeline_mode<synchronous>, transform_indices = @transform_2, window_bounds = array<i64: 1, 32>}, {pipeline_mode = #tpu.pipeline_mode<synchronous>, transform_indices = @transform_3, window_bounds = array<i64: 32, 8>}, {pipeline_mode = #tpu.pipeline_mode<synchronous>, transform_indices = @transform_4, window_bounds = array<i64: 1, 8>}, {pipeline_mode = #tpu.pipeline_mode<synchronous>, transform_indices = @transform_5, window_bounds = array<i64: 8, 32>}, {pipeline_mode = #tpu.pipeline_mode<synchronous>, transform_indices = @transform_6, window_bounds = array<i64: 1, 32>}, {pipeline_mode = #tpu.pipeline_mode<synchronous>, transform_indices = @transform_7, window_bounds = array<i64: 32, 128>}, {pipeline_mode = #tpu.pipeline_mode<synchronous>, transform_indices = @transform_8, window_bounds = array<i64: 1, 128>}, {pipeline_mode = #tpu.pipeline_mode<synchronous>, transform_indices = @transform_9, window_bounds = array<i64: 128, 32>}, {pipeline_mode = #tpu.pipeline_mode<synchronous>, transform_indices = @transform_10, window_bounds = array<i64: 1, 32>}, {transform_indices = @transform_11, window_bounds = array<i64: 64, 32>}]} {
    %c0 = arith.constant 0 : index
    %c0_0 = arith.constant 0 : index
    %0 = vector.load %arg1[%c0, %c0_0] : memref<64x32xf32, #tpu.memory_space<vmem>>, vector<64x32xf32>
    %c0_1 = arith.constant 0 : index
    %c0_2 = arith.constant 0 : index
    %1 = vector.load %arg2[%c0_1, %c0_2] : memref<1x32xf32, #tpu.memory_space<vmem>>, vector<1x32xf32>
    %c0_3 = arith.constant 0 : index
    %c0_4 = arith.constant 0 : index
    %2 = vector.load %arg3[%c0_3, %c0_4] : memref<1x32xf32, #tpu.memory_space<vmem>>, vector<1x32xf32>
    %cst = arith.constant dense<0.000000e+00> : vector<64xf32>
    %3 = vector.multi_reduction <add>, %0, %cst [1] : vector<64x32xf32> to vector<64xf32>
    %4 = vector.shape_cast %3 : vector<64xf32> to vector<64x1xf32>
    %cst_5 = arith.constant 3.200000e+01 : f32
    %5 = vector.broadcast %cst_5 : f32 to vector<64x1xf32>
    %6 = arith.divf %4, %5 : vector<64x1xf32>
    %7 = vector.broadcast %6 : vector<64x1xf32> to vector<64x32xf32>
    %8 = arith.subf %0, %7 : vector<64x32xf32>
    %9 = arith.mulf %8, %8 : vector<64x32xf32>
    %cst_6 = arith.constant dense<0.000000e+00> : vector<64xf32>
    %10 = vector.multi_reduction <add>, %9, %cst_6 [1] : vector<64x32xf32> to vector<64xf32>
    %11 = vector.shape_cast %10 : vector<64xf32> to vector<64x1xf32>
    %cst_7 = arith.constant 3.200000e+01 : f32
    %12 = vector.broadcast %cst_7 : f32 to vector<64x1xf32>
    %13 = arith.divf %11, %12 : vector<64x1xf32>
    %14 = vector.broadcast %6 : vector<64x1xf32> to vector<64x32xf32>
    %15 = arith.subf %0, %14 : vector<64x32xf32>
    %cst_8 = arith.constant 9.99999974E-6 : f32
    %16 = vector.broadcast %cst_8 : f32 to vector<64x1xf32>
    %17 = arith.addf %13, %16 : vector<64x1xf32>
    %18 = math.rsqrt %17 : vector<64x1xf32>
    %19 = vector.broadcast %18 : vector<64x1xf32> to vector<64x32xf32>
    %20 = arith.mulf %15, %19 : vector<64x32xf32>
    %21 = vector.broadcast %1 : vector<1x32xf32> to vector<64x32xf32>
    %22 = arith.mulf %20, %21 : vector<64x32xf32>
    %23 = vector.broadcast %2 : vector<1x32xf32> to vector<64x32xf32>
    %24 = arith.addf %22, %23 : vector<64x32xf32>
    %25 = arith.truncf %24 : vector<64x32xf32> to vector<64x32xbf16>
    %c0_9 = arith.constant 0 : index
    %c0_10 = arith.constant 0 : index
    %26 = vector.load %arg4[%c0_9, %c0_10] : memref<32x8xbf16, #tpu.memory_space<vmem>>, vector<32x8xbf16>
    %cst_11 = arith.constant dense<0.000000e+00> : vector<64x8xf32>
    %27 = tpu.matmul %25, %26, %cst_11 {dimension_numbers = #tpu.dot_dimension_numbers<[1], [0], [0], [1], [0, 0, 1, 1], [], []>} : vector<64x32xbf16>, vector<32x8xbf16>, vector<64x8xf32> -> vector<64x8xf32>
    %c0_12 = arith.constant 0 : index
    %c0_13 = arith.constant 0 : index
    %28 = vector.load %arg5[%c0_12, %c0_13] : memref<1x8xf32, #tpu.memory_space<vmem>>, vector<1x8xf32>
    %29 = vector.broadcast %28 : vector<1x8xf32> to vector<64x8xf32>
    %30 = arith.addf %27, %29 : vector<64x8xf32>
    %31 = arith.truncf %30 : vector<64x8xf32> to vector<64x8xbf16>
    %c0_14 = arith.constant 0 : index
    %c0_15 = arith.constant 0 : index
    %32 = vector.load %arg6[%c0_14, %c0_15] : memref<8x32xbf16, #tpu.memory_space<vmem>>, vector<8x32xbf16>
    %cst_16 = arith.constant dense<0.000000e+00> : vector<64x32xf32>
    %33 = tpu.matmul %31, %32, %cst_16 {dimension_numbers = #tpu.dot_dimension_numbers<[1], [0], [0], [1], [0, 0, 1, 1], [], []>} : vector<64x8xbf16>, vector<8x32xbf16>, vector<64x32xf32> -> vector<64x32xf32>
    %c0_17 = arith.constant 0 : index
    %c0_18 = arith.constant 0 : index
    %34 = vector.load %arg7[%c0_17, %c0_18] : memref<1x32xf32, #tpu.memory_space<vmem>>, vector<1x32xf32>
    %35 = vector.broadcast %34 : vector<1x32xf32> to vector<64x32xf32>
    %36 = arith.addf %33, %35 : vector<64x32xf32>
    %cst_19 = arith.constant 1.000000e+00 : f32
    %37 = vector.broadcast %cst_19 : f32 to vector<64x32xf32>
    %38 = arith.mulf %37, %36 : vector<64x32xf32>
    %39 = arith.addf %24, %38 : vector<64x32xf32>
    %40 = arith.truncf %39 : vector<64x32xf32> to vector<64x32xbf16>
    %c0_20 = arith.constant 0 : index
    %c0_21 = arith.constant 0 : index
    %41 = vector.load %arg8[%c0_20, %c0_21] : memref<32x128xbf16, #tpu.memory_space<vmem>>, vector<32x128xbf16>
    %cst_22 = arith.constant dense<0.000000e+00> : vector<64x128xf32>
    %42 = tpu.matmul %40, %41, %cst_22 {dimension_numbers = #tpu.dot_dimension_numbers<[1], [0], [0], [1], [0, 0, 1, 1], [], []>} : vector<64x32xbf16>, vector<32x128xbf16>, vector<64x128xf32> -> vector<64x128xf32>
    %c0_23 = arith.constant 0 : index
    %c0_24 = arith.constant 0 : index
    %43 = vector.load %arg9[%c0_23, %c0_24] : memref<1x128xf32, #tpu.memory_space<vmem>>, vector<1x128xf32>
    %44 = vector.broadcast %43 : vector<1x128xf32> to vector<64x128xf32>
    %45 = arith.addf %42, %44 : vector<64x128xf32>
    %cst_25 = arith.constant 1.702000e+00 : f32
    %46 = vector.broadcast %cst_25 : f32 to vector<64x128xf32>
    %47 = arith.mulf %46, %45 : vector<64x128xf32>
    %48 = arith.negf %47 : vector<64x128xf32>
    %49 = math.exp %48 : vector<64x128xf32>
    %cst_26 = arith.constant 1.000000e+00 : f32
    %50 = vector.broadcast %cst_26 : f32 to vector<64x128xf32>
    %51 = arith.addf %50, %49 : vector<64x128xf32>
    %52 = arith.divf %50, %51 : vector<64x128xf32>
    %53 = arith.mulf %45, %52 : vector<64x128xf32>
    %54 = arith.truncf %53 : vector<64x128xf32> to vector<64x128xbf16>
    %c0_27 = arith.constant 0 : index
    %c0_28 = arith.constant 0 : index
    %55 = vector.load %arg10[%c0_27, %c0_28] : memref<128x32xbf16, #tpu.memory_space<vmem>>, vector<128x32xbf16>
    %cst_29 = arith.constant dense<0.000000e+00> : vector<64x32xf32>
    %56 = tpu.matmul %54, %55, %cst_29 {dimension_numbers = #tpu.dot_dimension_numbers<[1], [0], [0], [1], [0, 0, 1, 1], [], []>} : vector<64x128xbf16>, vector<128x32xbf16>, vector<64x32xf32> -> vector<64x32xf32>
    %c0_30 = arith.constant 0 : index
    %c0_31 = arith.constant 0 : index
    %57 = vector.load %arg11[%c0_30, %c0_31] : memref<1x32xf32, #tpu.memory_space<vmem>>, vector<1x32xf32>
    %58 = vector.broadcast %57 : vector<1x32xf32> to vector<64x32xf32>
    %59 = arith.addf %56, %58 : vector<64x32xf32>
    %60 = arith.addf %0, %59 : vector<64x32xf32>
    %c0_32 = arith.constant 0 : index
    %c0_33 = arith.constant 0 : index
    %61 = vector.load %arg12[%c0_32, %c0_33] : memref<64x32xf32, #tpu.memory_space<vmem>>, vector<64x32xf32>
    tpu.vector_store %arg12[%c0_32, %c0_33], %60 {strides = array<i32>} : memref<64x32xf32, #tpu.memory_space<vmem>>, vector<64x32xf32>,
    return
  }
  func.func @transform_0(%arg0: i32) -> (i32, i32) {
    %c0_i32 = arith.constant 0 : i32
    %c0_i32_0 = arith.constant 0 : i32
    return %arg0, %c0_i32 : i32, i32
  }
  func.func @transform_1(%arg0: i32) -> (i32, i32) {
    %c0_i32 = arith.constant 0 : i32
    %c0_i32_0 = arith.constant 0 : i32
    %c0_i32_1 = arith.constant 0 : i32
    return %c0_i32, %c0_i32_0 : i32, i32
  }
  func.func @transform_2(%arg0: i32) -> (i32, i32) {
    %c0_i32 = arith.constant 0 : i32
    %c0_i32_0 = arith.constant 0 : i32
    %c0_i32_1 = arith.constant 0 : i32
    return %c0_i32, %c0_i32_0 : i32, i32
  }
  func.func @transform_3(%arg0: i32) -> (i32, i32) {
    %c0_i32 = arith.constant 0 : i32
    %c0_i32_0 = arith.constant 0 : i32
    %c0_i32_1 = arith.constant 0 : i32
    return %c0_i32, %c0_i32_0 : i32, i32
  }
  func.func @transform_4(%arg0: i32) -> (i32, i32) {
    %c0_i32 = arith.constant 0 : i32
    %c0_i32_0 = arith.constant 0 : i32
    %c0_i32_1 = arith.constant 0 : i32
    return %c0_i32, %c0_i32_0 : i32, i32
  }
  func.func @transform_5(%arg0: i32) -> (i32, i32) {
    %c0_i32 = arith.constant 0 : i32
    %c0_i32_0 = arith.constant 0 : i32
    %c0_i32_1 = arith.constant 0 : i32
    return %c0_i32, %c0_i32_0 : i32, i32
  }
  func.func @transform_6(%arg0: i32) -> (i32, i32) {
    %c0_i32 = arith.constant 0 : i32
    %c0_i32_0 = arith.constant 0 : i32
    %c0_i32_1 = arith.constant 0 : i32
    return %c0_i32, %c0_i32_0 : i32, i32
  }
  func.func @transform_7(%arg0: i32) -> (i32, i32) {
    %c0_i32 = arith.constant 0 : i32
    %c0_i32_0 = arith.constant 0 : i32
    %c0_i32_1 = arith.constant 0 : i32
    return %c0_i32, %c0_i32_0 : i32, i32
  }
  func.func @transform_8(%arg0: i32) -> (i32, i32) {
    %c0_i32 = arith.constant 0 : i32
    %c0_i32_0 = arith.constant 0 : i32
    %c0_i32_1 = arith.constant 0 : i32
    return %c0_i32, %c0_i32_0 : i32, i32
  }
  func.func @transform_9(%arg0: i32) -> (i32, i32) {
    %c0_i32 = arith.constant 0 : i32
    %c0_i32_0 = arith.constant 0 : i32
    %c0_i32_1 = arith.constant 0 : i32
    return %c0_i32, %c0_i32_0 : i32, i32
  }
  func.func @transform_10(%arg0: i32) -> (i32, i32) {
    %c0_i32 = arith.constant 0 : i32
    %c0_i32_0 = arith.constant 0 : i32
    %c0_i32_1 = arith.constant 0 : i32
    return %c0_i32, %c0_i32_0 : i32, i32
  }
  func.func @transform_11(%arg0: i32) -> (i32, i32) {
    %c0_i32 = arith.constant 0 : i32
    %c0_i32_0 = arith.constant 0 : i32
    return %arg0, %c0_i32 : i32, i32
  }
}

module attributes {stable_mosaic.version = 11 : i64} {
  func.func @_mlp_branch_kernel(%arg0: i32, %arg1: memref<64x32xf32, #tpu.memory_space<vmem>>, %arg2: memref<1x32xf32, #tpu.memory_space<vmem>>, %arg3: memref<1x32xf32, #tpu.memory_space<vmem>>, %arg4: memref<32x8xbf16, #tpu.memory_space<vmem>>, %arg5: memref<1x8xf32, #tpu.memory_space<vmem>>, %arg6: memref<8x32xbf16, #tpu.memory_space<vmem>>, %arg7: memref<1x32xf32, #tpu.memory_space<vmem>>, %arg8: memref<32x128xbf16, #tpu.memory_space<vmem>>, %arg9: memref<1x128xf32, #tpu.memory_space<vmem>>, %arg10: memref<128x32xbf16, #tpu.memory_space<vmem>>, %arg11: memref<1x32xf32, #tpu.memory_space<vmem>>, %arg12: memref<64x32xf32, #tpu.memory_space<vmem>>) attributes {dimension_semantics = [#tpu.dimension_semantics<parallel>], iteration_bounds = array<i64: 1>, scalar_prefetch = 0 : i64, scratch_operands = 0 : i64, tpu.core_type = #tpu.core_type<tc>, window_params = [{transform_indices = @transform_0, window_bounds = array<i64: 64, 32>}, {pipeline_mode = #tpu.pipeline_mode<synchronous>, transform_indices = @transform_1, window_bounds = array<i64: 1, 32>}, {pipeline_mode = #tpu.pipeline_mode<synchronous>, transform_indices = @transform_2, window_bounds = array<i64: 1, 32>}, {pipeline_mode = #tpu.pipeline_mode<synchronous>, transform_indices = @transform_3, window_bounds = array<i64: 32, 8>}, {pipeline_mode = #tpu.pipeline_mode<synchronous>, transform_indices = @transform_4, window_bounds = array<i64: 1, 8>}, {pipeline_mode = #tpu.pipeline_mode<synchronous>, transform_indices = @transform_5, window_bounds = array<i64: 8, 32>}, {pipeline_mode = #tpu.pipeline_mode<synchronous>, transform_indices = @transform_6, window_bounds = array<i64: 1, 32>}, {pipeline_mode = #tpu.pipeline_mode<synchronous>, transform_indices = @transform_7, window_bounds = array<i64: 32, 128>}, {pipeline_mode = #tpu.pipeline_mode<synchronous>, transform_indices = @transform_8, window_bounds = array<i64: 1, 128>}, {pipeline_mode = #tpu.pipeline_mode<synchronous>, transform_indices = @transform_9, window_bounds = array<i64: 128, 32>}, {pipeline_mode = #tpu.pipeline_mode<synchronous>, transform_indices = @transform_10, window_bounds = array<i64: 1, 32>}, {transform_indices = @transform_11, window_bounds = array<i64: 64, 32>}]} {
    %c0 = arith.constant 0 : index
    %c0_0 = arith.constant 0 : index
    %0 = vector.load %arg1[%c0, %c0_0] : memref<64x32xf32, #tpu.memory_space<vmem>>, vector<64x32xf32>
    %c0_1 = arith.constant 0 : index
    %c0_2 = arith.constant 0 : index
    %1 = vector.load %arg2[%c0_1, %c0_2] : memref<1x32xf32, #tpu.memory_space<vmem>>, vector<1x32xf32>
    %c0_3 = arith.constant 0 : index
    %c0_4 = arith.constant 0 : index
    %2 = vector.load %arg3[%c0_3, %c0_4] : memref<1x32xf32, #tpu.memory_space<vmem>>, vector<1x32xf32>
    %cst = arith.constant dense<0.000000e+00> : vector<64xf32>
    %3 = vector.multi_reduction <add>, %0, %cst [1] : vector<64x32xf32> to vector<64xf32>
    %4 = vector.shape_cast %3 : vector<64xf32> to vector<64x1xf32>
    %cst_5 = arith.constant 3.200000e+01 : f32
    %5 = vector.broadcast %cst_5 : f32 to vector<64x1xf32>
    %6 = arith.divf %4, %5 : vector<64x1xf32>
    %7 = vector.broadcast %6 : vector<64x1xf32> to vector<64x32xf32>
    %8 = arith.subf %0, %7 : vector<64x32xf32>
    %9 = arith.mulf %8, %8 : vector<64x32xf32>
    %cst_6 = arith.constant dense<0.000000e+00> : vector<64xf32>
    %10 = vector.multi_reduction <add>, %9, %cst_6 [1] : vector<64x32xf32> to vector<64xf32>
    %11 = vector.shape_cast %10 : vector<64xf32> to vector<64x1xf32>
    %cst_7 = arith.constant 3.200000e+01 : f32
    %12 = vector.broadcast %cst_7 : f32 to vector<64x1xf32>
    %13 = arith.divf %11, %12 : vector<64x1xf32>
    %14 = vector.broadcast %6 : vector<64x1xf32> to vector<64x32xf32>
    %15 = arith.subf %0, %14 : vector<64x32xf32>
    %cst_8 = arith.constant 9.99999974E-6 : f32
    %16 = vector.broadcast %cst_8 : f32 to vector<64x1xf32>
    %17 = arith.addf %13, %16 : vector<64x1xf32>
    %18 = math.rsqrt %17 : vector<64x1xf32>
    %19 = vector.broadcast %18 : vector<64x1xf32> to vector<64x32xf32>
    %20 = arith.mulf %15, %19 : vector<64x32xf32>
    %21 = vector.broadcast %1 : vector<1x32xf32> to vector<64x32xf32>
    %22 = arith.mulf %20, %21 : vector<64x32xf32>
    %23 = vector.broadcast %2 : vector<1x32xf32> to vector<64x32xf32>
    %24 = arith.addf %22, %23 : vector<64x32xf32>
    %25 = arith.truncf %24 : vector<64x32xf32> to vector<64x32xbf16>
    %c0_9 = arith.constant 0 : index
    %c0_10 = arith.constant 0 : index
    %26 = vector.load %arg4[%c0_9, %c0_10] : memref<32x8xbf16, #tpu.memory_space<vmem>>, vector<32x8xbf16>
    %cst_11 = arith.constant dense<0.000000e+00> : vector<64x8xf32>
    %27 = tpu.matmul %25, %26, %cst_11 {dimension_numbers = #tpu.dot_dimension_numbers<[1], [0], [0], [1], [0, 0, 1, 1], [], []>} : vector<64x32xbf16>, vector<32x8xbf16>, vector<64x8xf32> -> vector<64x8xf32>
    %c0_12 = arith.constant 0 : index
    %c0_13 = arith.constant 0 : index
    %28 = vector.load %arg5[%c0_12, %c0_13] : memref<1x8xf32, #tpu.memory_space<vmem>>, vector<1x8xf32>
    %29 = vector.broadcast %28 : vector<1x8xf32> to vector<64x8xf32>
    %30 = arith.addf %27, %29 : vector<64x8xf32>
    %31 = arith.truncf %30 : vector<64x8xf32> to vector<64x8xbf16>
    %c0_14 = arith.constant 0 : index
    %c0_15 = arith.constant 0 : index
    %32 = vector.load %arg6[%c0_14, %c0_15] : memref<8x32xbf16, #tpu.memory_space<vmem>>, vector<8x32xbf16>
    %cst_16 = arith.constant dense<0.000000e+00> : vector<64x32xf32>
    %33 = tpu.matmul %31, %32, %cst_16 {dimension_numbers = #tpu.dot_dimension_numbers<[1], [0], [0], [1], [0, 0, 1, 1], [], []>} : vector<64x8xbf16>, vector<8x32xbf16>, vector<64x32xf32> -> vector<64x32xf32>
    %c0_17 = arith.constant 0 : index
    %c0_18 = arith.constant 0 : index
    %34 = vector.load %arg7[%c0_17, %c0_18] : memref<1x32xf32, #tpu.memory_space<vmem>>, vector<1x32xf32>
    %35 = vector.broadcast %34 : vector<1x32xf32> to vector<64x32xf32>
    %36 = arith.addf %33, %35 : vector<64x32xf32>
    %cst_19 = arith.constant 1.000000e+00 : f32
    %37 = vector.broadcast %cst_19 : f32 to vector<64x32xf32>
    %38 = arith.mulf %37, %36 : vector<64x32xf32>
    %39 = arith.addf %24, %38 : vector<64x32xf32>
    %40 = arith.truncf %39 : vector<64x32xf32> to vector<64x32xbf16>
    %c0_20 = arith.constant 0 : index
    %c0_21 = arith.constant 0 : index
    %41 = vector.load %arg8[%c0_20, %c0_21] : memref<32x128xbf16, #tpu.memory_space<vmem>>, vector<32x128xbf16>
    %cst_22 = arith.constant dense<0.000000e+00> : vector<64x128xf32>
    %42 = tpu.matmul %40, %41, %cst_22 {dimension_numbers = #tpu.dot_dimension_numbers<[1], [0], [0], [1], [0, 0, 1, 1], [], []>} : vector<64x32xbf16>, vector<32x128xbf16>, vector<64x128xf32> -> vector<64x128xf32>
    %c0_23 = arith.constant 0 : index
    %c0_24 = arith.constant 0 : index
    %43 = vector.load %arg9[%c0_23, %c0_24] : memref<1x128xf32, #tpu.memory_space<vmem>>, vector<1x128xf32>
    %44 = vector.broadcast %43 : vector<1x128xf32> to vector<64x128xf32>
    %45 = arith.addf %42, %44 : vector<64x128xf32>
    %cst_25 = arith.constant 1.702000e+00 : f32
    %46 = vector.broadcast %cst_25 : f32 to vector<64x128xf32>
    %47 = arith.mulf %46, %45 : vector<64x128xf32>
    %48 = arith.negf %47 : vector<64x128xf32>
    %49 = math.exp %48 : vector<64x128xf32>
    %cst_26 = arith.constant 1.000000e+00 : f32
    %50 = vector.broadcast %cst_26 : f32 to vector<64x128xf32>
    %51 = arith.addf %50, %49 : vector<64x128xf32>
    %52 = arith.divf %50, %51 : vector<64x128xf32>
    %53 = arith.mulf %45, %52 : vector<64x128xf32>
    %54 = arith.truncf %53 : vector<64x128xf32> to vector<64x128xbf16>
    %c0_27 = arith.constant 0 : index
    %c0_28 = arith.constant 0 : index
    %55 = vector.load %arg10[%c0_27, %c0_28] : memref<128x32xbf16, #tpu.memory_space<vmem>>, vector<128x32xbf16>
    %cst_29 = arith.constant dense<0.000000e+00> : vector<64x32xf32>
    %56 = tpu.matmul %54, %55, %cst_29 {dimension_numbers = #tpu.dot_dimension_numbers<[1], [0], [0], [1], [0, 0, 1, 1], [], []>} : vector<64x128xbf16>, vector<128x32xbf16>, vector<64x32xf32> -> vector<64x32xf32>
    %c0_30 = arith.constant 0 : index
    %c0_31 = arith.constant 0 : index
    %57 = vector.load %arg11[%c0_30, %c0_31] : memref<1x32xf32, #tpu.memory_space<vmem>>, vector<1x32xf32>
    %58 = vector.broadcast %57 : vector<1x32xf32> to vector<64x32xf32>
    %59 = arith.addf %56, %58 : vector<64x32xf32>
    %60 = arith.addf %0, %59 : vector<64x32xf32>
    %c0_32 = arith.constant 0 : index
    %c0_33 = arith.constant 0 : index
    %61 = vector.load %arg12[%c0_32, %c0_33] : memref<64x32xf32, #tpu.memory_space<vmem>>, vector<64x32xf32>
    tpu.vector_store %arg12[%c0_32, %c0_33], %60 {strides = array<i32>} : memref<64x32xf32, #tpu.memory_space<vmem>>, vector<64x32xf32>,
    return
  }
  func.func @transform_0(%arg0: i32) -> (i32, i32) {
    %c0_i32 = arith.constant 0 : i32
    %c0_i32_0 = arith.constant 0 : i32
    return %arg0, %c0_i32 : i32, i32
  }
  func.func @transform_1(%arg0: i32) -> (i32, i32) {
    %c0_i32 = arith.constant 0 : i32
    %c0_i32_0 = arith.constant 0 : i32
    %c0_i32_1 = arith.constant 0 : i32
    return %c0_i32, %c0_i32_0 : i32, i32
  }
  func.func @transform_2(%arg0: i32) -> (i32, i32) {
    %c0_i32 = arith.constant 0 : i32
    %c0_i32_0 = arith.constant 0 : i32
    %c0_i32_1 = arith.constant 0 : i32
    return %c0_i32, %c0_i32_0 : i32, i32
  }
  func.func @transform_3(%arg0: i32) -> (i32, i32) {
    %c0_i32 = arith.constant 0 : i32
    %c0_i32_0 = arith.constant 0 : i32
    %c0_i32_1 = arith.constant 0 : i32
    return %c0_i32, %c0_i32_0 : i32, i32
  }
  func.func @transform_4(%arg0: i32) -> (i32, i32) {
    %c0_i32 = arith.constant 0 : i32
    %c0_i32_0 = arith.constant 0 : i32
    %c0_i32_1 = arith.constant 0 : i32
    return %c0_i32, %c0_i32_0 : i32, i32
  }
  func.func @transform_5(%arg0: i32) -> (i32, i32) {
    %c0_i32 = arith.constant 0 : i32
    %c0_i32_0 = arith.constant 0 : i32
    %c0_i32_1 = arith.constant 0 : i32
    return %c0_i32, %c0_i32_0 : i32, i32
  }
  func.func @transform_6(%arg0: i32) -> (i32, i32) {
    %c0_i32 = arith.constant 0 : i32
    %c0_i32_0 = arith.constant 0 : i32
    %c0_i32_1 = arith.constant 0 : i32
    return %c0_i32, %c0_i32_0 : i32, i32
  }
  func.func @transform_7(%arg0: i32) -> (i32, i32) {
    %c0_i32 = arith.constant 0 : i32
    %c0_i32_0 = arith.constant 0 : i32
    %c0_i32_1 = arith.constant 0 : i32
    return %c0_i32, %c0_i32_0 : i32, i32
  }
  func.func @transform_8(%arg0: i32) -> (i32, i32) {
    %c0_i32 = arith.constant 0 : i32
    %c0_i32_0 = arith.constant 0 : i32
    %c0_i32_1 = arith.constant 0 : i32
    return %c0_i32, %c0_i32_0 : i32, i32
  }
  func.func @transform_9(%arg0: i32) -> (i32, i32) {
    %c0_i32 = arith.constant 0 : i32
    %c0_i32_0 = arith.constant 0 : i32
    %c0_i32_1 = arith.constant 0 : i32
    return %c0_i32, %c0_i32_0 : i32, i32
  }
  func.func @transform_10(%arg0: i32) -> (i32, i32) {
    %c0_i32 = arith.constant 0 : i32
    %c0_i32_0 = arith.constant 0 : i32
    %c0_i32_1 = arith.constant 0 : i32
    return %c0_i32, %c0_i32_0 : i32, i32
  }
  func.func @transform_11(%arg0: i32) -> (i32, i32) {
    %c0_i32 = arith.constant 0 : i32
    %c0_i32_0 = arith.constant 0 : i32
    return %arg0, %c0_i32 : i32, i32
  }
}

</mosaic_0001>

<llo_original>
// kernel: transformer_forward.8
$region0: #{transformer_forward.8}
  #allocation0 [shape = 'u32[]', space=smem, size = 0x4, offset = 0x4, fixed_abs, tag = 'smem constant byte address 0x4 - core index']
  #allocation1 [shape = 'u32[144,128]{1,0:T(1,128)}', space=vmem, size = 0x12000, scoped, tag = 'internal scratch']
  %s0 = inlined_call_operand.vmem [shape: f32[64,32], index: 0, kind: input, shape index: {}]
  %s1 = inlined_call_operand.vmem [shape: f32[1,32], index: 1, kind: input, shape index: {}]
  %s2 = inlined_call_operand.vmem [shape: f32[1,32], index: 2, kind: input, shape index: {}]
  %s3 = inlined_call_operand.vmem [shape: bf16[32,8], index: 3, kind: input, shape index: {}]
  %s4 = inlined_call_operand.vmem [shape: f32[1,8], index: 4, kind: input, shape index: {}]
  %s5 = inlined_call_operand.vmem [shape: bf16[8,32], index: 5, kind: input, shape index: {}]
  %s6 = inlined_call_operand.vmem [shape: f32[1,32], index: 6, kind: input, shape index: {}]
  %s7 = inlined_call_operand.vmem [shape: bf16[32,96], index: 7, kind: input, shape index: {}]
  %s8 = inlined_call_operand.vmem [shape: f32[1,96], index: 8, kind: input, shape index: {}]
  %s9 = inlined_call_operand.vmem [shape: bf16[64,96], index: 9, kind: output, shape index: {}]
  %s10 = sld [smem:[#allocation0]]
  $region46: #{transformer_forward.8} parent=0
    _
  %s12 = ssub.s32 1, %s10
  %s13 = scalar_select 0, %s12, %s10
  // Predicated region
  $region2: #{transformer_forward.8} parent=0 // pred_check
    _
  $region3: #{transformer_forward.8} parent=0 // pred_check_branch
    %15 = sbr.rel (0) target = $region5
  $region4: #{transformer_forward.8} parent=0 // pred_region
    _
  $region5: #{transformer_forward.8} parent=0 // pred_fallthru
    _
  // Predicated region
  $region6: #{transformer_forward.8} parent=0 // pred_check
    _
  $region7: #{transformer_forward.8} parent=0 // pred_check_branch
    %17 = sbr.rel (0) target = $region9
  $region8: #{transformer_forward.8} parent=0 // pred_region
    _
  $region9: #{transformer_forward.8} parent=0 // pred_fallthru
    _
  // Predicated region
  $region10: #{transformer_forward.8} parent=0 // pred_check
    _
  $region11: #{transformer_forward.8} parent=0 // pred_check_branch
    %19 = sbr.rel (0) target = $region13
  $region12: #{transformer_forward.8} parent=0 // pred_region
    _
  $region13: #{transformer_forward.8} parent=0 // pred_fallthru
    _
  // Predicated region
  $region14: #{transformer_forward.8} parent=0 // pred_check
    _
  $region15: #{transformer_forward.8} parent=0 // pred_check_branch
    %21 = sbr.rel (0) target = $region17
  $region16: #{transformer_forward.8} parent=0 // pred_region
    _
  $region17: #{transformer_forward.8} parent=0 // pred_fallthru
    _
  // Predicated region
  $region18: #{transformer_forward.8} parent=0 // pred_check
    _
  $region19: #{transformer_forward.8} parent=0 // pred_check_branch
    %23 = sbr.rel (0) target = $region21
  $region20: #{transformer_forward.8} parent=0 // pred_region
    _
  $region21: #{transformer_forward.8} parent=0 // pred_fallthru
    _
  // Predicated region
  $region22: #{transformer_forward.8} parent=0 // pred_check
    _
  $region23: #{transformer_forward.8} parent=0 // pred_check_branch
    %25 = sbr.rel (0) target = $region25
  $region24: #{transformer_forward.8} parent=0 // pred_region
    _
  $region25: #{transformer_forward.8} parent=0 // pred_fallthru
    _
  // Predicated region
  $region26: #{transformer_forward.8} parent=0 // pred_check
    _
  $region27: #{transformer_forward.8} parent=0 // pred_check_branch
    %27 = sbr.rel (0) target = $region29
  $region28: #{transformer_forward.8} parent=0 // pred_region
    _
  $region29: #{transformer_forward.8} parent=0 // pred_fallthru
    _
  // Predicated region
  $region30: #{transformer_forward.8} parent=0 // pred_check
    _
  $region31: #{transformer_forward.8} parent=0 // pred_check_branch
    %29 = sbr.rel (0) target = $region33
  $region32: #{transformer_forward.8} parent=0 // pred_region
    _
  $region33: #{transformer_forward.8} parent=0 // pred_fallthru
    _
  // Predicated region
  $region34: #{transformer_forward.8} parent=0 // pred_check
    _
  $region35: #{transformer_forward.8} parent=0 // pred_check_branch
    %31 = sbr.rel (0) target = $region37
  $region36: #{transformer_forward.8} parent=0 // pred_region
    _
  $region37: #{transformer_forward.8} parent=0 // pred_fallthru
    _
  %v33 = vld [vmem:[%s0] sm:$0xff]
  %v34 = vld [vmem:[%s0 + $0x8] sm:$0xff]
  %v35 = vld [vmem:[%s0 + $0x10] sm:$0xff]
  %v36 = vld [vmem:[%s0 + $0x18] sm:$0xff]
  %v37 = vld [vmem:[%s0 + $0x20] sm:$0xff]
  %v38 = vld [vmem:[%s0 + $0x28] sm:$0xff]
  %v39 = vld [vmem:[%s0 + $0x30] sm:$0xff]
  %v40 = vld [vmem:[%s0 + $0x38] sm:$0xff]
  %v41 = vld [vmem:[%s1] sm:$0x1]
  %v42 = vld [vmem:[%s2] sm:$0x1]
  %vm43 = vcmask 261120
  %v44 = vsel %vm43, %v33, 0.0
  %45 = vadd.xlane.f32.xlu0 %v44
  %v46 = vpop.xlane.xlu0 %45
  %v47 = vsel %vm43, %v34, 0.0
  %48 = vadd.xlane.f32.xlu0 %v47
  %v49 = vpop.xlane.xlu0 %48
  %v50 = vsel %vm43, %v35, 0.0
  %51 = vadd.xlane.f32.xlu0 %v50
  %v52 = vpop.xlane.xlu0 %51
  %v53 = vsel %vm43, %v36, 0.0
  %54 = vadd.xlane.f32.xlu0 %v53
  %v55 = vpop.xlane.xlu0 %54
  %v56 = vsel %vm43, %v37, 0.0
  %57 = vadd.xlane.f32.xlu0 %v56
  %v58 = vpop.xlane.xlu0 %57
  %v59 = vsel %vm43, %v38, 0.0
  %60 = vadd.xlane.f32.xlu0 %v59
  %v61 = vpop.xlane.xlu0 %60
  %v62 = vsel %vm43, %v39, 0.0
  %63 = vadd.xlane.f32.xlu0 %v62
  %v64 = vpop.xlane.xlu0 %63
  %v65 = vsel %vm43, %v40, 0.0
  %66 = vadd.xlane.f32.xlu0 %v65
  %v67 = vpop.xlane.xlu0 %66
  %v68 = vrcp.pop 32.0
  %v69 = vmul.f32 %v46, %v68
  %v70 = vmul.f32 %v49, %v68
  %v71 = vmul.f32 %v52, %v68
  %v72 = vmul.f32 %v55, %v68
  %v73 = vmul.f32 %v58, %v68
  %v74 = vmul.f32 %v61, %v68
  %v75 = vmul.f32 %v64, %v68
  %v76 = vmul.f32 %v67, %v68
  %v77 = vsub.f32 %v33, %v69
  %v78 = vsub.f32 %v34, %v70
  %v79 = vsub.f32 %v35, %v71
  %v80 = vsub.f32 %v36, %v72
  %v81 = vsub.f32 %v37, %v73
  %v82 = vsub.f32 %v38, %v74
  %v83 = vsub.f32 %v39, %v75
  %v84 = vsub.f32 %v40, %v76
  %v85 = vmul.f32 %v77, %v77
  %v86 = vmul.f32 %v78, %v78
  %v87 = vmul.f32 %v79, %v79
  %v88 = vmul.f32 %v80, %v80
  %v89 = vmul.f32 %v81, %v81
  %v90 = vmul.f32 %v82, %v82
  %v91 = vmul.f32 %v83, %v83
  %v92 = vmul.f32 %v84, %v84
  %v93 = vsel %vm43, %v85, 0.0
  %94 = vadd.xlane.f32.xlu0 %v93
  %v95 = vpop.xlane.xlu0 %94
  %v96 = vsel %vm43, %v86, 0.0
  %97 = vadd.xlane.f32.xlu0 %v96
  %v98 = vpop.xlane.xlu0 %97
  %v99 = vsel %vm43, %v87, 0.0
  %100 = vadd.xlane.f32.xlu0 %v99
  %v101 = vpop.xlane.xlu0 %100
  %v102 = vsel %vm43, %v88, 0.0
  %103 = vadd.xlane.f32.xlu0 %v102
  %v104 = vpop.xlane.xlu0 %103
  %v105 = vsel %vm43, %v89, 0.0
  %106 = vadd.xlane.f32.xlu0 %v105
  %v107 = vpop.xlane.xlu0 %106
  %v108 = vsel %vm43, %v90, 0.0
  %109 = vadd.xlane.f32.xlu0 %v108
  %v110 = vpop.xlane.xlu0 %109
  %v111 = vsel %vm43, %v91, 0.0
  %112 = vadd.xlane.f32.xlu0 %v111
  %v113 = vpop.xlane.xlu0 %112
  %v114 = vsel %vm43, %v92, 0.0
  %115 = vadd.xlane.f32.xlu0 %v114
  %v116 = vpop.xlane.xlu0 %115
  %v117 = vmul.f32 %v95, %v68
  %v118 = vmul.f32 %v98, %v68
  %v119 = vmul.f32 %v101, %v68
  %v120 = vmul.f32 %v104, %v68
  %v121 = vmul.f32 %v107, %v68
  %v122 = vmul.f32 %v110, %v68
  %v123 = vmul.f32 %v113, %v68
  %v124 = vmul.f32 %v116, %v68
  %v125 = vadd.f32 %v117, 1e-05
  %v126 = vadd.f32 %v118, 1e-05
  %v127 = vadd.f32 %v119, 1e-05
  %v128 = vadd.f32 %v120, 1e-05
  %v129 = vadd.f32 %v121, 1e-05
  %v130 = vadd.f32 %v122, 1e-05
  %v131 = vadd.f32 %v123, 1e-05
  %v132 = vadd.f32 %v124, 1e-05
  %v133 = vrsqrt.pop %v125
  %v134 = vrsqrt.pop %v126
  %v135 = vrsqrt.pop %v127
  %v136 = vrsqrt.pop %v128
  %v137 = vrsqrt.pop %v129
  %v138 = vrsqrt.pop %v130
  %v139 = vrsqrt.pop %v131
  %v140 = vrsqrt.pop %v132
  %v141 = vmul.f32 %v77, %v133
  %v142 = vmul.f32 %v78, %v134
  %v143 = vmul.f32 %v79, %v135
  %v144 = vmul.f32 %v80, %v136
  %v145 = vmul.f32 %v81, %v137
  %v146 = vmul.f32 %v82, %v138
  %v147 = vmul.f32 %v83, %v139
  %v148 = vmul.f32 %v84, %v140
  %v150 = vlaneseq
  %v151 = vshrl.u32 %v150, 7
  %v152 = vsub.s32 0, %v151
  %v153 = vrot.slane %v41, %v152
  %v155 = vmul.f32 %v141, %v153
  %v156 = vmul.f32 %v142, %v153
  %v157 = vmul.f32 %v143, %v153
  %v158 = vmul.f32 %v144, %v153
  %v159 = vmul.f32 %v145, %v153
  %v160 = vmul.f32 %v146, %v153
  %v161 = vmul.f32 %v147, %v153
  %v162 = vmul.f32 %v148, %v153
  %v164 = vlaneseq
  %v165 = vshrl.u32 %v164, 7
  %v166 = vsub.s32 0, %v165
  %v167 = vrot.slane %v42, %v166
  %v169 = vadd.f32 %v155, %v167
  %v170 = vadd.f32 %v156, %v167
  %v171 = vadd.f32 %v157, %v167
  %v172 = vadd.f32 %v158, %v167
  %v173 = vadd.f32 %v159, %v167
  %v174 = vadd.f32 %v160, %v167
  %v175 = vadd.f32 %v161, %v167
  %v176 = vadd.f32 %v162, %v167
  %v177 = vpack.c.bf16 %v170, %v169
  %v178 = vpack.c.bf16 %v172, %v171
  %v179 = vpack.c.bf16 %v174, %v173
  %v180 = vpack.c.bf16 %v176, %v175
  %v181 = vld [vmem:[%s3] sm:$0xf]
  %v182 = vld [vmem:[%s3 + $0x4] sm:$0xf]
  %v183 = vld [vmem:[%s3 + $0x8] sm:$0xf]
  %v184 = vld [vmem:[%s3 + $0xc] sm:$0xf]
  %v185 = vld [vmem:[%s4] sm:$0x1]
  %v187 = vlaneseq
  %v188 = vshrl.u32 %v187, 7
  %v189 = vsub.s32 0, %v188
  %v190 = vrot.slane %v185, %v189
  %v196 = vunpack.c.l.b16 %v181
  %v197 = vunpack.c.l.b16 %v182
  %v198 = vunpack.c.l.b16 %v183
  %v199 = vunpack.c.l.b16 %v184
  %v200 = vpack.c.b16 %v197, %v196
  %v201 = vpack.c.b16 %v199, %v198
  %v205 = vsel %vm43, %v177, 0
  %v208 = vsel %vm43, %v178, 0
  %v211 = vsel %vm43, %v179, 0
  %v214 = vsel %vm43, %v180, 0
  %216 = vmatprep.subr.bf16.mxu0 0
  %217 = vmatpush1.bf16.msra.mxu0 %v200
  %218 = vmatprep.subr.bf16.mxu0 0
  %219 = vmatpush1.bf16.msra.mxu0 %v201
  %220 = vmatprep.subr.bf16.mxu0 0
  %221 = vmatpush1.bf16.msra.mxu0 0
  %222 = vmatprep.subr.bf16.mxu0 0
  %223 = vmatpush1.bf16.msra.mxu0 0
  %224 = vmatprep.subr.bf16.mxu0 0
  %225 = vmatpush1.bf16.msra.mxu0 0
  %226 = vmatprep.subr.bf16.mxu0 0
  %227 = vmatpush1.bf16.msra.mxu0 0
  %228 = vmatprep.subr.bf16.mxu0 0
  %229 = vmatpush1.bf16.msra.mxu0 0
  %230 = vmatprep.subr.bf16.mxu0 0
  %231 = vmatpush1.bf16.msra.mxu0 0
  %232 = vmatprep.subr.bf16.mxu0 0
  %233 = vmatpush1.bf16.msra.mxu0 0
  %234 = vmatprep.subr.bf16.mxu0 0
  %235 = vmatpush1.bf16.msra.mxu0 0
  %236 = vmatprep.subr.bf16.mxu0 0
  %237 = vmatpush1.bf16.msra.mxu0 0
  %238 = vmatprep.subr.bf16.mxu0 0
  %239 = vmatpush1.bf16.msra.mxu0 0
  %240 = vmatprep.subr.bf16.mxu0 0
  %241 = vmatpush1.bf16.msra.mxu0 0
  %242 = vmatprep.subr.bf16.mxu0 0
  %243 = vmatpush1.bf16.msra.mxu0 0
  %244 = vmatprep.subr.bf16.mxu0 0
  %245 = vmatpush1.bf16.msra.mxu0 0
  %246 = vmatprep.subr.bf16.mxu0 0
  %247 = vmatpush1.bf16.msra.mxu0 0
  %248 = vmatprep.mubr.bf16.mxu0 0
  %249 = vmatmul.mubr.bf16.gmra.mrb[0].mxu0 %v205
  %v250 = vpop.f32.mrb[0].mxu0
  %v251 = vadd.f32 %v190, %v250
  %v252 = vpop.f32.mrb[0].mxu0
  %v253 = vpop.f32.mrb[0].mxu0
  %v254 = vadd.f32 %v190, %v253
  %v255 = vpop.f32.mrb[0].mxu0
  %256 = vmatprep.mubr.bf16.mxu0 0
  %257 = vmatmul.mubr.bf16.gmra.mrb[0].mxu0 %v208
  %v258 = vpop.f32.mrb[0].mxu0
  %v259 = vadd.f32 %v190, %v258
  %v260 = vpop.f32.mrb[0].mxu0
  %v261 = vpop.f32.mrb[0].mxu0
  %v262 = vadd.f32 %v190, %v261
  %v263 = vpop.f32.mrb[0].mxu0
  %264 = vmatprep.mubr.bf16.mxu0 0
  %265 = vmatmul.mubr.bf16.gmra.mrb[0].mxu0 %v211
  %v266 = vpop.f32.mrb[0].mxu0
  %v267 = vadd.f32 %v190, %v266
  %v268 = vpop.f32.mrb[0].mxu0
  %v269 = vpop.f32.mrb[0].mxu0
  %v270 = vadd.f32 %v190, %v269
  %v271 = vpop.f32.mrb[0].mxu0
  %272 = vmatprep.mubr.bf16.mxu0 0
  %273 = vmatmul.mubr.bf16.gmra.mrb[0].mxu0 %v214
  %v274 = vpop.f32.mrb[0].mxu0
  %v275 = vadd.f32 %v190, %v274
  %v276 = vpop.f32.mrb[0].mxu0
  %v277 = vpop.f32.mrb[0].mxu0
  %v278 = vadd.f32 %v190, %v277
  %v279 = vpop.f32.mrb[0].mxu0
  %280 = vdwg.mxu0
  %v281 = vpack.c.bf16 %v254, %v251
  %v282 = vpack.c.bf16 %v262, %v259
  %v283 = vpack.c.bf16 %v270, %v267
  %v284 = vpack.c.bf16 %v278, %v275
  %v285 = vld [vmem:[%s5] sm:$0xf]
  %v286 = vld [vmem:[%s6] sm:$0x1]
  %v288 = vlaneseq
  %v289 = vshrl.u32 %v288, 7
  %v290 = vsub.s32 0, %v289
  %v291 = vrot.slane %v286, %v290
  %vm293 = vcmask 64512
  %v295 = vsel %vm293, %v281, 0
  %v298 = vsel %vm293, %v282, 0
  %v301 = vsel %vm293, %v283, 0
  %v304 = vsel %vm293, %v284, 0
  %vm306 = vcmask 1043456
  %v308 = vsel %vm306, %v285, 0
  %310 = vmatprep.subr.bf16.mxu0 0
  %311 = vmatpush1.bf16.msra.mxu0 %v308
  %312 = vmatprep.subr.bf16.mxu0 0
  %313 = vmatpush1.bf16.msra.mxu0 0
  %314 = vmatprep.subr.bf16.mxu0 0
  %315 = vmatpush1.bf16.msra.mxu0 0
  %316 = vmatprep.subr.bf16.mxu0 0
  %317 = vmatpush1.bf16.msra.mxu0 0
  %318 = vmatprep.subr.bf16.mxu0 0
  %319 = vmatpush1.bf16.msra.mxu0 0
  %320 = vmatprep.subr.bf16.mxu0 0
  %321 = vmatpush1.bf16.msra.mxu0 0
  %322 = vmatprep.subr.bf16.mxu0 0
  %323 = vmatpush1.bf16.msra.mxu0 0
  %324 = vmatprep.subr.bf16.mxu0 0
  %325 = vmatpush1.bf16.msra.mxu0 0
  %326 = vmatprep.subr.bf16.mxu0 0
  %327 = vmatpush1.bf16.msra.mxu0 0
  %328 = vmatprep.subr.bf16.mxu0 0
  %329 = vmatpush1.bf16.msra.mxu0 0
  %330 = vmatprep.subr.bf16.mxu0 0
  %331 = vmatpush1.bf16.msra.mxu0 0
  %332 = vmatprep.subr.bf16.mxu0 0
  %333 = vmatpush1.bf16.msra.mxu0 0
  %334 = vmatprep.subr.bf16.mxu0 0
  %335 = vmatpush1.bf16.msra.mxu0 0
  %336 = vmatprep.subr.bf16.mxu0 0
  %337 = vmatpush1.bf16.msra.mxu0 0
  %338 = vmatprep.subr.bf16.mxu0 0
  %339 = vmatpush1.bf16.msra.mxu0 0
  %340 = vmatprep.subr.bf16.mxu0 0
  %341 = vmatpush1.bf16.msra.mxu0 0
  %342 = vmatprep.mubr.bf16.mxu0 0
  %343 = vmatmul.mubr.bf16.gmra.mrb[0].mxu0 %v295
  %v344 = vpop.f32.mrb[0].mxu0
  %v345 = vadd.f32 %v291, %v344
  %v346 = vpop.f32.mrb[0].mxu0
  %v347 = vpop.f32.mrb[0].mxu0
  %v348 = vadd.f32 %v291, %v347
  %v349 = vpop.f32.mrb[0].mxu0
  %350 = vmatprep.mubr.bf16.mxu0 0
  %351 = vmatmul.mubr.bf16.gmra.mrb[0].mxu0 %v298
  %v352 = vpop.f32.mrb[0].mxu0
  %v353 = vadd.f32 %v291, %v352
  %v354 = vpop.f32.mrb[0].mxu0
  %v355 = vpop.f32.mrb[0].mxu0
  %v356 = vadd.f32 %v291, %v355
  %v357 = vpop.f32.mrb[0].mxu0
  %358 = vmatprep.mubr.bf16.mxu0 0
  %359 = vmatmul.mubr.bf16.gmra.mrb[0].mxu0 %v301
  %v360 = vpop.f32.mrb[0].mxu0
  %v361 = vadd.f32 %v291, %v360
  %v362 = vpop.f32.mrb[0].mxu0
  %v363 = vpop.f32.mrb[0].mxu0
  %v364 = vadd.f32 %v291, %v363
  %v365 = vpop.f32.mrb[0].mxu0
  %366 = vmatprep.mubr.bf16.mxu0 0
  %367 = vmatmul.mubr.bf16.gmra.mrb[0].mxu0 %v304
  %v368 = vpop.f32.mrb[0].mxu0
  %v369 = vadd.f32 %v291, %v368
  %v370 = vpop.f32.mrb[0].mxu0
  %v371 = vpop.f32.mrb[0].mxu0
  %v372 = vadd.f32 %v291, %v371
  %v373 = vpop.f32.mrb[0].mxu0
  %374 = vdwg.mxu0
  %v375 = vadd.f32 %v169, %v345
  %v376 = vadd.f32 %v170, %v348
  %v377 = vadd.f32 %v171, %v353
  %v378 = vadd.f32 %v172, %v356
  %v379 = vadd.f32 %v173, %v361
  %v380 = vadd.f32 %v174, %v364
  %v381 = vadd.f32 %v175, %v369
  %v382 = vadd.f32 %v176, %v372
  %v383 = vpack.c.bf16 %v376, %v375
  %v384 = vpack.c.bf16 %v378, %v377
  %v385 = vpack.c.bf16 %v380, %v379
  %v386 = vpack.c.bf16 %v382, %v381
  %v387 = vld [vmem:[%s7] sm:$0xf]
  %v388 = vld [vmem:[%s7 + $0x4] sm:$0xf]
  %v389 = vld [vmem:[%s7 + $0x8] sm:$0xf]
  %v390 = vld [vmem:[%s7 + $0xc] sm:$0xf]
  %v391 = vld [vmem:[%s8] sm:$0x1]
  %v393 = vlaneseq
  %v394 = vshrl.u32 %v393, 7
  %v395 = vsub.s32 0, %v394
  %v396 = vrot.slane %v391, %v395
  %v402 = vunpack.c.l.b16 %v387
  %v403 = vunpack.c.l.b16 %v388
  %v404 = vunpack.c.l.b16 %v389
  %v405 = vunpack.c.l.b16 %v390
  %v406 = vpack.c.b16 %v403, %v402
  %v407 = vpack.c.b16 %v405, %v404
  %v411 = vsel %vm43, %v383, 0
  %v414 = vsel %vm43, %v384, 0
  %v417 = vsel %vm43, %v385, 0
  %v420 = vsel %vm43, %v386, 0
  %422 = vmatprep.subr.bf16.mxu0 0
  %423 = vmatpush1.bf16.msra.mxu0 %v406
  %424 = vmatprep.subr.bf16.mxu0 0
  %425 = vmatpush1.bf16.msra.mxu0 %v407
  %426 = vmatprep.subr.bf16.mxu0 0
  %427 = vmatpush1.bf16.msra.mxu0 0
  %428 = vmatprep.subr.bf16.mxu0 0
  %429 = vmatpush1.bf16.msra.mxu0 0
  %430 = vmatprep.subr.bf16.mxu0 0
  %431 = vmatpush1.bf16.msra.mxu0 0
  %432 = vmatprep.subr.bf16.mxu0 0
  %433 = vmatpush1.bf16.msra.mxu0 0
  %434 = vmatprep.subr.bf16.mxu0 0
  %435 = vmatpush1.bf16.msra.mxu0 0
  %436 = vmatprep.subr.bf16.mxu0 0
  %437 = vmatpush1.bf16.msra.mxu0 0
  %438 = vmatprep.subr.bf16.mxu0 0
  %439 = vmatpush1.bf16.msra.mxu0 0
  %440 = vmatprep.subr.bf16.mxu0 0
  %441 = vmatpush1.bf16.msra.mxu0 0
  %442 = vmatprep.subr.bf16.mxu0 0
  %443 = vmatpush1.bf16.msra.mxu0 0
  %444 = vmatprep.subr.bf16.mxu0 0
  %445 = vmatpush1.bf16.msra.mxu0 0
  %446 = vmatprep.subr.bf16.mxu0 0
  %447 = vmatpush1.bf16.msra.mxu0 0
  %448 = vmatprep.subr.bf16.mxu0 0
  %449 = vmatpush1.bf16.msra.mxu0 0
  %450 = vmatprep.subr.bf16.mxu0 0
  %451 = vmatpush1.bf16.msra.mxu0 0
  %452 = vmatprep.subr.bf16.mxu0 0
  %453 = vmatpush1.bf16.msra.mxu0 0
  %454 = vmatprep.mubr.bf16.mxu0 0
  %455 = vmatmul.mubr.bf16.gmra.mrb[0].mxu0 %v411
  %v456 = vpop.f32.mrb[0].mxu0
  %v457 = vadd.f32 %v396, %v456
  %v458 = vpop.f32.mrb[0].mxu0
  %v459 = vpop.f32.mrb[0].mxu0
  %v460 = vadd.f32 %v396, %v459
  %v461 = vpop.f32.mrb[0].mxu0
  %462 = vmatprep.mubr.bf16.mxu0 0
  %463 = vmatmul.mubr.bf16.gmra.mrb[0].mxu0 %v414
  %v464 = vpop.f32.mrb[0].mxu0
  %v465 = vadd.f32 %v396, %v464
  %v466 = vpop.f32.mrb[0].mxu0
  %v467 = vpop.f32.mrb[0].mxu0
  %v468 = vadd.f32 %v396, %v467
  %v469 = vpop.f32.mrb[0].mxu0
  %470 = vmatprep.mubr.bf16.mxu0 0
  %471 = vmatmul.mubr.bf16.gmra.mrb[0].mxu0 %v417
  %v472 = vpop.f32.mrb[0].mxu0
  %v473 = vadd.f32 %v396, %v472
  %v474 = vpop.f32.mrb[0].mxu0
  %v475 = vpop.f32.mrb[0].mxu0
  %v476 = vadd.f32 %v396, %v475
  %v477 = vpop.f32.mrb[0].mxu0
  %478 = vmatprep.mubr.bf16.mxu0 0
  %479 = vmatmul.mubr.bf16.gmra.mrb[0].mxu0 %v420
  %v480 = vpop.f32.mrb[0].mxu0
  %v481 = vadd.f32 %v396, %v480
  %v482 = vpop.f32.mrb[0].mxu0
  %v483 = vpop.f32.mrb[0].mxu0
  %v484 = vadd.f32 %v396, %v483
  %v485 = vpop.f32.mrb[0].mxu0
  %486 = vdwg.mxu0
  %v487 = vpack.c.bf16 %v460, %v457
  %v488 = vpack.c.bf16 %v468, %v465
  %v489 = vpack.c.bf16 %v476, %v473
  %v490 = vpack.c.bf16 %v484, %v481
  %v495 = vunpack.c.l.b16 %v487
  %v496 = vunpack.c.h.b16 %v487
  %v497 = vunpack.c.l.b16 %v488
  %v498 = vunpack.c.h.b16 %v488
  %v499 = vunpack.c.l.b16 %v489
  %v500 = vunpack.c.h.b16 %v489
  %v501 = vunpack.c.l.b16 %v490
  %v502 = vunpack.c.h.b16 %v490
  %v503 = vpack.c.b16 %v495, %v495
  %v504 = vpack.c.b16 %v496, %v496
  %v505 = vpack.c.b16 %v497, %v497
  %v506 = vpack.c.b16 %v498, %v498
  %v507 = vpack.c.b16 %v499, %v499
  %v508 = vpack.c.b16 %v500, %v500
  %v509 = vpack.c.b16 %v501, %v501
  %v510 = vpack.c.b16 %v502, %v502
  %vm519 = vcmask 781312
  %520 = vst.msk [vmem:[%s9] sm:$0xf] %vm519, %v503
  %521 = vst.msk [vmem:[%s9 + $0x4] sm:$0xf] %vm519, %v504
  %522 = vst.msk [vmem:[%s9 + $0x8] sm:$0xf] %vm519, %v505
  %523 = vst.msk [vmem:[%s9 + $0xc] sm:$0xf] %vm519, %v506
  %524 = vst.msk [vmem:[%s9 + $0x10] sm:$0xf] %vm519, %v507
  %525 = vst.msk [vmem:[%s9 + $0x14] sm:$0xf] %vm519, %v508
  %526 = vst.msk [vmem:[%s9 + $0x18] sm:$0xf] %vm519, %v509
  %527 = vst.msk [vmem:[%s9 + $0x1c] sm:$0xf] %vm519, %v510
  // Predicated region
  $region38: #{transformer_forward.8} parent=0 // pred_check
    _
  $region39: #{transformer_forward.8} parent=0 // pred_check_branch
    %529 = sbr.rel (0) target = $region41
  $region40: #{transformer_forward.8} parent=0 // pred_region
    _
  $region41: #{transformer_forward.8} parent=0 // pred_fallthru
    _
  // Predicated region
  $region42: #{transformer_forward.8} parent=0 // pred_check
    _
  $region43: #{transformer_forward.8} parent=0 // pred_check_branch
    %531 = sbr.rel (0) target = $region45
  $region44: #{transformer_forward.8} parent=0 // pred_region
    _
  $region45: #{transformer_forward.8} parent=0 // pred_fallthru
    _

// kernel: transformer_forward.10
$region0: #{transformer_forward.10}
  #allocation0 [shape = 'u32[]', space=smem, size = 0x4, offset = 0x4, fixed_abs, tag = 'smem constant byte address 0x4 - core index']
  #allocation1 [shape = 'u32[144,128]{1,0:T(1,128)}', space=vmem, size = 0x12000, scoped, tag = 'internal scratch']
  %s0 = inlined_call_operand.vmem [shape: bf16[64,32], index: 0, kind: input, shape index: {}]
  %s1 = inlined_call_operand.vmem [shape: f32[64,32], index: 1, kind: input, shape index: {}]
  %s2 = inlined_call_operand.vmem [shape: bf16[32,32], index: 2, kind: input, shape index: {}]
  %s3 = inlined_call_operand.vmem [shape: f32[1,32], index: 3, kind: input, shape index: {}]
  %s4 = inlined_call_operand.vmem [shape: bf16[32,8], index: 4, kind: input, shape index: {}]
  %s5 = inlined_call_operand.vmem [shape: f32[1,8], index: 5, kind: input, shape index: {}]
  %s6 = inlined_call_operand.vmem [shape: bf16[8,32], index: 6, kind: input, shape index: {}]
  %s7 = inlined_call_operand.vmem [shape: f32[1,32], index: 7, kind: input, shape index: {}]
  %s8 = inlined_call_operand.vmem [shape: f32[64,32], index: 8, kind: output, shape index: {}]
  %s9 = sld [smem:[#allocation0]]
  $region42: #{transformer_forward.10} parent=0
    _
  %s11 = ssub.s32 1, %s9
  %s12 = scalar_select 0, %s11, %s9
  // Predicated region
  $region2: #{transformer_forward.10} parent=0 // pred_check
    _
  $region3: #{transformer_forward.10} parent=0 // pred_check_branch
    %14 = sbr.rel (0) target = $region5
  $region4: #{transformer_forward.10} parent=0 // pred_region
    _
  $region5: #{transformer_forward.10} parent=0 // pred_fallthru
    _
  // Predicated region
  $region6: #{transformer_forward.10} parent=0 // pred_check
    _
  $region7: #{transformer_forward.10} parent=0 // pred_check_branch
    %16 = sbr.rel (0) target = $region9
  $region8: #{transformer_forward.10} parent=0 // pred_region
    _
  $region9: #{transformer_forward.10} parent=0 // pred_fallthru
    _
  // Predicated region
  $region10: #{transformer_forward.10} parent=0 // pred_check
    _
  $region11: #{transformer_forward.10} parent=0 // pred_check_branch
    %18 = sbr.rel (0) target = $region13
  $region12: #{transformer_forward.10} parent=0 // pred_region
    _
  $region13: #{transformer_forward.10} parent=0 // pred_fallthru
    _
  // Predicated region
  $region14: #{transformer_forward.10} parent=0 // pred_check
    _
  $region15: #{transformer_forward.10} parent=0 // pred_check_branch
    %20 = sbr.rel (0) target = $region17
  $region16: #{transformer_forward.10} parent=0 // pred_region
    _
  $region17: #{transformer_forward.10} parent=0 // pred_fallthru
    _
  // Predicated region
  $region18: #{transformer_forward.10} parent=0 // pred_check
    _
  $region19: #{transformer_forward.10} parent=0 // pred_check_branch
    %22 = sbr.rel (0) target = $region21
  $region20: #{transformer_forward.10} parent=0 // pred_region
    _
  $region21: #{transformer_forward.10} parent=0 // pred_fallthru
    _
  // Predicated region
  $region22: #{transformer_forward.10} parent=0 // pred_check
    _
  $region23: #{transformer_forward.10} parent=0 // pred_check_branch
    %24 = sbr.rel (0) target = $region25
  $region24: #{transformer_forward.10} parent=0 // pred_region
    _
  $region25: #{transformer_forward.10} parent=0 // pred_fallthru
    _
  // Predicated region
  $region26: #{transformer_forward.10} parent=0 // pred_check
    _
  $region27: #{transformer_forward.10} parent=0 // pred_check_branch
    %26 = sbr.rel (0) target = $region29
  $region28: #{transformer_forward.10} parent=0 // pred_region
    _
  $region29: #{transformer_forward.10} parent=0 // pred_fallthru
    _
  // Predicated region
  $region30: #{transformer_forward.10} parent=0 // pred_check
    _
  $region31: #{transformer_forward.10} parent=0 // pred_check_branch
    %28 = sbr.rel (0) target = $region33
  $region32: #{transformer_forward.10} parent=0 // pred_region
    _
  $region33: #{transformer_forward.10} parent=0 // pred_fallthru
    _
  %v30 = vld [vmem:[%s0] sm:$0xf]
  %v31 = vld [vmem:[%s0 + $0x4] sm:$0xf]
  %v32 = vld [vmem:[%s0 + $0x8] sm:$0xf]
  %v33 = vld [vmem:[%s0 + $0xc] sm:$0xf]
  %v34 = vld [vmem:[%s0 + $0x10] sm:$0xf]
  %v35 = vld [vmem:[%s0 + $0x14] sm:$0xf]
  %v36 = vld [vmem:[%s0 + $0x18] sm:$0xf]
  %v37 = vld [vmem:[%s0 + $0x1c] sm:$0xf]
  %v38 = vld [vmem:[%s2] sm:$0xf]
  %v39 = vld [vmem:[%s2 + $0x4] sm:$0xf]
  %v40 = vld [vmem:[%s2 + $0x8] sm:$0xf]
  %v41 = vld [vmem:[%s2 + $0xc] sm:$0xf]
  %v42 = vld [vmem:[%s3] sm:$0x1]
  %v44 = vlaneseq
  %v45 = vshrl.u32 %v44, 7
  %v46 = vsub.s32 0, %v45
  %v47 = vrot.slane %v42, %v46
  %v57 = vunpack.c.l.b16 %v30
  %v58 = vunpack.c.l.b16 %v31
  %v59 = vunpack.c.l.b16 %v32
  %v60 = vunpack.c.l.b16 %v33
  %v61 = vunpack.c.l.b16 %v34
  %v62 = vunpack.c.l.b16 %v35
  %v63 = vunpack.c.l.b16 %v36
  %v64 = vunpack.c.l.b16 %v37
  %v65 = vpack.c.b16 %v58, %v57
  %v66 = vpack.c.b16 %v60, %v59
  %v67 = vpack.c.b16 %v62, %v61
  %v68 = vpack.c.b16 %v64, %v63
  %v73 = vunpack.c.l.b16 %v38
  %v74 = vunpack.c.l.b16 %v39
  %v75 = vunpack.c.l.b16 %v40
  %v76 = vunpack.c.l.b16 %v41
  %v77 = vpack.c.b16 %v74, %v73
  %v78 = vpack.c.b16 %v76, %v75
  %vm81 = vcmask 261120
  %v83 = vsel %vm81, %v65, 0
  %v86 = vsel %vm81, %v66, 0
  %v89 = vsel %vm81, %v67, 0
  %v92 = vsel %vm81, %v68, 0
  %94 = vmatprep.subr.bf16.mxu0 0
  %95 = vmatpush1.bf16.msra.mxu0 %v77
  %96 = vmatprep.subr.bf16.mxu0 0
  %97 = vmatpush1.bf16.msra.mxu0 %v78
  %98 = vmatprep.subr.bf16.mxu0 0
  %99 = vmatpush1.bf16.msra.mxu0 0
  %100 = vmatprep.subr.bf16.mxu0 0
  %101 = vmatpush1.bf16.msra.mxu0 0
  %102 = vmatprep.subr.bf16.mxu0 0
  %103 = vmatpush1.bf16.msra.mxu0 0
  %104 = vmatprep.subr.bf16.mxu0 0
  %105 = vmatpush1.bf16.msra.mxu0 0
  %106 = vmatprep.subr.bf16.mxu0 0
  %107 = vmatpush1.bf16.msra.mxu0 0
  %108 = vmatprep.subr.bf16.mxu0 0
  %109 = vmatpush1.bf16.msra.mxu0 0
  %110 = vmatprep.subr.bf16.mxu0 0
  %111 = vmatpush1.bf16.msra.mxu0 0
  %112 = vmatprep.subr.bf16.mxu0 0
  %113 = vmatpush1.bf16.msra.mxu0 0
  %114 = vmatprep.subr.bf16.mxu0 0
  %115 = vmatpush1.bf16.msra.mxu0 0
  %116 = vmatprep.subr.bf16.mxu0 0
  %117 = vmatpush1.bf16.msra.mxu0 0
  %118 = vmatprep.subr.bf16.mxu0 0
  %119 = vmatpush1.bf16.msra.mxu0 0
  %120 = vmatprep.subr.bf16.mxu0 0
  %121 = vmatpush1.bf16.msra.mxu0 0
  %122 = vmatprep.subr.bf16.mxu0 0
  %123 = vmatpush1.bf16.msra.mxu0 0
  %124 = vmatprep.subr.bf16.mxu0 0
  %125 = vmatpush1.bf16.msra.mxu0 0
  %126 = vmatprep.mubr.bf16.mxu0 0
  %127 = vmatmul.mubr.bf16.gmra.mrb[0].mxu0 %v83
  %v128 = vpop.f32.mrb[0].mxu0
  %v129 = vadd.f32 %v47, %v128
  %v130 = vpop.f32.mrb[0].mxu0
  %v131 = vpop.f32.mrb[0].mxu0
  %v132 = vadd.f32 %v47, %v131
  %v133 = vpop.f32.mrb[0].mxu0
  %134 = vmatprep.mubr.bf16.mxu0 0
  %135 = vmatmul.mubr.bf16.gmra.mrb[0].mxu0 %v86
  %v136 = vpop.f32.mrb[0].mxu0
  %v137 = vadd.f32 %v47, %v136
  %v138 = vpop.f32.mrb[0].mxu0
  %v139 = vpop.f32.mrb[0].mxu0
  %v140 = vadd.f32 %v47, %v139
  %v141 = vpop.f32.mrb[0].mxu0
  %142 = vmatprep.mubr.bf16.mxu0 0
  %143 = vmatmul.mubr.bf16.gmra.mrb[0].mxu0 %v89
  %v144 = vpop.f32.mrb[0].mxu0
  %v145 = vadd.f32 %v47, %v144
  %v146 = vpop.f32.mrb[0].mxu0
  %v147 = vpop.f32.mrb[0].mxu0
  %v148 = vadd.f32 %v47, %v147
  %v149 = vpop.f32.mrb[0].mxu0
  %150 = vmatprep.mubr.bf16.mxu0 0
  %151 = vmatmul.mubr.bf16.gmra.mrb[0].mxu0 %v92
  %v152 = vpop.f32.mrb[0].mxu0
  %v153 = vadd.f32 %v47, %v152
  %v154 = vpop.f32.mrb[0].mxu0
  %v155 = vpop.f32.mrb[0].mxu0
  %v156 = vadd.f32 %v47, %v155
  %v157 = vpop.f32.mrb[0].mxu0
  %158 = vdwg.mxu0
  %v159 = vpack.c.bf16 %v132, %v129
  %v160 = vpack.c.bf16 %v140, %v137
  %v161 = vpack.c.bf16 %v148, %v145
  %v162 = vpack.c.bf16 %v156, %v153
  %v163 = vld [vmem:[%s4] sm:$0xf]
  %v164 = vld [vmem:[%s4 + $0x4] sm:$0xf]
  %v165 = vld [vmem:[%s4 + $0x8] sm:$0xf]
  %v166 = vld [vmem:[%s4 + $0xc] sm:$0xf]
  %v167 = vld [vmem:[%s5] sm:$0x1]
  %v169 = vlaneseq
  %v170 = vshrl.u32 %v169, 7
  %v171 = vsub.s32 0, %v170
  %v172 = vrot.slane %v167, %v171
  %v178 = vunpack.c.l.b16 %v163
  %v179 = vunpack.c.l.b16 %v164
  %v180 = vunpack.c.l.b16 %v165
  %v181 = vunpack.c.l.b16 %v166
  %v182 = vpack.c.b16 %v179, %v178
  %v183 = vpack.c.b16 %v181, %v180
  %v187 = vsel %vm81, %v159, 0
  %v190 = vsel %vm81, %v160, 0
  %v193 = vsel %vm81, %v161, 0
  %v196 = vsel %vm81, %v162, 0
  %198 = vmatprep.subr.bf16.mxu0 0
  %199 = vmatpush1.bf16.msra.mxu0 %v182
  %200 = vmatprep.subr.bf16.mxu0 0
  %201 = vmatpush1.bf16.msra.mxu0 %v183
  %202 = vmatprep.subr.bf16.mxu0 0
  %203 = vmatpush1.bf16.msra.mxu0 0
  %204 = vmatprep.subr.bf16.mxu0 0
  %205 = vmatpush1.bf16.msra.mxu0 0
  %206 = vmatprep.subr.bf16.mxu0 0
  %207 = vmatpush1.bf16.msra.mxu0 0
  %208 = vmatprep.subr.bf16.mxu0 0
  %209 = vmatpush1.bf16.msra.mxu0 0
  %210 = vmatprep.subr.bf16.mxu0 0
  %211 = vmatpush1.bf16.msra.mxu0 0
  %212 = vmatprep.subr.bf16.mxu0 0
  %213 = vmatpush1.bf16.msra.mxu0 0
  %214 = vmatprep.subr.bf16.mxu0 0
  %215 = vmatpush1.bf16.msra.mxu0 0
  %216 = vmatprep.subr.bf16.mxu0 0
  %217 = vmatpush1.bf16.msra.mxu0 0
  %218 = vmatprep.subr.bf16.mxu0 0
  %219 = vmatpush1.bf16.msra.mxu0 0
  %220 = vmatprep.subr.bf16.mxu0 0
  %221 = vmatpush1.bf16.msra.mxu0 0
  %222 = vmatprep.subr.bf16.mxu0 0
  %223 = vmatpush1.bf16.msra.mxu0 0
  %224 = vmatprep.subr.bf16.mxu0 0
  %225 = vmatpush1.bf16.msra.mxu0 0
  %226 = vmatprep.subr.bf16.mxu0 0
  %227 = vmatpush1.bf16.msra.mxu0 0
  %228 = vmatprep.subr.bf16.mxu0 0
  %229 = vmatpush1.bf16.msra.mxu0 0
  %230 = vmatprep.mubr.bf16.mxu0 0
  %231 = vmatmul.mubr.bf16.gmra.mrb[0].mxu0 %v187
  %v232 = vpop.f32.mrb[0].mxu0
  %v233 = vadd.f32 %v172, %v232
  %v234 = vpop.f32.mrb[0].mxu0
  %v235 = vpop.f32.mrb[0].mxu0
  %v236 = vadd.f32 %v172, %v235
  %v237 = vpop.f32.mrb[0].mxu0
  %238 = vmatprep.mubr.bf16.mxu0 0
  %239 = vmatmul.mubr.bf16.gmra.mrb[0].mxu0 %v190
  %v240 = vpop.f32.mrb[0].mxu0
  %v241 = vadd.f32 %v172, %v240
  %v242 = vpop.f32.mrb[0].mxu0
  %v243 = vpop.f32.mrb[0].mxu0
  %v244 = vadd.f32 %v172, %v243
  %v245 = vpop.f32.mrb[0].mxu0
  %246 = vmatprep.mubr.bf16.mxu0 0
  %247 = vmatmul.mubr.bf16.gmra.mrb[0].mxu0 %v193
  %v248 = vpop.f32.mrb[0].mxu0
  %v249 = vadd.f32 %v172, %v248
  %v250 = vpop.f32.mrb[0].mxu0
  %v251 = vpop.f32.mrb[0].mxu0
  %v252 = vadd.f32 %v172, %v251
  %v253 = vpop.f32.mrb[0].mxu0
  %254 = vmatprep.mubr.bf16.mxu0 0
  %255 = vmatmul.mubr.bf16.gmra.mrb[0].mxu0 %v196
  %v256 = vpop.f32.mrb[0].mxu0
  %v257 = vadd.f32 %v172, %v256
  %v258 = vpop.f32.mrb[0].mxu0
  %v259 = vpop.f32.mrb[0].mxu0
  %v260 = vadd.f32 %v172, %v259
  %v261 = vpop.f32.mrb[0].mxu0
  %262 = vdwg.mxu0
  %v263 = vpack.c.bf16 %v236, %v233
  %v264 = vpack.c.bf16 %v244, %v241
  %v265 = vpack.c.bf16 %v252, %v249
  %v266 = vpack.c.bf16 %v260, %v257
  %v267 = vld [vmem:[%s6] sm:$0xf]
  %v268 = vld [vmem:[%s7] sm:$0x1]
  %v270 = vlaneseq
  %v271 = vshrl.u32 %v270, 7
  %v272 = vsub.s32 0, %v271
  %v273 = vrot.slane %v268, %v272
  %vm275 = vcmask 64512
  %v277 = vsel %vm275, %v263, 0
  %v280 = vsel %vm275, %v264, 0
  %v283 = vsel %vm275, %v265, 0
  %v286 = vsel %vm275, %v266, 0
  %vm288 = vcmask 1043456
  %v290 = vsel %vm288, %v267, 0
  %292 = vmatprep.subr.bf16.mxu0 0
  %293 = vmatpush1.bf16.msra.mxu0 %v290
  %294 = vmatprep.subr.bf16.mxu0 0
  %295 = vmatpush1.bf16.msra.mxu0 0
  %296 = vmatprep.subr.bf16.mxu0 0
  %297 = vmatpush1.bf16.msra.mxu0 0
  %298 = vmatprep.subr.bf16.mxu0 0
  %299 = vmatpush1.bf16.msra.mxu0 0
  %300 = vmatprep.subr.bf16.mxu0 0
  %301 = vmatpush1.bf16.msra.mxu0 0
  %302 = vmatprep.subr.bf16.mxu0 0
  %303 = vmatpush1.bf16.msra.mxu0 0
  %304 = vmatprep.subr.bf16.mxu0 0
  %305 = vmatpush1.bf16.msra.mxu0 0
  %306 = vmatprep.subr.bf16.mxu0 0
  %307 = vmatpush1.bf16.msra.mxu0 0
  %308 = vmatprep.subr.bf16.mxu0 0
  %309 = vmatpush1.bf16.msra.mxu0 0
  %310 = vmatprep.subr.bf16.mxu0 0
  %311 = vmatpush1.bf16.msra.mxu0 0
  %312 = vmatprep.subr.bf16.mxu0 0
  %313 = vmatpush1.bf16.msra.mxu0 0
  %314 = vmatprep.subr.bf16.mxu0 0
  %315 = vmatpush1.bf16.msra.mxu0 0
  %316 = vmatprep.subr.bf16.mxu0 0
  %317 = vmatpush1.bf16.msra.mxu0 0
  %318 = vmatprep.subr.bf16.mxu0 0
  %319 = vmatpush1.bf16.msra.mxu0 0
  %320 = vmatprep.subr.bf16.mxu0 0
  %321 = vmatpush1.bf16.msra.mxu0 0
  %322 = vmatprep.subr.bf16.mxu0 0
  %323 = vmatpush1.bf16.msra.mxu0 0
  %324 = vmatprep.mubr.bf16.mxu0 0
  %325 = vmatmul.mubr.bf16.gmra.mrb[0].mxu0 %v277
  %v326 = vpop.f32.mrb[0].mxu0
  %v327 = vadd.f32 %v273, %v326
  %v328 = vpop.f32.mrb[0].mxu0
  %v329 = vpop.f32.mrb[0].mxu0
  %v330 = vadd.f32 %v273, %v329
  %v331 = vpop.f32.mrb[0].mxu0
  %332 = vmatprep.mubr.bf16.mxu0 0
  %333 = vmatmul.mubr.bf16.gmra.mrb[0].mxu0 %v280
  %v334 = vpop.f32.mrb[0].mxu0
  %v335 = vadd.f32 %v273, %v334
  %v336 = vpop.f32.mrb[0].mxu0
  %v337 = vpop.f32.mrb[0].mxu0
  %v338 = vadd.f32 %v273, %v337
  %v339 = vpop.f32.mrb[0].mxu0
  %340 = vmatprep.mubr.bf16.mxu0 0
  %341 = vmatmul.mubr.bf16.gmra.mrb[0].mxu0 %v283
  %v342 = vpop.f32.mrb[0].mxu0
  %v343 = vadd.f32 %v273, %v342
  %v344 = vpop.f32.mrb[0].mxu0
  %v345 = vpop.f32.mrb[0].mxu0
  %v346 = vadd.f32 %v273, %v345
  %v347 = vpop.f32.mrb[0].mxu0
  %348 = vmatprep.mubr.bf16.mxu0 0
  %349 = vmatmul.mubr.bf16.gmra.mrb[0].mxu0 %v286
  %v350 = vpop.f32.mrb[0].mxu0
  %v351 = vadd.f32 %v273, %v350
  %v352 = vpop.f32.mrb[0].mxu0
  %v353 = vpop.f32.mrb[0].mxu0
  %v354 = vadd.f32 %v273, %v353
  %v355 = vpop.f32.mrb[0].mxu0
  %356 = vdwg.mxu0
  %v357 = vadd.f32 %v129, %v327
  %v358 = vadd.f32 %v132, %v330
  %v359 = vadd.f32 %v137, %v335
  %v360 = vadd.f32 %v140, %v338
  %v361 = vadd.f32 %v145, %v343
  %v362 = vadd.f32 %v148, %v346
  %v363 = vadd.f32 %v153, %v351
  %v364 = vadd.f32 %v156, %v354
  %v365 = vld [vmem:[%s1] sm:$0xff]
  %v366 = vld [vmem:[%s1 + $0x8] sm:$0xff]
  %v367 = vld [vmem:[%s1 + $0x10] sm:$0xff]
  %v368 = vld [vmem:[%s1 + $0x18] sm:$0xff]
  %v369 = vld [vmem:[%s1 + $0x20] sm:$0xff]
  %v370 = vld [vmem:[%s1 + $0x28] sm:$0xff]
  %v371 = vld [vmem:[%s1 + $0x30] sm:$0xff]
  %v372 = vld [vmem:[%s1 + $0x38] sm:$0xff]
  %v373 = vadd.f32 %v365, %v357
  %v374 = vadd.f32 %v366, %v358
  %v375 = vadd.f32 %v367, %v359
  %v376 = vadd.f32 %v368, %v360
  %v377 = vadd.f32 %v369, %v361
  %v378 = vadd.f32 %v370, %v362
  %v379 = vadd.f32 %v371, %v363
  %v380 = vadd.f32 %v372, %v364
  %381 = vst.msk [vmem:[%s8] sm:$0xff] %vm81, %v373
  %382 = vst.msk [vmem:[%s8 + $0x8] sm:$0xff] %vm81, %v374
  %383 = vst.msk [vmem:[%s8 + $0x10] sm:$0xff] %vm81, %v375
  %384 = vst.msk [vmem:[%s8 + $0x18] sm:$0xff] %vm81, %v376
  %385 = vst.msk [vmem:[%s8 + $0x20] sm:$0xff] %vm81, %v377
  %386 = vst.msk [vmem:[%s8 + $0x28] sm:$0xff] %vm81, %v378
  %387 = vst.msk [vmem:[%s8 + $0x30] sm:$0xff] %vm81, %v379
  %388 = vst.msk [vmem:[%s8 + $0x38] sm:$0xff] %vm81, %v380
  // Predicated region
  $region34: #{transformer_forward.10} parent=0 // pred_check
    _
  $region35: #{transformer_forward.10} parent=0 // pred_check_branch
    %390 = sbr.rel (0) target = $region37
  $region36: #{transformer_forward.10} parent=0 // pred_region
    _
  $region37: #{transformer_forward.10} parent=0 // pred_fallthru
    _
  // Predicated region
  $region38: #{transformer_forward.10} parent=0 // pred_check
    _
  $region39: #{transformer_forward.10} parent=0 // pred_check_branch
    %392 = sbr.rel (0) target = $region41
  $region40: #{transformer_forward.10} parent=0 // pred_region
    _
  $region41: #{transformer_forward.10} parent=0 // pred_fallthru
    _

// kernel: transformer_forward.11
$region0: #{transformer_forward.11}
  #allocation0 [shape = 'u32[]', space=smem, size = 0x4, offset = 0x4, fixed_abs, tag = 'smem constant byte address 0x4 - core index']
  #allocation1 [shape = 'u32[144,128]{1,0:T(1,128)}', space=vmem, size = 0x12000, scoped, tag = 'internal scratch']
  %s0 = inlined_call_operand.vmem [shape: f32[64,32], index: 0, kind: input, shape index: {}]
  %s1 = inlined_call_operand.vmem [shape: f32[1,32], index: 1, kind: input, shape index: {}]
  %s2 = inlined_call_operand.vmem [shape: f32[1,32], index: 2, kind: input, shape index: {}]
  %s3 = inlined_call_operand.vmem [shape: bf16[32,8], index: 3, kind: input, shape index: {}]
  %s4 = inlined_call_operand.vmem [shape: f32[1,8], index: 4, kind: input, shape index: {}]
  %s5 = inlined_call_operand.vmem [shape: bf16[8,32], index: 5, kind: input, shape index: {}]
  %s6 = inlined_call_operand.vmem [shape: f32[1,32], index: 6, kind: input, shape index: {}]
  %s7 = inlined_call_operand.vmem [shape: bf16[32,128], index: 7, kind: input, shape index: {}]
  %s8 = inlined_call_operand.vmem [shape: f32[1,128], index: 8, kind: input, shape index: {}]
  %s9 = inlined_call_operand.vmem [shape: bf16[128,32], index: 9, kind: input, shape index: {}]
  %s10 = inlined_call_operand.vmem [shape: f32[1,32], index: 10, kind: input, shape index: {}]
  %s11 = inlined_call_operand.vmem [shape: f32[64,32], index: 11, kind: output, shape index: {}]
  %s12 = sld [smem:[#allocation0]]
  $region54: #{transformer_forward.11} parent=0
    _
  %s14 = ssub.s32 1, %s12
  %s15 = scalar_select 0, %s14, %s12
  // Predicated region
  $region2: #{transformer_forward.11} parent=0 // pred_check
    _
  $region3: #{transformer_forward.11} parent=0 // pred_check_branch
    %17 = sbr.rel (0) target = $region5
  $region4: #{transformer_forward.11} parent=0 // pred_region
    _
  $region5: #{transformer_forward.11} parent=0 // pred_fallthru
    _
  // Predicated region
  $region6: #{transformer_forward.11} parent=0 // pred_check
    _
  $region7: #{transformer_forward.11} parent=0 // pred_check_branch
    %19 = sbr.rel (0) target = $region9
  $region8: #{transformer_forward.11} parent=0 // pred_region
    _
  $region9: #{transformer_forward.11} parent=0 // pred_fallthru
    _
  // Predicated region
  $region10: #{transformer_forward.11} parent=0 // pred_check
    _
  $region11: #{transformer_forward.11} parent=0 // pred_check_branch
    %21 = sbr.rel (0) target = $region13
  $region12: #{transformer_forward.11} parent=0 // pred_region
    _
  $region13: #{transformer_forward.11} parent=0 // pred_fallthru
    _
  // Predicated region
  $region14: #{transformer_forward.11} parent=0 // pred_check
    _
  $region15: #{transformer_forward.11} parent=0 // pred_check_branch
    %23 = sbr.rel (0) target = $region17
  $region16: #{transformer_forward.11} parent=0 // pred_region
    _
  $region17: #{transformer_forward.11} parent=0 // pred_fallthru
    _
  // Predicated region
  $region18: #{transformer_forward.11} parent=0 // pred_check
    _
  $region19: #{transformer_forward.11} parent=0 // pred_check_branch
    %25 = sbr.rel (0) target = $region21
  $region20: #{transformer_forward.11} parent=0 // pred_region
    _
  $region21: #{transformer_forward.11} parent=0 // pred_fallthru
    _
  // Predicated region
  $region22: #{transformer_forward.11} parent=0 // pred_check
    _
  $region23: #{transformer_forward.11} parent=0 // pred_check_branch
    %27 = sbr.rel (0) target = $region25
  $region24: #{transformer_forward.11} parent=0 // pred_region
    _
  $region25: #{transformer_forward.11} parent=0 // pred_fallthru
    _
  // Predicated region
  $region26: #{transformer_forward.11} parent=0 // pred_check
    _
  $region27: #{transformer_forward.11} parent=0 // pred_check_branch
    %29 = sbr.rel (0) target = $region29
  $region28: #{transformer_forward.11} parent=0 // pred_region
    _
  $region29: #{transformer_forward.11} parent=0 // pred_fallthru
    _
  // Predicated region
  $region30: #{transformer_forward.11} parent=0 // pred_check
    _
  $region31: #{transformer_forward.11} parent=0 // pred_check_branch
    %31 = sbr.rel (0) target = $region33
  $region32: #{transformer_forward.11} parent=0 // pred_region
    _
  $region33: #{transformer_forward.11} parent=0 // pred_fallthru
    _
  // Predicated region
  $region34: #{transformer_forward.11} parent=0 // pred_check
    _
  $region35: #{transformer_forward.11} parent=0 // pred_check_branch
    %33 = sbr.rel (0) target = $region37
  $region36: #{transformer_forward.11} parent=0 // pred_region
    _
  $region37: #{transformer_forward.11} parent=0 // pred_fallthru
    _
  // Predicated region
  $region38: #{transformer_forward.11} parent=0 // pred_check
    _
  $region39: #{transformer_forward.11} parent=0 // pred_check_branch
    %35 = sbr.rel (0) target = $region41
  $region40: #{transformer_forward.11} parent=0 // pred_region
    _
  $region41: #{transformer_forward.11} parent=0 // pred_fallthru
    _
  // Predicated region
  $region42: #{transformer_forward.11} parent=0 // pred_check
    _
  $region43: #{transformer_forward.11} parent=0 // pred_check_branch
    %37 = sbr.rel (0) target = $region45
  $region44: #{transformer_forward.11} parent=0 // pred_region
    _
  $region45: #{transformer_forward.11} parent=0 // pred_fallthru
    _
  %v39 = vld [vmem:[%s0] sm:$0xff]
  %v40 = vld [vmem:[%s0 + $0x8] sm:$0xff]
  %v41 = vld [vmem:[%s0 + $0x10] sm:$0xff]
  %v42 = vld [vmem:[%s0 + $0x18] sm:$0xff]
  %v43 = vld [vmem:[%s0 + $0x20] sm:$0xff]
  %v44 = vld [vmem:[%s0 + $0x28] sm:$0xff]
  %v45 = vld [vmem:[%s0 + $0x30] sm:$0xff]
  %v46 = vld [vmem:[%s0 + $0x38] sm:$0xff]
  %v47 = vld [vmem:[%s1] sm:$0x1]
  %v48 = vld [vmem:[%s2] sm:$0x1]
  %vm49 = vcmask 261120
  %v50 = vsel %vm49, %v39, 0.0
  %51 = vadd.xlane.f32.xlu0 %v50
  %v52 = vpop.xlane.xlu0 %51
  %v53 = vsel %vm49, %v40, 0.0
  %54 = vadd.xlane.f32.xlu0 %v53
  %v55 = vpop.xlane.xlu0 %54
  %v56 = vsel %vm49, %v41, 0.0
  %57 = vadd.xlane.f32.xlu0 %v56
  %v58 = vpop.xlane.xlu0 %57
  %v59 = vsel %vm49, %v42, 0.0
  %60 = vadd.xlane.f32.xlu0 %v59
  %v61 = vpop.xlane.xlu0 %60
  %v62 = vsel %vm49, %v43, 0.0
  %63 = vadd.xlane.f32.xlu0 %v62
  %v64 = vpop.xlane.xlu0 %63
  %v65 = vsel %vm49, %v44, 0.0
  %66 = vadd.xlane.f32.xlu0 %v65
  %v67 = vpop.xlane.xlu0 %66
  %v68 = vsel %vm49, %v45, 0.0
  %69 = vadd.xlane.f32.xlu0 %v68
  %v70 = vpop.xlane.xlu0 %69
  %v71 = vsel %vm49, %v46, 0.0
  %72 = vadd.xlane.f32.xlu0 %v71
  %v73 = vpop.xlane.xlu0 %72
  %v74 = vrcp.pop 32.0
  %v75 = vmul.f32 %v52, %v74
  %v76 = vmul.f32 %v55, %v74
  %v77 = vmul.f32 %v58, %v74
  %v78 = vmul.f32 %v61, %v74
  %v79 = vmul.f32 %v64, %v74
  %v80 = vmul.f32 %v67, %v74
  %v81 = vmul.f32 %v70, %v74
  %v82 = vmul.f32 %v73, %v74
  %v83 = vsub.f32 %v39, %v75
  %v84 = vsub.f32 %v40, %v76
  %v85 = vsub.f32 %v41, %v77
  %v86 = vsub.f32 %v42, %v78
  %v87 = vsub.f32 %v43, %v79
  %v88 = vsub.f32 %v44, %v80
  %v89 = vsub.f32 %v45, %v81
  %v90 = vsub.f32 %v46, %v82
  %v91 = vmul.f32 %v83, %v83
  %v92 = vmul.f32 %v84, %v84
  %v93 = vmul.f32 %v85, %v85
  %v94 = vmul.f32 %v86, %v86
  %v95 = vmul.f32 %v87, %v87
  %v96 = vmul.f32 %v88, %v88
  %v97 = vmul.f32 %v89, %v89
  %v98 = vmul.f32 %v90, %v90
  %v99 = vsel %vm49, %v91, 0.0
  %100 = vadd.xlane.f32.xlu0 %v99
  %v101 = vpop.xlane.xlu0 %100
  %v102 = vsel %vm49, %v92, 0.0
  %103 = vadd.xlane.f32.xlu0 %v102
  %v104 = vpop.xlane.xlu0 %103
  %v105 = vsel %vm49, %v93, 0.0
  %106 = vadd.xlane.f32.xlu0 %v105
  %v107 = vpop.xlane.xlu0 %106
  %v108 = vsel %vm49, %v94, 0.0
  %109 = vadd.xlane.f32.xlu0 %v108
  %v110 = vpop.xlane.xlu0 %109
  %v111 = vsel %vm49, %v95, 0.0
  %112 = vadd.xlane.f32.xlu0 %v111
  %v113 = vpop.xlane.xlu0 %112
  %v114 = vsel %vm49, %v96, 0.0
  %115 = vadd.xlane.f32.xlu0 %v114
  %v116 = vpop.xlane.xlu0 %115
  %v117 = vsel %vm49, %v97, 0.0
  %118 = vadd.xlane.f32.xlu0 %v117
  %v119 = vpop.xlane.xlu0 %118
  %v120 = vsel %vm49, %v98, 0.0
  %121 = vadd.xlane.f32.xlu0 %v120
  %v122 = vpop.xlane.xlu0 %121
  %v123 = vmul.f32 %v101, %v74
  %v124 = vmul.f32 %v104, %v74
  %v125 = vmul.f32 %v107, %v74
  %v126 = vmul.f32 %v110, %v74
  %v127 = vmul.f32 %v113, %v74
  %v128 = vmul.f32 %v116, %v74
  %v129 = vmul.f32 %v119, %v74
  %v130 = vmul.f32 %v122, %v74
  %v131 = vadd.f32 %v123, 1e-05
  %v132 = vadd.f32 %v124, 1e-05
  %v133 = vadd.f32 %v125, 1e-05
  %v134 = vadd.f32 %v126, 1e-05
  %v135 = vadd.f32 %v127, 1e-05
  %v136 = vadd.f32 %v128, 1e-05
  %v137 = vadd.f32 %v129, 1e-05
  %v138 = vadd.f32 %v130, 1e-05
  %v139 = vrsqrt.pop %v131
  %v140 = vrsqrt.pop %v132
  %v141 = vrsqrt.pop %v133
  %v142 = vrsqrt.pop %v134
  %v143 = vrsqrt.pop %v135
  %v144 = vrsqrt.pop %v136
  %v145 = vrsqrt.pop %v137
  %v146 = vrsqrt.pop %v138
  %v147 = vmul.f32 %v83, %v139
  %v148 = vmul.f32 %v84, %v140
  %v149 = vmul.f32 %v85, %v141
  %v150 = vmul.f32 %v86, %v142
  %v151 = vmul.f32 %v87, %v143
  %v152 = vmul.f32 %v88, %v144
  %v153 = vmul.f32 %v89, %v145
  %v154 = vmul.f32 %v90, %v146
  %v156 = vlaneseq
  %v157 = vshrl.u32 %v156, 7
  %v158 = vsub.s32 0, %v157
  %v159 = vrot.slane %v47, %v158
  %v161 = vmul.f32 %v147, %v159
  %v162 = vmul.f32 %v148, %v159
  %v163 = vmul.f32 %v149, %v159
  %v164 = vmul.f32 %v150, %v159
  %v165 = vmul.f32 %v151, %v159
  %v166 = vmul.f32 %v152, %v159
  %v167 = vmul.f32 %v153, %v159
  %v168 = vmul.f32 %v154, %v159
  %v170 = vlaneseq
  %v171 = vshrl.u32 %v170, 7
  %v172 = vsub.s32 0, %v171
  %v173 = vrot.slane %v48, %v172
  %v175 = vadd.f32 %v161, %v173
  %v176 = vadd.f32 %v162, %v173
  %v177 = vadd.f32 %v163, %v173
  %v178 = vadd.f32 %v164, %v173
  %v179 = vadd.f32 %v165, %v173
  %v180 = vadd.f32 %v166, %v173
  %v181 = vadd.f32 %v167, %v173
  %v182 = vadd.f32 %v168, %v173
  %v183 = vpack.c.bf16 %v176, %v175
  %v184 = vpack.c.bf16 %v178, %v177
  %v185 = vpack.c.bf16 %v180, %v179
  %v186 = vpack.c.bf16 %v182, %v181
  %v187 = vld [vmem:[%s3] sm:$0xf]
  %v188 = vld [vmem:[%s3 + $0x4] sm:$0xf]
  %v189 = vld [vmem:[%s3 + $0x8] sm:$0xf]
  %v190 = vld [vmem:[%s3 + $0xc] sm:$0xf]
  %v191 = vld [vmem:[%s4] sm:$0x1]
  %v193 = vlaneseq
  %v194 = vshrl.u32 %v193, 7
  %v195 = vsub.s32 0, %v194
  %v196 = vrot.slane %v191, %v195
  %v202 = vunpack.c.l.b16 %v187
  %v203 = vunpack.c.l.b16 %v188
  %v204 = vunpack.c.l.b16 %v189
  %v205 = vunpack.c.l.b16 %v190
  %v206 = vpack.c.b16 %v203, %v202
  %v207 = vpack.c.b16 %v205, %v204
  %v211 = vsel %vm49, %v183, 0
  %v214 = vsel %vm49, %v184, 0
  %v217 = vsel %vm49, %v185, 0
  %v220 = vsel %vm49, %v186, 0
  %222 = vmatprep.subr.bf16.mxu0 0
  %223 = vmatpush1.bf16.msra.mxu0 %v206
  %224 = vmatprep.subr.bf16.mxu0 0
  %225 = vmatpush1.bf16.msra.mxu0 %v207
  %226 = vmatprep.subr.bf16.mxu0 0
  %227 = vmatpush1.bf16.msra.mxu0 0
  %228 = vmatprep.subr.bf16.mxu0 0
  %229 = vmatpush1.bf16.msra.mxu0 0
  %230 = vmatprep.subr.bf16.mxu0 0
  %231 = vmatpush1.bf16.msra.mxu0 0
  %232 = vmatprep.subr.bf16.mxu0 0
  %233 = vmatpush1.bf16.msra.mxu0 0
  %234 = vmatprep.subr.bf16.mxu0 0
  %235 = vmatpush1.bf16.msra.mxu0 0
  %236 = vmatprep.subr.bf16.mxu0 0
  %237 = vmatpush1.bf16.msra.mxu0 0
  %238 = vmatprep.subr.bf16.mxu0 0
  %239 = vmatpush1.bf16.msra.mxu0 0
  %240 = vmatprep.subr.bf16.mxu0 0
  %241 = vmatpush1.bf16.msra.mxu0 0
  %242 = vmatprep.subr.bf16.mxu0 0
  %243 = vmatpush1.bf16.msra.mxu0 0
  %244 = vmatprep.subr.bf16.mxu0 0
  %245 = vmatpush1.bf16.msra.mxu0 0
  %246 = vmatprep.subr.bf16.mxu0 0
  %247 = vmatpush1.bf16.msra.mxu0 0
  %248 = vmatprep.subr.bf16.mxu0 0
  %249 = vmatpush1.bf16.msra.mxu0 0
  %250 = vmatprep.subr.bf16.mxu0 0
  %251 = vmatpush1.bf16.msra.mxu0 0
  %252 = vmatprep.subr.bf16.mxu0 0
  %253 = vmatpush1.bf16.msra.mxu0 0
  %254 = vmatprep.mubr.bf16.mxu0 0
  %255 = vmatmul.mubr.bf16.gmra.mrb[0].mxu0 %v211
  %v256 = vpop.f32.mrb[0].mxu0
  %v257 = vadd.f32 %v196, %v256
  %v258 = vpop.f32.mrb[0].mxu0
  %v259 = vpop.f32.mrb[0].mxu0
  %v260 = vadd.f32 %v196, %v259
  %v261 = vpop.f32.mrb[0].mxu0
  %262 = vmatprep.mubr.bf16.mxu0 0
  %263 = vmatmul.mubr.bf16.gmra.mrb[0].mxu0 %v214
  %v264 = vpop.f32.mrb[0].mxu0
  %v265 = vadd.f32 %v196, %v264
  %v266 = vpop.f32.mrb[0].mxu0
  %v267 = vpop.f32.mrb[0].mxu0
  %v268 = vadd.f32 %v196, %v267
  %v269 = vpop.f32.mrb[0].mxu0
  %270 = vmatprep.mubr.bf16.mxu0 0
  %271 = vmatmul.mubr.bf16.gmra.mrb[0].mxu0 %v217
  %v272 = vpop.f32.mrb[0].mxu0
  %v273 = vadd.f32 %v196, %v272
  %v274 = vpop.f32.mrb[0].mxu0
  %v275 = vpop.f32.mrb[0].mxu0
  %v276 = vadd.f32 %v196, %v275
  %v277 = vpop.f32.mrb[0].mxu0
  %278 = vmatprep.mubr.bf16.mxu0 0
  %279 = vmatmul.mubr.bf16.gmra.mrb[0].mxu0 %v220
  %v280 = vpop.f32.mrb[0].mxu0
  %v281 = vadd.f32 %v196, %v280
  %v282 = vpop.f32.mrb[0].mxu0
  %v283 = vpop.f32.mrb[0].mxu0
  %v284 = vadd.f32 %v196, %v283
  %v285 = vpop.f32.mrb[0].mxu0
  %286 = vdwg.mxu0
  %v287 = vpack.c.bf16 %v260, %v257
  %v288 = vpack.c.bf16 %v268, %v265
  %v289 = vpack.c.bf16 %v276, %v273
  %v290 = vpack.c.bf16 %v284, %v281
  %v291 = vld [vmem:[%s5] sm:$0xf]
  %v292 = vld [vmem:[%s6] sm:$0x1]
  %v294 = vlaneseq
  %v295 = vshrl.u32 %v294, 7
  %v296 = vsub.s32 0, %v295
  %v297 = vrot.slane %v292, %v296
  %vm299 = vcmask 64512
  %v301 = vsel %vm299, %v287, 0
  %v304 = vsel %vm299, %v288, 0
  %v307 = vsel %vm299, %v289, 0
  %v310 = vsel %vm299, %v290, 0
  %vm312 = vcmask 1043456
  %v314 = vsel %vm312, %v291, 0
  %316 = vmatprep.subr.bf16.mxu0 0
  %317 = vmatpush1.bf16.msra.mxu0 %v314
  %318 = vmatprep.subr.bf16.mxu0 0
  %319 = vmatpush1.bf16.msra.mxu0 0
  %320 = vmatprep.subr.bf16.mxu0 0
  %321 = vmatpush1.bf16.msra.mxu0 0
  %322 = vmatprep.subr.bf16.mxu0 0
  %323 = vmatpush1.bf16.msra.mxu0 0
  %324 = vmatprep.subr.bf16.mxu0 0
  %325 = vmatpush1.bf16.msra.mxu0 0
  %326 = vmatprep.subr.bf16.mxu0 0
  %327 = vmatpush1.bf16.msra.mxu0 0
  %328 = vmatprep.subr.bf16.mxu0 0
  %329 = vmatpush1.bf16.msra.mxu0 0
  %330 = vmatprep.subr.bf16.mxu0 0
  %331 = vmatpush1.bf16.msra.mxu0 0
  %332 = vmatprep.subr.bf16.mxu0 0
  %333 = vmatpush1.bf16.msra.mxu0 0
  %334 = vmatprep.subr.bf16.mxu0 0
  %335 = vmatpush1.bf16.msra.mxu0 0
  %336 = vmatprep.subr.bf16.mxu0 0
  %337 = vmatpush1.bf16.msra.mxu0 0
  %338 = vmatprep.subr.bf16.mxu0 0
  %339 = vmatpush1.bf16.msra.mxu0 0
  %340 = vmatprep.subr.bf16.mxu0 0
  %341 = vmatpush1.bf16.msra.mxu0 0
  %342 = vmatprep.subr.bf16.mxu0 0
  %343 = vmatpush1.bf16.msra.mxu0 0
  %344 = vmatprep.subr.bf16.mxu0 0
  %345 = vmatpush1.bf16.msra.mxu0 0
  %346 = vmatprep.subr.bf16.mxu0 0
  %347 = vmatpush1.bf16.msra.mxu0 0
  %348 = vmatprep.mubr.bf16.mxu0 0
  %349 = vmatmul.mubr.bf16.gmra.mrb[0].mxu0 %v301
  %v350 = vpop.f32.mrb[0].mxu0
  %v351 = vadd.f32 %v297, %v350
  %v352 = vpop.f32.mrb[0].mxu0
  %v353 = vpop.f32.mrb[0].mxu0
  %v354 = vadd.f32 %v297, %v353
  %v355 = vpop.f32.mrb[0].mxu0
  %356 = vmatprep.mubr.bf16.mxu0 0
  %357 = vmatmul.mubr.bf16.gmra.mrb[0].mxu0 %v304
  %v358 = vpop.f32.mrb[0].mxu0
  %v359 = vadd.f32 %v297, %v358
  %v360 = vpop.f32.mrb[0].mxu0
  %v361 = vpop.f32.mrb[0].mxu0
  %v362 = vadd.f32 %v297, %v361
  %v363 = vpop.f32.mrb[0].mxu0
  %364 = vmatprep.mubr.bf16.mxu0 0
  %365 = vmatmul.mubr.bf16.gmra.mrb[0].mxu0 %v307
  %v366 = vpop.f32.mrb[0].mxu0
  %v367 = vadd.f32 %v297, %v366
  %v368 = vpop.f32.mrb[0].mxu0
  %v369 = vpop.f32.mrb[0].mxu0
  %v370 = vadd.f32 %v297, %v369
  %v371 = vpop.f32.mrb[0].mxu0
  %372 = vmatprep.mubr.bf16.mxu0 0
  %373 = vmatmul.mubr.bf16.gmra.mrb[0].mxu0 %v310
  %v374 = vpop.f32.mrb[0].mxu0
  %v375 = vadd.f32 %v297, %v374
  %v376 = vpop.f32.mrb[0].mxu0
  %v377 = vpop.f32.mrb[0].mxu0
  %v378 = vadd.f32 %v297, %v377
  %v379 = vpop.f32.mrb[0].mxu0
  %380 = vdwg.mxu0
  %v381 = vadd.f32 %v175, %v351
  %v382 = vadd.f32 %v176, %v354
  %v383 = vadd.f32 %v177, %v359
  %v384 = vadd.f32 %v178, %v362
  %v385 = vadd.f32 %v179, %v367
  %v386 = vadd.f32 %v180, %v370
  %v387 = vadd.f32 %v181, %v375
  %v388 = vadd.f32 %v182, %v378
  %v389 = vpack.c.bf16 %v382, %v381
  %v390 = vpack.c.bf16 %v384, %v383
  %v391 = vpack.c.bf16 %v386, %v385
  %v392 = vpack.c.bf16 %v388, %v387
  %v393 = vld [vmem:[%s7] sm:$0xf]
  %v394 = vld [vmem:[%s7 + $0x4] sm:$0xf]
  %v395 = vld [vmem:[%s7 + $0x8] sm:$0xf]
  %v396 = vld [vmem:[%s7 + $0xc] sm:$0xf]
  %v397 = vld [vmem:[%s8] sm:$0x1]
  %v399 = vlaneseq
  %v400 = vshrl.u32 %v399, 7
  %v401 = vsub.s32 0, %v400
  %v402 = vrot.slane %v397, %v401
  %v408 = vunpack.c.l.b16 %v393
  %v409 = vunpack.c.l.b16 %v394
  %v410 = vunpack.c.l.b16 %v395
  %v411 = vunpack.c.l.b16 %v396
  %v412 = vpack.c.b16 %v409, %v408
  %v413 = vpack.c.b16 %v411, %v410
  %v417 = vsel %vm49, %v389, 0
  %v420 = vsel %vm49, %v390, 0
  %v423 = vsel %vm49, %v391, 0
  %v426 = vsel %vm49, %v392, 0
  %428 = vmatprep.subr.bf16.mxu0 0
  %429 = vmatpush1.bf16.msra.mxu0 %v412
  %430 = vmatprep.subr.bf16.mxu0 0
  %431 = vmatpush1.bf16.msra.mxu0 %v413
  %432 = vmatprep.subr.bf16.mxu0 0
  %433 = vmatpush1.bf16.msra.mxu0 0
  %434 = vmatprep.subr.bf16.mxu0 0
  %435 = vmatpush1.bf16.msra.mxu0 0
  %436 = vmatprep.subr.bf16.mxu0 0
  %437 = vmatpush1.bf16.msra.mxu0 0
  %438 = vmatprep.subr.bf16.mxu0 0
  %439 = vmatpush1.bf16.msra.mxu0 0
  %440 = vmatprep.subr.bf16.mxu0 0
  %441 = vmatpush1.bf16.msra.mxu0 0
  %442 = vmatprep.subr.bf16.mxu0 0
  %443 = vmatpush1.bf16.msra.mxu0 0
  %444 = vmatprep.subr.bf16.mxu0 0
  %445 = vmatpush1.bf16.msra.mxu0 0
  %446 = vmatprep.subr.bf16.mxu0 0
  %447 = vmatpush1.bf16.msra.mxu0 0
  %448 = vmatprep.subr.bf16.mxu0 0
  %449 = vmatpush1.bf16.msra.mxu0 0
  %450 = vmatprep.subr.bf16.mxu0 0
  %451 = vmatpush1.bf16.msra.mxu0 0
  %452 = vmatprep.subr.bf16.mxu0 0
  %453 = vmatpush1.bf16.msra.mxu0 0
  %454 = vmatprep.subr.bf16.mxu0 0
  %455 = vmatpush1.bf16.msra.mxu0 0
  %456 = vmatprep.subr.bf16.mxu0 0
  %457 = vmatpush1.bf16.msra.mxu0 0
  %458 = vmatprep.subr.bf16.mxu0 0
  %459 = vmatpush1.bf16.msra.mxu0 0
  %460 = vmatprep.mubr.bf16.mxu0 0
  %461 = vmatmul.mubr.bf16.gmra.mrb[0].mxu0 %v417
  %v462 = vpop.f32.mrb[0].mxu0
  %v463 = vadd.f32 %v402, %v462
  %v464 = vpop.f32.mrb[0].mxu0
  %v465 = vpop.f32.mrb[0].mxu0
  %v466 = vadd.f32 %v402, %v465
  %v467 = vpop.f32.mrb[0].mxu0
  %468 = vmatprep.mubr.bf16.mxu0 0
  %469 = vmatmul.mubr.bf16.gmra.mrb[0].mxu0 %v420
  %v470 = vpop.f32.mrb[0].mxu0
  %v471 = vadd.f32 %v402, %v470
  %v472 = vpop.f32.mrb[0].mxu0
  %v473 = vpop.f32.mrb[0].mxu0
  %v474 = vadd.f32 %v402, %v473
  %v475 = vpop.f32.mrb[0].mxu0
  %476 = vmatprep.mubr.bf16.mxu0 0
  %477 = vmatmul.mubr.bf16.gmra.mrb[0].mxu0 %v423
  %v478 = vpop.f32.mrb[0].mxu0
  %v479 = vadd.f32 %v402, %v478
  %v480 = vpop.f32.mrb[0].mxu0
  %v481 = vpop.f32.mrb[0].mxu0
  %v482 = vadd.f32 %v402, %v481
  %v483 = vpop.f32.mrb[0].mxu0
  %484 = vmatprep.mubr.bf16.mxu0 0
  %485 = vmatmul.mubr.bf16.gmra.mrb[0].mxu0 %v426
  %v486 = vpop.f32.mrb[0].mxu0
  %v487 = vadd.f32 %v402, %v486
  %v488 = vpop.f32.mrb[0].mxu0
  %v489 = vpop.f32.mrb[0].mxu0
  %v490 = vadd.f32 %v402, %v489
  %v491 = vpop.f32.mrb[0].mxu0
  %492 = vdwg.mxu0
  %v493 = vmul.f32 %v463, 1.702
  %v494 = vmul.f32 %v466, 1.702
  %v495 = vmul.f32 %v471, 1.702
  %v496 = vmul.f32 %v474, 1.702
  %v497 = vmul.f32 %v479, 1.702
  %v498 = vmul.f32 %v482, 1.702
  %v499 = vmul.f32 %v487, 1.702
  %v500 = vmul.f32 %v490, 1.702
  %v501 = vxor.u32 %v493, 2147483648
  %v502 = vxor.u32 %v494, 2147483648
  %v503 = vxor.u32 %v495, 2147483648
  %v504 = vxor.u32 %v496, 2147483648
  %v505 = vxor.u32 %v497, 2147483648
  %v506 = vxor.u32 %v498, 2147483648
  %v507 = vxor.u32 %v499, 2147483648
  %v508 = vxor.u32 %v500, 2147483648
  %v509 = vmul.f32 %v501, 1.442695
  %v510 = vpow.pop %v509
  %v511 = vmul.f32 %v502, 1.442695
  %v512 = vpow.pop %v511
  %v513 = vmul.f32 %v503, 1.442695
  %v514 = vpow.pop %v513
  %v515 = vmul.f32 %v504, 1.442695
  %v516 = vpow.pop %v515
  %v517 = vmul.f32 %v505, 1.442695
  %v518 = vpow.pop %v517
  %v519 = vmul.f32 %v506, 1.442695
  %v520 = vpow.pop %v519
  %v521 = vmul.f32 %v507, 1.442695
  %v522 = vpow.pop %v521
  %v523 = vmul.f32 %v508, 1.442695
  %v524 = vpow.pop %v523
  %v525 = vadd.f32 %v510, 1.0
  %v526 = vadd.f32 %v512, 1.0
  %v527 = vadd.f32 %v514, 1.0
  %v528 = vadd.f32 %v516, 1.0
  %v529 = vadd.f32 %v518, 1.0
  %v530 = vadd.f32 %v520, 1.0
  %v531 = vadd.f32 %v522, 1.0
  %v532 = vadd.f32 %v524, 1.0
  %v533 = vrcp.pop %v525
  %v534 = vmul.f32 1.0, %v533
  %v535 = vrcp.pop %v526
  %v536 = vmul.f32 1.0, %v535
  %v537 = vrcp.pop %v527
  %v538 = vmul.f32 1.0, %v537
  %v539 = vrcp.pop %v528
  %v540 = vmul.f32 1.0, %v539
  %v541 = vrcp.pop %v529
  %v542 = vmul.f32 1.0, %v541
  %v543 = vrcp.pop %v530
  %v544 = vmul.f32 1.0, %v543
  %v545 = vrcp.pop %v531
  %v546 = vmul.f32 1.0, %v545
  %v547 = vrcp.pop %v532
  %v548 = vmul.f32 1.0, %v547
  %v549 = vmul.f32 %v463, %v534
  %v550 = vmul.f32 %v466, %v536
  %v551 = vmul.f32 %v471, %v538
  %v552 = vmul.f32 %v474, %v540
  %v553 = vmul.f32 %v479, %v542
  %v554 = vmul.f32 %v482, %v544
  %v555 = vmul.f32 %v487, %v546
  %v556 = vmul.f32 %v490, %v548
  %v557 = vpack.c.bf16 %v550, %v549
  %v558 = vpack.c.bf16 %v552, %v551
  %v559 = vpack.c.bf16 %v554, %v553
  %v560 = vpack.c.bf16 %v556, %v555
  %v561 = vld [vmem:[%s9] sm:$0xf]
  %v562 = vld [vmem:[%s9 + $0x4] sm:$0xf]
  %v563 = vld [vmem:[%s9 + $0x8] sm:$0xf]
  %v564 = vld [vmem:[%s9 + $0xc] sm:$0xf]
  %v565 = vld [vmem:[%s9 + $0x10] sm:$0xf]
  %v566 = vld [vmem:[%s9 + $0x14] sm:$0xf]
  %v567 = vld [vmem:[%s9 + $0x18] sm:$0xf]
  %v568 = vld [vmem:[%s9 + $0x1c] sm:$0xf]
  %v569 = vld [vmem:[%s9 + $0x20] sm:$0xf]
  %v570 = vld [vmem:[%s9 + $0x24] sm:$0xf]
  %v571 = vld [vmem:[%s9 + $0x28] sm:$0xf]
  %v572 = vld [vmem:[%s9 + $0x2c] sm:$0xf]
  %v573 = vld [vmem:[%s9 + $0x30] sm:$0xf]
  %v574 = vld [vmem:[%s9 + $0x34] sm:$0xf]
  %v575 = vld [vmem:[%s9 + $0x38] sm:$0xf]
  %v576 = vld [vmem:[%s9 + $0x3c] sm:$0xf]
  %v577 = vld [vmem:[%s10] sm:$0x1]
  %v579 = vlaneseq
  %v580 = vshrl.u32 %v579, 7
  %v581 = vsub.s32 0, %v580
  %v582 = vrot.slane %v577, %v581
  %v600 = vunpack.c.l.b16 %v561
  %v601 = vunpack.c.l.b16 %v562
  %v602 = vunpack.c.l.b16 %v563
  %v603 = vunpack.c.l.b16 %v564
  %v604 = vunpack.c.l.b16 %v565
  %v605 = vunpack.c.l.b16 %v566
  %v606 = vunpack.c.l.b16 %v567
  %v607 = vunpack.c.l.b16 %v568
  %v608 = vunpack.c.l.b16 %v569
  %v609 = vunpack.c.l.b16 %v570
  %v610 = vunpack.c.l.b16 %v571
  %v611 = vunpack.c.l.b16 %v572
  %v612 = vunpack.c.l.b16 %v573
  %v613 = vunpack.c.l.b16 %v574
  %v614 = vunpack.c.l.b16 %v575
  %v615 = vunpack.c.l.b16 %v576
  %v616 = vpack.c.b16 %v601, %v600
  %v617 = vpack.c.b16 %v603, %v602
  %v618 = vpack.c.b16 %v605, %v604
  %v619 = vpack.c.b16 %v607, %v606
  %v620 = vpack.c.b16 %v609, %v608
  %v621 = vpack.c.b16 %v611, %v610
  %v622 = vpack.c.b16 %v613, %v612
  %v623 = vpack.c.b16 %v615, %v614
  %632 = vmatprep.subr.bf16.mxu0 0
  %633 = vmatpush1.bf16.msra.mxu0 %v616
  %634 = vmatprep.subr.bf16.mxu0 0
  %635 = vmatpush1.bf16.msra.mxu0 %v617
  %636 = vmatprep.subr.bf16.mxu0 0
  %637 = vmatpush1.bf16.msra.mxu0 %v618
  %638 = vmatprep.subr.bf16.mxu0 0
  %639 = vmatpush1.bf16.msra.mxu0 %v619
  %640 = vmatprep.subr.bf16.mxu0 0
  %641 = vmatpush1.bf16.msra.mxu0 %v620
  %642 = vmatprep.subr.bf16.mxu0 0
  %643 = vmatpush1.bf16.msra.mxu0 %v621
  %644 = vmatprep.subr.bf16.mxu0 0
  %645 = vmatpush1.bf16.msra.mxu0 %v622
  %646 = vmatprep.subr.bf16.mxu0 0
  %647 = vmatpush1.bf16.msra.mxu0 %v623
  %648 = vmatprep.subr.bf16.mxu0 0
  %649 = vmatpush1.bf16.msra.mxu0 0
  %650 = vmatprep.subr.bf16.mxu0 0
  %651 = vmatpush1.bf16.msra.mxu0 0
  %652 = vmatprep.subr.bf16.mxu0 0
  %653 = vmatpush1.bf16.msra.mxu0 0
  %654 = vmatprep.subr.bf16.mxu0 0
  %655 = vmatpush1.bf16.msra.mxu0 0
  %656 = vmatprep.subr.bf16.mxu0 0
  %657 = vmatpush1.bf16.msra.mxu0 0
  %658 = vmatprep.subr.bf16.mxu0 0
  %659 = vmatpush1.bf16.msra.mxu0 0
  %660 = vmatprep.subr.bf16.mxu0 0
  %661 = vmatpush1.bf16.msra.mxu0 0
  %662 = vmatprep.subr.bf16.mxu0 0
  %663 = vmatpush1.bf16.msra.mxu0 0
  %664 = vmatprep.mubr.bf16.mxu0 0
  %665 = vmatmul.mubr.bf16.gmra.mrb[0].mxu0 %v557
  %v666 = vpop.f32.mrb[0].mxu0
  %v667 = vadd.f32 %v582, %v666
  %v668 = vpop.f32.mrb[0].mxu0
  %v669 = vpop.f32.mrb[0].mxu0
  %v670 = vadd.f32 %v582, %v669
  %v671 = vpop.f32.mrb[0].mxu0
  %672 = vmatprep.mubr.bf16.mxu0 0
  %673 = vmatmul.mubr.bf16.gmra.mrb[0].mxu0 %v558
  %v674 = vpop.f32.mrb[0].mxu0
  %v675 = vadd.f32 %v582, %v674
  %v676 = vpop.f32.mrb[0].mxu0
  %v677 = vpop.f32.mrb[0].mxu0
  %v678 = vadd.f32 %v582, %v677
  %v679 = vpop.f32.mrb[0].mxu0
  %680 = vmatprep.mubr.bf16.mxu0 0
  %681 = vmatmul.mubr.bf16.gmra.mrb[0].mxu0 %v559
  %v682 = vpop.f32.mrb[0].mxu0
  %v683 = vadd.f32 %v582, %v682
  %v684 = vpop.f32.mrb[0].mxu0
  %v685 = vpop.f32.mrb[0].mxu0
  %v686 = vadd.f32 %v582, %v685
  %v687 = vpop.f32.mrb[0].mxu0
  %688 = vmatprep.mubr.bf16.mxu0 0
  %689 = vmatmul.mubr.bf16.gmra.mrb[0].mxu0 %v560
  %v690 = vpop.f32.mrb[0].mxu0
  %v691 = vadd.f32 %v582, %v690
  %v692 = vpop.f32.mrb[0].mxu0
  %v693 = vpop.f32.mrb[0].mxu0
  %v694 = vadd.f32 %v582, %v693
  %v695 = vpop.f32.mrb[0].mxu0
  %696 = vdwg.mxu0
  %v697 = vadd.f32 %v39, %v667
  %v698 = vadd.f32 %v40, %v670
  %v699 = vadd.f32 %v41, %v675
  %v700 = vadd.f32 %v42, %v678
  %v701 = vadd.f32 %v43, %v683
  %v702 = vadd.f32 %v44, %v686
  %v703 = vadd.f32 %v45, %v691
  %v704 = vadd.f32 %v46, %v694
  %705 = vst.msk [vmem:[%s11] sm:$0xff] %vm49, %v697
  %706 = vst.msk [vmem:[%s11 + $0x8] sm:$0xff] %vm49, %v698
  %707 = vst.msk [vmem:[%s11 + $0x10] sm:$0xff] %vm49, %v699
  %708 = vst.msk [vmem:[%s11 + $0x18] sm:$0xff] %vm49, %v700
  %709 = vst.msk [vmem:[%s11 + $0x20] sm:$0xff] %vm49, %v701
  %710 = vst.msk [vmem:[%s11 + $0x28] sm:$0xff] %vm49, %v702
  %711 = vst.msk [vmem:[%s11 + $0x30] sm:$0xff] %vm49, %v703
  %712 = vst.msk [vmem:[%s11 + $0x38] sm:$0xff] %vm49, %v704
  // Predicated region
  $region46: #{transformer_forward.11} parent=0 // pred_check
    _
  $region47: #{transformer_forward.11} parent=0 // pred_check_branch
    %714 = sbr.rel (0) target = $region49
  $region48: #{transformer_forward.11} parent=0 // pred_region
    _
  $region49: #{transformer_forward.11} parent=0 // pred_fallthru
    _
  // Predicated region
  $region50: #{transformer_forward.11} parent=0 // pred_check
    _
  $region51: #{transformer_forward.11} parent=0 // pred_check_branch
    %716 = sbr.rel (0) target = $region53
  $region52: #{transformer_forward.11} parent=0 // pred_region
    _
  $region53: #{transformer_forward.11} parent=0 // pred_fallthru
    _

// kernel: transformer_forward.15
$region0: #{transformer_forward.15}
  #allocation0 [shape = 'u32[]', space=smem, size = 0x4, offset = 0x4, fixed_abs, tag = 'smem constant byte address 0x4 - core index']
  #allocation1 [shape = 'u32[144,128]{1,0:T(1,128)}', space=vmem, size = 0x12000, scoped, tag = 'internal scratch']
  %s0 = inlined_call_operand.vmem [shape: f32[64,32], index: 0, kind: input, shape index: {}]
  %s1 = inlined_call_operand.vmem [shape: f32[1,32], index: 1, kind: input, shape index: {}]
  %s2 = inlined_call_operand.vmem [shape: f32[1,32], index: 2, kind: input, shape index: {}]
  %s3 = inlined_call_operand.vmem [shape: bf16[32,8], index: 3, kind: input, shape index: {}]
  %s4 = inlined_call_operand.vmem [shape: f32[1,8], index: 4, kind: input, shape index: {}]
  %s5 = inlined_call_operand.vmem [shape: bf16[8,32], index: 5, kind: input, shape index: {}]
  %s6 = inlined_call_operand.vmem [shape: f32[1,32], index: 6, kind: input, shape index: {}]
  %s7 = inlined_call_operand.vmem [shape: bf16[32,128], index: 7, kind: input, shape index: {}]
  %s8 = inlined_call_operand.vmem [shape: f32[1,128], index: 8, kind: input, shape index: {}]
  %s9 = inlined_call_operand.vmem [shape: bf16[128,32], index: 9, kind: input, shape index: {}]
  %s10 = inlined_call_operand.vmem [shape: f32[1,32], index: 10, kind: input, shape index: {}]
  %s11 = inlined_call_operand.hbm [shape: f32[64,32], index: 11, kind: output, shape index: {}]
  %s12 = sld [smem:[#allocation0]]
  $region54: #{transformer_forward.15} parent=0
    _
  %s14 = ssub.s32 1, %s12
  %s15 = scalar_select 0, %s14, %s12
  $region1: #{transformer_forward.15} parent=0
    #allocation2 [shape = 'u8[32768]{0}', space=vmem, size = 0x8000, scoped, tag = 'output window, operand 0, single buffered']
    #allocation3 [shape = 's32[1]{0}', space=sflag, size = 0x4, scoped, tag = 'scoped memory for transformer_forward.15']
    %16 = vsyncpa [#allocation3], 0
    // Predicated region
    $region2: #{transformer_forward.15} parent=1 // pred_check
      _
    $region3: #{transformer_forward.15} parent=1 // pred_check_branch
      %18 = sbr.rel (0) target = $region5
    $region4: #{transformer_forward.15} parent=1 // pred_region
      _
    $region5: #{transformer_forward.15} parent=1 // pred_fallthru
      _
    // Predicated region
    $region6: #{transformer_forward.15} parent=1 // pred_check
      _
    $region7: #{transformer_forward.15} parent=1 // pred_check_branch
      %20 = sbr.rel (0) target = $region9
    $region8: #{transformer_forward.15} parent=1 // pred_region
      _
    $region9: #{transformer_forward.15} parent=1 // pred_fallthru
      _
    // Predicated region
    $region10: #{transformer_forward.15} parent=1 // pred_check
      _
    $region11: #{transformer_forward.15} parent=1 // pred_check_branch
      %22 = sbr.rel (0) target = $region13
    $region12: #{transformer_forward.15} parent=1 // pred_region
      _
    $region13: #{transformer_forward.15} parent=1 // pred_fallthru
      _
    // Predicated region
    $region14: #{transformer_forward.15} parent=1 // pred_check
      _
    $region15: #{transformer_forward.15} parent=1 // pred_check_branch
      %24 = sbr.rel (0) target = $region17
    $region16: #{transformer_forward.15} parent=1 // pred_region
      _
    $region17: #{transformer_forward.15} parent=1 // pred_fallthru
      _
    // Predicated region
    $region18: #{transformer_forward.15} parent=1 // pred_check
      _
    $region19: #{transformer_forward.15} parent=1 // pred_check_branch
      %26 = sbr.rel (0) target = $region21
    $region20: #{transformer_forward.15} parent=1 // pred_region
      _
    $region21: #{transformer_forward.15} parent=1 // pred_fallthru
      _
    // Predicated region
    $region22: #{transformer_forward.15} parent=1 // pred_check
      _
    $region23: #{transformer_forward.15} parent=1 // pred_check_branch
      %28 = sbr.rel (0) target = $region25
    $region24: #{transformer_forward.15} parent=1 // pred_region
      _
    $region25: #{transformer_forward.15} parent=1 // pred_fallthru
      _
    // Predicated region
    $region26: #{transformer_forward.15} parent=1 // pred_check
      _
    $region27: #{transformer_forward.15} parent=1 // pred_check_branch
      %30 = sbr.rel (0) target = $region29
    $region28: #{transformer_forward.15} parent=1 // pred_region
      _
    $region29: #{transformer_forward.15} parent=1 // pred_fallthru
      _
    // Predicated region
    $region30: #{transformer_forward.15} parent=1 // pred_check
      _
    $region31: #{transformer_forward.15} parent=1 // pred_check_branch
      %32 = sbr.rel (0) target = $region33
    $region32: #{transformer_forward.15} parent=1 // pred_region
      _
    $region33: #{transformer_forward.15} parent=1 // pred_fallthru
      _
    // Predicated region
    $region34: #{transformer_forward.15} parent=1 // pred_check
      _
    $region35: #{transformer_forward.15} parent=1 // pred_check_branch
      %34 = sbr.rel (0) target = $region37
    $region36: #{transformer_forward.15} parent=1 // pred_region
      _
    $region37: #{transformer_forward.15} parent=1 // pred_fallthru
      _
    // Predicated region
    $region38: #{transformer_forward.15} parent=1 // pred_check
      _
    $region39: #{transformer_forward.15} parent=1 // pred_check_branch
      %36 = sbr.rel (0) target = $region41
    $region40: #{transformer_forward.15} parent=1 // pred_region
      _
    $region41: #{transformer_forward.15} parent=1 // pred_fallthru
      _
    // Predicated region
    $region42: #{transformer_forward.15} parent=1 // pred_check
      _
    $region43: #{transformer_forward.15} parent=1 // pred_check_branch
      %38 = sbr.rel (0) target = $region45
    $region44: #{transformer_forward.15} parent=1 // pred_region
      _
    $region45: #{transformer_forward.15} parent=1 // pred_fallthru
      _
    %v40 = vld [vmem:[%s0] sm:$0xff]
    %v41 = vld [vmem:[%s0 + $0x8] sm:$0xff]
    %v42 = vld [vmem:[%s0 + $0x10] sm:$0xff]
    %v43 = vld [vmem:[%s0 + $0x18] sm:$0xff]
    %v44 = vld [vmem:[%s0 + $0x20] sm:$0xff]
    %v45 = vld [vmem:[%s0 + $0x28] sm:$0xff]
    %v46 = vld [vmem:[%s0 + $0x30] sm:$0xff]
    %v47 = vld [vmem:[%s0 + $0x38] sm:$0xff]
    %v48 = vld [vmem:[%s1] sm:$0x1]
    %v49 = vld [vmem:[%s2] sm:$0x1]
    %vm50 = vcmask 261120
    %v51 = vsel %vm50, %v40, 0.0
    %52 = vadd.xlane.f32.xlu0 %v51
    %v53 = vpop.xlane.xlu0 %52
    %v54 = vsel %vm50, %v41, 0.0
    %55 = vadd.xlane.f32.xlu0 %v54
    %v56 = vpop.xlane.xlu0 %55
    %v57 = vsel %vm50, %v42, 0.0
    %58 = vadd.xlane.f32.xlu0 %v57
    %v59 = vpop.xlane.xlu0 %58
    %v60 = vsel %vm50, %v43, 0.0
    %61 = vadd.xlane.f32.xlu0 %v60
    %v62 = vpop.xlane.xlu0 %61
    %v63 = vsel %vm50, %v44, 0.0
    %64 = vadd.xlane.f32.xlu0 %v63
    %v65 = vpop.xlane.xlu0 %64
    %v66 = vsel %vm50, %v45, 0.0
    %67 = vadd.xlane.f32.xlu0 %v66
    %v68 = vpop.xlane.xlu0 %67
    %v69 = vsel %vm50, %v46, 0.0
    %70 = vadd.xlane.f32.xlu0 %v69
    %v71 = vpop.xlane.xlu0 %70
    %v72 = vsel %vm50, %v47, 0.0
    %73 = vadd.xlane.f32.xlu0 %v72
    %v74 = vpop.xlane.xlu0 %73
    %v75 = vrcp.pop 32.0
    %v76 = vmul.f32 %v53, %v75
    %v77 = vmul.f32 %v56, %v75
    %v78 = vmul.f32 %v59, %v75
    %v79 = vmul.f32 %v62, %v75
    %v80 = vmul.f32 %v65, %v75
    %v81 = vmul.f32 %v68, %v75
    %v82 = vmul.f32 %v71, %v75
    %v83 = vmul.f32 %v74, %v75
    %v84 = vsub.f32 %v40, %v76
    %v85 = vsub.f32 %v41, %v77
    %v86 = vsub.f32 %v42, %v78
    %v87 = vsub.f32 %v43, %v79
    %v88 = vsub.f32 %v44, %v80
    %v89 = vsub.f32 %v45, %v81
    %v90 = vsub.f32 %v46, %v82
    %v91 = vsub.f32 %v47, %v83
    %v92 = vmul.f32 %v84, %v84
    %v93 = vmul.f32 %v85, %v85
    %v94 = vmul.f32 %v86, %v86
    %v95 = vmul.f32 %v87, %v87
    %v96 = vmul.f32 %v88, %v88
    %v97 = vmul.f32 %v89, %v89
    %v98 = vmul.f32 %v90, %v90
    %v99 = vmul.f32 %v91, %v91
    %v100 = vsel %vm50, %v92, 0.0
    %101 = vadd.xlane.f32.xlu0 %v100
    %v102 = vpop.xlane.xlu0 %101
    %v103 = vsel %vm50, %v93, 0.0
    %104 = vadd.xlane.f32.xlu0 %v103
    %v105 = vpop.xlane.xlu0 %104
    %v106 = vsel %vm50, %v94, 0.0
    %107 = vadd.xlane.f32.xlu0 %v106
    %v108 = vpop.xlane.xlu0 %107
    %v109 = vsel %vm50, %v95, 0.0
    %110 = vadd.xlane.f32.xlu0 %v109
    %v111 = vpop.xlane.xlu0 %110
    %v112 = vsel %vm50, %v96, 0.0
    %113 = vadd.xlane.f32.xlu0 %v112
    %v114 = vpop.xlane.xlu0 %113
    %v115 = vsel %vm50, %v97, 0.0
    %116 = vadd.xlane.f32.xlu0 %v115
    %v117 = vpop.xlane.xlu0 %116
    %v118 = vsel %vm50, %v98, 0.0
    %119 = vadd.xlane.f32.xlu0 %v118
    %v120 = vpop.xlane.xlu0 %119
    %v121 = vsel %vm50, %v99, 0.0
    %122 = vadd.xlane.f32.xlu0 %v121
    %v123 = vpop.xlane.xlu0 %122
    %v124 = vmul.f32 %v102, %v75
    %v125 = vmul.f32 %v105, %v75
    %v126 = vmul.f32 %v108, %v75
    %v127 = vmul.f32 %v111, %v75
    %v128 = vmul.f32 %v114, %v75
    %v129 = vmul.f32 %v117, %v75
    %v130 = vmul.f32 %v120, %v75
    %v131 = vmul.f32 %v123, %v75
    %v132 = vadd.f32 %v124, 1e-05
    %v133 = vadd.f32 %v125, 1e-05
    %v134 = vadd.f32 %v126, 1e-05
    %v135 = vadd.f32 %v127, 1e-05
    %v136 = vadd.f32 %v128, 1e-05
    %v137 = vadd.f32 %v129, 1e-05
    %v138 = vadd.f32 %v130, 1e-05
    %v139 = vadd.f32 %v131, 1e-05
    %v140 = vrsqrt.pop %v132
    %v141 = vrsqrt.pop %v133
    %v142 = vrsqrt.pop %v134
    %v143 = vrsqrt.pop %v135
    %v144 = vrsqrt.pop %v136
    %v145 = vrsqrt.pop %v137
    %v146 = vrsqrt.pop %v138
    %v147 = vrsqrt.pop %v139
    %v148 = vmul.f32 %v84, %v140
    %v149 = vmul.f32 %v85, %v141
    %v150 = vmul.f32 %v86, %v142
    %v151 = vmul.f32 %v87, %v143
    %v152 = vmul.f32 %v88, %v144
    %v153 = vmul.f32 %v89, %v145
    %v154 = vmul.f32 %v90, %v146
    %v155 = vmul.f32 %v91, %v147
    %v157 = vlaneseq
    %v158 = vshrl.u32 %v157, 7
    %v159 = vsub.s32 0, %v158
    %v160 = vrot.slane %v48, %v159
    %v162 = vmul.f32 %v148, %v160
    %v163 = vmul.f32 %v149, %v160
    %v164 = vmul.f32 %v150, %v160
    %v165 = vmul.f32 %v151, %v160
    %v166 = vmul.f32 %v152, %v160
    %v167 = vmul.f32 %v153, %v160
    %v168 = vmul.f32 %v154, %v160
    %v169 = vmul.f32 %v155, %v160
    %v171 = vlaneseq
    %v172 = vshrl.u32 %v171, 7
    %v173 = vsub.s32 0, %v172
    %v174 = vrot.slane %v49, %v173
    %v176 = vadd.f32 %v162, %v174
    %v177 = vadd.f32 %v163, %v174
    %v178 = vadd.f32 %v164, %v174
    %v179 = vadd.f32 %v165, %v174
    %v180 = vadd.f32 %v166, %v174
    %v181 = vadd.f32 %v167, %v174
    %v182 = vadd.f32 %v168, %v174
    %v183 = vadd.f32 %v169, %v174
    %v184 = vpack.c.bf16 %v177, %v176
    %v185 = vpack.c.bf16 %v179, %v178
    %v186 = vpack.c.bf16 %v181, %v180
    %v187 = vpack.c.bf16 %v183, %v182
    %v188 = vld [vmem:[%s3] sm:$0xf]
    %v189 = vld [vmem:[%s3 + $0x4] sm:$0xf]
    %v190 = vld [vmem:[%s3 + $0x8] sm:$0xf]
    %v191 = vld [vmem:[%s3 + $0xc] sm:$0xf]
    %v192 = vld [vmem:[%s4] sm:$0x1]
    %v194 = vlaneseq
    %v195 = vshrl.u32 %v194, 7
    %v196 = vsub.s32 0, %v195
    %v197 = vrot.slane %v192, %v196
    %v203 = vunpack.c.l.b16 %v188
    %v204 = vunpack.c.l.b16 %v189
    %v205 = vunpack.c.l.b16 %v190
    %v206 = vunpack.c.l.b16 %v191
    %v207 = vpack.c.b16 %v204, %v203
    %v208 = vpack.c.b16 %v206, %v205
    %v212 = vsel %vm50, %v184, 0
    %v215 = vsel %vm50, %v185, 0
    %v218 = vsel %vm50, %v186, 0
    %v221 = vsel %vm50, %v187, 0
    %223 = vmatprep.subr.bf16.mxu0 0
    %224 = vmatpush1.bf16.msra.mxu0 %v207
    %225 = vmatprep.subr.bf16.mxu0 0
    %226 = vmatpush1.bf16.msra.mxu0 %v208
    %227 = vmatprep.subr.bf16.mxu0 0
    %228 = vmatpush1.bf16.msra.mxu0 0
    %229 = vmatprep.subr.bf16.mxu0 0
    %230 = vmatpush1.bf16.msra.mxu0 0
    %231 = vmatprep.subr.bf16.mxu0 0
    %232 = vmatpush1.bf16.msra.mxu0 0
    %233 = vmatprep.subr.bf16.mxu0 0
    %234 = vmatpush1.bf16.msra.mxu0 0
    %235 = vmatprep.subr.bf16.mxu0 0
    %236 = vmatpush1.bf16.msra.mxu0 0
    %237 = vmatprep.subr.bf16.mxu0 0
    %238 = vmatpush1.bf16.msra.mxu0 0
    %239 = vmatprep.subr.bf16.mxu0 0
    %240 = vmatpush1.bf16.msra.mxu0 0
    %241 = vmatprep.subr.bf16.mxu0 0
    %242 = vmatpush1.bf16.msra.mxu0 0
    %243 = vmatprep.subr.bf16.mxu0 0
    %244 = vmatpush1.bf16.msra.mxu0 0
    %245 = vmatprep.subr.bf16.mxu0 0
    %246 = vmatpush1.bf16.msra.mxu0 0
    %247 = vmatprep.subr.bf16.mxu0 0
    %248 = vmatpush1.bf16.msra.mxu0 0
    %249 = vmatprep.subr.bf16.mxu0 0
    %250 = vmatpush1.bf16.msra.mxu0 0
    %251 = vmatprep.subr.bf16.mxu0 0
    %252 = vmatpush1.bf16.msra.mxu0 0
    %253 = vmatprep.subr.bf16.mxu0 0
    %254 = vmatpush1.bf16.msra.mxu0 0
    %255 = vmatprep.mubr.bf16.mxu0 0
    %256 = vmatmul.mubr.bf16.gmra.mrb[0].mxu0 %v212
    %v257 = vpop.f32.mrb[0].mxu0
    %v258 = vadd.f32 %v197, %v257
    %v259 = vpop.f32.mrb[0].mxu0
    %v260 = vpop.f32.mrb[0].mxu0
    %v261 = vadd.f32 %v197, %v260
    %v262 = vpop.f32.mrb[0].mxu0
    %263 = vmatprep.mubr.bf16.mxu0 0
    %264 = vmatmul.mubr.bf16.gmra.mrb[0].mxu0 %v215
    %v265 = vpop.f32.mrb[0].mxu0
    %v266 = vadd.f32 %v197, %v265
    %v267 = vpop.f32.mrb[0].mxu0
    %v268 = vpop.f32.mrb[0].mxu0
    %v269 = vadd.f32 %v197, %v268
    %v270 = vpop.f32.mrb[0].mxu0
    %271 = vmatprep.mubr.bf16.mxu0 0
    %272 = vmatmul.mubr.bf16.gmra.mrb[0].mxu0 %v218
    %v273 = vpop.f32.mrb[0].mxu0
    %v274 = vadd.f32 %v197, %v273
    %v275 = vpop.f32.mrb[0].mxu0
    %v276 = vpop.f32.mrb[0].mxu0
    %v277 = vadd.f32 %v197, %v276
    %v278 = vpop.f32.mrb[0].mxu0
    %279 = vmatprep.mubr.bf16.mxu0 0
    %280 = vmatmul.mubr.bf16.gmra.mrb[0].mxu0 %v221
    %v281 = vpop.f32.mrb[0].mxu0
    %v282 = vadd.f32 %v197, %v281
    %v283 = vpop.f32.mrb[0].mxu0
    %v284 = vpop.f32.mrb[0].mxu0
    %v285 = vadd.f32 %v197, %v284
    %v286 = vpop.f32.mrb[0].mxu0
    %287 = vdwg.mxu0
    %v288 = vpack.c.bf16 %v261, %v258
    %v289 = vpack.c.bf16 %v269, %v266
    %v290 = vpack.c.bf16 %v277, %v274
    %v291 = vpack.c.bf16 %v285, %v282
    %v292 = vld [vmem:[%s5] sm:$0xf]
    %v293 = vld [vmem:[%s6] sm:$0x1]
    %v295 = vlaneseq
    %v296 = vshrl.u32 %v295, 7
    %v297 = vsub.s32 0, %v296
    %v298 = vrot.slane %v293, %v297
    %vm300 = vcmask 64512
    %v302 = vsel %vm300, %v288, 0
    %v305 = vsel %vm300, %v289, 0
    %v308 = vsel %vm300, %v290, 0
    %v311 = vsel %vm300, %v291, 0
    %vm313 = vcmask 1043456
    %v315 = vsel %vm313, %v292, 0
    %317 = vmatprep.subr.bf16.mxu0 0
    %318 = vmatpush1.bf16.msra.mxu0 %v315
    %319 = vmatprep.subr.bf16.mxu0 0
    %320 = vmatpush1.bf16.msra.mxu0 0
    %321 = vmatprep.subr.bf16.mxu0 0
    %322 = vmatpush1.bf16.msra.mxu0 0
    %323 = vmatprep.subr.bf16.mxu0 0
    %324 = vmatpush1.bf16.msra.mxu0 0
    %325 = vmatprep.subr.bf16.mxu0 0
    %326 = vmatpush1.bf16.msra.mxu0 0
    %327 = vmatprep.subr.bf16.mxu0 0
    %328 = vmatpush1.bf16.msra.mxu0 0
    %329 = vmatprep.subr.bf16.mxu0 0
    %330 = vmatpush1.bf16.msra.mxu0 0
    %331 = vmatprep.subr.bf16.mxu0 0
    %332 = vmatpush1.bf16.msra.mxu0 0
    %333 = vmatprep.subr.bf16.mxu0 0
    %334 = vmatpush1.bf16.msra.mxu0 0
    %335 = vmatprep.subr.bf16.mxu0 0
    %336 = vmatpush1.bf16.msra.mxu0 0
    %337 = vmatprep.subr.bf16.mxu0 0
    %338 = vmatpush1.bf16.msra.mxu0 0
    %339 = vmatprep.subr.bf16.mxu0 0
    %340 = vmatpush1.bf16.msra.mxu0 0
    %341 = vmatprep.subr.bf16.mxu0 0
    %342 = vmatpush1.bf16.msra.mxu0 0
    %343 = vmatprep.subr.bf16.mxu0 0
    %344 = vmatpush1.bf16.msra.mxu0 0
    %345 = vmatprep.subr.bf16.mxu0 0
    %346 = vmatpush1.bf16.msra.mxu0 0
    %347 = vmatprep.subr.bf16.mxu0 0
    %348 = vmatpush1.bf16.msra.mxu0 0
    %349 = vmatprep.mubr.bf16.mxu0 0
    %350 = vmatmul.mubr.bf16.gmra.mrb[0].mxu0 %v302
    %v351 = vpop.f32.mrb[0].mxu0
    %v352 = vadd.f32 %v298, %v351
    %v353 = vpop.f32.mrb[0].mxu0
    %v354 = vpop.f32.mrb[0].mxu0
    %v355 = vadd.f32 %v298, %v354
    %v356 = vpop.f32.mrb[0].mxu0
    %357 = vmatprep.mubr.bf16.mxu0 0
    %358 = vmatmul.mubr.bf16.gmra.mrb[0].mxu0 %v305
    %v359 = vpop.f32.mrb[0].mxu0
    %v360 = vadd.f32 %v298, %v359
    %v361 = vpop.f32.mrb[0].mxu0
    %v362 = vpop.f32.mrb[0].mxu0
    %v363 = vadd.f32 %v298, %v362
    %v364 = vpop.f32.mrb[0].mxu0
    %365 = vmatprep.mubr.bf16.mxu0 0
    %366 = vmatmul.mubr.bf16.gmra.mrb[0].mxu0 %v308
    %v367 = vpop.f32.mrb[0].mxu0
    %v368 = vadd.f32 %v298, %v367
    %v369 = vpop.f32.mrb[0].mxu0
    %v370 = vpop.f32.mrb[0].mxu0
    %v371 = vadd.f32 %v298, %v370
    %v372 = vpop.f32.mrb[0].mxu0
    %373 = vmatprep.mubr.bf16.mxu0 0
    %374 = vmatmul.mubr.bf16.gmra.mrb[0].mxu0 %v311
    %v375 = vpop.f32.mrb[0].mxu0
    %v376 = vadd.f32 %v298, %v375
    %v377 = vpop.f32.mrb[0].mxu0
    %v378 = vpop.f32.mrb[0].mxu0
    %v379 = vadd.f32 %v298, %v378
    %v380 = vpop.f32.mrb[0].mxu0
    %381 = vdwg.mxu0
    %v382 = vadd.f32 %v176, %v352
    %v383 = vadd.f32 %v177, %v355
    %v384 = vadd.f32 %v178, %v360
    %v385 = vadd.f32 %v179, %v363
    %v386 = vadd.f32 %v180, %v368
    %v387 = vadd.f32 %v181, %v371
    %v388 = vadd.f32 %v182, %v376
    %v389 = vadd.f32 %v183, %v379
    %v390 = vpack.c.bf16 %v383, %v382
    %v391 = vpack.c.bf16 %v385, %v384
    %v392 = vpack.c.bf16 %v387, %v386
    %v393 = vpack.c.bf16 %v389, %v388
    %v394 = vld [vmem:[%s7] sm:$0xf]
    %v395 = vld [vmem:[%s7 + $0x4] sm:$0xf]
    %v396 = vld [vmem:[%s7 + $0x8] sm:$0xf]
    %v397 = vld [vmem:[%s7 + $0xc] sm:$0xf]
    %v398 = vld [vmem:[%s8] sm:$0x1]
    %v400 = vlaneseq
    %v401 = vshrl.u32 %v400, 7
    %v402 = vsub.s32 0, %v401
    %v403 = vrot.slane %v398, %v402
    %v409 = vunpack.c.l.b16 %v394
    %v410 = vunpack.c.l.b16 %v395
    %v411 = vunpack.c.l.b16 %v396
    %v412 = vunpack.c.l.b16 %v397
    %v413 = vpack.c.b16 %v410, %v409
    %v414 = vpack.c.b16 %v412, %v411
    %v418 = vsel %vm50, %v390, 0
    %v421 = vsel %vm50, %v391, 0
    %v424 = vsel %vm50, %v392, 0
    %v427 = vsel %vm50, %v393, 0
    %429 = vmatprep.subr.bf16.mxu0 0
    %430 = vmatpush1.bf16.msra.mxu0 %v413
    %431 = vmatprep.subr.bf16.mxu0 0
    %432 = vmatpush1.bf16.msra.mxu0 %v414
    %433 = vmatprep.subr.bf16.mxu0 0
    %434 = vmatpush1.bf16.msra.mxu0 0
    %435 = vmatprep.subr.bf16.mxu0 0
    %436 = vmatpush1.bf16.msra.mxu0 0
    %437 = vmatprep.subr.bf16.mxu0 0
    %438 = vmatpush1.bf16.msra.mxu0 0
    %439 = vmatprep.subr.bf16.mxu0 0
    %440 = vmatpush1.bf16.msra.mxu0 0
    %441 = vmatprep.subr.bf16.mxu0 0
    %442 = vmatpush1.bf16.msra.mxu0 0
    %443 = vmatprep.subr.bf16.mxu0 0
    %444 = vmatpush1.bf16.msra.mxu0 0
    %445 = vmatprep.subr.bf16.mxu0 0
    %446 = vmatpush1.bf16.msra.mxu0 0
    %447 = vmatprep.subr.bf16.mxu0 0
    %448 = vmatpush1.bf16.msra.mxu0 0
    %449 = vmatprep.subr.bf16.mxu0 0
    %450 = vmatpush1.bf16.msra.mxu0 0
    %451 = vmatprep.subr.bf16.mxu0 0
    %452 = vmatpush1.bf16.msra.mxu0 0
    %453 = vmatprep.subr.bf16.mxu0 0
    %454 = vmatpush1.bf16.msra.mxu0 0
    %455 = vmatprep.subr.bf16.mxu0 0
    %456 = vmatpush1.bf16.msra.mxu0 0
    %457 = vmatprep.subr.bf16.mxu0 0
    %458 = vmatpush1.bf16.msra.mxu0 0
    %459 = vmatprep.subr.bf16.mxu0 0
    %460 = vmatpush1.bf16.msra.mxu0 0
    %461 = vmatprep.mubr.bf16.mxu0 0
    %462 = vmatmul.mubr.bf16.gmra.mrb[0].mxu0 %v418
    %v463 = vpop.f32.mrb[0].mxu0
    %v464 = vadd.f32 %v403, %v463
    %v465 = vpop.f32.mrb[0].mxu0
    %v466 = vpop.f32.mrb[0].mxu0
    %v467 = vadd.f32 %v403, %v466
    %v468 = vpop.f32.mrb[0].mxu0
    %469 = vmatprep.mubr.bf16.mxu0 0
    %470 = vmatmul.mubr.bf16.gmra.mrb[0].mxu0 %v421
    %v471 = vpop.f32.mrb[0].mxu0
    %v472 = vadd.f32 %v403, %v471
    %v473 = vpop.f32.mrb[0].mxu0
    %v474 = vpop.f32.mrb[0].mxu0
    %v475 = vadd.f32 %v403, %v474
    %v476 = vpop.f32.mrb[0].mxu0
    %477 = vmatprep.mubr.bf16.mxu0 0
    %478 = vmatmul.mubr.bf16.gmra.mrb[0].mxu0 %v424
    %v479 = vpop.f32.mrb[0].mxu0
    %v480 = vadd.f32 %v403, %v479
    %v481 = vpop.f32.mrb[0].mxu0
    %v482 = vpop.f32.mrb[0].mxu0
    %v483 = vadd.f32 %v403, %v482
    %v484 = vpop.f32.mrb[0].mxu0
    %485 = vmatprep.mubr.bf16.mxu0 0
    %486 = vmatmul.mubr.bf16.gmra.mrb[0].mxu0 %v427
    %v487 = vpop.f32.mrb[0].mxu0
    %v488 = vadd.f32 %v403, %v487
    %v489 = vpop.f32.mrb[0].mxu0
    %v490 = vpop.f32.mrb[0].mxu0
    %v491 = vadd.f32 %v403, %v490
    %v492 = vpop.f32.mrb[0].mxu0
    %493 = vdwg.mxu0
    %v494 = vmul.f32 %v464, 1.702
    %v495 = vmul.f32 %v467, 1.702
    %v496 = vmul.f32 %v472, 1.702
    %v497 = vmul.f32 %v475, 1.702
    %v498 = vmul.f32 %v480, 1.702
    %v499 = vmul.f32 %v483, 1.702
    %v500 = vmul.f32 %v488, 1.702
    %v501 = vmul.f32 %v491, 1.702
    %v502 = vxor.u32 %v494, 2147483648
    %v503 = vxor.u32 %v495, 2147483648
    %v504 = vxor.u32 %v496, 2147483648
    %v505 = vxor.u32 %v497, 2147483648
    %v506 = vxor.u32 %v498, 2147483648
    %v507 = vxor.u32 %v499, 2147483648
    %v508 = vxor.u32 %v500, 2147483648
    %v509 = vxor.u32 %v501, 2147483648
    %v510 = vmul.f32 %v502, 1.442695
    %v511 = vpow.pop %v510
    %v512 = vmul.f32 %v503, 1.442695
    %v513 = vpow.pop %v512
    %v514 = vmul.f32 %v504, 1.442695
    %v515 = vpow.pop %v514
    %v516 = vmul.f32 %v505, 1.442695
    %v517 = vpow.pop %v516
    %v518 = vmul.f32 %v506, 1.442695
    %v519 = vpow.pop %v518
    %v520 = vmul.f32 %v507, 1.442695
    %v521 = vpow.pop %v520
    %v522 = vmul.f32 %v508, 1.442695
    %v523 = vpow.pop %v522
    %v524 = vmul.f32 %v509, 1.442695
    %v525 = vpow.pop %v524
    %v526 = vadd.f32 %v511, 1.0
    %v527 = vadd.f32 %v513, 1.0
    %v528 = vadd.f32 %v515, 1.0
    %v529 = vadd.f32 %v517, 1.0
    %v530 = vadd.f32 %v519, 1.0
    %v531 = vadd.f32 %v521, 1.0
    %v532 = vadd.f32 %v523, 1.0
    %v533 = vadd.f32 %v525, 1.0
    %v534 = vrcp.pop %v526
    %v535 = vmul.f32 1.0, %v534
    %v536 = vrcp.pop %v527
    %v537 = vmul.f32 1.0, %v536
    %v538 = vrcp.pop %v528
    %v539 = vmul.f32 1.0, %v538
    %v540 = vrcp.pop %v529
    %v541 = vmul.f32 1.0, %v540
    %v542 = vrcp.pop %v530
    %v543 = vmul.f32 1.0, %v542
    %v544 = vrcp.pop %v531
    %v545 = vmul.f32 1.0, %v544
    %v546 = vrcp.pop %v532
    %v547 = vmul.f32 1.0, %v546
    %v548 = vrcp.pop %v533
    %v549 = vmul.f32 1.0, %v548
    %v550 = vmul.f32 %v464, %v535
    %v551 = vmul.f32 %v467, %v537
    %v552 = vmul.f32 %v472, %v539
    %v553 = vmul.f32 %v475, %v541
    %v554 = vmul.f32 %v480, %v543
    %v555 = vmul.f32 %v483, %v545
    %v556 = vmul.f32 %v488, %v547
    %v557 = vmul.f32 %v491, %v549
    %v558 = vpack.c.bf16 %v551, %v550
    %v559 = vpack.c.bf16 %v553, %v552
    %v560 = vpack.c.bf16 %v555, %v554
    %v561 = vpack.c.bf16 %v557, %v556
    %v562 = vld [vmem:[%s9] sm:$0xf]
    %v563 = vld [vmem:[%s9 + $0x4] sm:$0xf]
    %v564 = vld [vmem:[%s9 + $0x8] sm:$0xf]
    %v565 = vld [vmem:[%s9 + $0xc] sm:$0xf]
    %v566 = vld [vmem:[%s9 + $0x10] sm:$0xf]
    %v567 = vld [vmem:[%s9 + $0x14] sm:$0xf]
    %v568 = vld [vmem:[%s9 + $0x18] sm:$0xf]
    %v569 = vld [vmem:[%s9 + $0x1c] sm:$0xf]
    %v570 = vld [vmem:[%s9 + $0x20] sm:$0xf]
    %v571 = vld [vmem:[%s9 + $0x24] sm:$0xf]
    %v572 = vld [vmem:[%s9 + $0x28] sm:$0xf]
    %v573 = vld [vmem:[%s9 + $0x2c] sm:$0xf]
    %v574 = vld [vmem:[%s9 + $0x30] sm:$0xf]
    %v575 = vld [vmem:[%s9 + $0x34] sm:$0xf]
    %v576 = vld [vmem:[%s9 + $0x38] sm:$0xf]
    %v577 = vld [vmem:[%s9 + $0x3c] sm:$0xf]
    %v578 = vld [vmem:[%s10] sm:$0x1]
    %v580 = vlaneseq
    %v581 = vshrl.u32 %v580, 7
    %v582 = vsub.s32 0, %v581
    %v583 = vrot.slane %v578, %v582
    %v601 = vunpack.c.l.b16 %v562
    %v602 = vunpack.c.l.b16 %v563
    %v603 = vunpack.c.l.b16 %v564
    %v604 = vunpack.c.l.b16 %v565
    %v605 = vunpack.c.l.b16 %v566
    %v606 = vunpack.c.l.b16 %v567
    %v607 = vunpack.c.l.b16 %v568
    %v608 = vunpack.c.l.b16 %v569
    %v609 = vunpack.c.l.b16 %v570
    %v610 = vunpack.c.l.b16 %v571
    %v611 = vunpack.c.l.b16 %v572
    %v612 = vunpack.c.l.b16 %v573
    %v613 = vunpack.c.l.b16 %v574
    %v614 = vunpack.c.l.b16 %v575
    %v615 = vunpack.c.l.b16 %v576
    %v616 = vunpack.c.l.b16 %v577
    %v617 = vpack.c.b16 %v602, %v601
    %v618 = vpack.c.b16 %v604, %v603
    %v619 = vpack.c.b16 %v606, %v605
    %v620 = vpack.c.b16 %v608, %v607
    %v621 = vpack.c.b16 %v610, %v609
    %v622 = vpack.c.b16 %v612, %v611
    %v623 = vpack.c.b16 %v614, %v613
    %v624 = vpack.c.b16 %v616, %v615
    %633 = vmatprep.subr.bf16.mxu0 0
    %634 = vmatpush1.bf16.msra.mxu0 %v617
    %635 = vmatprep.subr.bf16.mxu0 0
    %636 = vmatpush1.bf16.msra.mxu0 %v618
    %637 = vmatprep.subr.bf16.mxu0 0
    %638 = vmatpush1.bf16.msra.mxu0 %v619
    %639 = vmatprep.subr.bf16.mxu0 0
    %640 = vmatpush1.bf16.msra.mxu0 %v620
    %641 = vmatprep.subr.bf16.mxu0 0
    %642 = vmatpush1.bf16.msra.mxu0 %v621
    %643 = vmatprep.subr.bf16.mxu0 0
    %644 = vmatpush1.bf16.msra.mxu0 %v622
    %645 = vmatprep.subr.bf16.mxu0 0
    %646 = vmatpush1.bf16.msra.mxu0 %v623
    %647 = vmatprep.subr.bf16.mxu0 0
    %648 = vmatpush1.bf16.msra.mxu0 %v624
    %649 = vmatprep.subr.bf16.mxu0 0
    %650 = vmatpush1.bf16.msra.mxu0 0
    %651 = vmatprep.subr.bf16.mxu0 0
    %652 = vmatpush1.bf16.msra.mxu0 0
    %653 = vmatprep.subr.bf16.mxu0 0
    %654 = vmatpush1.bf16.msra.mxu0 0
    %655 = vmatprep.subr.bf16.mxu0 0
    %656 = vmatpush1.bf16.msra.mxu0 0
    %657 = vmatprep.subr.bf16.mxu0 0
    %658 = vmatpush1.bf16.msra.mxu0 0
    %659 = vmatprep.subr.bf16.mxu0 0
    %660 = vmatpush1.bf16.msra.mxu0 0
    %661 = vmatprep.subr.bf16.mxu0 0
    %662 = vmatpush1.bf16.msra.mxu0 0
    %663 = vmatprep.subr.bf16.mxu0 0
    %664 = vmatpush1.bf16.msra.mxu0 0
    %665 = vmatprep.mubr.bf16.mxu0 0
    %666 = vmatmul.mubr.bf16.gmra.mrb[0].mxu0 %v558
    %v667 = vpop.f32.mrb[0].mxu0
    %v668 = vadd.f32 %v583, %v667
    %v669 = vpop.f32.mrb[0].mxu0
    %v670 = vpop.f32.mrb[0].mxu0
    %v671 = vadd.f32 %v583, %v670
    %v672 = vpop.f32.mrb[0].mxu0
    %673 = vmatprep.mubr.bf16.mxu0 0
    %674 = vmatmul.mubr.bf16.gmra.mrb[0].mxu0 %v559
    %v675 = vpop.f32.mrb[0].mxu0
    %v676 = vadd.f32 %v583, %v675
    %v677 = vpop.f32.mrb[0].mxu0
    %v678 = vpop.f32.mrb[0].mxu0
    %v679 = vadd.f32 %v583, %v678
    %v680 = vpop.f32.mrb[0].mxu0
    %681 = vmatprep.mubr.bf16.mxu0 0
    %682 = vmatmul.mubr.bf16.gmra.mrb[0].mxu0 %v560
    %v683 = vpop.f32.mrb[0].mxu0
    %v684 = vadd.f32 %v583, %v683
    %v685 = vpop.f32.mrb[0].mxu0
    %v686 = vpop.f32.mrb[0].mxu0
    %v687 = vadd.f32 %v583, %v686
    %v688 = vpop.f32.mrb[0].mxu0
    %689 = vmatprep.mubr.bf16.mxu0 0
    %690 = vmatmul.mubr.bf16.gmra.mrb[0].mxu0 %v561
    %v691 = vpop.f32.mrb[0].mxu0
    %v692 = vadd.f32 %v583, %v691
    %v693 = vpop.f32.mrb[0].mxu0
    %v694 = vpop.f32.mrb[0].mxu0
    %v695 = vadd.f32 %v583, %v694
    %v696 = vpop.f32.mrb[0].mxu0
    %697 = vdwg.mxu0
    %v698 = vadd.f32 %v40, %v668
    %v699 = vadd.f32 %v41, %v671
    %v700 = vadd.f32 %v42, %v676
    %v701 = vadd.f32 %v43, %v679
    %v702 = vadd.f32 %v44, %v684
    %v703 = vadd.f32 %v45, %v687
    %v704 = vadd.f32 %v46, %v692
    %v705 = vadd.f32 %v47, %v695
    %706 = vst.msk [vmem:[#allocation2] sm:$0xff] %vm50, %v698
    %707 = vst.msk [vmem:[#allocation2 + $0x8] sm:$0xff] %vm50, %v699
    %708 = vst.msk [vmem:[#allocation2 + $0x10] sm:$0xff] %vm50, %v700
    %709 = vst.msk [vmem:[#allocation2 + $0x18] sm:$0xff] %vm50, %v701
    %710 = vst.msk [vmem:[#allocation2 + $0x20] sm:$0xff] %vm50, %v702
    %711 = vst.msk [vmem:[#allocation2 + $0x28] sm:$0xff] %vm50, %v703
    %712 = vst.msk [vmem:[#allocation2 + $0x30] sm:$0xff] %vm50, %v704
    %713 = vst.msk [vmem:[#allocation2 + $0x38] sm:$0xff] %vm50, %v705
    // Predicated region
    $region46: #{transformer_forward.15} parent=1 // pred_check
      _
    $region47: #{transformer_forward.15} parent=1 // pred_check_branch
      %715 = sbr.rel (0) target = $region49
    $region48: #{transformer_forward.15} parent=1 // pred_region
      %s717 = ssub.s32 1024, 1024
      %718 = vsyncadd [#allocation3], %s717
      %s719 = sshll.u32 [#allocation2], 4
      %s720 = int_to_ptr.vmem [resolvable:$true] %s719
      %725 = dma.vmem_to_hbm [thread:$0]  %s720, 1024, %s11, [#allocation3], 128, 128, 8
    $region49: #{transformer_forward.15} parent=1 // pred_fallthru
      _
    // Predicated region
    $region50: #{transformer_forward.15} parent=1 // pred_check
      _
    $region51: #{transformer_forward.15} parent=1 // pred_check_branch
      %727 = sbr.rel (0) target = $region53
    $region52: #{transformer_forward.15} parent=1 // pred_region
      %728 = dma.done [#allocation3], 1024
    $region53: #{transformer_forward.15} parent=1 // pred_fallthru
      _
    %729 = vsyncpa [#allocation3], 1

// kernel: transformer_forward.9
$region0: #{transformer_forward.9}
  #allocation0 [shape = 'u32[]', space=smem, size = 0x4, offset = 0x4, fixed_abs, tag = 'smem constant byte address 0x4 - core index']
  #allocation1 [shape = 'u32[144,128]{1,0:T(1,128)}', space=vmem, size = 0x12000, scoped, tag = 'internal scratch']
  %s0 = inlined_call_operand.vmem [shape: bf16[8,8,1,96], index: 0, kind: input, shape index: {}]
  %s1 = inlined_call_operand.vmem [shape: bf16[8,8,1,4], index: 1, kind: input, shape index: {}]
  %s2 = inlined_call_operand.vmem [shape: bf16[8,8,1,32], index: 2, kind: output, shape index: {}]
  %s3 = sld [smem:[#allocation0]]
  $region160: #{transformer_forward.9} parent=0
    _
  %s5 = ssub.s32 1, %s3
  %s6 = scalar_select 0, %s5, %s3
  $region1: #{transformer_forward.9} parent=0
    #allocation2 [shape = 'u8[32768]{0}', space=vmem, size = 0x8000, scoped, tag = 'input window, operand 0']
    #allocation3 [shape = 'u8[32768]{0}', space=vmem, size = 0x8000, scoped, tag = 'input window, operand 1']
    #allocation4 [shape = 'u8[32768]{0}', space=vmem, size = 0x8000, scoped, tag = 'output window, operand 0']
    loop: start=0, step=1, limit=4
    $region2: #{transformer_forward.9} parent=1 // loop_pre_header
      _
    $region3: #{transformer_forward.9} parent=1 // loop_header
      %s8 = sphi 0, %s12
      %p9 = scmp.ge.s32.totalorder %s8, 4
      %s18 = sphi 0, %s20
      %s21 = sphi 0, %s18
      %s22 = sphi 0, %s21
      %s38 = sphi 0, %s22
      %s44 = sphi 0, %s46
      %s47 = sphi 0, %s44
      %s48 = sphi 0, %s47
      %s64 = sphi 0, %s48
      %s70 = sphi 0, %s72
      %s73 = sphi 0, %s70
      %s74 = sphi 0, %s73
      %s90 = sphi 0, %s74
    $region4: #{transformer_forward.9} parent=1 // loop_header_branch
      %11 = sbr.rel (%p9) target = $region8
    $region5: #{transformer_forward.9} parent=1 // loop_body
      %s13 = ssub.s32 %s8, 1
      %s14 = ssub.s32 %s8, 2
      %s15 = sadd.s32 %s8, 1
      %s16 = ssub.s32 %s8, %s15
      %p17 = scmp.eq.s32.totalorder %s16, 0
      %s19 = sadd.s32 %s18, 1
      %s20 = scalar_select %p17, %s18, %s19
      %p23 = pneg %p17
      %p24 = scmp.eq.s32.totalorder %s8, 1
      %p25 = por %p23, %p24
      %p26 = scmp.ne.s32.totalorder %s18, %s21
      %p27 = scmp.eq.s32.totalorder %s8, 0
      %p28 = por %p26, %p27
      %p29 = scmp.ne.s32.totalorder %s18, %s21
      %p30 = scmp.eq.s32.totalorder %s13, 1
      %p31 = por %p29, %p30
      %p32 = scmp.ne.s32.totalorder %s21, %s22
      %p33 = scmp.eq.s32.totalorder %s13, 0
      %p34 = por %p32, %p33
      %p35 = scmp.ne.s32.totalorder %s21, %s22
      %p36 = scmp.eq.s32.totalorder %s14, 1
      %p37 = por %p35, %p36
      %p39 = scmp.ne.s32.totalorder %s22, %s38
      %p40 = scmp.eq.s32.totalorder %s14, 0
      %p41 = por %p39, %p40
      %s42 = ssub.s32 %s8, %s15
      %p43 = scmp.eq.s32.totalorder %s42, 0
      %s45 = sadd.s32 %s44, 1
      %s46 = scalar_select %p43, %s44, %s45
      %p49 = pneg %p43
      %p50 = scmp.eq.s32.totalorder %s8, 1
      %p51 = por %p49, %p50
      %p52 = scmp.ne.s32.totalorder %s44, %s47
      %p53 = scmp.eq.s32.totalorder %s8, 0
      %p54 = por %p52, %p53
      %p55 = scmp.ne.s32.totalorder %s44, %s47
      %p56 = scmp.eq.s32.totalorder %s13, 1
      %p57 = por %p55, %p56
      %p58 = scmp.ne.s32.totalorder %s47, %s48
      %p59 = scmp.eq.s32.totalorder %s13, 0
      %p60 = por %p58, %p59
      %p61 = scmp.ne.s32.totalorder %s47, %s48
      %p62 = scmp.eq.s32.totalorder %s14, 1
      %p63 = por %p61, %p62
      %p65 = scmp.ne.s32.totalorder %s48, %s64
      %p66 = scmp.eq.s32.totalorder %s14, 0
      %p67 = por %p65, %p66
      %s68 = ssub.s32 %s8, %s15
      %p69 = scmp.eq.s32.totalorder %s68, 0
      %s71 = sadd.s32 %s70, 1
      %s72 = scalar_select %p69, %s70, %s71
      %p75 = pneg %p69
      %p76 = scmp.eq.s32.totalorder %s8, 1
      %p77 = por %p75, %p76
      %p78 = scmp.ne.s32.totalorder %s70, %s73
      %p79 = scmp.eq.s32.totalorder %s8, 0
      %p80 = por %p78, %p79
      %p81 = scmp.ne.s32.totalorder %s70, %s73
      %p82 = scmp.eq.s32.totalorder %s13, 1
      %p83 = por %p81, %p82
      %p84 = scmp.ne.s32.totalorder %s73, %s74
      %p85 = scmp.eq.s32.totalorder %s13, 0
      %p86 = por %p84, %p85
      %p87 = scmp.ne.s32.totalorder %s73, %s74
      %p88 = scmp.eq.s32.totalorder %s14, 1
      %p89 = por %p87, %p88
      %p91 = scmp.ne.s32.totalorder %s74, %s90
      %p92 = scmp.eq.s32.totalorder %s14, 0
      %p93 = por %p91, %p92
      %p94 = scmp.le.s32.totalorder 1, %s8
      %p95 = scmp.lt.s32.totalorder %s8, 3
      %p96 = pnand %p94, %p95
      %p97 = pneg %p96
      // Predicated region
      $region9: #{transformer_forward.9} parent=5 // pred_check
        _
      $region10: #{transformer_forward.9} parent=5 // pred_check_branch
        %99 = sbr.rel (%p96) target = $region12
      $region11: #{transformer_forward.9} parent=5 // pred_region
        %s100 = ssub.s32 %s8, 1
      $region12: #{transformer_forward.9} parent=5 // pred_fallthru
        _
      %p101 = scmp.lt.s32.totalorder %s8, 2
      // Predicated region
      $region13: #{transformer_forward.9} parent=5 // pred_check
        %p102 = pneg %p101
      $region14: #{transformer_forward.9} parent=5 // pred_check_branch
        %104 = sbr.rel (%p102) target = $region16
      $region15: #{transformer_forward.9} parent=5 // pred_region
        // Predicated region
        $region17: #{transformer_forward.9} parent=15 // pred_check
          %p105 = pneg %p28
        $region18: #{transformer_forward.9} parent=15 // pred_check_branch
          %107 = sbr.rel (%p105) target = $region20
        $region19: #{transformer_forward.9} parent=15 // pred_region
          %s108 = sand.u32 %s18, 1
          %s109 = sand.u32 %s18, 1
          %s110 = smul.addr %s109, 32
          %s111 = scalar_lea.vmem [#allocation2], %s110
          %s112 = smul.u32 4, %s8
          %s113 = scalar_lea.vmem %s0, %s112
          // Predicated region
          $region21: #{transformer_forward.9} parent=19 // pred_check
            _
          $region22: #{transformer_forward.9} parent=19 // pred_check_branch
            %115 = sbr.rel (0) target = $region24
          $region23: #{transformer_forward.9} parent=19 // pred_region
            // Predicated region
            $region25: #{transformer_forward.9} parent=23 // pred_check
              _
            $region26: #{transformer_forward.9} parent=23 // pred_check_branch
              %117 = sbr.rel target = $region28
            $region27: #{transformer_forward.9} parent=23 // pred_region
              // Predicated region
              $region40: #{transformer_forward.9} parent=27 // pred_check
                _
              $region41: #{transformer_forward.9} parent=27 // pred_check_branch
                %146 = sbr.rel (0) target = $region43
              $region42: #{transformer_forward.9} parent=27 // pred_region
                loop: start=0, step=1, limit=1
                $region44: #{transformer_forward.9} parent=42 // loop_pre_header
                  _
                $region45: #{transformer_forward.9} parent=42 // loop_header
                  %s148 = sphi 0, %s152
                  %p149 = scmp.ge.s32.totalorder %s148, 1
                  %s153 = sphi %s113, %s113
                  %s154 = sphi %s111, %s111
                $region46: #{transformer_forward.9} parent=42 // loop_header_branch
                  %151 = sbr.rel (%p149) target = $region50
                $region47: #{transformer_forward.9} parent=42 // loop_body
                  _
                $region48: #{transformer_forward.9} parent=42 // loop_footer
                  %s152 = sadd.s32 1, %s148
                $region49: #{transformer_forward.9} parent=42 // loop_footer_branch
                  %147 = sbr.rel target = $region45
                $region50: #{transformer_forward.9} parent=42 // loop_exit
                  _
                loop: start=0, step=1, limit=1
                $region51: #{transformer_forward.9} parent=42 // loop_pre_header
                  _
                $region52: #{transformer_forward.9} parent=42 // loop_header
                  %s157 = sphi 0, %s161
                  %p158 = scmp.ge.s32.totalorder %s157, 1
                  %s162 = sphi %s113, %s113
                  %s163 = sphi %s111, %s111
                $region53: #{transformer_forward.9} parent=42 // loop_header_branch
                  %160 = sbr.rel (%p158) target = $region57
                $region54: #{transformer_forward.9} parent=42 // loop_body
                  %v164 = vld [vmem:[%s162] sm:$0xf]
                  %165 = vst [vmem:[%s163] sm:$0xf] %v164
                  %v166 = vld [vmem:[%s162 + $0x8] sm:$0xf]
                  %167 = vst [vmem:[%s163 + $0x4] sm:$0xf] %v166
                  %v168 = vld [vmem:[%s162 + $0x10] sm:$0xf]
                  %169 = vst [vmem:[%s163 + $0x8] sm:$0xf] %v168
                  %v170 = vld [vmem:[%s162 + $0x18] sm:$0xf]
                  %171 = vst [vmem:[%s163 + $0xc] sm:$0xf] %v170
                  %v172 = vld [vmem:[%s162 + $0x20] sm:$0xf]
                  %173 = vst [vmem:[%s163 + $0x10] sm:$0xf] %v172
                  %v174 = vld [vmem:[%s162 + $0x28] sm:$0xf]
                  %175 = vst [vmem:[%s163 + $0x14] sm:$0xf] %v174
                  %v176 = vld [vmem:[%s162 + $0x30] sm:$0xf]
                  %177 = vst [vmem:[%s163 + $0x18] sm:$0xf] %v176
                  %v178 = vld [vmem:[%s162 + $0x38] sm:$0xf]
                  %179 = vst [vmem:[%s163 + $0x1c] sm:$0xf] %v178
                $region55: #{transformer_forward.9} parent=42 // loop_footer
                  %s161 = sadd.s32 1, %s157
                $region56: #{transformer_forward.9} parent=42 // loop_footer_branch
                  %156 = sbr.rel target = $region52
                $region57: #{transformer_forward.9} parent=42 // loop_exit
                  _
              $region43: #{transformer_forward.9} parent=27 // pred_fallthru
                _
            $region28: #{transformer_forward.9} parent=23 // pred_fallthru
              _
            // Predicated region
            $region29: #{transformer_forward.9} parent=23 // pred_check
              _
            $region30: #{transformer_forward.9} parent=23 // pred_check_branch
              %119 = sbr.rel (0) target = $region32
            $region31: #{transformer_forward.9} parent=23 // pred_region
              loop: start=0, step=1, limit=1
              $region33: #{transformer_forward.9} parent=31 // loop_pre_header
                _
              $region34: #{transformer_forward.9} parent=31 // loop_header
                %s122 = sphi 0, %s126
                %p123 = scmp.ge.s32.totalorder %s122, 1
                %s127 = sphi %s113, %s113
                %s128 = sphi %s111, %s111
              $region35: #{transformer_forward.9} parent=31 // loop_header_branch
                %125 = sbr.rel (%p123) target = $region39
              $region36: #{transformer_forward.9} parent=31 // loop_body
                %v129 = vld [vmem:[%s127] sm:$0xf]
                %130 = vst [vmem:[%s128] sm:$0xf] %v129
                %v131 = vld [vmem:[%s127 + $0x8] sm:$0xf]
                %132 = vst [vmem:[%s128 + $0x4] sm:$0xf] %v131
                %v133 = vld [vmem:[%s127 + $0x10] sm:$0xf]
                %134 = vst [vmem:[%s128 + $0x8] sm:$0xf] %v133
                %v135 = vld [vmem:[%s127 + $0x18] sm:$0xf]
                %136 = vst [vmem:[%s128 + $0xc] sm:$0xf] %v135
                %v137 = vld [vmem:[%s127 + $0x20] sm:$0xf]
                %138 = vst [vmem:[%s128 + $0x10] sm:$0xf] %v137
                %v139 = vld [vmem:[%s127 + $0x28] sm:$0xf]
                %140 = vst [vmem:[%s128 + $0x14] sm:$0xf] %v139
                %v141 = vld [vmem:[%s127 + $0x30] sm:$0xf]
                %142 = vst [vmem:[%s128 + $0x18] sm:$0xf] %v141
                %v143 = vld [vmem:[%s127 + $0x38] sm:$0xf]
                %144 = vst [vmem:[%s128 + $0x1c] sm:$0xf] %v143
              $region37: #{transformer_forward.9} parent=31 // loop_footer
                %s126 = sadd.s32 1, %s122
              $region38: #{transformer_forward.9} parent=31 // loop_footer_branch
                %121 = sbr.rel target = $region34
              $region39: #{transformer_forward.9} parent=31 // loop_exit
                _
            $region32: #{transformer_forward.9} parent=23 // pred_fallthru
              _
          $region24: #{transformer_forward.9} parent=19 // pred_fallthru
            _
          %180 = vnop
        $region20: #{transformer_forward.9} parent=15 // pred_fallthru
          _
        // Predicated region
        $region58: #{transformer_forward.9} parent=15 // pred_check
          %p181 = pneg %p54
        $region59: #{transformer_forward.9} parent=15 // pred_check_branch
          %183 = sbr.rel (%p181) target = $region61
        $region60: #{transformer_forward.9} parent=15 // pred_region
          %s184 = sand.u32 %s44, 1
          %s185 = sand.u32 %s44, 1
          %s186 = smul.addr %s185, 32
          %s187 = scalar_lea.vmem [#allocation3], %s186
          %s188 = smul.u32 4, %s8
          %s189 = scalar_lea.vmem %s1, %s188
          // Predicated region
          $region62: #{transformer_forward.9} parent=60 // pred_check
            _
          $region63: #{transformer_forward.9} parent=60 // pred_check_branch
            %191 = sbr.rel (0) target = $region65
          $region64: #{transformer_forward.9} parent=60 // pred_region
            // Predicated region
            $region66: #{transformer_forward.9} parent=64 // pred_check
              _
            $region67: #{transformer_forward.9} parent=64 // pred_check_branch
              %193 = sbr.rel target = $region69
            $region68: #{transformer_forward.9} parent=64 // pred_region
              // Predicated region
              $region81: #{transformer_forward.9} parent=68 // pred_check
                _
              $region82: #{transformer_forward.9} parent=68 // pred_check_branch
                %222 = sbr.rel (0) target = $region84
              $region83: #{transformer_forward.9} parent=68 // pred_region
                loop: start=0, step=1, limit=1
                $region85: #{transformer_forward.9} parent=83 // loop_pre_header
                  _
                $region86: #{transformer_forward.9} parent=83 // loop_header
                  %s224 = sphi 0, %s228
                  %p225 = scmp.ge.s32.totalorder %s224, 1
                  %s229 = sphi %s189, %s189
                  %s230 = sphi %s187, %s187
                $region87: #{transformer_forward.9} parent=83 // loop_header_branch
                  %227 = sbr.rel (%p225) target = $region91
                $region88: #{transformer_forward.9} parent=83 // loop_body
                  _
                $region89: #{transformer_forward.9} parent=83 // loop_footer
                  %s228 = sadd.s32 1, %s224
                $region90: #{transformer_forward.9} parent=83 // loop_footer_branch
                  %223 = sbr.rel target = $region86
                $region91: #{transformer_forward.9} parent=83 // loop_exit
                  _
                loop: start=0, step=1, limit=1
                $region92: #{transformer_forward.9} parent=83 // loop_pre_header
                  _
                $region93: #{transformer_forward.9} parent=83 // loop_header
                  %s233 = sphi 0, %s237
                  %p234 = scmp.ge.s32.totalorder %s233, 1
                  %s238 = sphi %s189, %s189
                  %s239 = sphi %s187, %s187
                $region94: #{transformer_forward.9} parent=83 // loop_header_branch
                  %236 = sbr.rel (%p234) target = $region98
                $region95: #{transformer_forward.9} parent=83 // loop_body
                  %v240 = vld [vmem:[%s238] sm:$0xf]
                  %241 = vst [vmem:[%s239] sm:$0xf] %v240
                  %v242 = vld [vmem:[%s238 + $0x8] sm:$0xf]
                  %243 = vst [vmem:[%s239 + $0x4] sm:$0xf] %v242
                  %v244 = vld [vmem:[%s238 + $0x10] sm:$0xf]
                  %245 = vst [vmem:[%s239 + $0x8] sm:$0xf] %v244
                  %v246 = vld [vmem:[%s238 + $0x18] sm:$0xf]
                  %247 = vst [vmem:[%s239 + $0xc] sm:$0xf] %v246
                  %v248 = vld [vmem:[%s238 + $0x20] sm:$0xf]
                  %249 = vst [vmem:[%s239 + $0x10] sm:$0xf] %v248
                  %v250 = vld [vmem:[%s238 + $0x28] sm:$0xf]
                  %251 = vst [vmem:[%s239 + $0x14] sm:$0xf] %v250
                  %v252 = vld [vmem:[%s238 + $0x30] sm:$0xf]
                  %253 = vst [vmem:[%s239 + $0x18] sm:$0xf] %v252
                  %v254 = vld [vmem:[%s238 + $0x38] sm:$0xf]
                  %255 = vst [vmem:[%s239 + $0x1c] sm:$0xf] %v254
                $region96: #{transformer_forward.9} parent=83 // loop_footer
                  %s237 = sadd.s32 1, %s233
                $region97: #{transformer_forward.9} parent=83 // loop_footer_branch
                  %232 = sbr.rel target = $region93
                $region98: #{transformer_forward.9} parent=83 // loop_exit
                  _
              $region84: #{transformer_forward.9} parent=68 // pred_fallthru
                _
            $region69: #{transformer_forward.9} parent=64 // pred_fallthru
              _
            // Predicated region
            $region70: #{transformer_forward.9} parent=64 // pred_check
              _
            $region71: #{transformer_forward.9} parent=64 // pred_check_branch
              %195 = sbr.rel (0) target = $region73
            $region72: #{transformer_forward.9} parent=64 // pred_region
              loop: start=0, step=1, limit=1
              $region74: #{transformer_forward.9} parent=72 // loop_pre_header
                _
              $region75: #{transformer_forward.9} parent=72 // loop_header
                %s198 = sphi 0, %s202
                %p199 = scmp.ge.s32.totalorder %s198, 1
                %s203 = sphi %s189, %s189
                %s204 = sphi %s187, %s187
              $region76: #{transformer_forward.9} parent=72 // loop_header_branch
                %201 = sbr.rel (%p199) target = $region80
              $region77: #{transformer_forward.9} parent=72 // loop_body
                %v205 = vld [vmem:[%s203] sm:$0xf]
                %206 = vst [vmem:[%s204] sm:$0xf] %v205
                %v207 = vld [vmem:[%s203 + $0x8] sm:$0xf]
                %208 = vst [vmem:[%s204 + $0x4] sm:$0xf] %v207
                %v209 = vld [vmem:[%s203 + $0x10] sm:$0xf]
                %210 = vst [vmem:[%s204 + $0x8] sm:$0xf] %v209
                %v211 = vld [vmem:[%s203 + $0x18] sm:$0xf]
                %212 = vst [vmem:[%s204 + $0xc] sm:$0xf] %v211
                %v213 = vld [vmem:[%s203 + $0x20] sm:$0xf]
                %214 = vst [vmem:[%s204 + $0x10] sm:$0xf] %v213
                %v215 = vld [vmem:[%s203 + $0x28] sm:$0xf]
                %216 = vst [vmem:[%s204 + $0x14] sm:$0xf] %v215
                %v217 = vld [vmem:[%s203 + $0x30] sm:$0xf]
                %218 = vst [vmem:[%s204 + $0x18] sm:$0xf] %v217
                %v219 = vld [vmem:[%s203 + $0x38] sm:$0xf]
                %220 = vst [vmem:[%s204 + $0x1c] sm:$0xf] %v219
              $region78: #{transformer_forward.9} parent=72 // loop_footer
                %s202 = sadd.s32 1, %s198
              $region79: #{transformer_forward.9} parent=72 // loop_footer_branch
                %197 = sbr.rel target = $region75
              $region80: #{transformer_forward.9} parent=72 // loop_exit
                _
            $region73: #{transformer_forward.9} parent=64 // pred_fallthru
              _
          $region65: #{transformer_forward.9} parent=60 // pred_fallthru
            _
          %256 = vnop
        $region61: #{transformer_forward.9} parent=15 // pred_fallthru
          _
      $region16: #{transformer_forward.9} parent=5 // pred_fallthru
        _
      %p257 = scmp.le.s32.totalorder 1, %s8
      %p258 = scmp.lt.s32.totalorder %s8, 3
      %p259 = pnand %p257, %p258
      %p260 = pneg %p259
      // Predicated region
      $region99: #{transformer_forward.9} parent=5 // pred_check
        _
      $region100: #{transformer_forward.9} parent=5 // pred_check_branch
        %262 = sbr.rel (%p259) target = $region102
      $region101: #{transformer_forward.9} parent=5 // pred_region
        %s263 = ssub.s32 %s8, 1
        %s264 = sand.u32 %s21, 1
        %s265 = sand.u32 %s21, 1
        %s266 = smul.addr %s265, 32
        %s267 = scalar_lea.vmem [#allocation2], %s266
        // Predicated region
        $region103: #{transformer_forward.9} parent=101 // pred_check
          %p268 = pneg %p34
        $region104: #{transformer_forward.9} parent=101 // pred_check_branch
          %270 = sbr.rel (%p268) target = $region106
        $region105: #{transformer_forward.9} parent=101 // pred_region
          _
        $region106: #{transformer_forward.9} parent=101 // pred_fallthru
          _
        %s271 = sand.u32 %s47, 1
        %s272 = sand.u32 %s47, 1
        %s273 = smul.addr %s272, 32
        %s274 = scalar_lea.vmem [#allocation3], %s273
        // Predicated region
        $region107: #{transformer_forward.9} parent=101 // pred_check
          %p275 = pneg %p60
        $region108: #{transformer_forward.9} parent=101 // pred_check_branch
          %277 = sbr.rel (%p275) target = $region110
        $region109: #{transformer_forward.9} parent=101 // pred_region
          _
        $region110: #{transformer_forward.9} parent=101 // pred_fallthru
          _
        %s278 = sand.u32 %s21, 1
        %s279 = sand.u32 %s21, 1
        %s280 = smul.addr %s279, 32
        %s281 = scalar_lea.vmem [#allocation2], %s280
        %p282 = pneg %p34
        %p283 = pneg %p31
        %s284 = sand.u32 %s47, 1
        %s285 = sand.u32 %s47, 1
        %s286 = smul.addr %s285, 32
        %s287 = scalar_lea.vmem [#allocation3], %s286
        %p288 = pneg %p60
        %p289 = pneg %p57
        %p290 = pneg %p86
        %p291 = pneg %p83
        %s292 = sand.u32 %s73, 1
        %s293 = sand.u32 %s73, 1
        %s294 = smul.addr %s293, 32
        %s295 = scalar_lea.vmem [#allocation4], %s294
        %s296 = smul.u32 4, %s13
        %s297 = smul.u32 4, %s13
        %s298 = smul.u32 4, %s13
        %v300 = vld [vmem:[%s267] sm:$0x1]
        %v301 = vld [vmem:[%s267 + $0x4] sm:$0x1]
        %v302 = vld [vmem:[%s267 + $0x8] sm:$0x1]
        %v303 = vld [vmem:[%s267 + $0xc] sm:$0x1]
        %v304 = vld [vmem:[%s267 + $0x10] sm:$0x1]
        %v305 = vld [vmem:[%s267 + $0x14] sm:$0x1]
        %v306 = vld [vmem:[%s267 + $0x18] sm:$0x1]
        %v307 = vld [vmem:[%s267 + $0x1c] sm:$0x1]
        %v308 = vld [vmem:[%s274] sm:$0x1]
        %v309 = vld [vmem:[%s274 + $0x4] sm:$0x1]
        %v310 = vld [vmem:[%s274 + $0x8] sm:$0x1]
        %v311 = vld [vmem:[%s274 + $0xc] sm:$0x1]
        %v312 = vld [vmem:[%s274 + $0x10] sm:$0x1]
        %v313 = vld [vmem:[%s274 + $0x14] sm:$0x1]
        %v314 = vld [vmem:[%s274 + $0x18] sm:$0x1]
        %v315 = vld [vmem:[%s274 + $0x1c] sm:$0x1]
        %v325 = vunpack.c.l.s4 1966171168
        %v326 = vunpack.c.0.s8 %v325
        %v327 = vlaneseq
        %v328 = vshrl.u32 %v327, 7
        %v329 = vsub.s32 %v326, %v328
        %v330 = vrot.slane %v308, %v329
        %v332 = vunpack.c.l.s4 1966171168
        %v333 = vunpack.c.0.s8 %v332
        %v334 = vlaneseq
        %v335 = vshrl.u32 %v334, 7
        %v336 = vsub.s32 %v333, %v335
        %v337 = vrot.slane %v330, %v336
        %v339 = vunpack.c.l.s4 1966171168
        %v340 = vunpack.c.0.s8 %v339
        %v341 = vlaneseq
        %v342 = vshrl.u32 %v341, 7
        %v343 = vsub.s32 %v340, %v342
        %v344 = vrot.slane %v309, %v343
        %v346 = vunpack.c.l.s4 1966171168
        %v347 = vunpack.c.0.s8 %v346
        %v348 = vlaneseq
        %v349 = vshrl.u32 %v348, 7
        %v350 = vsub.s32 %v347, %v349
        %v351 = vrot.slane %v344, %v350
        %v353 = vunpack.c.l.s4 1966171168
        %v354 = vunpack.c.0.s8 %v353
        %v355 = vlaneseq
        %v356 = vshrl.u32 %v355, 7
        %v357 = vsub.s32 %v354, %v356
        %v358 = vrot.slane %v310, %v357
        %v360 = vunpack.c.l.s4 1966171168
        %v361 = vunpack.c.0.s8 %v360
        %v362 = vlaneseq
        %v363 = vshrl.u32 %v362, 7
        %v364 = vsub.s32 %v361, %v363
        %v365 = vrot.slane %v358, %v364
        %v367 = vunpack.c.l.s4 1966171168
        %v368 = vunpack.c.0.s8 %v367
        %v369 = vlaneseq
        %v370 = vshrl.u32 %v369, 7
        %v371 = vsub.s32 %v368, %v370
        %v372 = vrot.slane %v311, %v371
        %v374 = vunpack.c.l.s4 1966171168
        %v375 = vunpack.c.0.s8 %v374
        %v376 = vlaneseq
        %v377 = vshrl.u32 %v376, 7
        %v378 = vsub.s32 %v375, %v377
        %v379 = vrot.slane %v372, %v378
        %v381 = vunpack.c.l.s4 1966171168
        %v382 = vunpack.c.0.s8 %v381
        %v383 = vlaneseq
        %v384 = vshrl.u32 %v383, 7
        %v385 = vsub.s32 %v382, %v384
        %v386 = vrot.slane %v312, %v385
        %v388 = vunpack.c.l.s4 1966171168
        %v389 = vunpack.c.0.s8 %v388
        %v390 = vlaneseq
        %v391 = vshrl.u32 %v390, 7
        %v392 = vsub.s32 %v389, %v391
        %v393 = vrot.slane %v386, %v392
        %v395 = vunpack.c.l.s4 1966171168
        %v396 = vunpack.c.0.s8 %v395
        %v397 = vlaneseq
        %v398 = vshrl.u32 %v397, 7
        %v399 = vsub.s32 %v396, %v398
        %v400 = vrot.slane %v313, %v399
        %v402 = vunpack.c.l.s4 1966171168
        %v403 = vunpack.c.0.s8 %v402
        %v404 = vlaneseq
        %v405 = vshrl.u32 %v404, 7
        %v406 = vsub.s32 %v403, %v405
        %v407 = vrot.slane %v400, %v406
        %v409 = vunpack.c.l.s4 1966171168
        %v410 = vunpack.c.0.s8 %v409
        %v411 = vlaneseq
        %v412 = vshrl.u32 %v411, 7
        %v413 = vsub.s32 %v410, %v412
        %v414 = vrot.slane %v314, %v413
        %v416 = vunpack.c.l.s4 1966171168
        %v417 = vunpack.c.0.s8 %v416
        %v418 = vlaneseq
        %v419 = vshrl.u32 %v418, 7
        %v420 = vsub.s32 %v417, %v419
        %v421 = vrot.slane %v414, %v420
        %v423 = vunpack.c.l.s4 1966171168
        %v424 = vunpack.c.0.s8 %v423
        %v425 = vlaneseq
        %v426 = vshrl.u32 %v425, 7
        %v427 = vsub.s32 %v424, %v426
        %v428 = vrot.slane %v315, %v427
        %v430 = vunpack.c.l.s4 1966171168
        %v431 = vunpack.c.0.s8 %v430
        %v432 = vlaneseq
        %v433 = vshrl.u32 %v432, 7
        %v434 = vsub.s32 %v431, %v433
        %v435 = vrot.slane %v428, %v434
        %v436 = vunpack.c.l.b16 %v337
        %v437 = vunpack.c.l.b16 %v351
        %v438 = vunpack.c.l.b16 %v365
        %v439 = vunpack.c.l.b16 %v379
        %v440 = vunpack.c.l.b16 %v393
        %v441 = vunpack.c.l.b16 %v407
        %v442 = vunpack.c.l.b16 %v421
        %v443 = vunpack.c.l.b16 %v435
        %v444 = vrot.slane %v437, 7
        %vm445 = vcmask 1041409
        %v446 = vsel %vm445, %v444, %v436
        %v447 = vrot.slane %v438, 6
        %vm448 = vcmask 1042434
        %v449 = vsel %vm448, %v447, %v446
        %v450 = vrot.slane %v439, 5
        %vm451 = vcmask 1043459
        %v452 = vsel %vm451, %v450, %v449
        %v453 = vrot.slane %v440, 4
        %vm454 = vcmask 1044484
        %v455 = vsel %vm454, %v453, %v452
        %v456 = vrot.slane %v441, 3
        %vm457 = vcmask 1045509
        %v458 = vsel %vm457, %v456, %v455
        %v459 = vrot.slane %v442, 2
        %vm460 = vcmask 1046534
        %v461 = vsel %vm460, %v459, %v458
        %v462 = vrot.slane %v443, 1
        %vm463 = vcmask 1047559
        %v464 = vsel %vm463, %v462, %v461
        %v465 = vpack.c.b16 %v464, %v464
        %v475 = vunpack.c.l.s4 1966171168
        %v476 = vunpack.c.0.s8 %v475
        %v477 = vlaneseq
        %v478 = vshrl.u32 %v477, 7
        %v479 = vsub.s32 %v476, %v478
        %v480 = vrot.slane %v300, %v479
        %v482 = vunpack.c.l.s4 1966171168
        %v483 = vunpack.c.0.s8 %v482
        %v484 = vlaneseq
        %v485 = vshrl.u32 %v484, 7
        %v486 = vsub.s32 %v483, %v485
        %v487 = vrot.slane %v480, %v486
        %v489 = vunpack.c.l.s4 1966171168
        %v490 = vunpack.c.0.s8 %v489
        %v491 = vlaneseq
        %v492 = vshrl.u32 %v491, 7
        %v493 = vsub.s32 %v490, %v492
        %v494 = vrot.slane %v301, %v493
        %v496 = vunpack.c.l.s4 1966171168
        %v497 = vunpack.c.0.s8 %v496
        %v498 = vlaneseq
        %v499 = vshrl.u32 %v498, 7
        %v500 = vsub.s32 %v497, %v499
        %v501 = vrot.slane %v494, %v500
        %v503 = vunpack.c.l.s4 1966171168
        %v504 = vunpack.c.0.s8 %v503
        %v505 = vlaneseq
        %v506 = vshrl.u32 %v505, 7
        %v507 = vsub.s32 %v504, %v506
        %v508 = vrot.slane %v302, %v507
        %v510 = vunpack.c.l.s4 1966171168
        %v511 = vunpack.c.0.s8 %v510
        %v512 = vlaneseq
        %v513 = vshrl.u32 %v512, 7
        %v514 = vsub.s32 %v511, %v513
        %v515 = vrot.slane %v508, %v514
        %v517 = vunpack.c.l.s4 1966171168
        %v518 = vunpack.c.0.s8 %v517
        %v519 = vlaneseq
        %v520 = vshrl.u32 %v519, 7
        %v521 = vsub.s32 %v518, %v520
        %v522 = vrot.slane %v303, %v521
        %v524 = vunpack.c.l.s4 1966171168
        %v525 = vunpack.c.0.s8 %v524
        %v526 = vlaneseq
        %v527 = vshrl.u32 %v526, 7
        %v528 = vsub.s32 %v525, %v527
        %v529 = vrot.slane %v522, %v528
        %v531 = vunpack.c.l.s4 1966171168
        %v532 = vunpack.c.0.s8 %v531
        %v533 = vlaneseq
        %v534 = vshrl.u32 %v533, 7
        %v535 = vsub.s32 %v532, %v534
        %v536 = vrot.slane %v304, %v535
        %v538 = vunpack.c.l.s4 1966171168
        %v539 = vunpack.c.0.s8 %v538
        %v540 = vlaneseq
        %v541 = vshrl.u32 %v540, 7
        %v542 = vsub.s32 %v539, %v541
        %v543 = vrot.slane %v536, %v542
        %v545 = vunpack.c.l.s4 1966171168
        %v546 = vunpack.c.0.s8 %v545
        %v547 = vlaneseq
        %v548 = vshrl.u32 %v547, 7
        %v549 = vsub.s32 %v546, %v548
        %v550 = vrot.slane %v305, %v549
        %v552 = vunpack.c.l.s4 1966171168
        %v553 = vunpack.c.0.s8 %v552
        %v554 = vlaneseq
        %v555 = vshrl.u32 %v554, 7
        %v556 = vsub.s32 %v553, %v555
        %v557 = vrot.slane %v550, %v556
        %v559 = vunpack.c.l.s4 1966171168
        %v560 = vunpack.c.0.s8 %v559
        %v561 = vlaneseq
        %v562 = vshrl.u32 %v561, 7
        %v563 = vsub.s32 %v560, %v562
        %v564 = vrot.slane %v306, %v563
        %v566 = vunpack.c.l.s4 1966171168
        %v567 = vunpack.c.0.s8 %v566
        %v568 = vlaneseq
        %v569 = vshrl.u32 %v568, 7
        %v570 = vsub.s32 %v567, %v569
        %v571 = vrot.slane %v564, %v570
        %v573 = vunpack.c.l.s4 1966171168
        %v574 = vunpack.c.0.s8 %v573
        %v575 = vlaneseq
        %v576 = vshrl.u32 %v575, 7
        %v577 = vsub.s32 %v574, %v576
        %v578 = vrot.slane %v307, %v577
        %v580 = vunpack.c.l.s4 1966171168
        %v581 = vunpack.c.0.s8 %v580
        %v582 = vlaneseq
        %v583 = vshrl.u32 %v582, 7
        %v584 = vsub.s32 %v581, %v583
        %v585 = vrot.slane %v578, %v584
        %v586 = vunpack.c.l.b16 %v487
        %v587 = vunpack.c.l.b16 %v501
        %v588 = vunpack.c.l.b16 %v515
        %v589 = vunpack.c.l.b16 %v529
        %v590 = vunpack.c.l.b16 %v543
        %v591 = vunpack.c.l.b16 %v557
        %v592 = vunpack.c.l.b16 %v571
        %v593 = vunpack.c.l.b16 %v585
        %v594 = vrot.slane %v587, 7
        %v595 = vsel %vm445, %v594, %v586
        %v596 = vrot.slane %v588, 6
        %v597 = vsel %vm448, %v596, %v595
        %v598 = vrot.slane %v589, 5
        %v599 = vsel %vm451, %v598, %v597
        %v600 = vrot.slane %v590, 4
        %v601 = vsel %vm454, %v600, %v599
        %v602 = vrot.slane %v591, 3
        %v603 = vsel %vm457, %v602, %v601
        %v604 = vrot.slane %v592, 2
        %v605 = vsel %vm460, %v604, %v603
        %v606 = vrot.slane %v593, 1
        %v607 = vsel %vm463, %v606, %v605
        %v608 = vpack.c.b16 %v607, %v607
        %609 = vrot.lane.b32.xlu0 %v608, 96
        %v610 = vpop.permute.xlu0 %609
        %vm611 = vcmask 15360
        %v614 = vsel %vm611, %v465, %v610
        %615 = vrot.lane.b32.xlu0 %v465, 126
        %v616 = vpop.permute.xlu0 %615
        %617 = vrot.lane.b32.xlu0 %v608, 64
        %v618 = vpop.permute.xlu0 %617
        %v621 = vsel %vm611, %v616, %v618
        %vm622 = vcmask 64512
        %v624 = vsel %vm622, %v608, 0
        %v626 = vsel %vm622, %v614, 0
        %628 = vmatprep.subr.bf16.mxu0 0
        %629 = vmatpush1.bf16.xpose.msra.mxu0 %v626
        %630 = vmatprep.subr.bf16.mxu0 0
        %631 = vmatpush1.bf16.xpose.msra.mxu0 0
        %632 = vmatprep.subr.bf16.mxu0 0
        %633 = vmatpush1.bf16.xpose.msra.mxu0 0
        %634 = vmatprep.subr.bf16.mxu0 0
        %635 = vmatpush1.bf16.xpose.msra.mxu0 0
        %636 = vmatprep.subr.bf16.mxu0 0
        %637 = vmatpush1.bf16.xpose.msra.mxu0 0
        %638 = vmatprep.subr.bf16.mxu0 0
        %639 = vmatpush1.bf16.xpose.msra.mxu0 0
        %640 = vmatprep.subr.bf16.mxu0 0
        %641 = vmatpush1.bf16.xpose.msra.mxu0 0
        %642 = vmatprep.subr.bf16.mxu0 0
        %643 = vmatpush1.bf16.xpose.msra.mxu0 0
        %644 = vmatprep.subr.bf16.mxu0 0
        %645 = vmatpush1.bf16.xpose.msra.mxu0 0
        %646 = vmatprep.subr.bf16.mxu0 0
        %647 = vmatpush1.bf16.xpose.msra.mxu0 0
        %648 = vmatprep.subr.bf16.mxu0 0
        %649 = vmatpush1.bf16.xpose.msra.mxu0 0
        %650 = vmatprep.subr.bf16.mxu0 0
        %651 = vmatpush1.bf16.xpose.msra.mxu0 0
        %652 = vmatprep.subr.bf16.mxu0 0
        %653 = vmatpush1.bf16.xpose.msra.mxu0 0
        %654 = vmatprep.subr.bf16.mxu0 0
        %655 = vmatpush1.bf16.xpose.msra.mxu0 0
        %656 = vmatprep.subr.bf16.mxu0 0
        %657 = vmatpush1.bf16.xpose.msra.mxu0 0
        %658 = vmatprep.subr.bf16.mxu0 0
        %659 = vmatpush1.bf16.xpose.msra.mxu0 0
        %660 = vmatprep.mubr.bf16.mxu0 0
        %661 = vmatmul.mubr.bf16.gmra.mrb[0].mxu0 %v624
        %v662 = vpop.f32.mrb[0].mxu0
        %v663 = vadd.f32 0.0, %v662
        %v664 = vpop.f32.mrb[0].mxu0
        %v665 = vpop.f32.mrb[0].mxu0
        %v666 = vpop.f32.mrb[0].mxu0
        %667 = vdwg.mxu0
        %v668 = vmul.f32 %v663, 0.35355338
        %v669 = vsel %vm622, %v668, -inf
        %670 = vmax.xlane.f32.xlu0 %v669
        %v671 = vpop.xlane.xlu0 %670
        %v672 = vsub.f32 %v668, %v671
        %v673 = vmul.f32 %v672, 1.442695
        %v674 = vpow.pop %v673
        %v675 = vsel %vm622, %v674, 0.0
        %676 = vadd.xlane.f32.xlu0 %v675
        %v677 = vpop.xlane.xlu0 %676
        %v678 = vrcp.pop %v677
        %v679 = vmul.f32 %v674, %v678
        %v680 = vpack.c.bf16 %v679, %v679
        %v682 = vsel %vm622, %v680, 0
        %vm684 = vcmask 1043456
        %v685 = vsel %vm684, %v621, 0
        %687 = vmatprep.subr.bf16.mxu0 0
        %688 = vmatpush1.bf16.msra.mxu0 %v685
        %689 = vmatprep.subr.bf16.mxu0 0
        %690 = vmatpush1.bf16.msra.mxu0 0
        %691 = vmatprep.subr.bf16.mxu0 0
        %692 = vmatpush1.bf16.msra.mxu0 0
        %693 = vmatprep.subr.bf16.mxu0 0
        %694 = vmatpush1.bf16.msra.mxu0 0
        %695 = vmatprep.subr.bf16.mxu0 0
        %696 = vmatpush1.bf16.msra.mxu0 0
        %697 = vmatprep.subr.bf16.mxu0 0
        %698 = vmatpush1.bf16.msra.mxu0 0
        %699 = vmatprep.subr.bf16.mxu0 0
        %700 = vmatpush1.bf16.msra.mxu0 0
        %701 = vmatprep.subr.bf16.mxu0 0
        %702 = vmatpush1.bf16.msra.mxu0 0
        %703 = vmatprep.subr.bf16.mxu0 0
        %704 = vmatpush1.bf16.msra.mxu0 0
        %705 = vmatprep.subr.bf16.mxu0 0
        %706 = vmatpush1.bf16.msra.mxu0 0
        %707 = vmatprep.subr.bf16.mxu0 0
        %708 = vmatpush1.bf16.msra.mxu0 0
        %709 = vmatprep.subr.bf16.mxu0 0
        %710 = vmatpush1.bf16.msra.mxu0 0
        %711 = vmatprep.subr.bf16.mxu0 0
        %712 = vmatpush1.bf16.msra.mxu0 0
        %713 = vmatprep.subr.bf16.mxu0 0
        %714 = vmatpush1.bf16.msra.mxu0 0
        %715 = vmatprep.subr.bf16.mxu0 0
        %716 = vmatpush1.bf16.msra.mxu0 0
        %717 = vmatprep.subr.bf16.mxu0 0
        %718 = vmatpush1.bf16.msra.mxu0 0
        %719 = vmatprep.mubr.bf16.mxu0 0
        %720 = vmatmul.mubr.bf16.gmra.mrb[0].mxu0 %v682
        %v721 = vpop.f32.mrb[0].mxu0
        %v722 = vadd.f32 0.0, %v721
        %v723 = vpop.f32.mrb[0].mxu0
        %v724 = vpop.f32.mrb[0].mxu0
        %v725 = vpop.f32.mrb[0].mxu0
        %726 = vdwg.mxu0
        %727 = vrot.lane.b32.xlu0 %v608, 120
        %v728 = vpop.permute.xlu0 %727
        %730 = vrot.lane.b32.xlu0 %v614, 120
        %v731 = vpop.permute.xlu0 %730
        %v733 = vsel %vm622, %v728, 0
        %v736 = vsel %vm622, %v731, 0
        %738 = vmatprep.subr.bf16.mxu0 0
        %739 = vmatpush1.bf16.xpose.msra.mxu0 %v736
        %740 = vmatprep.subr.bf16.mxu0 0
        %741 = vmatpush1.bf16.xpose.msra.mxu0 0
        %742 = vmatprep.subr.bf16.mxu0 0
        %743 = vmatpush1.bf16.xpose.msra.mxu0 0
        %744 = vmatprep.subr.bf16.mxu0 0
        %745 = vmatpush1.bf16.xpose.msra.mxu0 0
        %746 = vmatprep.subr.bf16.mxu0 0
        %747 = vmatpush1.bf16.xpose.msra.mxu0 0
        %748 = vmatprep.subr.bf16.mxu0 0
        %749 = vmatpush1.bf16.xpose.msra.mxu0 0
        %750 = vmatprep.subr.bf16.mxu0 0
        %751 = vmatpush1.bf16.xpose.msra.mxu0 0
        %752 = vmatprep.subr.bf16.mxu0 0
        %753 = vmatpush1.bf16.xpose.msra.mxu0 0
        %754 = vmatprep.subr.bf16.mxu0 0
        %755 = vmatpush1.bf16.xpose.msra.mxu0 0
        %756 = vmatprep.subr.bf16.mxu0 0
        %757 = vmatpush1.bf16.xpose.msra.mxu0 0
        %758 = vmatprep.subr.bf16.mxu0 0
        %759 = vmatpush1.bf16.xpose.msra.mxu0 0
        %760 = vmatprep.subr.bf16.mxu0 0
        %761 = vmatpush1.bf16.xpose.msra.mxu0 0
        %762 = vmatprep.subr.bf16.mxu0 0
        %763 = vmatpush1.bf16.xpose.msra.mxu0 0
        %764 = vmatprep.subr.bf16.mxu0 0
        %765 = vmatpush1.bf16.xpose.msra.mxu0 0
        %766 = vmatprep.subr.bf16.mxu0 0
        %767 = vmatpush1.bf16.xpose.msra.mxu0 0
        %768 = vmatprep.subr.bf16.mxu0 0
        %769 = vmatpush1.bf16.xpose.msra.mxu0 0
        %770 = vmatprep.mubr.bf16.mxu0 0
        %771 = vmatmul.mubr.bf16.gmra.mrb[0].mxu0 %v733
        %v772 = vpop.f32.mrb[0].mxu0
        %v773 = vadd.f32 0.0, %v772
        %v774 = vpop.f32.mrb[0].mxu0
        %v775 = vpop.f32.mrb[0].mxu0
        %v776 = vpop.f32.mrb[0].mxu0
        %777 = vdwg.mxu0
        %v778 = vmul.f32 %v773, 0.35355338
        %v779 = vsel %vm622, %v778, -inf
        %780 = vmax.xlane.f32.xlu0 %v779
        %v781 = vpop.xlane.xlu0 %780
        %v782 = vsub.f32 %v778, %v781
        %v783 = vmul.f32 %v782, 1.442695
        %v784 = vpow.pop %v783
        %v785 = vsel %vm622, %v784, 0.0
        %786 = vadd.xlane.f32.xlu0 %v785
        %v787 = vpop.xlane.xlu0 %786
        %v788 = vrcp.pop %v787
        %v789 = vmul.f32 %v784, %v788
        %v790 = vpack.c.bf16 %v789, %v789
        %792 = vrot.lane.b32.xlu0 %v621, 120
        %v793 = vpop.permute.xlu0 %792
        %v795 = vsel %vm622, %v790, 0
        %v798 = vsel %vm684, %v793, 0
        %800 = vmatprep.subr.bf16.mxu0 0
        %801 = vmatpush1.bf16.msra.mxu0 %v798
        %802 = vmatprep.subr.bf16.mxu0 0
        %803 = vmatpush1.bf16.msra.mxu0 0
        %804 = vmatprep.subr.bf16.mxu0 0
        %805 = vmatpush1.bf16.msra.mxu0 0
        %806 = vmatprep.subr.bf16.mxu0 0
        %807 = vmatpush1.bf16.msra.mxu0 0
        %808 = vmatprep.subr.bf16.mxu0 0
        %809 = vmatpush1.bf16.msra.mxu0 0
        %810 = vmatprep.subr.bf16.mxu0 0
        %811 = vmatpush1.bf16.msra.mxu0 0
        %812 = vmatprep.subr.bf16.mxu0 0
        %813 = vmatpush1.bf16.msra.mxu0 0
        %814 = vmatprep.subr.bf16.mxu0 0
        %815 = vmatpush1.bf16.msra.mxu0 0
        %816 = vmatprep.subr.bf16.mxu0 0
        %817 = vmatpush1.bf16.msra.mxu0 0
        %818 = vmatprep.subr.bf16.mxu0 0
        %819 = vmatpush1.bf16.msra.mxu0 0
        %820 = vmatprep.subr.bf16.mxu0 0
        %821 = vmatpush1.bf16.msra.mxu0 0
        %822 = vmatprep.subr.bf16.mxu0 0
        %823 = vmatpush1.bf16.msra.mxu0 0
        %824 = vmatprep.subr.bf16.mxu0 0
        %825 = vmatpush1.bf16.msra.mxu0 0
        %826 = vmatprep.subr.bf16.mxu0 0
        %827 = vmatpush1.bf16.msra.mxu0 0
        %828 = vmatprep.subr.bf16.mxu0 0
        %829 = vmatpush1.bf16.msra.mxu0 0
        %830 = vmatprep.subr.bf16.mxu0 0
        %831 = vmatpush1.bf16.msra.mxu0 0
        %832 = vmatprep.mubr.bf16.mxu0 0
        %833 = vmatmul.mubr.bf16.gmra.mrb[0].mxu0 %v795
        %v834 = vpop.f32.mrb[0].mxu0
        %v835 = vadd.f32 0.0, %v834
        %v836 = vpop.f32.mrb[0].mxu0
        %v837 = vpop.f32.mrb[0].mxu0
        %v838 = vpop.f32.mrb[0].mxu0
        %839 = vdwg.mxu0
        %841 = vrot.lane.b32.xlu0 %v835, 8
        %v842 = vpop.permute.xlu0 %841
        %v844 = vsel %vm622, %v722, %v842
        %v845 = vpack.c.bf16 %v844, %v844
        %v848 = vunpack.c.l.s4 1966171168
        %v849 = vunpack.c.0.s8 %v848
        %v850 = vlaneseq
        %v851 = vshrl.u32 %v850, 7
        %v852 = vsub.s32 %v849, %v851
        %v853 = vrot.slane %v845, %v852
        %v854 = vcombine.high %v853, %v853
        %v856 = vunpack.c.l.s4 1966171168
        %v857 = vunpack.c.0.s8 %v856
        %v858 = vlaneseq
        %v859 = vshrl.u32 %v858, 7
        %v860 = vsub.s32 %v857, %v859
        %v861 = vrot.slane %v853, %v860
        %v863 = vunpack.c.l.s4 1966171168
        %v864 = vunpack.c.0.s8 %v863
        %v865 = vlaneseq
        %v866 = vshrl.u32 %v865, 7
        %v867 = vsub.s32 %v864, %v866
        %v868 = vrot.slane %v854, %v867
        %v869 = vcombine.high %v861, %v861
        %v870 = vcombine.high %v868, %v868
        %v871 = vunpack.i.l.s16 %v861
        %v872 = vunpack.i.h.s16 %v861
        %v873 = vunpack.i.l.s16 %v868
        %v874 = vunpack.i.h.s16 %v868
        %v875 = vunpack.i.l.s16 %v869
        %v876 = vunpack.i.h.s16 %v869
        %v877 = vunpack.i.l.s16 %v870
        %v878 = vunpack.i.h.s16 %v870
        %v879 = vpack.i.b16 %v871, %v871
        %v880 = vpack.i.b16 %v872, %v872
        %v881 = vpack.i.b16 %v873, %v873
        %v882 = vpack.i.b16 %v874, %v874
        %v883 = vpack.i.b16 %v875, %v875
        %v884 = vpack.i.b16 %v876, %v876
        %v885 = vpack.i.b16 %v877, %v877
        %v886 = vpack.i.b16 %v878, %v878
        %vm895 = vcmask 122880
        %vm896 = vsmask.f32 256
        %vm897 = vmand %vm895, %vm896
        %v898 = vld [vmem:[%s295] sm:$0x1]
        %v899 = vsel %vm897, %v879, %v898
        %900 = vst [vmem:[%s295] sm:$0x1] %v899
        %v901 = vld [vmem:[%s295 + $0x4] sm:$0x1]
        %v902 = vsel %vm897, %v880, %v901
        %903 = vst [vmem:[%s295 + $0x4] sm:$0x1] %v902
        %v904 = vld [vmem:[%s295 + $0x8] sm:$0x1]
        %v905 = vsel %vm897, %v881, %v904
        %906 = vst [vmem:[%s295 + $0x8] sm:$0x1] %v905
        %v907 = vld [vmem:[%s295 + $0xc] sm:$0x1]
        %v908 = vsel %vm897, %v882, %v907
        %909 = vst [vmem:[%s295 + $0xc] sm:$0x1] %v908
        %v910 = vld [vmem:[%s295 + $0x10] sm:$0x1]
        %v911 = vsel %vm897, %v883, %v910
        %912 = vst [vmem:[%s295 + $0x10] sm:$0x1] %v911
        %v913 = vld [vmem:[%s295 + $0x14] sm:$0x1]
        %v914 = vsel %vm897, %v884, %v913
        %915 = vst [vmem:[%s295 + $0x14] sm:$0x1] %v914
        %v916 = vld [vmem:[%s295 + $0x18] sm:$0x1]
        %v917 = vsel %vm897, %v885, %v916
        %918 = vst [vmem:[%s295 + $0x18] sm:$0x1] %v917
        %v919 = vld [vmem:[%s295 + $0x1c] sm:$0x1]
        %v920 = vsel %vm897, %v886, %v919
        %921 = vst [vmem:[%s295 + $0x1c] sm:$0x1] %v920
        %922 = vrot.lane.b32.xlu0 %v608, 112
        %v923 = vpop.permute.xlu0 %922
        %924 = vrot.lane.b32.xlu0 %v614, 112
        %v925 = vpop.permute.xlu0 %924
        %v927 = vsel %vm622, %v923, 0
        %v930 = vsel %vm622, %v925, 0
        %932 = vmatprep.subr.bf16.mxu0 0
        %933 = vmatpush1.bf16.xpose.msra.mxu0 %v930
        %934 = vmatprep.subr.bf16.mxu0 0
        %935 = vmatpush1.bf16.xpose.msra.mxu0 0
        %936 = vmatprep.subr.bf16.mxu0 0
        %937 = vmatpush1.bf16.xpose.msra.mxu0 0
        %938 = vmatprep.subr.bf16.mxu0 0
        %939 = vmatpush1.bf16.xpose.msra.mxu0 0
        %940 = vmatprep.subr.bf16.mxu0 0
        %941 = vmatpush1.bf16.xpose.msra.mxu0 0
        %942 = vmatprep.subr.bf16.mxu0 0
        %943 = vmatpush1.bf16.xpose.msra.mxu0 0
        %944 = vmatprep.subr.bf16.mxu0 0
        %945 = vmatpush1.bf16.xpose.msra.mxu0 0
        %946 = vmatprep.subr.bf16.mxu0 0
        %947 = vmatpush1.bf16.xpose.msra.mxu0 0
        %948 = vmatprep.subr.bf16.mxu0 0
        %949 = vmatpush1.bf16.xpose.msra.mxu0 0
        %950 = vmatprep.subr.bf16.mxu0 0
        %951 = vmatpush1.bf16.xpose.msra.mxu0 0
        %952 = vmatprep.subr.bf16.mxu0 0
        %953 = vmatpush1.bf16.xpose.msra.mxu0 0
        %954 = vmatprep.subr.bf16.mxu0 0
        %955 = vmatpush1.bf16.xpose.msra.mxu0 0
        %956 = vmatprep.subr.bf16.mxu0 0
        %957 = vmatpush1.bf16.xpose.msra.mxu0 0
        %958 = vmatprep.subr.bf16.mxu0 0
        %959 = vmatpush1.bf16.xpose.msra.mxu0 0
        %960 = vmatprep.subr.bf16.mxu0 0
        %961 = vmatpush1.bf16.xpose.msra.mxu0 0
        %962 = vmatprep.subr.bf16.mxu0 0
        %963 = vmatpush1.bf16.xpose.msra.mxu0 0
        %964 = vmatprep.mubr.bf16.mxu0 0
        %965 = vmatmul.mubr.bf16.gmra.mrb[0].mxu0 %v927
        %v966 = vpop.f32.mrb[0].mxu0
        %v967 = vadd.f32 0.0, %v966
        %v968 = vpop.f32.mrb[0].mxu0
        %v969 = vpop.f32.mrb[0].mxu0
        %v970 = vpop.f32.mrb[0].mxu0
        %971 = vdwg.mxu0
        %v972 = vmul.f32 %v967, 0.35355338
        %v973 = vsel %vm622, %v972, -inf
        %974 = vmax.xlane.f32.xlu0 %v973
        %v975 = vpop.xlane.xlu0 %974
        %v976 = vsub.f32 %v972, %v975
        %v977 = vmul.f32 %v976, 1.442695
        %v978 = vpow.pop %v977
        %v979 = vsel %vm622, %v978, 0.0
        %980 = vadd.xlane.f32.xlu0 %v979
        %v981 = vpop.xlane.xlu0 %980
        %v982 = vrcp.pop %v981
        %v983 = vmul.f32 %v978, %v982
        %v984 = vpack.c.bf16 %v983, %v983
        %985 = vrot.lane.b32.xlu0 %v621, 112
        %v986 = vpop.permute.xlu0 %985
        %v988 = vsel %vm622, %v984, 0
        %v991 = vsel %vm684, %v986, 0
        %993 = vmatprep.subr.bf16.mxu0 0
        %994 = vmatpush1.bf16.msra.mxu0 %v991
        %995 = vmatprep.subr.bf16.mxu0 0
        %996 = vmatpush1.bf16.msra.mxu0 0
        %997 = vmatprep.subr.bf16.mxu0 0
        %998 = vmatpush1.bf16.msra.mxu0 0
        %999 = vmatprep.subr.bf16.mxu0 0
        %1000 = vmatpush1.bf16.msra.mxu0 0
        %1001 = vmatprep.subr.bf16.mxu0 0
        %1002 = vmatpush1.bf16.msra.mxu0 0
        %1003 = vmatprep.subr.bf16.mxu0 0
        %1004 = vmatpush1.bf16.msra.mxu0 0
        %1005 = vmatprep.subr.bf16.mxu0 0
        %1006 = vmatpush1.bf16.msra.mxu0 0
        %1007 = vmatprep.subr.bf16.mxu0 0
        %1008 = vmatpush1.bf16.msra.mxu0 0
        %1009 = vmatprep.subr.bf16.mxu0 0
        %1010 = vmatpush1.bf16.msra.mxu0 0
        %1011 = vmatprep.subr.bf16.mxu0 0
        %1012 = vmatpush1.bf16.msra.mxu0 0
        %1013 = vmatprep.subr.bf16.mxu0 0
        %1014 = vmatpush1.bf16.msra.mxu0 0
        %1015 = vmatprep.subr.bf16.mxu0 0
        %1016 = vmatpush1.bf16.msra.mxu0 0
        %1017 = vmatprep.subr.bf16.mxu0 0
        %1018 = vmatpush1.bf16.msra.mxu0 0
        %1019 = vmatprep.subr.bf16.mxu0 0
        %1020 = vmatpush1.bf16.msra.mxu0 0
        %1021 = vmatprep.subr.bf16.mxu0 0
        %1022 = vmatpush1.bf16.msra.mxu0 0
        %1023 = vmatprep.subr.bf16.mxu0 0
        %1024 = vmatpush1.bf16.msra.mxu0 0
        %1025 = vmatprep.mubr.bf16.mxu0 0
        %1026 = vmatmul.mubr.bf16.gmra.mrb[0].mxu0 %v988
        %v1027 = vpop.f32.mrb[0].mxu0
        %v1028 = vadd.f32 0.0, %v1027
        %v1029 = vpop.f32.mrb[0].mxu0
        %v1030 = vpop.f32.mrb[0].mxu0
        %v1031 = vpop.f32.mrb[0].mxu0
        %1032 = vdwg.mxu0
        %1033 = vrot.lane.b32.xlu0 %v608, 104
        %v1034 = vpop.permute.xlu0 %1033
        %1035 = vrot.lane.b32.xlu0 %v614, 104
        %v1036 = vpop.permute.xlu0 %1035
        %v1038 = vsel %vm622, %v1034, 0
        %v1041 = vsel %vm622, %v1036, 0
        %1043 = vmatprep.subr.bf16.mxu0 0
        %1044 = vmatpush1.bf16.xpose.msra.mxu0 %v1041
        %1045 = vmatprep.subr.bf16.mxu0 0
        %1046 = vmatpush1.bf16.xpose.msra.mxu0 0
        %1047 = vmatprep.subr.bf16.mxu0 0
        %1048 = vmatpush1.bf16.xpose.msra.mxu0 0
        %1049 = vmatprep.subr.bf16.mxu0 0
        %1050 = vmatpush1.bf16.xpose.msra.mxu0 0
        %1051 = vmatprep.subr.bf16.mxu0 0
        %1052 = vmatpush1.bf16.xpose.msra.mxu0 0
        %1053 = vmatprep.subr.bf16.mxu0 0
        %1054 = vmatpush1.bf16.xpose.msra.mxu0 0
        %1055 = vmatprep.subr.bf16.mxu0 0
        %1056 = vmatpush1.bf16.xpose.msra.mxu0 0
        %1057 = vmatprep.subr.bf16.mxu0 0
        %1058 = vmatpush1.bf16.xpose.msra.mxu0 0
        %1059 = vmatprep.subr.bf16.mxu0 0
        %1060 = vmatpush1.bf16.xpose.msra.mxu0 0
        %1061 = vmatprep.subr.bf16.mxu0 0
        %1062 = vmatpush1.bf16.xpose.msra.mxu0 0
        %1063 = vmatprep.subr.bf16.mxu0 0
        %1064 = vmatpush1.bf16.xpose.msra.mxu0 0
        %1065 = vmatprep.subr.bf16.mxu0 0
        %1066 = vmatpush1.bf16.xpose.msra.mxu0 0
        %1067 = vmatprep.subr.bf16.mxu0 0
        %1068 = vmatpush1.bf16.xpose.msra.mxu0 0
        %1069 = vmatprep.subr.bf16.mxu0 0
        %1070 = vmatpush1.bf16.xpose.msra.mxu0 0
        %1071 = vmatprep.subr.bf16.mxu0 0
        %1072 = vmatpush1.bf16.xpose.msra.mxu0 0
        %1073 = vmatprep.subr.bf16.mxu0 0
        %1074 = vmatpush1.bf16.xpose.msra.mxu0 0
        %1075 = vmatprep.mubr.bf16.mxu0 0
        %1076 = vmatmul.mubr.bf16.gmra.mrb[0].mxu0 %v1038
        %v1077 = vpop.f32.mrb[0].mxu0
        %v1078 = vadd.f32 0.0, %v1077
        %v1079 = vpop.f32.mrb[0].mxu0
        %v1080 = vpop.f32.mrb[0].mxu0
        %v1081 = vpop.f32.mrb[0].mxu0
        %1082 = vdwg.mxu0
        %v1083 = vmul.f32 %v1078, 0.35355338
        %v1084 = vsel %vm622, %v1083, -inf
        %1085 = vmax.xlane.f32.xlu0 %v1084
        %v1086 = vpop.xlane.xlu0 %1085
        %v1087 = vsub.f32 %v1083, %v1086
        %v1088 = vmul.f32 %v1087, 1.442695
        %v1089 = vpow.pop %v1088
        %v1090 = vsel %vm622, %v1089, 0.0
        %1091 = vadd.xlane.f32.xlu0 %v1090
        %v1092 = vpop.xlane.xlu0 %1091
        %v1093 = vrcp.pop %v1092
        %v1094 = vmul.f32 %v1089, %v1093
        %v1095 = vpack.c.bf16 %v1094, %v1094
        %1096 = vrot.lane.b32.xlu0 %v621, 104
        %v1097 = vpop.permute.xlu0 %1096
        %v1099 = vsel %vm622, %v1095, 0
        %v1102 = vsel %vm684, %v1097, 0
        %1104 = vmatprep.subr.bf16.mxu0 0
        %1105 = vmatpush1.bf16.msra.mxu0 %v1102
        %1106 = vmatprep.subr.bf16.mxu0 0
        %1107 = vmatpush1.bf16.msra.mxu0 0
        %1108 = vmatprep.subr.bf16.mxu0 0
        %1109 = vmatpush1.bf16.msra.mxu0 0
        %1110 = vmatprep.subr.bf16.mxu0 0
        %1111 = vmatpush1.bf16.msra.mxu0 0
        %1112 = vmatprep.subr.bf16.mxu0 0
        %1113 = vmatpush1.bf16.msra.mxu0 0
        %1114 = vmatprep.subr.bf16.mxu0 0
        %1115 = vmatpush1.bf16.msra.mxu0 0
        %1116 = vmatprep.subr.bf16.mxu0 0
        %1117 = vmatpush1.bf16.msra.mxu0 0
        %1118 = vmatprep.subr.bf16.mxu0 0
        %1119 = vmatpush1.bf16.msra.mxu0 0
        %1120 = vmatprep.subr.bf16.mxu0 0
        %1121 = vmatpush1.bf16.msra.mxu0 0
        %1122 = vmatprep.subr.bf16.mxu0 0
        %1123 = vmatpush1.bf16.msra.mxu0 0
        %1124 = vmatprep.subr.bf16.mxu0 0
        %1125 = vmatpush1.bf16.msra.mxu0 0
        %1126 = vmatprep.subr.bf16.mxu0 0
        %1127 = vmatpush1.bf16.msra.mxu0 0
        %1128 = vmatprep.subr.bf16.mxu0 0
        %1129 = vmatpush1.bf16.msra.mxu0 0
        %1130 = vmatprep.subr.bf16.mxu0 0
        %1131 = vmatpush1.bf16.msra.mxu0 0
        %1132 = vmatprep.subr.bf16.mxu0 0
        %1133 = vmatpush1.bf16.msra.mxu0 0
        %1134 = vmatprep.subr.bf16.mxu0 0
        %1135 = vmatpush1.bf16.msra.mxu0 0
        %1136 = vmatprep.mubr.bf16.mxu0 0
        %1137 = vmatmul.mubr.bf16.gmra.mrb[0].mxu0 %v1099
        %v1138 = vpop.f32.mrb[0].mxu0
        %v1139 = vadd.f32 0.0, %v1138
        %v1140 = vpop.f32.mrb[0].mxu0
        %v1141 = vpop.f32.mrb[0].mxu0
        %v1142 = vpop.f32.mrb[0].mxu0
        %1143 = vdwg.mxu0
        %1145 = vrot.lane.b32.xlu0 %v1139, 8
        %v1146 = vpop.permute.xlu0 %1145
        %v1148 = vsel %vm622, %v1028, %v1146
        %v1149 = vpack.c.bf16 %v1148, %v1148
        %v1152 = vunpack.c.l.s4 1966171168
        %v1153 = vunpack.c.0.s8 %v1152
        %v1154 = vlaneseq
        %v1155 = vshrl.u32 %v1154, 7
        %v1156 = vsub.s32 %v1153, %v1155
        %v1157 = vrot.slane %v1149, %v1156
        %v1158 = vcombine.high %v1157, %v1157
        %v1160 = vunpack.c.l.s4 1966171168
        %v1161 = vunpack.c.0.s8 %v1160
        %v1162 = vlaneseq
        %v1163 = vshrl.u32 %v1162, 7
        %v1164 = vsub.s32 %v1161, %v1163
        %v1165 = vrot.slane %v1157, %v1164
        %v1167 = vunpack.c.l.s4 1966171168
        %v1168 = vunpack.c.0.s8 %v1167
        %v1169 = vlaneseq
        %v1170 = vshrl.u32 %v1169, 7
        %v1171 = vsub.s32 %v1168, %v1170
        %v1172 = vrot.slane %v1158, %v1171
        %v1173 = vcombine.high %v1165, %v1165
        %v1174 = vcombine.high %v1172, %v1172
        %v1175 = vunpack.i.l.s16 %v1165
        %v1176 = vunpack.i.h.s16 %v1165
        %v1177 = vunpack.i.l.s16 %v1172
        %v1178 = vunpack.i.h.s16 %v1172
        %v1179 = vunpack.i.l.s16 %v1173
        %v1180 = vunpack.i.h.s16 %v1173
        %v1181 = vunpack.i.l.s16 %v1174
        %v1182 = vunpack.i.h.s16 %v1174
        %v1183 = vpack.i.b16 %v1175, %v1175
        %v1184 = vpack.i.b16 %v1176, %v1176
        %v1185 = vpack.i.b16 %v1177, %v1177
        %v1186 = vpack.i.b16 %v1178, %v1178
        %v1187 = vpack.i.b16 %v1179, %v1179
        %v1188 = vpack.i.b16 %v1180, %v1180
        %v1189 = vpack.i.b16 %v1181, %v1181
        %v1190 = vpack.i.b16 %v1182, %v1182
        %1191 = vrot.lane.b32.xlu0 %v1183, 16
        %v1192 = vpop.permute.xlu0 %1191
        %1193 = vrot.lane.b32.xlu0 %v1184, 16
        %v1194 = vpop.permute.xlu0 %1193
        %1195 = vrot.lane.b32.xlu0 %v1185, 16
        %v1196 = vpop.permute.xlu0 %1195
        %1197 = vrot.lane.b32.xlu0 %v1186, 16
        %v1198 = vpop.permute.xlu0 %1197
        %1199 = vrot.lane.b32.xlu0 %v1187, 16
        %v1200 = vpop.permute.xlu0 %1199
        %1201 = vrot.lane.b32.xlu0 %v1188, 16
        %v1202 = vpop.permute.xlu0 %1201
        %1203 = vrot.lane.b32.xlu0 %v1189, 16
        %v1204 = vpop.permute.xlu0 %1203
        %1205 = vrot.lane.b32.xlu0 %v1190, 16
        %v1206 = vpop.permute.xlu0 %1205
        %vm1215 = vcmask 254080
        %vm1216 = vmand %vm1215, %vm896
        %v1217 = vld [vmem:[%s295] sm:$0x1]
        %v1218 = vsel %vm1216, %v1192, %v1217
        %1219 = vst [vmem:[%s295] sm:$0x1] %v1218
        %v1220 = vld [vmem:[%s295 + $0x4] sm:$0x1]
        %v1221 = vsel %vm1216, %v1194, %v1220
        %1222 = vst [vmem:[%s295 + $0x4] sm:$0x1] %v1221
        %v1223 = vld [vmem:[%s295 + $0x8] sm:$0x1]
        %v1224 = vsel %vm1216, %v1196, %v1223
        %1225 = vst [vmem:[%s295 + $0x8] sm:$0x1] %v1224
        %v1226 = vld [vmem:[%s295 + $0xc] sm:$0x1]
        %v1227 = vsel %vm1216, %v1198, %v1226
        %1228 = vst [vmem:[%s295 + $0xc] sm:$0x1] %v1227
        %v1229 = vld [vmem:[%s295 + $0x10] sm:$0x1]
        %v1230 = vsel %vm1216, %v1200, %v1229
        %1231 = vst [vmem:[%s295 + $0x10] sm:$0x1] %v1230
        %v1232 = vld [vmem:[%s295 + $0x14] sm:$0x1]
        %v1233 = vsel %vm1216, %v1202, %v1232
        %1234 = vst [vmem:[%s295 + $0x14] sm:$0x1] %v1233
        %v1235 = vld [vmem:[%s295 + $0x18] sm:$0x1]
        %v1236 = vsel %vm1216, %v1204, %v1235
        %1237 = vst [vmem:[%s295 + $0x18] sm:$0x1] %v1236
        %v1238 = vld [vmem:[%s295 + $0x1c] sm:$0x1]
        %v1239 = vsel %vm1216, %v1206, %v1238
        %1240 = vst [vmem:[%s295 + $0x1c] sm:$0x1] %v1239
        %s1241 = scalar_lea.vmem %s267, 1 [#allocation2]
        %v1242 = vld [vmem:[%s1241] sm:$0x1]
        %v1243 = vld [vmem:[%s1241 + $0x4] sm:$0x1]
        %v1244 = vld [vmem:[%s1241 + $0x8] sm:$0x1]
        %v1245 = vld [vmem:[%s1241 + $0xc] sm:$0x1]
        %v1246 = vld [vmem:[%s1241 + $0x10] sm:$0x1]
        %v1247 = vld [vmem:[%s1241 + $0x14] sm:$0x1]
        %v1248 = vld [vmem:[%s1241 + $0x18] sm:$0x1]
        %v1249 = vld [vmem:[%s1241 + $0x1c] sm:$0x1]
        %s1250 = scalar_lea.vmem %s274, 1 [#allocation3]
        %v1251 = vld [vmem:[%s1250] sm:$0x1]
        %v1252 = vld [vmem:[%s1250 + $0x4] sm:$0x1]
        %v1253 = vld [vmem:[%s1250 + $0x8] sm:$0x1]
        %v1254 = vld [vmem:[%s1250 + $0xc] sm:$0x1]
        %v1255 = vld [vmem:[%s1250 + $0x10] sm:$0x1]
        %v1256 = vld [vmem:[%s1250 + $0x14] sm:$0x1]
        %v1257 = vld [vmem:[%s1250 + $0x18] sm:$0x1]
        %v1258 = vld [vmem:[%s1250 + $0x1c] sm:$0x1]
        %v1268 = vunpack.c.l.s4 1966171168
        %v1269 = vunpack.c.0.s8 %v1268
        %v1270 = vlaneseq
        %v1271 = vshrl.u32 %v1270, 7
        %v1272 = vsub.s32 %v1269, %v1271
        %v1273 = vrot.slane %v1251, %v1272
        %v1275 = vunpack.c.l.s4 1966171168
        %v1276 = vunpack.c.0.s8 %v1275
        %v1277 = vlaneseq
        %v1278 = vshrl.u32 %v1277, 7
        %v1279 = vsub.s32 %v1276, %v1278
        %v1280 = vrot.slane %v1273, %v1279
        %v1282 = vunpack.c.l.s4 1966171168
        %v1283 = vunpack.c.0.s8 %v1282
        %v1284 = vlaneseq
        %v1285 = vshrl.u32 %v1284, 7
        %v1286 = vsub.s32 %v1283, %v1285
        %v1287 = vrot.slane %v1252, %v1286
        %v1289 = vunpack.c.l.s4 1966171168
        %v1290 = vunpack.c.0.s8 %v1289
        %v1291 = vlaneseq
        %v1292 = vshrl.u32 %v1291, 7
        %v1293 = vsub.s32 %v1290, %v1292
        %v1294 = vrot.slane %v1287, %v1293
        %v1296 = vunpack.c.l.s4 1966171168
        %v1297 = vunpack.c.0.s8 %v1296
        %v1298 = vlaneseq
        %v1299 = vshrl.u32 %v1298, 7
        %v1300 = vsub.s32 %v1297, %v1299
        %v1301 = vrot.slane %v1253, %v1300
        %v1303 = vunpack.c.l.s4 1966171168
        %v1304 = vunpack.c.0.s8 %v1303
        %v1305 = vlaneseq
        %v1306 = vshrl.u32 %v1305, 7
        %v1307 = vsub.s32 %v1304, %v1306
        %v1308 = vrot.slane %v1301, %v1307
        %v1310 = vunpack.c.l.s4 1966171168
        %v1311 = vunpack.c.0.s8 %v1310
        %v1312 = vlaneseq
        %v1313 = vshrl.u32 %v1312, 7
        %v1314 = vsub.s32 %v1311, %v1313
        %v1315 = vrot.slane %v1254, %v1314
        %v1317 = vunpack.c.l.s4 1966171168
        %v1318 = vunpack.c.0.s8 %v1317
        %v1319 = vlaneseq
        %v1320 = vshrl.u32 %v1319, 7
        %v1321 = vsub.s32 %v1318, %v1320
        %v1322 = vrot.slane %v1315, %v1321
        %v1324 = vunpack.c.l.s4 1966171168
        %v1325 = vunpack.c.0.s8 %v1324
        %v1326 = vlaneseq
        %v1327 = vshrl.u32 %v1326, 7
        %v1328 = vsub.s32 %v1325, %v1327
        %v1329 = vrot.slane %v1255, %v1328
        %v1331 = vunpack.c.l.s4 1966171168
        %v1332 = vunpack.c.0.s8 %v1331
        %v1333 = vlaneseq
        %v1334 = vshrl.u32 %v1333, 7
        %v1335 = vsub.s32 %v1332, %v1334
        %v1336 = vrot.slane %v1329, %v1335
        %v1338 = vunpack.c.l.s4 1966171168
        %v1339 = vunpack.c.0.s8 %v1338
        %v1340 = vlaneseq
        %v1341 = vshrl.u32 %v1340, 7
        %v1342 = vsub.s32 %v1339, %v1341
        %v1343 = vrot.slane %v1256, %v1342
        %v1345 = vunpack.c.l.s4 1966171168
        %v1346 = vunpack.c.0.s8 %v1345
        %v1347 = vlaneseq
        %v1348 = vshrl.u32 %v1347, 7
        %v1349 = vsub.s32 %v1346, %v1348
        %v1350 = vrot.slane %v1343, %v1349
        %v1352 = vunpack.c.l.s4 1966171168
        %v1353 = vunpack.c.0.s8 %v1352
        %v1354 = vlaneseq
        %v1355 = vshrl.u32 %v1354, 7
        %v1356 = vsub.s32 %v1353, %v1355
        %v1357 = vrot.slane %v1257, %v1356
        %v1359 = vunpack.c.l.s4 1966171168
        %v1360 = vunpack.c.0.s8 %v1359
        %v1361 = vlaneseq
        %v1362 = vshrl.u32 %v1361, 7
        %v1363 = vsub.s32 %v1360, %v1362
        %v1364 = vrot.slane %v1357, %v1363
        %v1366 = vunpack.c.l.s4 1966171168
        %v1367 = vunpack.c.0.s8 %v1366
        %v1368 = vlaneseq
        %v1369 = vshrl.u32 %v1368, 7
        %v1370 = vsub.s32 %v1367, %v1369
        %v1371 = vrot.slane %v1258, %v1370
        %v1373 = vunpack.c.l.s4 1966171168
        %v1374 = vunpack.c.0.s8 %v1373
        %v1375 = vlaneseq
        %v1376 = vshrl.u32 %v1375, 7
        %v1377 = vsub.s32 %v1374, %v1376
        %v1378 = vrot.slane %v1371, %v1377
        %v1379 = vunpack.c.l.b16 %v1280
        %v1380 = vunpack.c.l.b16 %v1294
        %v1381 = vunpack.c.l.b16 %v1308
        %v1382 = vunpack.c.l.b16 %v1322
        %v1383 = vunpack.c.l.b16 %v1336
        %v1384 = vunpack.c.l.b16 %v1350
        %v1385 = vunpack.c.l.b16 %v1364
        %v1386 = vunpack.c.l.b16 %v1378
        %v1387 = vrot.slane %v1380, 7
        %v1388 = vsel %vm445, %v1387, %v1379
        %v1389 = vrot.slane %v1381, 6
        %v1390 = vsel %vm448, %v1389, %v1388
        %v1391 = vrot.slane %v1382, 5
        %v1392 = vsel %vm451, %v1391, %v1390
        %v1393 = vrot.slane %v1383, 4
        %v1394 = vsel %vm454, %v1393, %v1392
        %v1395 = vrot.slane %v1384, 3
        %v1396 = vsel %vm457, %v1395, %v1394
        %v1397 = vrot.slane %v1385, 2
        %v1398 = vsel %vm460, %v1397, %v1396
        %v1399 = vrot.slane %v1386, 1
        %v1400 = vsel %vm463, %v1399, %v1398
        %v1401 = vpack.c.b16 %v1400, %v1400
        %v1411 = vunpack.c.l.s4 1966171168
        %v1412 = vunpack.c.0.s8 %v1411
        %v1413 = vlaneseq
        %v1414 = vshrl.u32 %v1413, 7
        %v1415 = vsub.s32 %v1412, %v1414
        %v1416 = vrot.slane %v1242, %v1415
        %v1418 = vunpack.c.l.s4 1966171168
        %v1419 = vunpack.c.0.s8 %v1418
        %v1420 = vlaneseq
        %v1421 = vshrl.u32 %v1420, 7
        %v1422 = vsub.s32 %v1419, %v1421
        %v1423 = vrot.slane %v1416, %v1422
        %v1425 = vunpack.c.l.s4 1966171168
        %v1426 = vunpack.c.0.s8 %v1425
        %v1427 = vlaneseq
        %v1428 = vshrl.u32 %v1427, 7
        %v1429 = vsub.s32 %v1426, %v1428
        %v1430 = vrot.slane %v1243, %v1429
        %v1432 = vunpack.c.l.s4 1966171168
        %v1433 = vunpack.c.0.s8 %v1432
        %v1434 = vlaneseq
        %v1435 = vshrl.u32 %v1434, 7
        %v1436 = vsub.s32 %v1433, %v1435
        %v1437 = vrot.slane %v1430, %v1436
        %v1439 = vunpack.c.l.s4 1966171168
        %v1440 = vunpack.c.0.s8 %v1439
        %v1441 = vlaneseq
        %v1442 = vshrl.u32 %v1441, 7
        %v1443 = vsub.s32 %v1440, %v1442
        %v1444 = vrot.slane %v1244, %v1443
        %v1446 = vunpack.c.l.s4 1966171168
        %v1447 = vunpack.c.0.s8 %v1446
        %v1448 = vlaneseq
        %v1449 = vshrl.u32 %v1448, 7
        %v1450 = vsub.s32 %v1447, %v1449
        %v1451 = vrot.slane %v1444, %v1450
        %v1453 = vunpack.c.l.s4 1966171168
        %v1454 = vunpack.c.0.s8 %v1453
        %v1455 = vlaneseq
        %v1456 = vshrl.u32 %v1455, 7
        %v1457 = vsub.s32 %v1454, %v1456
        %v1458 = vrot.slane %v1245, %v1457
        %v1460 = vunpack.c.l.s4 1966171168
        %v1461 = vunpack.c.0.s8 %v1460
        %v1462 = vlaneseq
        %v1463 = vshrl.u32 %v1462, 7
        %v1464 = vsub.s32 %v1461, %v1463
        %v1465 = vrot.slane %v1458, %v1464
        %v1467 = vunpack.c.l.s4 1966171168
        %v1468 = vunpack.c.0.s8 %v1467
        %v1469 = vlaneseq
        %v1470 = vshrl.u32 %v1469, 7
        %v1471 = vsub.s32 %v1468, %v1470
        %v1472 = vrot.slane %v1246, %v1471
        %v1474 = vunpack.c.l.s4 1966171168
        %v1475 = vunpack.c.0.s8 %v1474
        %v1476 = vlaneseq
        %v1477 = vshrl.u32 %v1476, 7
        %v1478 = vsub.s32 %v1475, %v1477
        %v1479 = vrot.slane %v1472, %v1478
        %v1481 = vunpack.c.l.s4 1966171168
        %v1482 = vunpack.c.0.s8 %v1481
        %v1483 = vlaneseq
        %v1484 = vshrl.u32 %v1483, 7
        %v1485 = vsub.s32 %v1482, %v1484
        %v1486 = vrot.slane %v1247, %v1485
        %v1488 = vunpack.c.l.s4 1966171168
        %v1489 = vunpack.c.0.s8 %v1488
        %v1490 = vlaneseq
        %v1491 = vshrl.u32 %v1490, 7
        %v1492 = vsub.s32 %v1489, %v1491
        %v1493 = vrot.slane %v1486, %v1492
        %v1495 = vunpack.c.l.s4 1966171168
        %v1496 = vunpack.c.0.s8 %v1495
        %v1497 = vlaneseq
        %v1498 = vshrl.u32 %v1497, 7
        %v1499 = vsub.s32 %v1496, %v1498
        %v1500 = vrot.slane %v1248, %v1499
        %v1502 = vunpack.c.l.s4 1966171168
        %v1503 = vunpack.c.0.s8 %v1502
        %v1504 = vlaneseq
        %v1505 = vshrl.u32 %v1504, 7
        %v1506 = vsub.s32 %v1503, %v1505
        %v1507 = vrot.slane %v1500, %v1506
        %v1509 = vunpack.c.l.s4 1966171168
        %v1510 = vunpack.c.0.s8 %v1509
        %v1511 = vlaneseq
        %v1512 = vshrl.u32 %v1511, 7
        %v1513 = vsub.s32 %v1510, %v1512
        %v1514 = vrot.slane %v1249, %v1513
        %v1516 = vunpack.c.l.s4 1966171168
        %v1517 = vunpack.c.0.s8 %v1516
        %v1518 = vlaneseq
        %v1519 = vshrl.u32 %v1518, 7
        %v1520 = vsub.s32 %v1517, %v1519
        %v1521 = vrot.slane %v1514, %v1520
        %v1522 = vunpack.c.l.b16 %v1423
        %v1523 = vunpack.c.l.b16 %v1437
        %v1524 = vunpack.c.l.b16 %v1451
        %v1525 = vunpack.c.l.b16 %v1465
        %v1526 = vunpack.c.l.b16 %v1479
        %v1527 = vunpack.c.l.b16 %v1493
        %v1528 = vunpack.c.l.b16 %v1507
        %v1529 = vunpack.c.l.b16 %v1521
        %v1530 = vrot.slane %v1523, 7
        %v1531 = vsel %vm445, %v1530, %v1522
        %v1532 = vrot.slane %v1524, 6
        %v1533 = vsel %vm448, %v1532, %v1531
        %v1534 = vrot.slane %v1525, 5
        %v1535 = vsel %vm451, %v1534, %v1533
        %v1536 = vrot.slane %v1526, 4
        %v1537 = vsel %vm454, %v1536, %v1535
        %v1538 = vrot.slane %v1527, 3
        %v1539 = vsel %vm457, %v1538, %v1537
        %v1540 = vrot.slane %v1528, 2
        %v1541 = vsel %vm460, %v1540, %v1539
        %v1542 = vrot.slane %v1529, 1
        %v1543 = vsel %vm463, %v1542, %v1541
        %v1544 = vpack.c.b16 %v1543, %v1543
        %1545 = vrot.lane.b32.xlu0 %v1544, 96
        %v1546 = vpop.permute.xlu0 %1545
        %v1549 = vsel %vm611, %v1401, %v1546
        %1550 = vrot.lane.b32.xlu0 %v1401, 126
        %v1551 = vpop.permute.xlu0 %1550
        %1552 = vrot.lane.b32.xlu0 %v1544, 64
        %v1553 = vpop.permute.xlu0 %1552
        %v1556 = vsel %vm611, %v1551, %v1553
        %v1558 = vsel %vm622, %v1544, 0
        %v1560 = vsel %vm622, %v1549, 0
        %1562 = vmatprep.subr.bf16.mxu0 0
        %1563 = vmatpush1.bf16.xpose.msra.mxu0 %v1560
        %1564 = vmatprep.subr.bf16.mxu0 0
        %1565 = vmatpush1.bf16.xpose.msra.mxu0 0
        %1566 = vmatprep.subr.bf16.mxu0 0
        %1567 = vmatpush1.bf16.xpose.msra.mxu0 0
        %1568 = vmatprep.subr.bf16.mxu0 0
        %1569 = vmatpush1.bf16.xpose.msra.mxu0 0
        %1570 = vmatprep.subr.bf16.mxu0 0
        %1571 = vmatpush1.bf16.xpose.msra.mxu0 0
        %1572 = vmatprep.subr.bf16.mxu0 0
        %1573 = vmatpush1.bf16.xpose.msra.mxu0 0
        %1574 = vmatprep.subr.bf16.mxu0 0
        %1575 = vmatpush1.bf16.xpose.msra.mxu0 0
        %1576 = vmatprep.subr.bf16.mxu0 0
        %1577 = vmatpush1.bf16.xpose.msra.mxu0 0
        %1578 = vmatprep.subr.bf16.mxu0 0
        %1579 = vmatpush1.bf16.xpose.msra.mxu0 0
        %1580 = vmatprep.subr.bf16.mxu0 0
        %1581 = vmatpush1.bf16.xpose.msra.mxu0 0
        %1582 = vmatprep.subr.bf16.mxu0 0
        %1583 = vmatpush1.bf16.xpose.msra.mxu0 0
        %1584 = vmatprep.subr.bf16.mxu0 0
        %1585 = vmatpush1.bf16.xpose.msra.mxu0 0
        %1586 = vmatprep.subr.bf16.mxu0 0
        %1587 = vmatpush1.bf16.xpose.msra.mxu0 0
        %1588 = vmatprep.subr.bf16.mxu0 0
        %1589 = vmatpush1.bf16.xpose.msra.mxu0 0
        %1590 = vmatprep.subr.bf16.mxu0 0
        %1591 = vmatpush1.bf16.xpose.msra.mxu0 0
        %1592 = vmatprep.subr.bf16.mxu0 0
        %1593 = vmatpush1.bf16.xpose.msra.mxu0 0
        %1594 = vmatprep.mubr.bf16.mxu0 0
        %1595 = vmatmul.mubr.bf16.gmra.mrb[0].mxu0 %v1558
        %v1596 = vpop.f32.mrb[0].mxu0
        %v1597 = vadd.f32 0.0, %v1596
        %v1598 = vpop.f32.mrb[0].mxu0
        %v1599 = vpop.f32.mrb[0].mxu0
        %v1600 = vpop.f32.mrb[0].mxu0
        %1601 = vdwg.mxu0
        %v1602 = vmul.f32 %v1597, 0.35355338
        %v1603 = vsel %vm622, %v1602, -inf
        %1604 = vmax.xlane.f32.xlu0 %v1603
        %v1605 = vpop.xlane.xlu0 %1604
        %v1606 = vsub.f32 %v1602, %v1605
        %v1607 = vmul.f32 %v1606, 1.442695
        %v1608 = vpow.pop %v1607
        %v1609 = vsel %vm622, %v1608, 0.0
        %1610 = vadd.xlane.f32.xlu0 %v1609
        %v1611 = vpop.xlane.xlu0 %1610
        %v1612 = vrcp.pop %v1611
        %v1613 = vmul.f32 %v1608, %v1612
        %v1614 = vpack.c.bf16 %v1613, %v1613
        %v1616 = vsel %vm622, %v1614, 0
        %v1618 = vsel %vm684, %v1556, 0
        %1620 = vmatprep.subr.bf16.mxu0 0
        %1621 = vmatpush1.bf16.msra.mxu0 %v1618
        %1622 = vmatprep.subr.bf16.mxu0 0
        %1623 = vmatpush1.bf16.msra.mxu0 0
        %1624 = vmatprep.subr.bf16.mxu0 0
        %1625 = vmatpush1.bf16.msra.mxu0 0
        %1626 = vmatprep.subr.bf16.mxu0 0
        %1627 = vmatpush1.bf16.msra.mxu0 0
        %1628 = vmatprep.subr.bf16.mxu0 0
        %1629 = vmatpush1.bf16.msra.mxu0 0
        %1630 = vmatprep.subr.bf16.mxu0 0
        %1631 = vmatpush1.bf16.msra.mxu0 0
        %1632 = vmatprep.subr.bf16.mxu0 0
        %1633 = vmatpush1.bf16.msra.mxu0 0
        %1634 = vmatprep.subr.bf16.mxu0 0
        %1635 = vmatpush1.bf16.msra.mxu0 0
        %1636 = vmatprep.subr.bf16.mxu0 0
        %1637 = vmatpush1.bf16.msra.mxu0 0
        %1638 = vmatprep.subr.bf16.mxu0 0
        %1639 = vmatpush1.bf16.msra.mxu0 0
        %1640 = vmatprep.subr.bf16.mxu0 0
        %1641 = vmatpush1.bf16.msra.mxu0 0
        %1642 = vmatprep.subr.bf16.mxu0 0
        %1643 = vmatpush1.bf16.msra.mxu0 0
        %1644 = vmatprep.subr.bf16.mxu0 0
        %1645 = vmatpush1.bf16.msra.mxu0 0
        %1646 = vmatprep.subr.bf16.mxu0 0
        %1647 = vmatpush1.bf16.msra.mxu0 0
        %1648 = vmatprep.subr.bf16.mxu0 0
        %1649 = vmatpush1.bf16.msra.mxu0 0
        %1650 = vmatprep.subr.bf16.mxu0 0
        %1651 = vmatpush1.bf16.msra.mxu0 0
        %1652 = vmatprep.mubr.bf16.mxu0 0
        %1653 = vmatmul.mubr.bf16.gmra.mrb[0].mxu0 %v1616
        %v1654 = vpop.f32.mrb[0].mxu0
        %v1655 = vadd.f32 0.0, %v1654
        %v1656 = vpop.f32.mrb[0].mxu0
        %v1657 = vpop.f32.mrb[0].mxu0
        %v1658 = vpop.f32.mrb[0].mxu0
        %1659 = vdwg.mxu0
        %1660 = vrot.lane.b32.xlu0 %v1544, 120
        %v1661 = vpop.permute.xlu0 %1660
        %1663 = vrot.lane.b32.xlu0 %v1549, 120
        %v1664 = vpop.permute.xlu0 %1663
        %v1666 = vsel %vm622, %v1661, 0
        %v1669 = vsel %vm622, %v1664, 0
        %1671 = vmatprep.subr.bf16.mxu0 0
        %1672 = vmatpush1.bf16.xpose.msra.mxu0 %v1669
        %1673 = vmatprep.subr.bf16.mxu0 0
        %1674 = vmatpush1.bf16.xpose.msra.mxu0 0
        %1675 = vmatprep.subr.bf16.mxu0 0
        %1676 = vmatpush1.bf16.xpose.msra.mxu0 0
        %1677 = vmatprep.subr.bf16.mxu0 0
        %1678 = vmatpush1.bf16.xpose.msra.mxu0 0
        %1679 = vmatprep.subr.bf16.mxu0 0
        %1680 = vmatpush1.bf16.xpose.msra.mxu0 0
        %1681 = vmatprep.subr.bf16.mxu0 0
        %1682 = vmatpush1.bf16.xpose.msra.mxu0 0
        %1683 = vmatprep.subr.bf16.mxu0 0
        %1684 = vmatpush1.bf16.xpose.msra.mxu0 0
        %1685 = vmatprep.subr.bf16.mxu0 0
        %1686 = vmatpush1.bf16.xpose.msra.mxu0 0
        %1687 = vmatprep.subr.bf16.mxu0 0
        %1688 = vmatpush1.bf16.xpose.msra.mxu0 0
        %1689 = vmatprep.subr.bf16.mxu0 0
        %1690 = vmatpush1.bf16.xpose.msra.mxu0 0
        %1691 = vmatprep.subr.bf16.mxu0 0
        %1692 = vmatpush1.bf16.xpose.msra.mxu0 0
        %1693 = vmatprep.subr.bf16.mxu0 0
        %1694 = vmatpush1.bf16.xpose.msra.mxu0 0
        %1695 = vmatprep.subr.bf16.mxu0 0
        %1696 = vmatpush1.bf16.xpose.msra.mxu0 0
        %1697 = vmatprep.subr.bf16.mxu0 0
        %1698 = vmatpush1.bf16.xpose.msra.mxu0 0
        %1699 = vmatprep.subr.bf16.mxu0 0
        %1700 = vmatpush1.bf16.xpose.msra.mxu0 0
        %1701 = vmatprep.subr.bf16.mxu0 0
        %1702 = vmatpush1.bf16.xpose.msra.mxu0 0
        %1703 = vmatprep.mubr.bf16.mxu0 0
        %1704 = vmatmul.mubr.bf16.gmra.mrb[0].mxu0 %v1666
        %v1705 = vpop.f32.mrb[0].mxu0
        %v1706 = vadd.f32 0.0, %v1705
        %v1707 = vpop.f32.mrb[0].mxu0
        %v1708 = vpop.f32.mrb[0].mxu0
        %v1709 = vpop.f32.mrb[0].mxu0
        %1710 = vdwg.mxu0
        %v1711 = vmul.f32 %v1706, 0.35355338
        %v1712 = vsel %vm622, %v1711, -inf
        %1713 = vmax.xlane.f32.xlu0 %v1712
        %v1714 = vpop.xlane.xlu0 %1713
        %v1715 = vsub.f32 %v1711, %v1714
        %v1716 = vmul.f32 %v1715, 1.442695
        %v1717 = vpow.pop %v1716
        %v1718 = vsel %vm622, %v1717, 0.0
        %1719 = vadd.xlane.f32.xlu0 %v1718
        %v1720 = vpop.xlane.xlu0 %1719
        %v1721 = vrcp.pop %v1720
        %v1722 = vmul.f32 %v1717, %v1721
        %v1723 = vpack.c.bf16 %v1722, %v1722
        %1725 = vrot.lane.b32.xlu0 %v1556, 120
        %v1726 = vpop.permute.xlu0 %1725
        %v1728 = vsel %vm622, %v1723, 0
        %v1731 = vsel %vm684, %v1726, 0
        %1733 = vmatprep.subr.bf16.mxu0 0
        %1734 = vmatpush1.bf16.msra.mxu0 %v1731
        %1735 = vmatprep.subr.bf16.mxu0 0
        %1736 = vmatpush1.bf16.msra.mxu0 0
        %1737 = vmatprep.subr.bf16.mxu0 0
        %1738 = vmatpush1.bf16.msra.mxu0 0
        %1739 = vmatprep.subr.bf16.mxu0 0
        %1740 = vmatpush1.bf16.msra.mxu0 0
        %1741 = vmatprep.subr.bf16.mxu0 0
        %1742 = vmatpush1.bf16.msra.mxu0 0
        %1743 = vmatprep.subr.bf16.mxu0 0
        %1744 = vmatpush1.bf16.msra.mxu0 0
        %1745 = vmatprep.subr.bf16.mxu0 0
        %1746 = vmatpush1.bf16.msra.mxu0 0
        %1747 = vmatprep.subr.bf16.mxu0 0
        %1748 = vmatpush1.bf16.msra.mxu0 0
        %1749 = vmatprep.subr.bf16.mxu0 0
        %1750 = vmatpush1.bf16.msra.mxu0 0
        %1751 = vmatprep.subr.bf16.mxu0 0
        %1752 = vmatpush1.bf16.msra.mxu0 0
        %1753 = vmatprep.subr.bf16.mxu0 0
        %1754 = vmatpush1.bf16.msra.mxu0 0
        %1755 = vmatprep.subr.bf16.mxu0 0
        %1756 = vmatpush1.bf16.msra.mxu0 0
        %1757 = vmatprep.subr.bf16.mxu0 0
        %1758 = vmatpush1.bf16.msra.mxu0 0
        %1759 = vmatprep.subr.bf16.mxu0 0
        %1760 = vmatpush1.bf16.msra.mxu0 0
        %1761 = vmatprep.subr.bf16.mxu0 0
        %1762 = vmatpush1.bf16.msra.mxu0 0
        %1763 = vmatprep.subr.bf16.mxu0 0
        %1764 = vmatpush1.bf16.msra.mxu0 0
        %1765 = vmatprep.mubr.bf16.mxu0 0
        %1766 = vmatmul.mubr.bf16.gmra.mrb[0].mxu0 %v1728
        %v1767 = vpop.f32.mrb[0].mxu0
        %v1768 = vadd.f32 0.0, %v1767
        %v1769 = vpop.f32.mrb[0].mxu0
        %v1770 = vpop.f32.mrb[0].mxu0
        %v1771 = vpop.f32.mrb[0].mxu0
        %1772 = vdwg.mxu0
        %1774 = vrot.lane.b32.xlu0 %v1768, 8
        %v1775 = vpop.permute.xlu0 %1774
        %v1777 = vsel %vm622, %v1655, %v1775
        %v1778 = vpack.c.bf16 %v1777, %v1777
        %v1781 = vunpack.c.l.s4 1966171168
        %v1782 = vunpack.c.0.s8 %v1781
        %v1783 = vlaneseq
        %v1784 = vshrl.u32 %v1783, 7
        %v1785 = vsub.s32 %v1782, %v1784
        %v1786 = vrot.slane %v1778, %v1785
        %v1787 = vcombine.high %v1786, %v1786
        %v1789 = vunpack.c.l.s4 1966171168
        %v1790 = vunpack.c.0.s8 %v1789
        %v1791 = vlaneseq
        %v1792 = vshrl.u32 %v1791, 7
        %v1793 = vsub.s32 %v1790, %v1792
        %v1794 = vrot.slane %v1786, %v1793
        %v1796 = vunpack.c.l.s4 1966171168
        %v1797 = vunpack.c.0.s8 %v1796
        %v1798 = vlaneseq
        %v1799 = vshrl.u32 %v1798, 7
        %v1800 = vsub.s32 %v1797, %v1799
        %v1801 = vrot.slane %v1787, %v1800
        %v1802 = vcombine.high %v1794, %v1794
        %v1803 = vcombine.high %v1801, %v1801
        %v1804 = vunpack.i.l.s16 %v1794
        %v1805 = vunpack.i.h.s16 %v1794
        %v1806 = vunpack.i.l.s16 %v1801
        %v1807 = vunpack.i.h.s16 %v1801
        %v1808 = vunpack.i.l.s16 %v1802
        %v1809 = vunpack.i.h.s16 %v1802
        %v1810 = vunpack.i.l.s16 %v1803
        %v1811 = vunpack.i.h.s16 %v1803
        %v1812 = vpack.i.b16 %v1804, %v1804
        %v1813 = vpack.i.b16 %v1805, %v1805
        %v1814 = vpack.i.b16 %v1806, %v1806
        %v1815 = vpack.i.b16 %v1807, %v1807
        %v1816 = vpack.i.b16 %v1808, %v1808
        %v1817 = vpack.i.b16 %v1809, %v1809
        %v1818 = vpack.i.b16 %v1810, %v1810
        %v1819 = vpack.i.b16 %v1811, %v1811
        %s1828 = scalar_lea.vmem %s295, 1 [#allocation4]
        %v1829 = vld [vmem:[%s1828] sm:$0x1]
        %v1830 = vsel %vm897, %v1812, %v1829
        %1831 = vst [vmem:[%s1828] sm:$0x1] %v1830
        %v1832 = vld [vmem:[%s1828 + $0x4] sm:$0x1]
        %v1833 = vsel %vm897, %v1813, %v1832
        %1834 = vst [vmem:[%s1828 + $0x4] sm:$0x1] %v1833
        %v1835 = vld [vmem:[%s1828 + $0x8] sm:$0x1]
        %v1836 = vsel %vm897, %v1814, %v1835
        %1837 = vst [vmem:[%s1828 + $0x8] sm:$0x1] %v1836
        %v1838 = vld [vmem:[%s1828 + $0xc] sm:$0x1]
        %v1839 = vsel %vm897, %v1815, %v1838
        %1840 = vst [vmem:[%s1828 + $0xc] sm:$0x1] %v1839
        %v1841 = vld [vmem:[%s1828 + $0x10] sm:$0x1]
        %v1842 = vsel %vm897, %v1816, %v1841
        %1843 = vst [vmem:[%s1828 + $0x10] sm:$0x1] %v1842
        %v1844 = vld [vmem:[%s1828 + $0x14] sm:$0x1]
        %v1845 = vsel %vm897, %v1817, %v1844
        %1846 = vst [vmem:[%s1828 + $0x14] sm:$0x1] %v1845
        %v1847 = vld [vmem:[%s1828 + $0x18] sm:$0x1]
        %v1848 = vsel %vm897, %v1818, %v1847
        %1849 = vst [vmem:[%s1828 + $0x18] sm:$0x1] %v1848
        %v1850 = vld [vmem:[%s1828 + $0x1c] sm:$0x1]
        %v1851 = vsel %vm897, %v1819, %v1850
        %1852 = vst [vmem:[%s1828 + $0x1c] sm:$0x1] %v1851
        %1853 = vrot.lane.b32.xlu0 %v1544, 112
        %v1854 = vpop.permute.xlu0 %1853
        %1855 = vrot.lane.b32.xlu0 %v1549, 112
        %v1856 = vpop.permute.xlu0 %1855
        %v1858 = vsel %vm622, %v1854, 0
        %v1861 = vsel %vm622, %v1856, 0
        %1863 = vmatprep.subr.bf16.mxu0 0
        %1864 = vmatpush1.bf16.xpose.msra.mxu0 %v1861
        %1865 = vmatprep.subr.bf16.mxu0 0
        %1866 = vmatpush1.bf16.xpose.msra.mxu0 0
        %1867 = vmatprep.subr.bf16.mxu0 0
        %1868 = vmatpush1.bf16.xpose.msra.mxu0 0
        %1869 = vmatprep.subr.bf16.mxu0 0
        %1870 = vmatpush1.bf16.xpose.msra.mxu0 0
        %1871 = vmatprep.subr.bf16.mxu0 0
        %1872 = vmatpush1.bf16.xpose.msra.mxu0 0
        %1873 = vmatprep.subr.bf16.mxu0 0
        %1874 = vmatpush1.bf16.xpose.msra.mxu0 0
        %1875 = vmatprep.subr.bf16.mxu0 0
        %1876 = vmatpush1.bf16.xpose.msra.mxu0 0
        %1877 = vmatprep.subr.bf16.mxu0 0
        %1878 = vmatpush1.bf16.xpose.msra.mxu0 0
        %1879 = vmatprep.subr.bf16.mxu0 0
        %1880 = vmatpush1.bf16.xpose.msra.mxu0 0
        %1881 = vmatprep.subr.bf16.mxu0 0
        %1882 = vmatpush1.bf16.xpose.msra.mxu0 0
        %1883 = vmatprep.subr.bf16.mxu0 0
        %1884 = vmatpush1.bf16.xpose.msra.mxu0 0
        %1885 = vmatprep.subr.bf16.mxu0 0
        %1886 = vmatpush1.bf16.xpose.msra.mxu0 0
        %1887 = vmatprep.subr.bf16.mxu0 0
        %1888 = vmatpush1.bf16.xpose.msra.mxu0 0
        %1889 = vmatprep.subr.bf16.mxu0 0
        %1890 = vmatpush1.bf16.xpose.msra.mxu0 0
        %1891 = vmatprep.subr.bf16.mxu0 0
        %1892 = vmatpush1.bf16.xpose.msra.mxu0 0
        %1893 = vmatprep.subr.bf16.mxu0 0
        %1894 = vmatpush1.bf16.xpose.msra.mxu0 0
        %1895 = vmatprep.mubr.bf16.mxu0 0
        %1896 = vmatmul.mubr.bf16.gmra.mrb[0].mxu0 %v1858
        %v1897 = vpop.f32.mrb[0].mxu0
        %v1898 = vadd.f32 0.0, %v1897
        %v1899 = vpop.f32.mrb[0].mxu0
        %v1900 = vpop.f32.mrb[0].mxu0
        %v1901 = vpop.f32.mrb[0].mxu0
        %1902 = vdwg.mxu0
        %v1903 = vmul.f32 %v1898, 0.35355338
        %v1904 = vsel %vm622, %v1903, -inf
        %1905 = vmax.xlane.f32.xlu0 %v1904
        %v1906 = vpop.xlane.xlu0 %1905
        %v1907 = vsub.f32 %v1903, %v1906
        %v1908 = vmul.f32 %v1907, 1.442695
        %v1909 = vpow.pop %v1908
        %v1910 = vsel %vm622, %v1909, 0.0
        %1911 = vadd.xlane.f32.xlu0 %v1910
        %v1912 = vpop.xlane.xlu0 %1911
        %v1913 = vrcp.pop %v1912
        %v1914 = vmul.f32 %v1909, %v1913
        %v1915 = vpack.c.bf16 %v1914, %v1914
        %1916 = vrot.lane.b32.xlu0 %v1556, 112
        %v1917 = vpop.permute.xlu0 %1916
        %v1919 = vsel %vm622, %v1915, 0
        %v1922 = vsel %vm684, %v1917, 0
        %1924 = vmatprep.subr.bf16.mxu0 0
        %1925 = vmatpush1.bf16.msra.mxu0 %v1922
        %1926 = vmatprep.subr.bf16.mxu0 0
        %1927 = vmatpush1.bf16.msra.mxu0 0
        %1928 = vmatprep.subr.bf16.mxu0 0
        %1929 = vmatpush1.bf16.msra.mxu0 0
        %1930 = vmatprep.subr.bf16.mxu0 0
        %1931 = vmatpush1.bf16.msra.mxu0 0
        %1932 = vmatprep.subr.bf16.mxu0 0
        %1933 = vmatpush1.bf16.msra.mxu0 0
        %1934 = vmatprep.subr.bf16.mxu0 0
        %1935 = vmatpush1.bf16.msra.mxu0 0
        %1936 = vmatprep.subr.bf16.mxu0 0
        %1937 = vmatpush1.bf16.msra.mxu0 0
        %1938 = vmatprep.subr.bf16.mxu0 0
        %1939 = vmatpush1.bf16.msra.mxu0 0
        %1940 = vmatprep.subr.bf16.mxu0 0
        %1941 = vmatpush1.bf16.msra.mxu0 0
        %1942 = vmatprep.subr.bf16.mxu0 0
        %1943 = vmatpush1.bf16.msra.mxu0 0
        %1944 = vmatprep.subr.bf16.mxu0 0
        %1945 = vmatpush1.bf16.msra.mxu0 0
        %1946 = vmatprep.subr.bf16.mxu0 0
        %1947 = vmatpush1.bf16.msra.mxu0 0
        %1948 = vmatprep.subr.bf16.mxu0 0
        %1949 = vmatpush1.bf16.msra.mxu0 0
        %1950 = vmatprep.subr.bf16.mxu0 0
        %1951 = vmatpush1.bf16.msra.mxu0 0
        %1952 = vmatprep.subr.bf16.mxu0 0
        %1953 = vmatpush1.bf16.msra.mxu0 0
        %1954 = vmatprep.subr.bf16.mxu0 0
        %1955 = vmatpush1.bf16.msra.mxu0 0
        %1956 = vmatprep.mubr.bf16.mxu0 0
        %1957 = vmatmul.mubr.bf16.gmra.mrb[0].mxu0 %v1919
        %v1958 = vpop.f32.mrb[0].mxu0
        %v1959 = vadd.f32 0.0, %v1958
        %v1960 = vpop.f32.mrb[0].mxu0
        %v1961 = vpop.f32.mrb[0].mxu0
        %v1962 = vpop.f32.mrb[0].mxu0
        %1963 = vdwg.mxu0
        %1964 = vrot.lane.b32.xlu0 %v1544, 104
        %v1965 = vpop.permute.xlu0 %1964
        %1966 = vrot.lane.b32.xlu0 %v1549, 104
        %v1967 = vpop.permute.xlu0 %1966
        %v1969 = vsel %vm622, %v1965, 0
        %v1972 = vsel %vm622, %v1967, 0
        %1974 = vmatprep.subr.bf16.mxu0 0
        %1975 = vmatpush1.bf16.xpose.msra.mxu0 %v1972
        %1976 = vmatprep.subr.bf16.mxu0 0
        %1977 = vmatpush1.bf16.xpose.msra.mxu0 0
        %1978 = vmatprep.subr.bf16.mxu0 0
        %1979 = vmatpush1.bf16.xpose.msra.mxu0 0
        %1980 = vmatprep.subr.bf16.mxu0 0
        %1981 = vmatpush1.bf16.xpose.msra.mxu0 0
        %1982 = vmatprep.subr.bf16.mxu0 0
        %1983 = vmatpush1.bf16.xpose.msra.mxu0 0
        %1984 = vmatprep.subr.bf16.mxu0 0
        %1985 = vmatpush1.bf16.xpose.msra.mxu0 0
        %1986 = vmatprep.subr.bf16.mxu0 0
        %1987 = vmatpush1.bf16.xpose.msra.mxu0 0
        %1988 = vmatprep.subr.bf16.mxu0 0
        %1989 = vmatpush1.bf16.xpose.msra.mxu0 0
        %1990 = vmatprep.subr.bf16.mxu0 0
        %1991 = vmatpush1.bf16.xpose.msra.mxu0 0
        %1992 = vmatprep.subr.bf16.mxu0 0
        %1993 = vmatpush1.bf16.xpose.msra.mxu0 0
        %1994 = vmatprep.subr.bf16.mxu0 0
        %1995 = vmatpush1.bf16.xpose.msra.mxu0 0
        %1996 = vmatprep.subr.bf16.mxu0 0
        %1997 = vmatpush1.bf16.xpose.msra.mxu0 0
        %1998 = vmatprep.subr.bf16.mxu0 0
        %1999 = vmatpush1.bf16.xpose.msra.mxu0 0
        %2000 = vmatprep.subr.bf16.mxu0 0
        %2001 = vmatpush1.bf16.xpose.msra.mxu0 0
        %2002 = vmatprep.subr.bf16.mxu0 0
        %2003 = vmatpush1.bf16.xpose.msra.mxu0 0
        %2004 = vmatprep.subr.bf16.mxu0 0
        %2005 = vmatpush1.bf16.xpose.msra.mxu0 0
        %2006 = vmatprep.mubr.bf16.mxu0 0
        %2007 = vmatmul.mubr.bf16.gmra.mrb[0].mxu0 %v1969
        %v2008 = vpop.f32.mrb[0].mxu0
        %v2009 = vadd.f32 0.0, %v2008
        %v2010 = vpop.f32.mrb[0].mxu0
        %v2011 = vpop.f32.mrb[0].mxu0
        %v2012 = vpop.f32.mrb[0].mxu0
        %2013 = vdwg.mxu0
        %v2014 = vmul.f32 %v2009, 0.35355338
        %v2015 = vsel %vm622, %v2014, -inf
        %2016 = vmax.xlane.f32.xlu0 %v2015
        %v2017 = vpop.xlane.xlu0 %2016
        %v2018 = vsub.f32 %v2014, %v2017
        %v2019 = vmul.f32 %v2018, 1.442695
        %v2020 = vpow.pop %v2019
        %v2021 = vsel %vm622, %v2020, 0.0
        %2022 = vadd.xlane.f32.xlu0 %v2021
        %v2023 = vpop.xlane.xlu0 %2022
        %v2024 = vrcp.pop %v2023
        %v2025 = vmul.f32 %v2020, %v2024
        %v2026 = vpack.c.bf16 %v2025, %v2025
        %2027 = vrot.lane.b32.xlu0 %v1556, 104
        %v2028 = vpop.permute.xlu0 %2027
        %v2030 = vsel %vm622, %v2026, 0
        %v2033 = vsel %vm684, %v2028, 0
        %2035 = vmatprep.subr.bf16.mxu0 0
        %2036 = vmatpush1.bf16.msra.mxu0 %v2033
        %2037 = vmatprep.subr.bf16.mxu0 0
        %2038 = vmatpush1.bf16.msra.mxu0 0
        %2039 = vmatprep.subr.bf16.mxu0 0
        %2040 = vmatpush1.bf16.msra.mxu0 0
        %2041 = vmatprep.subr.bf16.mxu0 0
        %2042 = vmatpush1.bf16.msra.mxu0 0
        %2043 = vmatprep.subr.bf16.mxu0 0
        %2044 = vmatpush1.bf16.msra.mxu0 0
        %2045 = vmatprep.subr.bf16.mxu0 0
        %2046 = vmatpush1.bf16.msra.mxu0 0
        %2047 = vmatprep.subr.bf16.mxu0 0
        %2048 = vmatpush1.bf16.msra.mxu0 0
        %2049 = vmatprep.subr.bf16.mxu0 0
        %2050 = vmatpush1.bf16.msra.mxu0 0
        %2051 = vmatprep.subr.bf16.mxu0 0
        %2052 = vmatpush1.bf16.msra.mxu0 0
        %2053 = vmatprep.subr.bf16.mxu0 0
        %2054 = vmatpush1.bf16.msra.mxu0 0
        %2055 = vmatprep.subr.bf16.mxu0 0
        %2056 = vmatpush1.bf16.msra.mxu0 0
        %2057 = vmatprep.subr.bf16.mxu0 0
        %2058 = vmatpush1.bf16.msra.mxu0 0
        %2059 = vmatprep.subr.bf16.mxu0 0
        %2060 = vmatpush1.bf16.msra.mxu0 0
        %2061 = vmatprep.subr.bf16.mxu0 0
        %2062 = vmatpush1.bf16.msra.mxu0 0
        %2063 = vmatprep.subr.bf16.mxu0 0
        %2064 = vmatpush1.bf16.msra.mxu0 0
        %2065 = vmatprep.subr.bf16.mxu0 0
        %2066 = vmatpush1.bf16.msra.mxu0 0
        %2067 = vmatprep.mubr.bf16.mxu0 0
        %2068 = vmatmul.mubr.bf16.gmra.mrb[0].mxu0 %v2030
        %v2069 = vpop.f32.mrb[0].mxu0
        %v2070 = vadd.f32 0.0, %v2069
        %v2071 = vpop.f32.mrb[0].mxu0
        %v2072 = vpop.f32.mrb[0].mxu0
        %v2073 = vpop.f32.mrb[0].mxu0
        %2074 = vdwg.mxu0
        %2076 = vrot.lane.b32.xlu0 %v2070, 8
        %v2077 = vpop.permute.xlu0 %2076
        %v2079 = vsel %vm622, %v1959, %v2077
        %v2080 = vpack.c.bf16 %v2079, %v2079
        %v2083 = vunpack.c.l.s4 1966171168
        %v2084 = vunpack.c.0.s8 %v2083
        %v2085 = vlaneseq
        %v2086 = vshrl.u32 %v2085, 7
        %v2087 = vsub.s32 %v2084, %v2086
        %v2088 = vrot.slane %v2080, %v2087
        %v2089 = vcombine.high %v2088, %v2088
        %v2091 = vunpack.c.l.s4 1966171168
        %v2092 = vunpack.c.0.s8 %v2091
        %v2093 = vlaneseq
        %v2094 = vshrl.u32 %v2093, 7
        %v2095 = vsub.s32 %v2092, %v2094
        %v2096 = vrot.slane %v2088, %v2095
        %v2098 = vunpack.c.l.s4 1966171168
        %v2099 = vunpack.c.0.s8 %v2098
        %v2100 = vlaneseq
        %v2101 = vshrl.u32 %v2100, 7
        %v2102 = vsub.s32 %v2099, %v2101
        %v2103 = vrot.slane %v2089, %v2102
        %v2104 = vcombine.high %v2096, %v2096
        %v2105 = vcombine.high %v2103, %v2103
        %v2106 = vunpack.i.l.s16 %v2096
        %v2107 = vunpack.i.h.s16 %v2096
        %v2108 = vunpack.i.l.s16 %v2103
        %v2109 = vunpack.i.h.s16 %v2103
        %v2110 = vunpack.i.l.s16 %v2104
        %v2111 = vunpack.i.h.s16 %v2104
        %v2112 = vunpack.i.l.s16 %v2105
        %v2113 = vunpack.i.h.s16 %v2105
        %v2114 = vpack.i.b16 %v2106, %v2106
        %v2115 = vpack.i.b16 %v2107, %v2107
        %v2116 = vpack.i.b16 %v2108, %v2108
        %v2117 = vpack.i.b16 %v2109, %v2109
        %v2118 = vpack.i.b16 %v2110, %v2110
        %v2119 = vpack.i.b16 %v2111, %v2111
        %v2120 = vpack.i.b16 %v2112, %v2112
        %v2121 = vpack.i.b16 %v2113, %v2113
        %2122 = vrot.lane.b32.xlu0 %v2114, 16
        %v2123 = vpop.permute.xlu0 %2122
        %2124 = vrot.lane.b32.xlu0 %v2115, 16
        %v2125 = vpop.permute.xlu0 %2124
        %2126 = vrot.lane.b32.xlu0 %v2116, 16
        %v2127 = vpop.permute.xlu0 %2126
        %2128 = vrot.lane.b32.xlu0 %v2117, 16
        %v2129 = vpop.permute.xlu0 %2128
        %2130 = vrot.lane.b32.xlu0 %v2118, 16
        %v2131 = vpop.permute.xlu0 %2130
        %2132 = vrot.lane.b32.xlu0 %v2119, 16
        %v2133 = vpop.permute.xlu0 %2132
        %2134 = vrot.lane.b32.xlu0 %v2120, 16
        %v2135 = vpop.permute.xlu0 %2134
        %2136 = vrot.lane.b32.xlu0 %v2121, 16
        %v2137 = vpop.permute.xlu0 %2136
        %v2146 = vld [vmem:[%s1828] sm:$0x1]
        %v2147 = vsel %vm1216, %v2123, %v2146
        %2148 = vst [vmem:[%s1828] sm:$0x1] %v2147
        %v2149 = vld [vmem:[%s1828 + $0x4] sm:$0x1]
        %v2150 = vsel %vm1216, %v2125, %v2149
        %2151 = vst [vmem:[%s1828 + $0x4] sm:$0x1] %v2150
        %v2152 = vld [vmem:[%s1828 + $0x8] sm:$0x1]
        %v2153 = vsel %vm1216, %v2127, %v2152
        %2154 = vst [vmem:[%s1828 + $0x8] sm:$0x1] %v2153
        %v2155 = vld [vmem:[%s1828 + $0xc] sm:$0x1]
        %v2156 = vsel %vm1216, %v2129, %v2155
        %2157 = vst [vmem:[%s1828 + $0xc] sm:$0x1] %v2156
        %v2158 = vld [vmem:[%s1828 + $0x10] sm:$0x1]
        %v2159 = vsel %vm1216, %v2131, %v2158
        %2160 = vst [vmem:[%s1828 + $0x10] sm:$0x1] %v2159
        %v2161 = vld [vmem:[%s1828 + $0x14] sm:$0x1]
        %v2162 = vsel %vm1216, %v2133, %v2161
        %2163 = vst [vmem:[%s1828 + $0x14] sm:$0x1] %v2162
        %v2164 = vld [vmem:[%s1828 + $0x18] sm:$0x1]
        %v2165 = vsel %vm1216, %v2135, %v2164
        %2166 = vst [vmem:[%s1828 + $0x18] sm:$0x1] %v2165
        %v2167 = vld [vmem:[%s1828 + $0x1c] sm:$0x1]
        %v2168 = vsel %vm1216, %v2137, %v2167
        %2169 = vst [vmem:[%s1828 + $0x1c] sm:$0x1] %v2168
        %s2170 = scalar_lea.vmem %s267, 2 [#allocation2]
        %v2171 = vld [vmem:[%s2170] sm:$0x1]
        %v2172 = vld [vmem:[%s2170 + $0x4] sm:$0x1]
        %v2173 = vld [vmem:[%s2170 + $0x8] sm:$0x1]
        %v2174 = vld [vmem:[%s2170 + $0xc] sm:$0x1]
        %v2175 = vld [vmem:[%s2170 + $0x10] sm:$0x1]
        %v2176 = vld [vmem:[%s2170 + $0x14] sm:$0x1]
        %v2177 = vld [vmem:[%s2170 + $0x18] sm:$0x1]
        %v2178 = vld [vmem:[%s2170 + $0x1c] sm:$0x1]
        %s2179 = scalar_lea.vmem %s274, 2 [#allocation3]
        %v2180 = vld [vmem:[%s2179] sm:$0x1]
        %v2181 = vld [vmem:[%s2179 + $0x4] sm:$0x1]
        %v2182 = vld [vmem:[%s2179 + $0x8] sm:$0x1]
        %v2183 = vld [vmem:[%s2179 + $0xc] sm:$0x1]
        %v2184 = vld [vmem:[%s2179 + $0x10] sm:$0x1]
        %v2185 = vld [vmem:[%s2179 + $0x14] sm:$0x1]
        %v2186 = vld [vmem:[%s2179 + $0x18] sm:$0x1]
        %v2187 = vld [vmem:[%s2179 + $0x1c] sm:$0x1]
        %v2197 = vunpack.c.l.s4 1966171168
        %v2198 = vunpack.c.0.s8 %v2197
        %v2199 = vlaneseq
        %v2200 = vshrl.u32 %v2199, 7
        %v2201 = vsub.s32 %v2198, %v2200
        %v2202 = vrot.slane %v2180, %v2201
        %v2204 = vunpack.c.l.s4 1966171168
        %v2205 = vunpack.c.0.s8 %v2204
        %v2206 = vlaneseq
        %v2207 = vshrl.u32 %v2206, 7
        %v2208 = vsub.s32 %v2205, %v2207
        %v2209 = vrot.slane %v2202, %v2208
        %v2211 = vunpack.c.l.s4 1966171168
        %v2212 = vunpack.c.0.s8 %v2211
        %v2213 = vlaneseq
        %v2214 = vshrl.u32 %v2213, 7
        %v2215 = vsub.s32 %v2212, %v2214
        %v2216 = vrot.slane %v2181, %v2215
        %v2218 = vunpack.c.l.s4 1966171168
        %v2219 = vunpack.c.0.s8 %v2218
        %v2220 = vlaneseq
        %v2221 = vshrl.u32 %v2220, 7
        %v2222 = vsub.s32 %v2219, %v2221
        %v2223 = vrot.slane %v2216, %v2222
        %v2225 = vunpack.c.l.s4 1966171168
        %v2226 = vunpack.c.0.s8 %v2225
        %v2227 = vlaneseq
        %v2228 = vshrl.u32 %v2227, 7
        %v2229 = vsub.s32 %v2226, %v2228
        %v2230 = vrot.slane %v2182, %v2229
        %v2232 = vunpack.c.l.s4 1966171168
        %v2233 = vunpack.c.0.s8 %v2232
        %v2234 = vlaneseq
        %v2235 = vshrl.u32 %v2234, 7
        %v2236 = vsub.s32 %v2233, %v2235
        %v2237 = vrot.slane %v2230, %v2236
        %v2239 = vunpack.c.l.s4 1966171168
        %v2240 = vunpack.c.0.s8 %v2239
        %v2241 = vlaneseq
        %v2242 = vshrl.u32 %v2241, 7
        %v2243 = vsub.s32 %v2240, %v2242
        %v2244 = vrot.slane %v2183, %v2243
        %v2246 = vunpack.c.l.s4 1966171168
        %v2247 = vunpack.c.0.s8 %v2246
        %v2248 = vlaneseq
        %v2249 = vshrl.u32 %v2248, 7
        %v2250 = vsub.s32 %v2247, %v2249
        %v2251 = vrot.slane %v2244, %v2250
        %v2253 = vunpack.c.l.s4 1966171168
        %v2254 = vunpack.c.0.s8 %v2253
        %v2255 = vlaneseq
        %v2256 = vshrl.u32 %v2255, 7
        %v2257 = vsub.s32 %v2254, %v2256
        %v2258 = vrot.slane %v2184, %v2257
        %v2260 = vunpack.c.l.s4 1966171168
        %v2261 = vunpack.c.0.s8 %v2260
        %v2262 = vlaneseq
        %v2263 = vshrl.u32 %v2262, 7
        %v2264 = vsub.s32 %v2261, %v2263
        %v2265 = vrot.slane %v2258, %v2264
        %v2267 = vunpack.c.l.s4 1966171168
        %v2268 = vunpack.c.0.s8 %v2267
        %v2269 = vlaneseq
        %v2270 = vshrl.u32 %v2269, 7
        %v2271 = vsub.s32 %v2268, %v2270
        %v2272 = vrot.slane %v2185, %v2271
        %v2274 = vunpack.c.l.s4 1966171168
        %v2275 = vunpack.c.0.s8 %v2274
        %v2276 = vlaneseq
        %v2277 = vshrl.u32 %v2276, 7
        %v2278 = vsub.s32 %v2275, %v2277
        %v2279 = vrot.slane %v2272, %v2278
        %v2281 = vunpack.c.l.s4 1966171168
        %v2282 = vunpack.c.0.s8 %v2281
        %v2283 = vlaneseq
        %v2284 = vshrl.u32 %v2283, 7
        %v2285 = vsub.s32 %v2282, %v2284
        %v2286 = vrot.slane %v2186, %v2285
        %v2288 = vunpack.c.l.s4 1966171168
        %v2289 = vunpack.c.0.s8 %v2288
        %v2290 = vlaneseq
        %v2291 = vshrl.u32 %v2290, 7
        %v2292 = vsub.s32 %v2289, %v2291
        %v2293 = vrot.slane %v2286, %v2292
        %v2295 = vunpack.c.l.s4 1966171168
        %v2296 = vunpack.c.0.s8 %v2295
        %v2297 = vlaneseq
        %v2298 = vshrl.u32 %v2297, 7
        %v2299 = vsub.s32 %v2296, %v2298
        %v2300 = vrot.slane %v2187, %v2299
        %v2302 = vunpack.c.l.s4 1966171168
        %v2303 = vunpack.c.0.s8 %v2302
        %v2304 = vlaneseq
        %v2305 = vshrl.u32 %v2304, 7
        %v2306 = vsub.s32 %v2303, %v2305
        %v2307 = vrot.slane %v2300, %v2306
        %v2308 = vunpack.c.l.b16 %v2209
        %v2309 = vunpack.c.l.b16 %v2223
        %v2310 = vunpack.c.l.b16 %v2237
        %v2311 = vunpack.c.l.b16 %v2251
        %v2312 = vunpack.c.l.b16 %v2265
        %v2313 = vunpack.c.l.b16 %v2279
        %v2314 = vunpack.c.l.b16 %v2293
        %v2315 = vunpack.c.l.b16 %v2307
        %v2316 = vrot.slane %v2309, 7
        %v2317 = vsel %vm445, %v2316, %v2308
        %v2318 = vrot.slane %v2310, 6
        %v2319 = vsel %vm448, %v2318, %v2317
        %v2320 = vrot.slane %v2311, 5
        %v2321 = vsel %vm451, %v2320, %v2319
        %v2322 = vrot.slane %v2312, 4
        %v2323 = vsel %vm454, %v2322, %v2321
        %v2324 = vrot.slane %v2313, 3
        %v2325 = vsel %vm457, %v2324, %v2323
        %v2326 = vrot.slane %v2314, 2
        %v2327 = vsel %vm460, %v2326, %v2325
        %v2328 = vrot.slane %v2315, 1
        %v2329 = vsel %vm463, %v2328, %v2327
        %v2330 = vpack.c.b16 %v2329, %v2329
        %v2340 = vunpack.c.l.s4 1966171168
        %v2341 = vunpack.c.0.s8 %v2340
        %v2342 = vlaneseq
        %v2343 = vshrl.u32 %v2342, 7
        %v2344 = vsub.s32 %v2341, %v2343
        %v2345 = vrot.slane %v2171, %v2344
        %v2347 = vunpack.c.l.s4 1966171168
        %v2348 = vunpack.c.0.s8 %v2347
        %v2349 = vlaneseq
        %v2350 = vshrl.u32 %v2349, 7
        %v2351 = vsub.s32 %v2348, %v2350
        %v2352 = vrot.slane %v2345, %v2351
        %v2354 = vunpack.c.l.s4 1966171168
        %v2355 = vunpack.c.0.s8 %v2354
        %v2356 = vlaneseq
        %v2357 = vshrl.u32 %v2356, 7
        %v2358 = vsub.s32 %v2355, %v2357
        %v2359 = vrot.slane %v2172, %v2358
        %v2361 = vunpack.c.l.s4 1966171168
        %v2362 = vunpack.c.0.s8 %v2361
        %v2363 = vlaneseq
        %v2364 = vshrl.u32 %v2363, 7
        %v2365 = vsub.s32 %v2362, %v2364
        %v2366 = vrot.slane %v2359, %v2365
        %v2368 = vunpack.c.l.s4 1966171168
        %v2369 = vunpack.c.0.s8 %v2368
        %v2370 = vlaneseq
        %v2371 = vshrl.u32 %v2370, 7
        %v2372 = vsub.s32 %v2369, %v2371
        %v2373 = vrot.slane %v2173, %v2372
        %v2375 = vunpack.c.l.s4 1966171168
        %v2376 = vunpack.c.0.s8 %v2375
        %v2377 = vlaneseq
        %v2378 = vshrl.u32 %v2377, 7
        %v2379 = vsub.s32 %v2376, %v2378
        %v2380 = vrot.slane %v2373, %v2379
        %v2382 = vunpack.c.l.s4 1966171168
        %v2383 = vunpack.c.0.s8 %v2382
        %v2384 = vlaneseq
        %v2385 = vshrl.u32 %v2384, 7
        %v2386 = vsub.s32 %v2383, %v2385
        %v2387 = vrot.slane %v2174, %v2386
        %v2389 = vunpack.c.l.s4 1966171168
        %v2390 = vunpack.c.0.s8 %v2389
        %v2391 = vlaneseq
        %v2392 = vshrl.u32 %v2391, 7
        %v2393 = vsub.s32 %v2390, %v2392
        %v2394 = vrot.slane %v2387, %v2393
        %v2396 = vunpack.c.l.s4 1966171168
        %v2397 = vunpack.c.0.s8 %v2396
        %v2398 = vlaneseq
        %v2399 = vshrl.u32 %v2398, 7
        %v2400 = vsub.s32 %v2397, %v2399
        %v2401 = vrot.slane %v2175, %v2400
        %v2403 = vunpack.c.l.s4 1966171168
        %v2404 = vunpack.c.0.s8 %v2403
        %v2405 = vlaneseq
        %v2406 = vshrl.u32 %v2405, 7
        %v2407 = vsub.s32 %v2404, %v2406
        %v2408 = vrot.slane %v2401, %v2407
        %v2410 = vunpack.c.l.s4 1966171168
        %v2411 = vunpack.c.0.s8 %v2410
        %v2412 = vlaneseq
        %v2413 = vshrl.u32 %v2412, 7
        %v2414 = vsub.s32 %v2411, %v2413
        %v2415 = vrot.slane %v2176, %v2414
        %v2417 = vunpack.c.l.s4 1966171168
        %v2418 = vunpack.c.0.s8 %v2417
        %v2419 = vlaneseq
        %v2420 = vshrl.u32 %v2419, 7
        %v2421 = vsub.s32 %v2418, %v2420
        %v2422 = vrot.slane %v2415, %v2421
        %v2424 = vunpack.c.l.s4 1966171168
        %v2425 = vunpack.c.0.s8 %v2424
        %v2426 = vlaneseq
        %v2427 = vshrl.u32 %v2426, 7
        %v2428 = vsub.s32 %v2425, %v2427
        %v2429 = vrot.slane %v2177, %v2428
        %v2431 = vunpack.c.l.s4 1966171168
        %v2432 = vunpack.c.0.s8 %v2431
        %v2433 = vlaneseq
        %v2434 = vshrl.u32 %v2433, 7
        %v2435 = vsub.s32 %v2432, %v2434
        %v2436 = vrot.slane %v2429, %v2435
        %v2438 = vunpack.c.l.s4 1966171168
        %v2439 = vunpack.c.0.s8 %v2438
        %v2440 = vlaneseq
        %v2441 = vshrl.u32 %v2440, 7
        %v2442 = vsub.s32 %v2439, %v2441
        %v2443 = vrot.slane %v2178, %v2442
        %v2445 = vunpack.c.l.s4 1966171168
        %v2446 = vunpack.c.0.s8 %v2445
        %v2447 = vlaneseq
        %v2448 = vshrl.u32 %v2447, 7
        %v2449 = vsub.s32 %v2446, %v2448
        %v2450 = vrot.slane %v2443, %v2449
        %v2451 = vunpack.c.l.b16 %v2352
        %v2452 = vunpack.c.l.b16 %v2366
        %v2453 = vunpack.c.l.b16 %v2380
        %v2454 = vunpack.c.l.b16 %v2394
        %v2455 = vunpack.c.l.b16 %v2408
        %v2456 = vunpack.c.l.b16 %v2422
        %v2457 = vunpack.c.l.b16 %v2436
        %v2458 = vunpack.c.l.b16 %v2450
        %v2459 = vrot.slane %v2452, 7
        %v2460 = vsel %vm445, %v2459, %v2451
        %v2461 = vrot.slane %v2453, 6
        %v2462 = vsel %vm448, %v2461, %v2460
        %v2463 = vrot.slane %v2454, 5
        %v2464 = vsel %vm451, %v2463, %v2462
        %v2465 = vrot.slane %v2455, 4
        %v2466 = vsel %vm454, %v2465, %v2464
        %v2467 = vrot.slane %v2456, 3
        %v2468 = vsel %vm457, %v2467, %v2466
        %v2469 = vrot.slane %v2457, 2
        %v2470 = vsel %vm460, %v2469, %v2468
        %v2471 = vrot.slane %v2458, 1
        %v2472 = vsel %vm463, %v2471, %v2470
        %v2473 = vpack.c.b16 %v2472, %v2472
        %2474 = vrot.lane.b32.xlu0 %v2473, 96
        %v2475 = vpop.permute.xlu0 %2474
        %v2478 = vsel %vm611, %v2330, %v2475
        %2479 = vrot.lane.b32.xlu0 %v2330, 126
        %v2480 = vpop.permute.xlu0 %2479
        %2481 = vrot.lane.b32.xlu0 %v2473, 64
        %v2482 = vpop.permute.xlu0 %2481
        %v2485 = vsel %vm611, %v2480, %v2482
        %v2487 = vsel %vm622, %v2473, 0
        %v2489 = vsel %vm622, %v2478, 0
        %2491 = vmatprep.subr.bf16.mxu0 0
        %2492 = vmatpush1.bf16.xpose.msra.mxu0 %v2489
        %2493 = vmatprep.subr.bf16.mxu0 0
        %2494 = vmatpush1.bf16.xpose.msra.mxu0 0
        %2495 = vmatprep.subr.bf16.mxu0 0
        %2496 = vmatpush1.bf16.xpose.msra.mxu0 0
        %2497 = vmatprep.subr.bf16.mxu0 0
        %2498 = vmatpush1.bf16.xpose.msra.mxu0 0
        %2499 = vmatprep.subr.bf16.mxu0 0
        %2500 = vmatpush1.bf16.xpose.msra.mxu0 0
        %2501 = vmatprep.subr.bf16.mxu0 0
        %2502 = vmatpush1.bf16.xpose.msra.mxu0 0
        %2503 = vmatprep.subr.bf16.mxu0 0
        %2504 = vmatpush1.bf16.xpose.msra.mxu0 0
        %2505 = vmatprep.subr.bf16.mxu0 0
        %2506 = vmatpush1.bf16.xpose.msra.mxu0 0
        %2507 = vmatprep.subr.bf16.mxu0 0
        %2508 = vmatpush1.bf16.xpose.msra.mxu0 0
        %2509 = vmatprep.subr.bf16.mxu0 0
        %2510 = vmatpush1.bf16.xpose.msra.mxu0 0
        %2511 = vmatprep.subr.bf16.mxu0 0
        %2512 = vmatpush1.bf16.xpose.msra.mxu0 0
        %2513 = vmatprep.subr.bf16.mxu0 0
        %2514 = vmatpush1.bf16.xpose.msra.mxu0 0
        %2515 = vmatprep.subr.bf16.mxu0 0
        %2516 = vmatpush1.bf16.xpose.msra.mxu0 0
        %2517 = vmatprep.subr.bf16.mxu0 0
        %2518 = vmatpush1.bf16.xpose.msra.mxu0 0
        %2519 = vmatprep.subr.bf16.mxu0 0
        %2520 = vmatpush1.bf16.xpose.msra.mxu0 0
        %2521 = vmatprep.subr.bf16.mxu0 0
        %2522 = vmatpush1.bf16.xpose.msra.mxu0 0
        %2523 = vmatprep.mubr.bf16.mxu0 0
        %2524 = vmatmul.mubr.bf16.gmra.mrb[0].mxu0 %v2487
        %v2525 = vpop.f32.mrb[0].mxu0
        %v2526 = vadd.f32 0.0, %v2525
        %v2527 = vpop.f32.mrb[0].mxu0
        %v2528 = vpop.f32.mrb[0].mxu0
        %v2529 = vpop.f32.mrb[0].mxu0
        %2530 = vdwg.mxu0
        %v2531 = vmul.f32 %v2526, 0.35355338
        %v2532 = vsel %vm622, %v2531, -inf
        %2533 = vmax.xlane.f32.xlu0 %v2532
        %v2534 = vpop.xlane.xlu0 %2533
        %v2535 = vsub.f32 %v2531, %v2534
        %v2536 = vmul.f32 %v2535, 1.442695
        %v2537 = vpow.pop %v2536
        %v2538 = vsel %vm622, %v2537, 0.0
        %2539 = vadd.xlane.f32.xlu0 %v2538
        %v2540 = vpop.xlane.xlu0 %2539
        %v2541 = vrcp.pop %v2540
        %v2542 = vmul.f32 %v2537, %v2541
        %v2543 = vpack.c.bf16 %v2542, %v2542
        %v2545 = vsel %vm622, %v2543, 0
        %v2547 = vsel %vm684, %v2485, 0
        %2549 = vmatprep.subr.bf16.mxu0 0
        %2550 = vmatpush1.bf16.msra.mxu0 %v2547
        %2551 = vmatprep.subr.bf16.mxu0 0
        %2552 = vmatpush1.bf16.msra.mxu0 0
        %2553 = vmatprep.subr.bf16.mxu0 0
        %2554 = vmatpush1.bf16.msra.mxu0 0
        %2555 = vmatprep.subr.bf16.mxu0 0
        %2556 = vmatpush1.bf16.msra.mxu0 0
        %2557 = vmatprep.subr.bf16.mxu0 0
        %2558 = vmatpush1.bf16.msra.mxu0 0
        %2559 = vmatprep.subr.bf16.mxu0 0
        %2560 = vmatpush1.bf16.msra.mxu0 0
        %2561 = vmatprep.subr.bf16.mxu0 0
        %2562 = vmatpush1.bf16.msra.mxu0 0
        %2563 = vmatprep.subr.bf16.mxu0 0
        %2564 = vmatpush1.bf16.msra.mxu0 0
        %2565 = vmatprep.subr.bf16.mxu0 0
        %2566 = vmatpush1.bf16.msra.mxu0 0
        %2567 = vmatprep.subr.bf16.mxu0 0
        %2568 = vmatpush1.bf16.msra.mxu0 0
        %2569 = vmatprep.subr.bf16.mxu0 0
        %2570 = vmatpush1.bf16.msra.mxu0 0
        %2571 = vmatprep.subr.bf16.mxu0 0
        %2572 = vmatpush1.bf16.msra.mxu0 0
        %2573 = vmatprep.subr.bf16.mxu0 0
        %2574 = vmatpush1.bf16.msra.mxu0 0
        %2575 = vmatprep.subr.bf16.mxu0 0
        %2576 = vmatpush1.bf16.msra.mxu0 0
        %2577 = vmatprep.subr.bf16.mxu0 0
        %2578 = vmatpush1.bf16.msra.mxu0 0
        %2579 = vmatprep.subr.bf16.mxu0 0
        %2580 = vmatpush1.bf16.msra.mxu0 0
        %2581 = vmatprep.mubr.bf16.mxu0 0
        %2582 = vmatmul.mubr.bf16.gmra.mrb[0].mxu0 %v2545
        %v2583 = vpop.f32.mrb[0].mxu0
        %v2584 = vadd.f32 0.0, %v2583
        %v2585 = vpop.f32.mrb[0].mxu0
        %v2586 = vpop.f32.mrb[0].mxu0
        %v2587 = vpop.f32.mrb[0].mxu0
        %2588 = vdwg.mxu0
        %2589 = vrot.lane.b32.xlu0 %v2473, 120
        %v2590 = vpop.permute.xlu0 %2589
        %2592 = vrot.lane.b32.xlu0 %v2478, 120
        %v2593 = vpop.permute.xlu0 %2592
        %v2595 = vsel %vm622, %v2590, 0
        %v2598 = vsel %vm622, %v2593, 0
        %2600 = vmatprep.subr.bf16.mxu0 0
        %2601 = vmatpush1.bf16.xpose.msra.mxu0 %v2598
        %2602 = vmatprep.subr.bf16.mxu0 0
        %2603 = vmatpush1.bf16.xpose.msra.mxu0 0
        %2604 = vmatprep.subr.bf16.mxu0 0
        %2605 = vmatpush1.bf16.xpose.msra.mxu0 0
        %2606 = vmatprep.subr.bf16.mxu0 0
        %2607 = vmatpush1.bf16.xpose.msra.mxu0 0
        %2608 = vmatprep.subr.bf16.mxu0 0
        %2609 = vmatpush1.bf16.xpose.msra.mxu0 0
        %2610 = vmatprep.subr.bf16.mxu0 0
        %2611 = vmatpush1.bf16.xpose.msra.mxu0 0
        %2612 = vmatprep.subr.bf16.mxu0 0
        %2613 = vmatpush1.bf16.xpose.msra.mxu0 0
        %2614 = vmatprep.subr.bf16.mxu0 0
        %2615 = vmatpush1.bf16.xpose.msra.mxu0 0
        %2616 = vmatprep.subr.bf16.mxu0 0
        %2617 = vmatpush1.bf16.xpose.msra.mxu0 0
        %2618 = vmatprep.subr.bf16.mxu0 0
        %2619 = vmatpush1.bf16.xpose.msra.mxu0 0
        %2620 = vmatprep.subr.bf16.mxu0 0
        %2621 = vmatpush1.bf16.xpose.msra.mxu0 0
        %2622 = vmatprep.subr.bf16.mxu0 0
        %2623 = vmatpush1.bf16.xpose.msra.mxu0 0
        %2624 = vmatprep.subr.bf16.mxu0 0
        %2625 = vmatpush1.bf16.xpose.msra.mxu0 0
        %2626 = vmatprep.subr.bf16.mxu0 0
        %2627 = vmatpush1.bf16.xpose.msra.mxu0 0
        %2628 = vmatprep.subr.bf16.mxu0 0
        %2629 = vmatpush1.bf16.xpose.msra.mxu0 0
        %2630 = vmatprep.subr.bf16.mxu0 0
        %2631 = vmatpush1.bf16.xpose.msra.mxu0 0
        %2632 = vmatprep.mubr.bf16.mxu0 0
        %2633 = vmatmul.mubr.bf16.gmra.mrb[0].mxu0 %v2595
        %v2634 = vpop.f32.mrb[0].mxu0
        %v2635 = vadd.f32 0.0, %v2634
        %v2636 = vpop.f32.mrb[0].mxu0
        %v2637 = vpop.f32.mrb[0].mxu0
        %v2638 = vpop.f32.mrb[0].mxu0
        %2639 = vdwg.mxu0
        %v2640 = vmul.f32 %v2635, 0.35355338
        %v2641 = vsel %vm622, %v2640, -inf
        %2642 = vmax.xlane.f32.xlu0 %v2641
        %v2643 = vpop.xlane.xlu0 %2642
        %v2644 = vsub.f32 %v2640, %v2643
        %v2645 = vmul.f32 %v2644, 1.442695
        %v2646 = vpow.pop %v2645
        %v2647 = vsel %vm622, %v2646, 0.0
        %2648 = vadd.xlane.f32.xlu0 %v2647
        %v2649 = vpop.xlane.xlu0 %2648
        %v2650 = vrcp.pop %v2649
        %v2651 = vmul.f32 %v2646, %v2650
        %v2652 = vpack.c.bf16 %v2651, %v2651
        %2654 = vrot.lane.b32.xlu0 %v2485, 120
        %v2655 = vpop.permute.xlu0 %2654
        %v2657 = vsel %vm622, %v2652, 0
        %v2660 = vsel %vm684, %v2655, 0
        %2662 = vmatprep.subr.bf16.mxu0 0
        %2663 = vmatpush1.bf16.msra.mxu0 %v2660
        %2664 = vmatprep.subr.bf16.mxu0 0
        %2665 = vmatpush1.bf16.msra.mxu0 0
        %2666 = vmatprep.subr.bf16.mxu0 0
        %2667 = vmatpush1.bf16.msra.mxu0 0
        %2668 = vmatprep.subr.bf16.mxu0 0
        %2669 = vmatpush1.bf16.msra.mxu0 0
        %2670 = vmatprep.subr.bf16.mxu0 0
        %2671 = vmatpush1.bf16.msra.mxu0 0
        %2672 = vmatprep.subr.bf16.mxu0 0
        %2673 = vmatpush1.bf16.msra.mxu0 0
        %2674 = vmatprep.subr.bf16.mxu0 0
        %2675 = vmatpush1.bf16.msra.mxu0 0
        %2676 = vmatprep.subr.bf16.mxu0 0
        %2677 = vmatpush1.bf16.msra.mxu0 0
        %2678 = vmatprep.subr.bf16.mxu0 0
        %2679 = vmatpush1.bf16.msra.mxu0 0
        %2680 = vmatprep.subr.bf16.mxu0 0
        %2681 = vmatpush1.bf16.msra.mxu0 0
        %2682 = vmatprep.subr.bf16.mxu0 0
        %2683 = vmatpush1.bf16.msra.mxu0 0
        %2684 = vmatprep.subr.bf16.mxu0 0
        %2685 = vmatpush1.bf16.msra.mxu0 0
        %2686 = vmatprep.subr.bf16.mxu0 0
        %2687 = vmatpush1.bf16.msra.mxu0 0
        %2688 = vmatprep.subr.bf16.mxu0 0
        %2689 = vmatpush1.bf16.msra.mxu0 0
        %2690 = vmatprep.subr.bf16.mxu0 0
        %2691 = vmatpush1.bf16.msra.mxu0 0
        %2692 = vmatprep.subr.bf16.mxu0 0
        %2693 = vmatpush1.bf16.msra.mxu0 0
        %2694 = vmatprep.mubr.bf16.mxu0 0
        %2695 = vmatmul.mubr.bf16.gmra.mrb[0].mxu0 %v2657
        %v2696 = vpop.f32.mrb[0].mxu0
        %v2697 = vadd.f32 0.0, %v2696
        %v2698 = vpop.f32.mrb[0].mxu0
        %v2699 = vpop.f32.mrb[0].mxu0
        %v2700 = vpop.f32.mrb[0].mxu0
        %2701 = vdwg.mxu0
        %2703 = vrot.lane.b32.xlu0 %v2697, 8
        %v2704 = vpop.permute.xlu0 %2703
        %v2706 = vsel %vm622, %v2584, %v2704
        %v2707 = vpack.c.bf16 %v2706, %v2706
        %v2710 = vunpack.c.l.s4 1966171168
        %v2711 = vunpack.c.0.s8 %v2710
        %v2712 = vlaneseq
        %v2713 = vshrl.u32 %v2712, 7
        %v2714 = vsub.s32 %v2711, %v2713
        %v2715 = vrot.slane %v2707, %v2714
        %v2716 = vcombine.high %v2715, %v2715
        %v2718 = vunpack.c.l.s4 1966171168
        %v2719 = vunpack.c.0.s8 %v2718
        %v2720 = vlaneseq
        %v2721 = vshrl.u32 %v2720, 7
        %v2722 = vsub.s32 %v2719, %v2721
        %v2723 = vrot.slane %v2715, %v2722
        %v2725 = vunpack.c.l.s4 1966171168
        %v2726 = vunpack.c.0.s8 %v2725
        %v2727 = vlaneseq
        %v2728 = vshrl.u32 %v2727, 7
        %v2729 = vsub.s32 %v2726, %v2728
        %v2730 = vrot.slane %v2716, %v2729
        %v2731 = vcombine.high %v2723, %v2723
        %v2732 = vcombine.high %v2730, %v2730
        %v2733 = vunpack.i.l.s16 %v2723
        %v2734 = vunpack.i.h.s16 %v2723
        %v2735 = vunpack.i.l.s16 %v2730
        %v2736 = vunpack.i.h.s16 %v2730
        %v2737 = vunpack.i.l.s16 %v2731
        %v2738 = vunpack.i.h.s16 %v2731
        %v2739 = vunpack.i.l.s16 %v2732
        %v2740 = vunpack.i.h.s16 %v2732
        %v2741 = vpack.i.b16 %v2733, %v2733
        %v2742 = vpack.i.b16 %v2734, %v2734
        %v2743 = vpack.i.b16 %v2735, %v2735
        %v2744 = vpack.i.b16 %v2736, %v2736
        %v2745 = vpack.i.b16 %v2737, %v2737
        %v2746 = vpack.i.b16 %v2738, %v2738
        %v2747 = vpack.i.b16 %v2739, %v2739
        %v2748 = vpack.i.b16 %v2740, %v2740
        %s2757 = scalar_lea.vmem %s295, 2 [#allocation4]
        %v2758 = vld [vmem:[%s2757] sm:$0x1]
        %v2759 = vsel %vm897, %v2741, %v2758
        %2760 = vst [vmem:[%s2757] sm:$0x1] %v2759
        %v2761 = vld [vmem:[%s2757 + $0x4] sm:$0x1]
        %v2762 = vsel %vm897, %v2742, %v2761
        %2763 = vst [vmem:[%s2757 + $0x4] sm:$0x1] %v2762
        %v2764 = vld [vmem:[%s2757 + $0x8] sm:$0x1]
        %v2765 = vsel %vm897, %v2743, %v2764
        %2766 = vst [vmem:[%s2757 + $0x8] sm:$0x1] %v2765
        %v2767 = vld [vmem:[%s2757 + $0xc] sm:$0x1]
        %v2768 = vsel %vm897, %v2744, %v2767
        %2769 = vst [vmem:[%s2757 + $0xc] sm:$0x1] %v2768
        %v2770 = vld [vmem:[%s2757 + $0x10] sm:$0x1]
        %v2771 = vsel %vm897, %v2745, %v2770
        %2772 = vst [vmem:[%s2757 + $0x10] sm:$0x1] %v2771
        %v2773 = vld [vmem:[%s2757 + $0x14] sm:$0x1]
        %v2774 = vsel %vm897, %v2746, %v2773
        %2775 = vst [vmem:[%s2757 + $0x14] sm:$0x1] %v2774
        %v2776 = vld [vmem:[%s2757 + $0x18] sm:$0x1]
        %v2777 = vsel %vm897, %v2747, %v2776
        %2778 = vst [vmem:[%s2757 + $0x18] sm:$0x1] %v2777
        %v2779 = vld [vmem:[%s2757 + $0x1c] sm:$0x1]
        %v2780 = vsel %vm897, %v2748, %v2779
        %2781 = vst [vmem:[%s2757 + $0x1c] sm:$0x1] %v2780
        %2782 = vrot.lane.b32.xlu0 %v2473, 112
        %v2783 = vpop.permute.xlu0 %2782
        %2784 = vrot.lane.b32.xlu0 %v2478, 112
        %v2785 = vpop.permute.xlu0 %2784
        %v2787 = vsel %vm622, %v2783, 0
        %v2790 = vsel %vm622, %v2785, 0
        %2792 = vmatprep.subr.bf16.mxu0 0
        %2793 = vmatpush1.bf16.xpose.msra.mxu0 %v2790
        %2794 = vmatprep.subr.bf16.mxu0 0
        %2795 = vmatpush1.bf16.xpose.msra.mxu0 0
        %2796 = vmatprep.subr.bf16.mxu0 0
        %2797 = vmatpush1.bf16.xpose.msra.mxu0 0
        %2798 = vmatprep.subr.bf16.mxu0 0
        %2799 = vmatpush1.bf16.xpose.msra.mxu0 0
        %2800 = vmatprep.subr.bf16.mxu0 0
        %2801 = vmatpush1.bf16.xpose.msra.mxu0 0
        %2802 = vmatprep.subr.bf16.mxu0 0
        %2803 = vmatpush1.bf16.xpose.msra.mxu0 0
        %2804 = vmatprep.subr.bf16.mxu0 0
        %2805 = vmatpush1.bf16.xpose.msra.mxu0 0
        %2806 = vmatprep.subr.bf16.mxu0 0
        %2807 = vmatpush1.bf16.xpose.msra.mxu0 0
        %2808 = vmatprep.subr.bf16.mxu0 0
        %2809 = vmatpush1.bf16.xpose.msra.mxu0 0
        %2810 = vmatprep.subr.bf16.mxu0 0
        %2811 = vmatpush1.bf16.xpose.msra.mxu0 0
        %2812 = vmatprep.subr.bf16.mxu0 0
        %2813 = vmatpush1.bf16.xpose.msra.mxu0 0
        %2814 = vmatprep.subr.bf16.mxu0 0
        %2815 = vmatpush1.bf16.xpose.msra.mxu0 0
        %2816 = vmatprep.subr.bf16.mxu0 0
        %2817 = vmatpush1.bf16.xpose.msra.mxu0 0
        %2818 = vmatprep.subr.bf16.mxu0 0
        %2819 = vmatpush1.bf16.xpose.msra.mxu0 0
        %2820 = vmatprep.subr.bf16.mxu0 0
        %2821 = vmatpush1.bf16.xpose.msra.mxu0 0
        %2822 = vmatprep.subr.bf16.mxu0 0
        %2823 = vmatpush1.bf16.xpose.msra.mxu0 0
        %2824 = vmatprep.mubr.bf16.mxu0 0
        %2825 = vmatmul.mubr.bf16.gmra.mrb[0].mxu0 %v2787
        %v2826 = vpop.f32.mrb[0].mxu0
        %v2827 = vadd.f32 0.0, %v2826
        %v2828 = vpop.f32.mrb[0].mxu0
        %v2829 = vpop.f32.mrb[0].mxu0
        %v2830 = vpop.f32.mrb[0].mxu0
        %2831 = vdwg.mxu0
        %v2832 = vmul.f32 %v2827, 0.35355338
        %v2833 = vsel %vm622, %v2832, -inf
        %2834 = vmax.xlane.f32.xlu0 %v2833
        %v2835 = vpop.xlane.xlu0 %2834
        %v2836 = vsub.f32 %v2832, %v2835
        %v2837 = vmul.f32 %v2836, 1.442695
        %v2838 = vpow.pop %v2837
        %v2839 = vsel %vm622, %v2838, 0.0
        %2840 = vadd.xlane.f32.xlu0 %v2839
        %v2841 = vpop.xlane.xlu0 %2840
        %v2842 = vrcp.pop %v2841
        %v2843 = vmul.f32 %v2838, %v2842
        %v2844 = vpack.c.bf16 %v2843, %v2843
        %2845 = vrot.lane.b32.xlu0 %v2485, 112
        %v2846 = vpop.permute.xlu0 %2845
        %v2848 = vsel %vm622, %v2844, 0
        %v2851 = vsel %vm684, %v2846, 0
        %2853 = vmatprep.subr.bf16.mxu0 0
        %2854 = vmatpush1.bf16.msra.mxu0 %v2851
        %2855 = vmatprep.subr.bf16.mxu0 0
        %2856 = vmatpush1.bf16.msra.mxu0 0
        %2857 = vmatprep.subr.bf16.mxu0 0
        %2858 = vmatpush1.bf16.msra.mxu0 0
        %2859 = vmatprep.subr.bf16.mxu0 0
        %2860 = vmatpush1.bf16.msra.mxu0 0
        %2861 = vmatprep.subr.bf16.mxu0 0
        %2862 = vmatpush1.bf16.msra.mxu0 0
        %2863 = vmatprep.subr.bf16.mxu0 0
        %2864 = vmatpush1.bf16.msra.mxu0 0
        %2865 = vmatprep.subr.bf16.mxu0 0
        %2866 = vmatpush1.bf16.msra.mxu0 0
        %2867 = vmatprep.subr.bf16.mxu0 0
        %2868 = vmatpush1.bf16.msra.mxu0 0
        %2869 = vmatprep.subr.bf16.mxu0 0
        %2870 = vmatpush1.bf16.msra.mxu0 0
        %2871 = vmatprep.subr.bf16.mxu0 0
        %2872 = vmatpush1.bf16.msra.mxu0 0
        %2873 = vmatprep.subr.bf16.mxu0 0
        %2874 = vmatpush1.bf16.msra.mxu0 0
        %2875 = vmatprep.subr.bf16.mxu0 0
        %2876 = vmatpush1.bf16.msra.mxu0 0
        %2877 = vmatprep.subr.bf16.mxu0 0
        %2878 = vmatpush1.bf16.msra.mxu0 0
        %2879 = vmatprep.subr.bf16.mxu0 0
        %2880 = vmatpush1.bf16.msra.mxu0 0
        %2881 = vmatprep.subr.bf16.mxu0 0
        %2882 = vmatpush1.bf16.msra.mxu0 0
        %2883 = vmatprep.subr.bf16.mxu0 0
        %2884 = vmatpush1.bf16.msra.mxu0 0
        %2885 = vmatprep.mubr.bf16.mxu0 0
        %2886 = vmatmul.mubr.bf16.gmra.mrb[0].mxu0 %v2848
        %v2887 = vpop.f32.mrb[0].mxu0
        %v2888 = vadd.f32 0.0, %v2887
        %v2889 = vpop.f32.mrb[0].mxu0
        %v2890 = vpop.f32.mrb[0].mxu0
        %v2891 = vpop.f32.mrb[0].mxu0
        %2892 = vdwg.mxu0
        %2893 = vrot.lane.b32.xlu0 %v2473, 104
        %v2894 = vpop.permute.xlu0 %2893
        %2895 = vrot.lane.b32.xlu0 %v2478, 104
        %v2896 = vpop.permute.xlu0 %2895
        %v2898 = vsel %vm622, %v2894, 0
        %v2901 = vsel %vm622, %v2896, 0
        %2903 = vmatprep.subr.bf16.mxu0 0
        %2904 = vmatpush1.bf16.xpose.msra.mxu0 %v2901
        %2905 = vmatprep.subr.bf16.mxu0 0
        %2906 = vmatpush1.bf16.xpose.msra.mxu0 0
        %2907 = vmatprep.subr.bf16.mxu0 0
        %2908 = vmatpush1.bf16.xpose.msra.mxu0 0
        %2909 = vmatprep.subr.bf16.mxu0 0
        %2910 = vmatpush1.bf16.xpose.msra.mxu0 0
        %2911 = vmatprep.subr.bf16.mxu0 0
        %2912 = vmatpush1.bf16.xpose.msra.mxu0 0
        %2913 = vmatprep.subr.bf16.mxu0 0
        %2914 = vmatpush1.bf16.xpose.msra.mxu0 0
        %2915 = vmatprep.subr.bf16.mxu0 0
        %2916 = vmatpush1.bf16.xpose.msra.mxu0 0
        %2917 = vmatprep.subr.bf16.mxu0 0
        %2918 = vmatpush1.bf16.xpose.msra.mxu0 0
        %2919 = vmatprep.subr.bf16.mxu0 0
        %2920 = vmatpush1.bf16.xpose.msra.mxu0 0
        %2921 = vmatprep.subr.bf16.mxu0 0
        %2922 = vmatpush1.bf16.xpose.msra.mxu0 0
        %2923 = vmatprep.subr.bf16.mxu0 0
        %2924 = vmatpush1.bf16.xpose.msra.mxu0 0
        %2925 = vmatprep.subr.bf16.mxu0 0
        %2926 = vmatpush1.bf16.xpose.msra.mxu0 0
        %2927 = vmatprep.subr.bf16.mxu0 0
        %2928 = vmatpush1.bf16.xpose.msra.mxu0 0
        %2929 = vmatprep.subr.bf16.mxu0 0
        %2930 = vmatpush1.bf16.xpose.msra.mxu0 0
        %2931 = vmatprep.subr.bf16.mxu0 0
        %2932 = vmatpush1.bf16.xpose.msra.mxu0 0
        %2933 = vmatprep.subr.bf16.mxu0 0
        %2934 = vmatpush1.bf16.xpose.msra.mxu0 0
        %2935 = vmatprep.mubr.bf16.mxu0 0
        %2936 = vmatmul.mubr.bf16.gmra.mrb[0].mxu0 %v2898
        %v2937 = vpop.f32.mrb[0].mxu0
        %v2938 = vadd.f32 0.0, %v2937
        %v2939 = vpop.f32.mrb[0].mxu0
        %v2940 = vpop.f32.mrb[0].mxu0
        %v2941 = vpop.f32.mrb[0].mxu0
        %2942 = vdwg.mxu0
        %v2943 = vmul.f32 %v2938, 0.35355338
        %v2944 = vsel %vm622, %v2943, -inf
        %2945 = vmax.xlane.f32.xlu0 %v2944
        %v2946 = vpop.xlane.xlu0 %2945
        %v2947 = vsub.f32 %v2943, %v2946
        %v2948 = vmul.f32 %v2947, 1.442695
        %v2949 = vpow.pop %v2948
        %v2950 = vsel %vm622, %v2949, 0.0
        %2951 = vadd.xlane.f32.xlu0 %v2950
        %v2952 = vpop.xlane.xlu0 %2951
        %v2953 = vrcp.pop %v2952
        %v2954 = vmul.f32 %v2949, %v2953
        %v2955 = vpack.c.bf16 %v2954, %v2954
        %2956 = vrot.lane.b32.xlu0 %v2485, 104
        %v2957 = vpop.permute.xlu0 %2956
        %v2959 = vsel %vm622, %v2955, 0
        %v2962 = vsel %vm684, %v2957, 0
        %2964 = vmatprep.subr.bf16.mxu0 0
        %2965 = vmatpush1.bf16.msra.mxu0 %v2962
        %2966 = vmatprep.subr.bf16.mxu0 0
        %2967 = vmatpush1.bf16.msra.mxu0 0
        %2968 = vmatprep.subr.bf16.mxu0 0
        %2969 = vmatpush1.bf16.msra.mxu0 0
        %2970 = vmatprep.subr.bf16.mxu0 0
        %2971 = vmatpush1.bf16.msra.mxu0 0
        %2972 = vmatprep.subr.bf16.mxu0 0
        %2973 = vmatpush1.bf16.msra.mxu0 0
        %2974 = vmatprep.subr.bf16.mxu0 0
        %2975 = vmatpush1.bf16.msra.mxu0 0
        %2976 = vmatprep.subr.bf16.mxu0 0
        %2977 = vmatpush1.bf16.msra.mxu0 0
        %2978 = vmatprep.subr.bf16.mxu0 0
        %2979 = vmatpush1.bf16.msra.mxu0 0
        %2980 = vmatprep.subr.bf16.mxu0 0
        %2981 = vmatpush1.bf16.msra.mxu0 0
        %2982 = vmatprep.subr.bf16.mxu0 0
        %2983 = vmatpush1.bf16.msra.mxu0 0
        %2984 = vmatprep.subr.bf16.mxu0 0
        %2985 = vmatpush1.bf16.msra.mxu0 0
        %2986 = vmatprep.subr.bf16.mxu0 0
        %2987 = vmatpush1.bf16.msra.mxu0 0
        %2988 = vmatprep.subr.bf16.mxu0 0
        %2989 = vmatpush1.bf16.msra.mxu0 0
        %2990 = vmatprep.subr.bf16.mxu0 0
        %2991 = vmatpush1.bf16.msra.mxu0 0
        %2992 = vmatprep.subr.bf16.mxu0 0
        %2993 = vmatpush1.bf16.msra.mxu0 0
        %2994 = vmatprep.subr.bf16.mxu0 0
        %2995 = vmatpush1.bf16.msra.mxu0 0
        %2996 = vmatprep.mubr.bf16.mxu0 0
        %2997 = vmatmul.mubr.bf16.gmra.mrb[0].mxu0 %v2959
        %v2998 = vpop.f32.mrb[0].mxu0
        %v2999 = vadd.f32 0.0, %v2998
        %v3000 = vpop.f32.mrb[0].mxu0
        %v3001 = vpop.f32.mrb[0].mxu0
        %v3002 = vpop.f32.mrb[0].mxu0
        %3003 = vdwg.mxu0
        %3005 = vrot.lane.b32.xlu0 %v2999, 8
        %v3006 = vpop.permute.xlu0 %3005
        %v3008 = vsel %vm622, %v2888, %v3006
        %v3009 = vpack.c.bf16 %v3008, %v3008
        %v3012 = vunpack.c.l.s4 1966171168
        %v3013 = vunpack.c.0.s8 %v3012
        %v3014 = vlaneseq
        %v3015 = vshrl.u32 %v3014, 7
        %v3016 = vsub.s32 %v3013, %v3015
        %v3017 = vrot.slane %v3009, %v3016
        %v3018 = vcombine.high %v3017, %v3017
        %v3020 = vunpack.c.l.s4 1966171168
        %v3021 = vunpack.c.0.s8 %v3020
        %v3022 = vlaneseq
        %v3023 = vshrl.u32 %v3022, 7
        %v3024 = vsub.s32 %v3021, %v3023
        %v3025 = vrot.slane %v3017, %v3024
        %v3027 = vunpack.c.l.s4 1966171168
        %v3028 = vunpack.c.0.s8 %v3027
        %v3029 = vlaneseq
        %v3030 = vshrl.u32 %v3029, 7
        %v3031 = vsub.s32 %v3028, %v3030
        %v3032 = vrot.slane %v3018, %v3031
        %v3033 = vcombine.high %v3025, %v3025
        %v3034 = vcombine.high %v3032, %v3032
        %v3035 = vunpack.i.l.s16 %v3025
        %v3036 = vunpack.i.h.s16 %v3025
        %v3037 = vunpack.i.l.s16 %v3032
        %v3038 = vunpack.i.h.s16 %v3032
        %v3039 = vunpack.i.l.s16 %v3033
        %v3040 = vunpack.i.h.s16 %v3033
        %v3041 = vunpack.i.l.s16 %v3034
        %v3042 = vunpack.i.h.s16 %v3034
        %v3043 = vpack.i.b16 %v3035, %v3035
        %v3044 = vpack.i.b16 %v3036, %v3036
        %v3045 = vpack.i.b16 %v3037, %v3037
        %v3046 = vpack.i.b16 %v3038, %v3038
        %v3047 = vpack.i.b16 %v3039, %v3039
        %v3048 = vpack.i.b16 %v3040, %v3040
        %v3049 = vpack.i.b16 %v3041, %v3041
        %v3050 = vpack.i.b16 %v3042, %v3042
        %3051 = vrot.lane.b32.xlu0 %v3043, 16
        %v3052 = vpop.permute.xlu0 %3051
        %3053 = vrot.lane.b32.xlu0 %v3044, 16
        %v3054 = vpop.permute.xlu0 %3053
        %3055 = vrot.lane.b32.xlu0 %v3045, 16
        %v3056 = vpop.permute.xlu0 %3055
        %3057 = vrot.lane.b32.xlu0 %v3046, 16
        %v3058 = vpop.permute.xlu0 %3057
        %3059 = vrot.lane.b32.xlu0 %v3047, 16
        %v3060 = vpop.permute.xlu0 %3059
        %3061 = vrot.lane.b32.xlu0 %v3048, 16
        %v3062 = vpop.permute.xlu0 %3061
        %3063 = vrot.lane.b32.xlu0 %v3049, 16
        %v3064 = vpop.permute.xlu0 %3063
        %3065 = vrot.lane.b32.xlu0 %v3050, 16
        %v3066 = vpop.permute.xlu0 %3065
        %v3075 = vld [vmem:[%s2757] sm:$0x1]
        %v3076 = vsel %vm1216, %v3052, %v3075
        %3077 = vst [vmem:[%s2757] sm:$0x1] %v3076
        %v3078 = vld [vmem:[%s2757 + $0x4] sm:$0x1]
        %v3079 = vsel %vm1216, %v3054, %v3078
        %3080 = vst [vmem:[%s2757 + $0x4] sm:$0x1] %v3079
        %v3081 = vld [vmem:[%s2757 + $0x8] sm:$0x1]
        %v3082 = vsel %vm1216, %v3056, %v3081
        %3083 = vst [vmem:[%s2757 + $0x8] sm:$0x1] %v3082
        %v3084 = vld [vmem:[%s2757 + $0xc] sm:$0x1]
        %v3085 = vsel %vm1216, %v3058, %v3084
        %3086 = vst [vmem:[%s2757 + $0xc] sm:$0x1] %v3085
        %v3087 = vld [vmem:[%s2757 + $0x10] sm:$0x1]
        %v3088 = vsel %vm1216, %v3060, %v3087
        %3089 = vst [vmem:[%s2757 + $0x10] sm:$0x1] %v3088
        %v3090 = vld [vmem:[%s2757 + $0x14] sm:$0x1]
        %v3091 = vsel %vm1216, %v3062, %v3090
        %3092 = vst [vmem:[%s2757 + $0x14] sm:$0x1] %v3091
        %v3093 = vld [vmem:[%s2757 + $0x18] sm:$0x1]
        %v3094 = vsel %vm1216, %v3064, %v3093
        %3095 = vst [vmem:[%s2757 + $0x18] sm:$0x1] %v3094
        %v3096 = vld [vmem:[%s2757 + $0x1c] sm:$0x1]
        %v3097 = vsel %vm1216, %v3066, %v3096
        %3098 = vst [vmem:[%s2757 + $0x1c] sm:$0x1] %v3097
        %s3099 = scalar_lea.vmem %s267, 3 [#allocation2]
        %v3100 = vld [vmem:[%s3099] sm:$0x1]
        %v3101 = vld [vmem:[%s3099 + $0x4] sm:$0x1]
        %v3102 = vld [vmem:[%s3099 + $0x8] sm:$0x1]
        %v3103 = vld [vmem:[%s3099 + $0xc] sm:$0x1]
        %v3104 = vld [vmem:[%s3099 + $0x10] sm:$0x1]
        %v3105 = vld [vmem:[%s3099 + $0x14] sm:$0x1]
        %v3106 = vld [vmem:[%s3099 + $0x18] sm:$0x1]
        %v3107 = vld [vmem:[%s3099 + $0x1c] sm:$0x1]
        %s3108 = scalar_lea.vmem %s274, 3 [#allocation3]
        %v3109 = vld [vmem:[%s3108] sm:$0x1]
        %v3110 = vld [vmem:[%s3108 + $0x4] sm:$0x1]
        %v3111 = vld [vmem:[%s3108 + $0x8] sm:$0x1]
        %v3112 = vld [vmem:[%s3108 + $0xc] sm:$0x1]
        %v3113 = vld [vmem:[%s3108 + $0x10] sm:$0x1]
        %v3114 = vld [vmem:[%s3108 + $0x14] sm:$0x1]
        %v3115 = vld [vmem:[%s3108 + $0x18] sm:$0x1]
        %v3116 = vld [vmem:[%s3108 + $0x1c] sm:$0x1]
        %v3126 = vunpack.c.l.s4 1966171168
        %v3127 = vunpack.c.0.s8 %v3126
        %v3128 = vlaneseq
        %v3129 = vshrl.u32 %v3128, 7
        %v3130 = vsub.s32 %v3127, %v3129
        %v3131 = vrot.slane %v3109, %v3130
        %v3133 = vunpack.c.l.s4 1966171168
        %v3134 = vunpack.c.0.s8 %v3133
        %v3135 = vlaneseq
        %v3136 = vshrl.u32 %v3135, 7
        %v3137 = vsub.s32 %v3134, %v3136
        %v3138 = vrot.slane %v3131, %v3137
        %v3140 = vunpack.c.l.s4 1966171168
        %v3141 = vunpack.c.0.s8 %v3140
        %v3142 = vlaneseq
        %v3143 = vshrl.u32 %v3142, 7
        %v3144 = vsub.s32 %v3141, %v3143
        %v3145 = vrot.slane %v3110, %v3144
        %v3147 = vunpack.c.l.s4 1966171168
        %v3148 = vunpack.c.0.s8 %v3147
        %v3149 = vlaneseq
        %v3150 = vshrl.u32 %v3149, 7
        %v3151 = vsub.s32 %v3148, %v3150
        %v3152 = vrot.slane %v3145, %v3151
        %v3154 = vunpack.c.l.s4 1966171168
        %v3155 = vunpack.c.0.s8 %v3154
        %v3156 = vlaneseq
        %v3157 = vshrl.u32 %v3156, 7
        %v3158 = vsub.s32 %v3155, %v3157
        %v3159 = vrot.slane %v3111, %v3158
        %v3161 = vunpack.c.l.s4 1966171168
        %v3162 = vunpack.c.0.s8 %v3161
        %v3163 = vlaneseq
        %v3164 = vshrl.u32 %v3163, 7
        %v3165 = vsub.s32 %v3162, %v3164
        %v3166 = vrot.slane %v3159, %v3165
        %v3168 = vunpack.c.l.s4 1966171168
        %v3169 = vunpack.c.0.s8 %v3168
        %v3170 = vlaneseq
        %v3171 = vshrl.u32 %v3170, 7
        %v3172 = vsub.s32 %v3169, %v3171
        %v3173 = vrot.slane %v3112, %v3172
        %v3175 = vunpack.c.l.s4 1966171168
        %v3176 = vunpack.c.0.s8 %v3175
        %v3177 = vlaneseq
        %v3178 = vshrl.u32 %v3177, 7
        %v3179 = vsub.s32 %v3176, %v3178
        %v3180 = vrot.slane %v3173, %v3179
        %v3182 = vunpack.c.l.s4 1966171168
        %v3183 = vunpack.c.0.s8 %v3182
        %v3184 = vlaneseq
        %v3185 = vshrl.u32 %v3184, 7
        %v3186 = vsub.s32 %v3183, %v3185
        %v3187 = vrot.slane %v3113, %v3186
        %v3189 = vunpack.c.l.s4 1966171168
        %v3190 = vunpack.c.0.s8 %v3189
        %v3191 = vlaneseq
        %v3192 = vshrl.u32 %v3191, 7
        %v3193 = vsub.s32 %v3190, %v3192
        %v3194 = vrot.slane %v3187, %v3193
        %v3196 = vunpack.c.l.s4 1966171168
        %v3197 = vunpack.c.0.s8 %v3196
        %v3198 = vlaneseq
        %v3199 = vshrl.u32 %v3198, 7
        %v3200 = vsub.s32 %v3197, %v3199
        %v3201 = vrot.slane %v3114, %v3200
        %v3203 = vunpack.c.l.s4 1966171168
        %v3204 = vunpack.c.0.s8 %v3203
        %v3205 = vlaneseq
        %v3206 = vshrl.u32 %v3205, 7
        %v3207 = vsub.s32 %v3204, %v3206
        %v3208 = vrot.slane %v3201, %v3207
        %v3210 = vunpack.c.l.s4 1966171168
        %v3211 = vunpack.c.0.s8 %v3210
        %v3212 = vlaneseq
        %v3213 = vshrl.u32 %v3212, 7
        %v3214 = vsub.s32 %v3211, %v3213
        %v3215 = vrot.slane %v3115, %v3214
        %v3217 = vunpack.c.l.s4 1966171168
        %v3218 = vunpack.c.0.s8 %v3217
        %v3219 = vlaneseq
        %v3220 = vshrl.u32 %v3219, 7
        %v3221 = vsub.s32 %v3218, %v3220
        %v3222 = vrot.slane %v3215, %v3221
        %v3224 = vunpack.c.l.s4 1966171168
        %v3225 = vunpack.c.0.s8 %v3224
        %v3226 = vlaneseq
        %v3227 = vshrl.u32 %v3226, 7
        %v3228 = vsub.s32 %v3225, %v3227
        %v3229 = vrot.slane %v3116, %v3228
        %v3231 = vunpack.c.l.s4 1966171168
        %v3232 = vunpack.c.0.s8 %v3231
        %v3233 = vlaneseq
        %v3234 = vshrl.u32 %v3233, 7
        %v3235 = vsub.s32 %v3232, %v3234
        %v3236 = vrot.slane %v3229, %v3235
        %v3237 = vunpack.c.l.b16 %v3138
        %v3238 = vunpack.c.l.b16 %v3152
        %v3239 = vunpack.c.l.b16 %v3166
        %v3240 = vunpack.c.l.b16 %v3180
        %v3241 = vunpack.c.l.b16 %v3194
        %v3242 = vunpack.c.l.b16 %v3208
        %v3243 = vunpack.c.l.b16 %v3222
        %v3244 = vunpack.c.l.b16 %v3236
        %v3245 = vrot.slane %v3238, 7
        %v3246 = vsel %vm445, %v3245, %v3237
        %v3247 = vrot.slane %v3239, 6
        %v3248 = vsel %vm448, %v3247, %v3246
        %v3249 = vrot.slane %v3240, 5
        %v3250 = vsel %vm451, %v3249, %v3248
        %v3251 = vrot.slane %v3241, 4
        %v3252 = vsel %vm454, %v3251, %v3250
        %v3253 = vrot.slane %v3242, 3
        %v3254 = vsel %vm457, %v3253, %v3252
        %v3255 = vrot.slane %v3243, 2
        %v3256 = vsel %vm460, %v3255, %v3254
        %v3257 = vrot.slane %v3244, 1
        %v3258 = vsel %vm463, %v3257, %v3256
        %v3259 = vpack.c.b16 %v3258, %v3258
        %v3269 = vunpack.c.l.s4 1966171168
        %v3270 = vunpack.c.0.s8 %v3269
        %v3271 = vlaneseq
        %v3272 = vshrl.u32 %v3271, 7
        %v3273 = vsub.s32 %v3270, %v3272
        %v3274 = vrot.slane %v3100, %v3273
        %v3276 = vunpack.c.l.s4 1966171168
        %v3277 = vunpack.c.0.s8 %v3276
        %v3278 = vlaneseq
        %v3279 = vshrl.u32 %v3278, 7
        %v3280 = vsub.s32 %v3277, %v3279
        %v3281 = vrot.slane %v3274, %v3280
        %v3283 = vunpack.c.l.s4 1966171168
        %v3284 = vunpack.c.0.s8 %v3283
        %v3285 = vlaneseq
        %v3286 = vshrl.u32 %v3285, 7
        %v3287 = vsub.s32 %v3284, %v3286
        %v3288 = vrot.slane %v3101, %v3287
        %v3290 = vunpack.c.l.s4 1966171168
        %v3291 = vunpack.c.0.s8 %v3290
        %v3292 = vlaneseq
        %v3293 = vshrl.u32 %v3292, 7
        %v3294 = vsub.s32 %v3291, %v3293
        %v3295 = vrot.slane %v3288, %v3294
        %v3297 = vunpack.c.l.s4 1966171168
        %v3298 = vunpack.c.0.s8 %v3297
        %v3299 = vlaneseq
        %v3300 = vshrl.u32 %v3299, 7
        %v3301 = vsub.s32 %v3298, %v3300
        %v3302 = vrot.slane %v3102, %v3301
        %v3304 = vunpack.c.l.s4 1966171168
        %v3305 = vunpack.c.0.s8 %v3304
        %v3306 = vlaneseq
        %v3307 = vshrl.u32 %v3306, 7
        %v3308 = vsub.s32 %v3305, %v3307
        %v3309 = vrot.slane %v3302, %v3308
        %v3311 = vunpack.c.l.s4 1966171168
        %v3312 = vunpack.c.0.s8 %v3311
        %v3313 = vlaneseq
        %v3314 = vshrl.u32 %v3313, 7
        %v3315 = vsub.s32 %v3312, %v3314
        %v3316 = vrot.slane %v3103, %v3315
        %v3318 = vunpack.c.l.s4 1966171168
        %v3319 = vunpack.c.0.s8 %v3318
        %v3320 = vlaneseq
        %v3321 = vshrl.u32 %v3320, 7
        %v3322 = vsub.s32 %v3319, %v3321
        %v3323 = vrot.slane %v3316, %v3322
        %v3325 = vunpack.c.l.s4 1966171168
        %v3326 = vunpack.c.0.s8 %v3325
        %v3327 = vlaneseq
        %v3328 = vshrl.u32 %v3327, 7
        %v3329 = vsub.s32 %v3326, %v3328
        %v3330 = vrot.slane %v3104, %v3329
        %v3332 = vunpack.c.l.s4 1966171168
        %v3333 = vunpack.c.0.s8 %v3332
        %v3334 = vlaneseq
        %v3335 = vshrl.u32 %v3334, 7
        %v3336 = vsub.s32 %v3333, %v3335
        %v3337 = vrot.slane %v3330, %v3336
        %v3339 = vunpack.c.l.s4 1966171168
        %v3340 = vunpack.c.0.s8 %v3339
        %v3341 = vlaneseq
        %v3342 = vshrl.u32 %v3341, 7
        %v3343 = vsub.s32 %v3340, %v3342
        %v3344 = vrot.slane %v3105, %v3343
        %v3346 = vunpack.c.l.s4 1966171168
        %v3347 = vunpack.c.0.s8 %v3346
        %v3348 = vlaneseq
        %v3349 = vshrl.u32 %v3348, 7
        %v3350 = vsub.s32 %v3347, %v3349
        %v3351 = vrot.slane %v3344, %v3350
        %v3353 = vunpack.c.l.s4 1966171168
        %v3354 = vunpack.c.0.s8 %v3353
        %v3355 = vlaneseq
        %v3356 = vshrl.u32 %v3355, 7
        %v3357 = vsub.s32 %v3354, %v3356
        %v3358 = vrot.slane %v3106, %v3357
        %v3360 = vunpack.c.l.s4 1966171168
        %v3361 = vunpack.c.0.s8 %v3360
        %v3362 = vlaneseq
        %v3363 = vshrl.u32 %v3362, 7
        %v3364 = vsub.s32 %v3361, %v3363
        %v3365 = vrot.slane %v3358, %v3364
        %v3367 = vunpack.c.l.s4 1966171168
        %v3368 = vunpack.c.0.s8 %v3367
        %v3369 = vlaneseq
        %v3370 = vshrl.u32 %v3369, 7
        %v3371 = vsub.s32 %v3368, %v3370
        %v3372 = vrot.slane %v3107, %v3371
        %v3374 = vunpack.c.l.s4 1966171168
        %v3375 = vunpack.c.0.s8 %v3374
        %v3376 = vlaneseq
        %v3377 = vshrl.u32 %v3376, 7
        %v3378 = vsub.s32 %v3375, %v3377
        %v3379 = vrot.slane %v3372, %v3378
        %v3380 = vunpack.c.l.b16 %v3281
        %v3381 = vunpack.c.l.b16 %v3295
        %v3382 = vunpack.c.l.b16 %v3309
        %v3383 = vunpack.c.l.b16 %v3323
        %v3384 = vunpack.c.l.b16 %v3337
        %v3385 = vunpack.c.l.b16 %v3351
        %v3386 = vunpack.c.l.b16 %v3365
        %v3387 = vunpack.c.l.b16 %v3379
        %v3388 = vrot.slane %v3381, 7
        %v3389 = vsel %vm445, %v3388, %v3380
        %v3390 = vrot.slane %v3382, 6
        %v3391 = vsel %vm448, %v3390, %v3389
        %v3392 = vrot.slane %v3383, 5
        %v3393 = vsel %vm451, %v3392, %v3391
        %v3394 = vrot.slane %v3384, 4
        %v3395 = vsel %vm454, %v3394, %v3393
        %v3396 = vrot.slane %v3385, 3
        %v3397 = vsel %vm457, %v3396, %v3395
        %v3398 = vrot.slane %v3386, 2
        %v3399 = vsel %vm460, %v3398, %v3397
        %v3400 = vrot.slane %v3387, 1
        %v3401 = vsel %vm463, %v3400, %v3399
        %v3402 = vpack.c.b16 %v3401, %v3401
        %3403 = vrot.lane.b32.xlu0 %v3402, 96
        %v3404 = vpop.permute.xlu0 %3403
        %v3407 = vsel %vm611, %v3259, %v3404
        %3408 = vrot.lane.b32.xlu0 %v3259, 126
        %v3409 = vpop.permute.xlu0 %3408
        %3410 = vrot.lane.b32.xlu0 %v3402, 64
        %v3411 = vpop.permute.xlu0 %3410
        %v3414 = vsel %vm611, %v3409, %v3411
        %v3416 = vsel %vm622, %v3402, 0
        %v3418 = vsel %vm622, %v3407, 0
        %3420 = vmatprep.subr.bf16.mxu0 0
        %3421 = vmatpush1.bf16.xpose.msra.mxu0 %v3418
        %3422 = vmatprep.subr.bf16.mxu0 0
        %3423 = vmatpush1.bf16.xpose.msra.mxu0 0
        %3424 = vmatprep.subr.bf16.mxu0 0
        %3425 = vmatpush1.bf16.xpose.msra.mxu0 0
        %3426 = vmatprep.subr.bf16.mxu0 0
        %3427 = vmatpush1.bf16.xpose.msra.mxu0 0
        %3428 = vmatprep.subr.bf16.mxu0 0
        %3429 = vmatpush1.bf16.xpose.msra.mxu0 0
        %3430 = vmatprep.subr.bf16.mxu0 0
        %3431 = vmatpush1.bf16.xpose.msra.mxu0 0
        %3432 = vmatprep.subr.bf16.mxu0 0
        %3433 = vmatpush1.bf16.xpose.msra.mxu0 0
        %3434 = vmatprep.subr.bf16.mxu0 0
        %3435 = vmatpush1.bf16.xpose.msra.mxu0 0
        %3436 = vmatprep.subr.bf16.mxu0 0
        %3437 = vmatpush1.bf16.xpose.msra.mxu0 0
        %3438 = vmatprep.subr.bf16.mxu0 0
        %3439 = vmatpush1.bf16.xpose.msra.mxu0 0
        %3440 = vmatprep.subr.bf16.mxu0 0
        %3441 = vmatpush1.bf16.xpose.msra.mxu0 0
        %3442 = vmatprep.subr.bf16.mxu0 0
        %3443 = vmatpush1.bf16.xpose.msra.mxu0 0
        %3444 = vmatprep.subr.bf16.mxu0 0
        %3445 = vmatpush1.bf16.xpose.msra.mxu0 0
        %3446 = vmatprep.subr.bf16.mxu0 0
        %3447 = vmatpush1.bf16.xpose.msra.mxu0 0
        %3448 = vmatprep.subr.bf16.mxu0 0
        %3449 = vmatpush1.bf16.xpose.msra.mxu0 0
        %3450 = vmatprep.subr.bf16.mxu0 0
        %3451 = vmatpush1.bf16.xpose.msra.mxu0 0
        %3452 = vmatprep.mubr.bf16.mxu0 0
        %3453 = vmatmul.mubr.bf16.gmra.mrb[0].mxu0 %v3416
        %v3454 = vpop.f32.mrb[0].mxu0
        %v3455 = vadd.f32 0.0, %v3454
        %v3456 = vpop.f32.mrb[0].mxu0
        %v3457 = vpop.f32.mrb[0].mxu0
        %v3458 = vpop.f32.mrb[0].mxu0
        %3459 = vdwg.mxu0
        %v3460 = vmul.f32 %v3455, 0.35355338
        %v3461 = vsel %vm622, %v3460, -inf
        %3462 = vmax.xlane.f32.xlu0 %v3461
        %v3463 = vpop.xlane.xlu0 %3462
        %v3464 = vsub.f32 %v3460, %v3463
        %v3465 = vmul.f32 %v3464, 1.442695
        %v3466 = vpow.pop %v3465
        %v3467 = vsel %vm622, %v3466, 0.0
        %3468 = vadd.xlane.f32.xlu0 %v3467
        %v3469 = vpop.xlane.xlu0 %3468
        %v3470 = vrcp.pop %v3469
        %v3471 = vmul.f32 %v3466, %v3470
        %v3472 = vpack.c.bf16 %v3471, %v3471
        %v3474 = vsel %vm622, %v3472, 0
        %v3476 = vsel %vm684, %v3414, 0
        %3478 = vmatprep.subr.bf16.mxu0 0
        %3479 = vmatpush1.bf16.msra.mxu0 %v3476
        %3480 = vmatprep.subr.bf16.mxu0 0
        %3481 = vmatpush1.bf16.msra.mxu0 0
        %3482 = vmatprep.subr.bf16.mxu0 0
        %3483 = vmatpush1.bf16.msra.mxu0 0
        %3484 = vmatprep.subr.bf16.mxu0 0
        %3485 = vmatpush1.bf16.msra.mxu0 0
        %3486 = vmatprep.subr.bf16.mxu0 0
        %3487 = vmatpush1.bf16.msra.mxu0 0
        %3488 = vmatprep.subr.bf16.mxu0 0
        %3489 = vmatpush1.bf16.msra.mxu0 0
        %3490 = vmatprep.subr.bf16.mxu0 0
        %3491 = vmatpush1.bf16.msra.mxu0 0
        %3492 = vmatprep.subr.bf16.mxu0 0
        %3493 = vmatpush1.bf16.msra.mxu0 0
        %3494 = vmatprep.subr.bf16.mxu0 0
        %3495 = vmatpush1.bf16.msra.mxu0 0
        %3496 = vmatprep.subr.bf16.mxu0 0
        %3497 = vmatpush1.bf16.msra.mxu0 0
        %3498 = vmatprep.subr.bf16.mxu0 0
        %3499 = vmatpush1.bf16.msra.mxu0 0
        %3500 = vmatprep.subr.bf16.mxu0 0
        %3501 = vmatpush1.bf16.msra.mxu0 0
        %3502 = vmatprep.subr.bf16.mxu0 0
        %3503 = vmatpush1.bf16.msra.mxu0 0
        %3504 = vmatprep.subr.bf16.mxu0 0
        %3505 = vmatpush1.bf16.msra.mxu0 0
        %3506 = vmatprep.subr.bf16.mxu0 0
        %3507 = vmatpush1.bf16.msra.mxu0 0
        %3508 = vmatprep.subr.bf16.mxu0 0
        %3509 = vmatpush1.bf16.msra.mxu0 0
        %3510 = vmatprep.mubr.bf16.mxu0 0
        %3511 = vmatmul.mubr.bf16.gmra.mrb[0].mxu0 %v3474
        %v3512 = vpop.f32.mrb[0].mxu0
        %v3513 = vadd.f32 0.0, %v3512
        %v3514 = vpop.f32.mrb[0].mxu0
        %v3515 = vpop.f32.mrb[0].mxu0
        %v3516 = vpop.f32.mrb[0].mxu0
        %3517 = vdwg.mxu0
        %3518 = vrot.lane.b32.xlu0 %v3402, 120
        %v3519 = vpop.permute.xlu0 %3518
        %3521 = vrot.lane.b32.xlu0 %v3407, 120
        %v3522 = vpop.permute.xlu0 %3521
        %v3524 = vsel %vm622, %v3519, 0
        %v3527 = vsel %vm622, %v3522, 0
        %3529 = vmatprep.subr.bf16.mxu0 0
        %3530 = vmatpush1.bf16.xpose.msra.mxu0 %v3527
        %3531 = vmatprep.subr.bf16.mxu0 0
        %3532 = vmatpush1.bf16.xpose.msra.mxu0 0
        %3533 = vmatprep.subr.bf16.mxu0 0
        %3534 = vmatpush1.bf16.xpose.msra.mxu0 0
        %3535 = vmatprep.subr.bf16.mxu0 0
        %3536 = vmatpush1.bf16.xpose.msra.mxu0 0
        %3537 = vmatprep.subr.bf16.mxu0 0
        %3538 = vmatpush1.bf16.xpose.msra.mxu0 0
        %3539 = vmatprep.subr.bf16.mxu0 0
        %3540 = vmatpush1.bf16.xpose.msra.mxu0 0
        %3541 = vmatprep.subr.bf16.mxu0 0
        %3542 = vmatpush1.bf16.xpose.msra.mxu0 0
        %3543 = vmatprep.subr.bf16.mxu0 0
        %3544 = vmatpush1.bf16.xpose.msra.mxu0 0
        %3545 = vmatprep.subr.bf16.mxu0 0
        %3546 = vmatpush1.bf16.xpose.msra.mxu0 0
        %3547 = vmatprep.subr.bf16.mxu0 0
        %3548 = vmatpush1.bf16.xpose.msra.mxu0 0
        %3549 = vmatprep.subr.bf16.mxu0 0
        %3550 = vmatpush1.bf16.xpose.msra.mxu0 0
        %3551 = vmatprep.subr.bf16.mxu0 0
        %3552 = vmatpush1.bf16.xpose.msra.mxu0 0
        %3553 = vmatprep.subr.bf16.mxu0 0
        %3554 = vmatpush1.bf16.xpose.msra.mxu0 0
        %3555 = vmatprep.subr.bf16.mxu0 0
        %3556 = vmatpush1.bf16.xpose.msra.mxu0 0
        %3557 = vmatprep.subr.bf16.mxu0 0
        %3558 = vmatpush1.bf16.xpose.msra.mxu0 0
        %3559 = vmatprep.subr.bf16.mxu0 0
        %3560 = vmatpush1.bf16.xpose.msra.mxu0 0
        %3561 = vmatprep.mubr.bf16.mxu0 0
        %3562 = vmatmul.mubr.bf16.gmra.mrb[0].mxu0 %v3524
        %v3563 = vpop.f32.mrb[0].mxu0
        %v3564 = vadd.f32 0.0, %v3563
        %v3565 = vpop.f32.mrb[0].mxu0
        %v3566 = vpop.f32.mrb[0].mxu0
        %v3567 = vpop.f32.mrb[0].mxu0
        %3568 = vdwg.mxu0
        %v3569 = vmul.f32 %v3564, 0.35355338
        %v3570 = vsel %vm622, %v3569, -inf
        %3571 = vmax.xlane.f32.xlu0 %v3570
        %v3572 = vpop.xlane.xlu0 %3571
        %v3573 = vsub.f32 %v3569, %v3572
        %v3574 = vmul.f32 %v3573, 1.442695
        %v3575 = vpow.pop %v3574
        %v3576 = vsel %vm622, %v3575, 0.0
        %3577 = vadd.xlane.f32.xlu0 %v3576
        %v3578 = vpop.xlane.xlu0 %3577
        %v3579 = vrcp.pop %v3578
        %v3580 = vmul.f32 %v3575, %v3579
        %v3581 = vpack.c.bf16 %v3580, %v3580
        %3583 = vrot.lane.b32.xlu0 %v3414, 120
        %v3584 = vpop.permute.xlu0 %3583
        %v3586 = vsel %vm622, %v3581, 0
        %v3589 = vsel %vm684, %v3584, 0
        %3591 = vmatprep.subr.bf16.mxu0 0
        %3592 = vmatpush1.bf16.msra.mxu0 %v3589
        %3593 = vmatprep.subr.bf16.mxu0 0
        %3594 = vmatpush1.bf16.msra.mxu0 0
        %3595 = vmatprep.subr.bf16.mxu0 0
        %3596 = vmatpush1.bf16.msra.mxu0 0
        %3597 = vmatprep.subr.bf16.mxu0 0
        %3598 = vmatpush1.bf16.msra.mxu0 0
        %3599 = vmatprep.subr.bf16.mxu0 0
        %3600 = vmatpush1.bf16.msra.mxu0 0
        %3601 = vmatprep.subr.bf16.mxu0 0
        %3602 = vmatpush1.bf16.msra.mxu0 0
        %3603 = vmatprep.subr.bf16.mxu0 0
        %3604 = vmatpush1.bf16.msra.mxu0 0
        %3605 = vmatprep.subr.bf16.mxu0 0
        %3606 = vmatpush1.bf16.msra.mxu0 0
        %3607 = vmatprep.subr.bf16.mxu0 0
        %3608 = vmatpush1.bf16.msra.mxu0 0
        %3609 = vmatprep.subr.bf16.mxu0 0
        %3610 = vmatpush1.bf16.msra.mxu0 0
        %3611 = vmatprep.subr.bf16.mxu0 0
        %3612 = vmatpush1.bf16.msra.mxu0 0
        %3613 = vmatprep.subr.bf16.mxu0 0
        %3614 = vmatpush1.bf16.msra.mxu0 0
        %3615 = vmatprep.subr.bf16.mxu0 0
        %3616 = vmatpush1.bf16.msra.mxu0 0
        %3617 = vmatprep.subr.bf16.mxu0 0
        %3618 = vmatpush1.bf16.msra.mxu0 0
        %3619 = vmatprep.subr.bf16.mxu0 0
        %3620 = vmatpush1.bf16.msra.mxu0 0
        %3621 = vmatprep.subr.bf16.mxu0 0
        %3622 = vmatpush1.bf16.msra.mxu0 0
        %3623 = vmatprep.mubr.bf16.mxu0 0
        %3624 = vmatmul.mubr.bf16.gmra.mrb[0].mxu0 %v3586
        %v3625 = vpop.f32.mrb[0].mxu0
        %v3626 = vadd.f32 0.0, %v3625
        %v3627 = vpop.f32.mrb[0].mxu0
        %v3628 = vpop.f32.mrb[0].mxu0
        %v3629 = vpop.f32.mrb[0].mxu0
        %3630 = vdwg.mxu0
        %3632 = vrot.lane.b32.xlu0 %v3626, 8
        %v3633 = vpop.permute.xlu0 %3632
        %v3635 = vsel %vm622, %v3513, %v3633
        %v3636 = vpack.c.bf16 %v3635, %v3635
        %v3639 = vunpack.c.l.s4 1966171168
        %v3640 = vunpack.c.0.s8 %v3639
        %v3641 = vlaneseq
        %v3642 = vshrl.u32 %v3641, 7
        %v3643 = vsub.s32 %v3640, %v3642
        %v3644 = vrot.slane %v3636, %v3643
        %v3645 = vcombine.high %v3644, %v3644
        %v3647 = vunpack.c.l.s4 1966171168
        %v3648 = vunpack.c.0.s8 %v3647
        %v3649 = vlaneseq
        %v3650 = vshrl.u32 %v3649, 7
        %v3651 = vsub.s32 %v3648, %v3650
        %v3652 = vrot.slane %v3644, %v3651
        %v3654 = vunpack.c.l.s4 1966171168
        %v3655 = vunpack.c.0.s8 %v3654
        %v3656 = vlaneseq
        %v3657 = vshrl.u32 %v3656, 7
        %v3658 = vsub.s32 %v3655, %v3657
        %v3659 = vrot.slane %v3645, %v3658
        %v3660 = vcombine.high %v3652, %v3652
        %v3661 = vcombine.high %v3659, %v3659
        %v3662 = vunpack.i.l.s16 %v3652
        %v3663 = vunpack.i.h.s16 %v3652
        %v3664 = vunpack.i.l.s16 %v3659
        %v3665 = vunpack.i.h.s16 %v3659
        %v3666 = vunpack.i.l.s16 %v3660
        %v3667 = vunpack.i.h.s16 %v3660
        %v3668 = vunpack.i.l.s16 %v3661
        %v3669 = vunpack.i.h.s16 %v3661
        %v3670 = vpack.i.b16 %v3662, %v3662
        %v3671 = vpack.i.b16 %v3663, %v3663
        %v3672 = vpack.i.b16 %v3664, %v3664
        %v3673 = vpack.i.b16 %v3665, %v3665
        %v3674 = vpack.i.b16 %v3666, %v3666
        %v3675 = vpack.i.b16 %v3667, %v3667
        %v3676 = vpack.i.b16 %v3668, %v3668
        %v3677 = vpack.i.b16 %v3669, %v3669
        %s3686 = scalar_lea.vmem %s295, 3 [#allocation4]
        %v3687 = vld [vmem:[%s3686] sm:$0x1]
        %v3688 = vsel %vm897, %v3670, %v3687
        %3689 = vst [vmem:[%s3686] sm:$0x1] %v3688
        %v3690 = vld [vmem:[%s3686 + $0x4] sm:$0x1]
        %v3691 = vsel %vm897, %v3671, %v3690
        %3692 = vst [vmem:[%s3686 + $0x4] sm:$0x1] %v3691
        %v3693 = vld [vmem:[%s3686 + $0x8] sm:$0x1]
        %v3694 = vsel %vm897, %v3672, %v3693
        %3695 = vst [vmem:[%s3686 + $0x8] sm:$0x1] %v3694
        %v3696 = vld [vmem:[%s3686 + $0xc] sm:$0x1]
        %v3697 = vsel %vm897, %v3673, %v3696
        %3698 = vst [vmem:[%s3686 + $0xc] sm:$0x1] %v3697
        %v3699 = vld [vmem:[%s3686 + $0x10] sm:$0x1]
        %v3700 = vsel %vm897, %v3674, %v3699
        %3701 = vst [vmem:[%s3686 + $0x10] sm:$0x1] %v3700
        %v3702 = vld [vmem:[%s3686 + $0x14] sm:$0x1]
        %v3703 = vsel %vm897, %v3675, %v3702
        %3704 = vst [vmem:[%s3686 + $0x14] sm:$0x1] %v3703
        %v3705 = vld [vmem:[%s3686 + $0x18] sm:$0x1]
        %v3706 = vsel %vm897, %v3676, %v3705
        %3707 = vst [vmem:[%s3686 + $0x18] sm:$0x1] %v3706
        %v3708 = vld [vmem:[%s3686 + $0x1c] sm:$0x1]
        %v3709 = vsel %vm897, %v3677, %v3708
        %3710 = vst [vmem:[%s3686 + $0x1c] sm:$0x1] %v3709
        %3711 = vrot.lane.b32.xlu0 %v3402, 112
        %v3712 = vpop.permute.xlu0 %3711
        %3713 = vrot.lane.b32.xlu0 %v3407, 112
        %v3714 = vpop.permute.xlu0 %3713
        %v3716 = vsel %vm622, %v3712, 0
        %v3719 = vsel %vm622, %v3714, 0
        %3721 = vmatprep.subr.bf16.mxu0 0
        %3722 = vmatpush1.bf16.xpose.msra.mxu0 %v3719
        %3723 = vmatprep.subr.bf16.mxu0 0
        %3724 = vmatpush1.bf16.xpose.msra.mxu0 0
        %3725 = vmatprep.subr.bf16.mxu0 0
        %3726 = vmatpush1.bf16.xpose.msra.mxu0 0
        %3727 = vmatprep.subr.bf16.mxu0 0
        %3728 = vmatpush1.bf16.xpose.msra.mxu0 0
        %3729 = vmatprep.subr.bf16.mxu0 0
        %3730 = vmatpush1.bf16.xpose.msra.mxu0 0
        %3731 = vmatprep.subr.bf16.mxu0 0
        %3732 = vmatpush1.bf16.xpose.msra.mxu0 0
        %3733 = vmatprep.subr.bf16.mxu0 0
        %3734 = vmatpush1.bf16.xpose.msra.mxu0 0
        %3735 = vmatprep.subr.bf16.mxu0 0
        %3736 = vmatpush1.bf16.xpose.msra.mxu0 0
        %3737 = vmatprep.subr.bf16.mxu0 0
        %3738 = vmatpush1.bf16.xpose.msra.mxu0 0
        %3739 = vmatprep.subr.bf16.mxu0 0
        %3740 = vmatpush1.bf16.xpose.msra.mxu0 0
        %3741 = vmatprep.subr.bf16.mxu0 0
        %3742 = vmatpush1.bf16.xpose.msra.mxu0 0
        %3743 = vmatprep.subr.bf16.mxu0 0
        %3744 = vmatpush1.bf16.xpose.msra.mxu0 0
        %3745 = vmatprep.subr.bf16.mxu0 0
        %3746 = vmatpush1.bf16.xpose.msra.mxu0 0
        %3747 = vmatprep.subr.bf16.mxu0 0
        %3748 = vmatpush1.bf16.xpose.msra.mxu0 0
        %3749 = vmatprep.subr.bf16.mxu0 0
        %3750 = vmatpush1.bf16.xpose.msra.mxu0 0
        %3751 = vmatprep.subr.bf16.mxu0 0
        %3752 = vmatpush1.bf16.xpose.msra.mxu0 0
        %3753 = vmatprep.mubr.bf16.mxu0 0
        %3754 = vmatmul.mubr.bf16.gmra.mrb[0].mxu0 %v3716
        %v3755 = vpop.f32.mrb[0].mxu0
        %v3756 = vadd.f32 0.0, %v3755
        %v3757 = vpop.f32.mrb[0].mxu0
        %v3758 = vpop.f32.mrb[0].mxu0
        %v3759 = vpop.f32.mrb[0].mxu0
        %3760 = vdwg.mxu0
        %v3761 = vmul.f32 %v3756, 0.35355338
        %v3762 = vsel %vm622, %v3761, -inf
        %3763 = vmax.xlane.f32.xlu0 %v3762
        %v3764 = vpop.xlane.xlu0 %3763
        %v3765 = vsub.f32 %v3761, %v3764
        %v3766 = vmul.f32 %v3765, 1.442695
        %v3767 = vpow.pop %v3766
        %v3768 = vsel %vm622, %v3767, 0.0
        %3769 = vadd.xlane.f32.xlu0 %v3768
        %v3770 = vpop.xlane.xlu0 %3769
        %v3771 = vrcp.pop %v3770
        %v3772 = vmul.f32 %v3767, %v3771
        %v3773 = vpack.c.bf16 %v3772, %v3772
        %3774 = vrot.lane.b32.xlu0 %v3414, 112
        %v3775 = vpop.permute.xlu0 %3774
        %v3777 = vsel %vm622, %v3773, 0
        %v3780 = vsel %vm684, %v3775, 0
        %3782 = vmatprep.subr.bf16.mxu0 0
        %3783 = vmatpush1.bf16.msra.mxu0 %v3780
        %3784 = vmatprep.subr.bf16.mxu0 0
        %3785 = vmatpush1.bf16.msra.mxu0 0
        %3786 = vmatprep.subr.bf16.mxu0 0
        %3787 = vmatpush1.bf16.msra.mxu0 0
        %3788 = vmatprep.subr.bf16.mxu0 0
        %3789 = vmatpush1.bf16.msra.mxu0 0
        %3790 = vmatprep.subr.bf16.mxu0 0
        %3791 = vmatpush1.bf16.msra.mxu0 0
        %3792 = vmatprep.subr.bf16.mxu0 0
        %3793 = vmatpush1.bf16.msra.mxu0 0
        %3794 = vmatprep.subr.bf16.mxu0 0
        %3795 = vmatpush1.bf16.msra.mxu0 0
        %3796 = vmatprep.subr.bf16.mxu0 0
        %3797 = vmatpush1.bf16.msra.mxu0 0
        %3798 = vmatprep.subr.bf16.mxu0 0
        %3799 = vmatpush1.bf16.msra.mxu0 0
        %3800 = vmatprep.subr.bf16.mxu0 0
        %3801 = vmatpush1.bf16.msra.mxu0 0
        %3802 = vmatprep.subr.bf16.mxu0 0
        %3803 = vmatpush1.bf16.msra.mxu0 0
        %3804 = vmatprep.subr.bf16.mxu0 0
        %3805 = vmatpush1.bf16.msra.mxu0 0
        %3806 = vmatprep.subr.bf16.mxu0 0
        %3807 = vmatpush1.bf16.msra.mxu0 0
        %3808 = vmatprep.subr.bf16.mxu0 0
        %3809 = vmatpush1.bf16.msra.mxu0 0
        %3810 = vmatprep.subr.bf16.mxu0 0
        %3811 = vmatpush1.bf16.msra.mxu0 0
        %3812 = vmatprep.subr.bf16.mxu0 0
        %3813 = vmatpush1.bf16.msra.mxu0 0
        %3814 = vmatprep.mubr.bf16.mxu0 0
        %3815 = vmatmul.mubr.bf16.gmra.mrb[0].mxu0 %v3777
        %v3816 = vpop.f32.mrb[0].mxu0
        %v3817 = vadd.f32 0.0, %v3816
        %v3818 = vpop.f32.mrb[0].mxu0
        %v3819 = vpop.f32.mrb[0].mxu0
        %v3820 = vpop.f32.mrb[0].mxu0
        %3821 = vdwg.mxu0
        %3822 = vrot.lane.b32.xlu0 %v3402, 104
        %v3823 = vpop.permute.xlu0 %3822
        %3824 = vrot.lane.b32.xlu0 %v3407, 104
        %v3825 = vpop.permute.xlu0 %3824
        %v3827 = vsel %vm622, %v3823, 0
        %v3830 = vsel %vm622, %v3825, 0
        %3832 = vmatprep.subr.bf16.mxu0 0
        %3833 = vmatpush1.bf16.xpose.msra.mxu0 %v3830
        %3834 = vmatprep.subr.bf16.mxu0 0
        %3835 = vmatpush1.bf16.xpose.msra.mxu0 0
        %3836 = vmatprep.subr.bf16.mxu0 0
        %3837 = vmatpush1.bf16.xpose.msra.mxu0 0
        %3838 = vmatprep.subr.bf16.mxu0 0
        %3839 = vmatpush1.bf16.xpose.msra.mxu0 0
        %3840 = vmatprep.subr.bf16.mxu0 0
        %3841 = vmatpush1.bf16.xpose.msra.mxu0 0
        %3842 = vmatprep.subr.bf16.mxu0 0
        %3843 = vmatpush1.bf16.xpose.msra.mxu0 0
        %3844 = vmatprep.subr.bf16.mxu0 0
        %3845 = vmatpush1.bf16.xpose.msra.mxu0 0
        %3846 = vmatprep.subr.bf16.mxu0 0
        %3847 = vmatpush1.bf16.xpose.msra.mxu0 0
        %3848 = vmatprep.subr.bf16.mxu0 0
        %3849 = vmatpush1.bf16.xpose.msra.mxu0 0
        %3850 = vmatprep.subr.bf16.mxu0 0
        %3851 = vmatpush1.bf16.xpose.msra.mxu0 0
        %3852 = vmatprep.subr.bf16.mxu0 0
        %3853 = vmatpush1.bf16.xpose.msra.mxu0 0
        %3854 = vmatprep.subr.bf16.mxu0 0
        %3855 = vmatpush1.bf16.xpose.msra.mxu0 0
        %3856 = vmatprep.subr.bf16.mxu0 0
        %3857 = vmatpush1.bf16.xpose.msra.mxu0 0
        %3858 = vmatprep.subr.bf16.mxu0 0
        %3859 = vmatpush1.bf16.xpose.msra.mxu0 0
        %3860 = vmatprep.subr.bf16.mxu0 0
        %3861 = vmatpush1.bf16.xpose.msra.mxu0 0
        %3862 = vmatprep.subr.bf16.mxu0 0
        %3863 = vmatpush1.bf16.xpose.msra.mxu0 0
        %3864 = vmatprep.mubr.bf16.mxu0 0
        %3865 = vmatmul.mubr.bf16.gmra.mrb[0].mxu0 %v3827
        %v3866 = vpop.f32.mrb[0].mxu0
        %v3867 = vadd.f32 0.0, %v3866
        %v3868 = vpop.f32.mrb[0].mxu0
        %v3869 = vpop.f32.mrb[0].mxu0
        %v3870 = vpop.f32.mrb[0].mxu0
        %3871 = vdwg.mxu0
        %v3872 = vmul.f32 %v3867, 0.35355338
        %v3873 = vsel %vm622, %v3872, -inf
        %3874 = vmax.xlane.f32.xlu0 %v3873
        %v3875 = vpop.xlane.xlu0 %3874
        %v3876 = vsub.f32 %v3872, %v3875
        %v3877 = vmul.f32 %v3876, 1.442695
        %v3878 = vpow.pop %v3877
        %v3879 = vsel %vm622, %v3878, 0.0
        %3880 = vadd.xlane.f32.xlu0 %v3879
        %v3881 = vpop.xlane.xlu0 %3880
        %v3882 = vrcp.pop %v3881
        %v3883 = vmul.f32 %v3878, %v3882
        %v3884 = vpack.c.bf16 %v3883, %v3883
        %3885 = vrot.lane.b32.xlu0 %v3414, 104
        %v3886 = vpop.permute.xlu0 %3885
        %v3888 = vsel %vm622, %v3884, 0
        %v3891 = vsel %vm684, %v3886, 0
        %3893 = vmatprep.subr.bf16.mxu0 0
        %3894 = vmatpush1.bf16.msra.mxu0 %v3891
        %3895 = vmatprep.subr.bf16.mxu0 0
        %3896 = vmatpush1.bf16.msra.mxu0 0
        %3897 = vmatprep.subr.bf16.mxu0 0
        %3898 = vmatpush1.bf16.msra.mxu0 0
        %3899 = vmatprep.subr.bf16.mxu0 0
        %3900 = vmatpush1.bf16.msra.mxu0 0
        %3901 = vmatprep.subr.bf16.mxu0 0
        %3902 = vmatpush1.bf16.msra.mxu0 0
        %3903 = vmatprep.subr.bf16.mxu0 0
        %3904 = vmatpush1.bf16.msra.mxu0 0
        %3905 = vmatprep.subr.bf16.mxu0 0
        %3906 = vmatpush1.bf16.msra.mxu0 0
        %3907 = vmatprep.subr.bf16.mxu0 0
        %3908 = vmatpush1.bf16.msra.mxu0 0
        %3909 = vmatprep.subr.bf16.mxu0 0
        %3910 = vmatpush1.bf16.msra.mxu0 0
        %3911 = vmatprep.subr.bf16.mxu0 0
        %3912 = vmatpush1.bf16.msra.mxu0 0
        %3913 = vmatprep.subr.bf16.mxu0 0
        %3914 = vmatpush1.bf16.msra.mxu0 0
        %3915 = vmatprep.subr.bf16.mxu0 0
        %3916 = vmatpush1.bf16.msra.mxu0 0
        %3917 = vmatprep.subr.bf16.mxu0 0
        %3918 = vmatpush1.bf16.msra.mxu0 0
        %3919 = vmatprep.subr.bf16.mxu0 0
        %3920 = vmatpush1.bf16.msra.mxu0 0
        %3921 = vmatprep.subr.bf16.mxu0 0
        %3922 = vmatpush1.bf16.msra.mxu0 0
        %3923 = vmatprep.subr.bf16.mxu0 0
        %3924 = vmatpush1.bf16.msra.mxu0 0
        %3925 = vmatprep.mubr.bf16.mxu0 0
        %3926 = vmatmul.mubr.bf16.gmra.mrb[0].mxu0 %v3888
        %v3927 = vpop.f32.mrb[0].mxu0
        %v3928 = vadd.f32 0.0, %v3927
        %v3929 = vpop.f32.mrb[0].mxu0
        %v3930 = vpop.f32.mrb[0].mxu0
        %v3931 = vpop.f32.mrb[0].mxu0
        %3932 = vdwg.mxu0
        %3934 = vrot.lane.b32.xlu0 %v3928, 8
        %v3935 = vpop.permute.xlu0 %3934
        %v3937 = vsel %vm622, %v3817, %v3935
        %v3938 = vpack.c.bf16 %v3937, %v3937
        %v3941 = vunpack.c.l.s4 1966171168
        %v3942 = vunpack.c.0.s8 %v3941
        %v3943 = vlaneseq
        %v3944 = vshrl.u32 %v3943, 7
        %v3945 = vsub.s32 %v3942, %v3944
        %v3946 = vrot.slane %v3938, %v3945
        %v3947 = vcombine.high %v3946, %v3946
        %v3949 = vunpack.c.l.s4 1966171168
        %v3950 = vunpack.c.0.s8 %v3949
        %v3951 = vlaneseq
        %v3952 = vshrl.u32 %v3951, 7
        %v3953 = vsub.s32 %v3950, %v3952
        %v3954 = vrot.slane %v3946, %v3953
        %v3956 = vunpack.c.l.s4 1966171168
        %v3957 = vunpack.c.0.s8 %v3956
        %v3958 = vlaneseq
        %v3959 = vshrl.u32 %v3958, 7
        %v3960 = vsub.s32 %v3957, %v3959
        %v3961 = vrot.slane %v3947, %v3960
        %v3962 = vcombine.high %v3954, %v3954
        %v3963 = vcombine.high %v3961, %v3961
        %v3964 = vunpack.i.l.s16 %v3954
        %v3965 = vunpack.i.h.s16 %v3954
        %v3966 = vunpack.i.l.s16 %v3961
        %v3967 = vunpack.i.h.s16 %v3961
        %v3968 = vunpack.i.l.s16 %v3962
        %v3969 = vunpack.i.h.s16 %v3962
        %v3970 = vunpack.i.l.s16 %v3963
        %v3971 = vunpack.i.h.s16 %v3963
        %v3972 = vpack.i.b16 %v3964, %v3964
        %v3973 = vpack.i.b16 %v3965, %v3965
        %v3974 = vpack.i.b16 %v3966, %v3966
        %v3975 = vpack.i.b16 %v3967, %v3967
        %v3976 = vpack.i.b16 %v3968, %v3968
        %v3977 = vpack.i.b16 %v3969, %v3969
        %v3978 = vpack.i.b16 %v3970, %v3970
        %v3979 = vpack.i.b16 %v3971, %v3971
        %3980 = vrot.lane.b32.xlu0 %v3972, 16
        %v3981 = vpop.permute.xlu0 %3980
        %3982 = vrot.lane.b32.xlu0 %v3973, 16
        %v3983 = vpop.permute.xlu0 %3982
        %3984 = vrot.lane.b32.xlu0 %v3974, 16
        %v3985 = vpop.permute.xlu0 %3984
        %3986 = vrot.lane.b32.xlu0 %v3975, 16
        %v3987 = vpop.permute.xlu0 %3986
        %3988 = vrot.lane.b32.xlu0 %v3976, 16
        %v3989 = vpop.permute.xlu0 %3988
        %3990 = vrot.lane.b32.xlu0 %v3977, 16
        %v3991 = vpop.permute.xlu0 %3990
        %3992 = vrot.lane.b32.xlu0 %v3978, 16
        %v3993 = vpop.permute.xlu0 %3992
        %3994 = vrot.lane.b32.xlu0 %v3979, 16
        %v3995 = vpop.permute.xlu0 %3994
        %v4004 = vld [vmem:[%s3686] sm:$0x1]
        %v4005 = vsel %vm1216, %v3981, %v4004
        %4006 = vst [vmem:[%s3686] sm:$0x1] %v4005
        %v4007 = vld [vmem:[%s3686 + $0x4] sm:$0x1]
        %v4008 = vsel %vm1216, %v3983, %v4007
        %4009 = vst [vmem:[%s3686 + $0x4] sm:$0x1] %v4008
        %v4010 = vld [vmem:[%s3686 + $0x8] sm:$0x1]
        %v4011 = vsel %vm1216, %v3985, %v4010
        %4012 = vst [vmem:[%s3686 + $0x8] sm:$0x1] %v4011
        %v4013 = vld [vmem:[%s3686 + $0xc] sm:$0x1]
        %v4014 = vsel %vm1216, %v3987, %v4013
        %4015 = vst [vmem:[%s3686 + $0xc] sm:$0x1] %v4014
        %v4016 = vld [vmem:[%s3686 + $0x10] sm:$0x1]
        %v4017 = vsel %vm1216, %v3989, %v4016
        %4018 = vst [vmem:[%s3686 + $0x10] sm:$0x1] %v4017
        %v4019 = vld [vmem:[%s3686 + $0x14] sm:$0x1]
        %v4020 = vsel %vm1216, %v3991, %v4019
        %4021 = vst [vmem:[%s3686 + $0x14] sm:$0x1] %v4020
        %v4022 = vld [vmem:[%s3686 + $0x18] sm:$0x1]
        %v4023 = vsel %vm1216, %v3993, %v4022
        %4024 = vst [vmem:[%s3686 + $0x18] sm:$0x1] %v4023
        %v4025 = vld [vmem:[%s3686 + $0x1c] sm:$0x1]
        %v4026 = vsel %vm1216, %v3995, %v4025
        %4027 = vst [vmem:[%s3686 + $0x1c] sm:$0x1] %v4026
        %s4028 = sand.u32 %s73, 1
        %s4029 = sand.u32 %s73, 1
        %s4030 = smul.addr %s4029, 32
        %s4031 = scalar_lea.vmem [#allocation4], %s4030
        // Predicated region
        $region111: #{transformer_forward.9} parent=101 // pred_check
          %p4032 = pneg %p83
        $region112: #{transformer_forward.9} parent=101 // pred_check_branch
          %4034 = sbr.rel (%p4032) target = $region114
        $region113: #{transformer_forward.9} parent=101 // pred_region
          %s4035 = smul.u32 4, %s13
          %s4036 = scalar_lea.vmem %s2, %s4035
          // Predicated region
          $region115: #{transformer_forward.9} parent=113 // pred_check
            _
          $region116: #{transformer_forward.9} parent=113 // pred_check_branch
            %4038 = sbr.rel (0) target = $region118
          $region117: #{transformer_forward.9} parent=113 // pred_region
            // Predicated region
            $region119: #{transformer_forward.9} parent=117 // pred_check
              _
            $region120: #{transformer_forward.9} parent=117 // pred_check_branch
              %4040 = sbr.rel target = $region122
            $region121: #{transformer_forward.9} parent=117 // pred_region
              // Predicated region
              $region134: #{transformer_forward.9} parent=121 // pred_check
                _
              $region135: #{transformer_forward.9} parent=121 // pred_check_branch
                %4069 = sbr.rel (0) target = $region137
              $region136: #{transformer_forward.9} parent=121 // pred_region
                loop: start=0, step=1, limit=1
                $region138: #{transformer_forward.9} parent=136 // loop_pre_header
                  _
                $region139: #{transformer_forward.9} parent=136 // loop_header
                  %s4071 = sphi 0, %s4075
                  %p4072 = scmp.ge.s32.totalorder %s4071, 1
                  %s4076 = sphi %s4031, %s4031
                  %s4077 = sphi %s4036, %s4036
                $region140: #{transformer_forward.9} parent=136 // loop_header_branch
                  %4074 = sbr.rel (%p4072) target = $region144
                $region141: #{transformer_forward.9} parent=136 // loop_body
                  _
                $region142: #{transformer_forward.9} parent=136 // loop_footer
                  %s4075 = sadd.s32 1, %s4071
                $region143: #{transformer_forward.9} parent=136 // loop_footer_branch
                  %4070 = sbr.rel target = $region139
                $region144: #{transformer_forward.9} parent=136 // loop_exit
                  _
                loop: start=0, step=1, limit=1
                $region145: #{transformer_forward.9} parent=136 // loop_pre_header
                  _
                $region146: #{transformer_forward.9} parent=136 // loop_header
                  %s4080 = sphi 0, %s4084
                  %p4081 = scmp.ge.s32.totalorder %s4080, 1
                  %s4085 = sphi %s4031, %s4031
                  %s4086 = sphi %s4036, %s4036
                $region147: #{transformer_forward.9} parent=136 // loop_header_branch
                  %4083 = sbr.rel (%p4081) target = $region151
                $region148: #{transformer_forward.9} parent=136 // loop_body
                  %v4087 = vld [vmem:[%s4085] sm:$0xf]
                  %4088 = vst [vmem:[%s4086] sm:$0xf] %v4087
                  %v4089 = vld [vmem:[%s4085 + $0x4] sm:$0xf]
                  %4090 = vst [vmem:[%s4086 + $0x8] sm:$0xf] %v4089
                  %v4091 = vld [vmem:[%s4085 + $0x8] sm:$0xf]
                  %4092 = vst [vmem:[%s4086 + $0x10] sm:$0xf] %v4091
                  %v4093 = vld [vmem:[%s4085 + $0xc] sm:$0xf]
                  %4094 = vst [vmem:[%s4086 + $0x18] sm:$0xf] %v4093
                  %v4095 = vld [vmem:[%s4085 + $0x10] sm:$0xf]
                  %4096 = vst [vmem:[%s4086 + $0x20] sm:$0xf] %v4095
                  %v4097 = vld [vmem:[%s4085 + $0x14] sm:$0xf]
                  %4098 = vst [vmem:[%s4086 + $0x28] sm:$0xf] %v4097
                  %v4099 = vld [vmem:[%s4085 + $0x18] sm:$0xf]
                  %4100 = vst [vmem:[%s4086 + $0x30] sm:$0xf] %v4099
                  %v4101 = vld [vmem:[%s4085 + $0x1c] sm:$0xf]
                  %4102 = vst [vmem:[%s4086 + $0x38] sm:$0xf] %v4101
                $region149: #{transformer_forward.9} parent=136 // loop_footer
                  %s4084 = sadd.s32 1, %s4080
                $region150: #{transformer_forward.9} parent=136 // loop_footer_branch
                  %4079 = sbr.rel target = $region146
                $region151: #{transformer_forward.9} parent=136 // loop_exit
                  _
              $region137: #{transformer_forward.9} parent=121 // pred_fallthru
                _
            $region122: #{transformer_forward.9} parent=117 // pred_fallthru
              _
            // Predicated region
            $region123: #{transformer_forward.9} parent=117 // pred_check
              _
            $region124: #{transformer_forward.9} parent=117 // pred_check_branch
              %4042 = sbr.rel (0) target = $region126
            $region125: #{transformer_forward.9} parent=117 // pred_region
              loop: start=0, step=1, limit=1
              $region127: #{transformer_forward.9} parent=125 // loop_pre_header
                _
              $region128: #{transformer_forward.9} parent=125 // loop_header
                %s4045 = sphi 0, %s4049
                %p4046 = scmp.ge.s32.totalorder %s4045, 1
                %s4050 = sphi %s4031, %s4031
                %s4051 = sphi %s4036, %s4036
              $region129: #{transformer_forward.9} parent=125 // loop_header_branch
                %4048 = sbr.rel (%p4046) target = $region133
              $region130: #{transformer_forward.9} parent=125 // loop_body
                %v4052 = vld [vmem:[%s4050] sm:$0xf]
                %4053 = vst [vmem:[%s4051] sm:$0xf] %v4052
                %v4054 = vld [vmem:[%s4050 + $0x4] sm:$0xf]
                %4055 = vst [vmem:[%s4051 + $0x8] sm:$0xf] %v4054
                %v4056 = vld [vmem:[%s4050 + $0x8] sm:$0xf]
                %4057 = vst [vmem:[%s4051 + $0x10] sm:$0xf] %v4056
                %v4058 = vld [vmem:[%s4050 + $0xc] sm:$0xf]
                %4059 = vst [vmem:[%s4051 + $0x18] sm:$0xf] %v4058
                %v4060 = vld [vmem:[%s4050 + $0x10] sm:$0xf]
                %4061 = vst [vmem:[%s4051 + $0x20] sm:$0xf] %v4060
                %v4062 = vld [vmem:[%s4050 + $0x14] sm:$0xf]
                %4063 = vst [vmem:[%s4051 + $0x28] sm:$0xf] %v4062
                %v4064 = vld [vmem:[%s4050 + $0x18] sm:$0xf]
                %4065 = vst [vmem:[%s4051 + $0x30] sm:$0xf] %v4064
                %v4066 = vld [vmem:[%s4050 + $0x1c] sm:$0xf]
                %4067 = vst [vmem:[%s4051 + $0x38] sm:$0xf] %v4066
              $region131: #{transformer_forward.9} parent=125 // loop_footer
                %s4049 = sadd.s32 1, %s4045
              $region132: #{transformer_forward.9} parent=125 // loop_footer_branch
                %4044 = sbr.rel target = $region128
              $region133: #{transformer_forward.9} parent=125 // loop_exit
                _
            $region126: #{transformer_forward.9} parent=117 // pred_fallthru
              _
          $region118: #{transformer_forward.9} parent=113 // pred_fallthru
            _
          %4103 = vnop
        $region114: #{transformer_forward.9} parent=101 // pred_fallthru
          _
      $region102: #{transformer_forward.9} parent=5 // pred_fallthru
        _
      %p4104 = scmp.le.s32.totalorder 2, %s8
      // Predicated region
      $region152: #{transformer_forward.9} parent=5 // pred_check
        %p4105 = pneg %p4104
      $region153: #{transformer_forward.9} parent=5 // pred_check_branch
        %4107 = sbr.rel (%p4105) target = $region155
      $region154: #{transformer_forward.9} parent=5 // pred_region
        %s4108 = ssub.s32 %s8, 2
        // Predicated region
        $region156: #{transformer_forward.9} parent=154 // pred_check
          %p4109 = pneg %p89
        $region157: #{transformer_forward.9} parent=154 // pred_check_branch
          %4111 = sbr.rel (%p4109) target = $region159
        $region158: #{transformer_forward.9} parent=154 // pred_region
          %s4112 = sand.u32 %s74, 1
          %s4113 = sand.u32 %s74, 1
          %s4114 = smul.addr %s4113, 32
          %s4115 = scalar_lea.vmem [#allocation4], %s4114
        $region159: #{transformer_forward.9} parent=154 // pred_fallthru
          _
      $region155: #{transformer_forward.9} parent=5 // pred_fallthru
        _
    $region6: #{transformer_forward.9} parent=1 // loop_footer
      %s12 = sadd.s32 1, %s8
    $region7: #{transformer_forward.9} parent=1 // loop_footer_branch
      %7 = sbr.rel target = $region3
    $region8: #{transformer_forward.9} parent=1 // loop_exit
      _

</llo_original>
